<compile_context>
chip_gen: v7x
topology: tpu7x:2x2x1
jax: 0.10.0
libtpu: 0.0.40
codegen_flags: <defaults>
</compile_context>

<pallas_src>
import functools

import numpy as np
import jax
import jax.numpy as jnp
from jax.experimental import pallas as pl
from jax.experimental.pallas import tpu as pltpu


def _sgse_kernel(q_ref, kt_ref, div_ref, ws_ref, wc_ref, b_ref, o_ref, *,
                 tn, tk, hidden, compute_dtype):
    # q_ref   : (1, TN, 3)        query-point tile (coords on lanes)
    # kt_ref  : (1, 3, TK)        key-point chunk, transposed (keys on lanes)
    # div_ref : (1, H//2)         sinusoidal div_term, pre-scaled by 1/sigma_d
    # ws_ref  : (H//2, H)         W[:, 0::2]^T  (sin part), compute_dtype
    # wc_ref  : (H//2, H)         W[:, 1::2]^T  (cos part), compute_dtype
    # b_ref   : (1, H)            bias (f32)
    # o_ref   : (1, TN, TK, H)    output tile
    q = q_ref[0]                  # (TN, 3)
    kt = kt_ref[0]                # (3, TK)

    # ||q_i - p_j||^2 on the VPU: 3 unrolled broadcast FMAs over a (TN, TK) tile.
    # Exactly zero on the diagonal (same source values), always >= 0.
    sq = jnp.zeros((tn, tk), jnp.float32)
    for c in range(3):
        diff = q[:, c:c + 1] - kt[c:c + 1, :]        # (TN, 1) - (1, TK) -> (TN, TK)
        sq = sq + diff * diff
    d = jnp.sqrt(sq)                                 # (TN, TK)

    # omega = (d / sigma_d) * div_term; 1/sigma_d already folded into div_ref.
    # The small (TN, TK) -> (TN*TK, H/2) relayout is the cheapest place to pay
    # for the lane->sublane move of the key axis.
    div = div_ref[...].reshape(1, 1, hidden // 2)
    omega = d[:, :, None] * div                      # (TN, TK, H/2) f32
    sin_e = jnp.sin(omega).reshape(tn * tk, hidden // 2).astype(compute_dtype)
    cos_e = jnp.cos(omega).reshape(tn * tk, hidden // 2).astype(compute_dtype)

    # Interleaved Linear as two split matmuls (no concat temporary); f32 accum.
    out = jnp.dot(sin_e, ws_ref[...], preferred_element_type=jnp.float32)
    out = out + jnp.dot(cos_e, wc_ref[...], preferred_element_type=jnp.float32)
    out = out + b_ref[...]                           # (TN*TK, H)
    o_ref[...] = out.reshape(1, tn, tk, hidden).astype(o_ref.dtype)


def _largest_divisor(n, cap, mult):
    """Largest divisor of n that is <= cap and a multiple of `mult`; else n (full dim)."""
    for d in range(min(n, cap), 0, -1):
        if n % d == 0 and d % mult == 0:
            return d
    return n


def _pick_tiles(n, hidden, out_itemsize, max_block_bytes=4 << 20):
    """Key tile on lanes (mult of 128), query tile on sublanes sized to ~4 MiB blocks."""
    tk = _largest_divisor(n, cap=512, mult=128)
    budget_rows = max(8, max_block_bytes // max(1, tk * hidden * out_itemsize))
    tn = _largest_divisor(n, cap=min(budget_rows, 256), mult=8)
    return tn, tk


def self_geometric_structure_embedding(points, weight, bias, *, hidden_dim, sigma_d,
                                        tn=None, tk=None,
                                        compute_dtype=jnp.bfloat16,
                                        out_dtype=jnp.float32):
    """points: (B, N, 3) f32; weight: (H, H) nn.Linear weight (out, in); bias: (H,)."""
    points = jnp.asarray(points, jnp.float32)
    B, N, _ = points.shape
    H = hidden_dim
    assert H % 2 == 0
    out_itemsize = jnp.dtype(out_dtype).itemsize

    auto_tn, auto_tk = _pick_tiles(N, H, out_itemsize)
    if tn is None:
        tn = auto_tn
    if tk is None:
        tk = auto_tk
    assert N % tn == 0 and N % tk == 0

    # Keys pre-transposed so the key axis sits on lanes inside the kernel.
    points_kt = jnp.transpose(points, (0, 2, 1))                      # (B, 3, N)

    # Sinusoidal div_term (same as SinusoidalPositionalEmbedding buffer),
    # pre-scaled by 1/sigma_d so the kernel skips one per-element multiply.
    div_term = jnp.exp(jnp.arange(0, H, 2, dtype=jnp.float32)
                       * (-np.log(10000.0) / H))
    div_scaled = (div_term / float(sigma_d)).reshape(1, H // 2)

    # Split weight so the interleaved [sin0,cos0,sin1,cos1,...] Linear becomes
    # sin @ W[:,0::2]^T + cos @ W[:,1::2]^T.
    W = jnp.asarray(weight, jnp.float32)
    w_sin = W[:, 0::2].T.astype(compute_dtype)                        # (H/2, H)
    w_cos = W[:, 1::2].T.astype(compute_dtype)                        # (H/2, H)
    bias2d = jnp.asarray(bias, jnp.float32).reshape(1, H)

    kernel = functools.partial(_sgse_kernel, tn=tn, tk=tk, hidden=H,
                               compute_dtype=compute_dtype)

    grid = (B, N // tn, N // tk)
    cost = pl.CostEstimate(
        flops=2 * B * N * N * H * H,           # two (N*N, H/2) @ (H/2, H) matmuls
        transcendentals=B * N * N * H,         # sin + cos
        bytes_accessed=B * N * N * H * out_itemsize + 2 * B * N * 3 * 4 + H * H * 4,
    )

    return pl.pallas_call(
        kernel,
        out_shape=jax.ShapeDtypeStruct((B, N, N, H), out_dtype),
        grid_spec=pltpu.PrefetchScalarGridSpec(
            num_scalar_prefetch=0,
            grid=grid,
            in_specs=[
                pl.BlockSpec((1, tn, 3), lambda b, i, k: (b, i, 0)),     # query tile
                pl.BlockSpec((1, 3, tk), lambda b, i, k: (b, 0, k)),     # key chunk (transposed)
                pl.BlockSpec((1, H // 2), lambda b, i, k: (0, 0)),       # div_term / sigma_d
                pl.BlockSpec((H // 2, H), lambda b, i, k: (0, 0)),       # W_sin
                pl.BlockSpec((H // 2, H), lambda b, i, k: (0, 0)),       # W_cos
                pl.BlockSpec((1, H), lambda b, i, k: (0, 0)),            # bias
            ],
            out_specs=pl.BlockSpec((1, tn, tk, H), lambda b, i, k: (b, i, k, 0)),
        ),
        compiler_params=pltpu.CompilerParams(
            # No cross-step dependencies anywhere -> every axis is parallel
            # (lets megacore shard whichever axis it prefers).
            dimension_semantics=("parallel", "parallel", "parallel"),
            vmem_limit_bytes=64 * 1024 * 1024),
        cost_estimate=cost,
    )(points, points_kt, div_scaled, w_sin, w_cos, bias2d)


def _reference(points, weight, bias, hidden_dim, sigma_d):
    """Pure-JAX mirror of the PyTorch forward.

    pairwise_distance's clamp(|x|^2 - 2xy + |y|^2, 0) == sum_c (x_c - y_c)^2;
    the latter is used here (and in the kernel) for a well-defined diagonal.
    """
    H = hidden_dim
    diff = points[:, :, None, :] - points[:, None, :, :]                # (B, N, N, 3)
    sq = jnp.sum(diff * diff, axis=-1)
    d_idx = jnp.sqrt(sq) / sigma_d                                      # (B, N, N)
    div_term = jnp.exp(jnp.arange(0, H, 2, dtype=jnp.float32) * (-np.log(10000.0) / H))
    omega = d_idx[..., None] * div_term                                 # (B, N, N, H/2)
    emb = jnp.stack([jnp.sin(omega), jnp.cos(omega)], axis=-1).reshape(*d_idx.shape, H)
    return emb @ weight.T + bias


if __name__ == "__main__":
    B, N, H = 2, 16, 32
    sigma_d = 0.2

    key = jax.random.PRNGKey(0)
    k_pts, k_w, k_b = jax.random.split(key, 3)
    points = jax.random.normal(k_pts, (B, N, 3), dtype=jnp.float32)
    # Deterministic synthetic nn.Linear(H, H) parameters.
    bound = 1.0 / np.sqrt(H)
    weight = jax.random.uniform(k_w, (H, H), jnp.float32, -bound, bound)
    bias = jax.random.uniform(k_b, (H,), jnp.float32, -bound, bound)

    ref = _reference(points, weight, bias, H, sigma_d)

    # Full-precision projection path: tight numerical check.
    out_f32 = self_geometric_structure_embedding(
        points, weight, bias, hidden_dim=H, sigma_d=sigma_d,
        compute_dtype=jnp.float32)
    out_f32 = jax.block_until_ready(out_f32)
    assert out_f32.shape == (B, N, N, H)
    np.testing.assert_allclose(np.asarray(out_f32), np.asarray(ref), rtol=1e-3, atol=1e-3)

    # Default bf16-projection path (production config): relaxed tolerance
    # (bf16 activations/weights with f32 accumulation -> ~1e-2 level error).
    out_bf16 = self_geometric_structure_embedding(
        points, weight, bias, hidden_dim=H, sigma_d=sigma_d)
    out_bf16 = jax.block_until_ready(out_bf16)
    assert out_bf16.shape == (B, N, N, H)
    np.testing.assert_allclose(np.asarray(out_bf16), np.asarray(ref), rtol=3e-2, atol=3e-2)

    print("KERNEL_OK")
</pallas_src>

<mosaic_0001>
module attributes {stable_mosaic.version = 11 : i64} {
  func.func @_sgse_kernel(%arg0: i32, %arg1: i32, %arg2: i32, %arg3: memref<1x16x3xf32, #tpu.memory_space<vmem>>, %arg4: memref<1x3x16xf32, #tpu.memory_space<vmem>>, %arg5: memref<1x16xf32, #tpu.memory_space<vmem>>, %arg6: memref<16x32xf32, #tpu.memory_space<vmem>>, %arg7: memref<16x32xf32, #tpu.memory_space<vmem>>, %arg8: memref<1x32xf32, #tpu.memory_space<vmem>>, %arg9: memref<1x16x16x32xf32, #tpu.memory_space<vmem>>) attributes {dimension_semantics = [#tpu.dimension_semantics<parallel>, #tpu.dimension_semantics<parallel>, #tpu.dimension_semantics<parallel>], iteration_bounds = array<i64: 2, 1, 1>, scalar_prefetch = 0 : i64, scratch_operands = 0 : i64, tpu.core_type = #tpu.core_type<tc>, window_params = [{transform_indices = @transform_0, window_bounds = array<i64: 1, 16, 3>}, {transform_indices = @transform_1, window_bounds = array<i64: 1, 3, 16>}, {pipeline_mode = #tpu.pipeline_mode<synchronous>, transform_indices = @transform_2, window_bounds = array<i64: 1, 16>}, {pipeline_mode = #tpu.pipeline_mode<synchronous>, transform_indices = @transform_3, window_bounds = array<i64: 16, 32>}, {pipeline_mode = #tpu.pipeline_mode<synchronous>, transform_indices = @transform_4, window_bounds = array<i64: 16, 32>}, {pipeline_mode = #tpu.pipeline_mode<synchronous>, transform_indices = @transform_5, window_bounds = array<i64: 1, 32>}, {transform_indices = @transform_6, window_bounds = array<i64: 1, 16, 16, 32>}]} {
    %c0 = arith.constant 0 : index
    %c0_0 = arith.constant 0 : index
    %c0_1 = arith.constant 0 : index
    %0 = vector.load %arg3[%c0, %c0_0, %c0_1] : memref<1x16x3xf32, #tpu.memory_space<vmem>>, vector<1x16x3xf32>
    %1 = vector.shape_cast %0 : vector<1x16x3xf32> to vector<16x3xf32>
    %c0_2 = arith.constant 0 : index
    %c0_3 = arith.constant 0 : index
    %c0_4 = arith.constant 0 : index
    %2 = vector.load %arg4[%c0_2, %c0_3, %c0_4] : memref<1x3x16xf32, #tpu.memory_space<vmem>>, vector<1x3x16xf32>
    %3 = vector.shape_cast %2 : vector<1x3x16xf32> to vector<3x16xf32>
    %cst = arith.constant 0.000000e+00 : f32
    %4 = vector.broadcast %cst : f32 to vector<16x16xf32>
    %5 = vector.extract_strided_slice %1 {offsets = [0, 0], sizes = [16, 1], strides = [1, 1]} : vector<16x3xf32> to vector<16x1xf32>
    %6 = vector.extract_strided_slice %3 {offsets = [0, 0], sizes = [1, 16], strides = [1, 1]} : vector<3x16xf32> to vector<1x16xf32>
    %7 = vector.broadcast %5 : vector<16x1xf32> to vector<16x16xf32>
    %8 = vector.broadcast %6 : vector<1x16xf32> to vector<16x16xf32>
    %9 = arith.subf %7, %8 : vector<16x16xf32>
    %10 = arith.mulf %9, %9 : vector<16x16xf32>
    %11 = arith.addf %4, %10 : vector<16x16xf32>
    %12 = vector.extract_strided_slice %1 {offsets = [0, 1], sizes = [16, 1], strides = [1, 1]} : vector<16x3xf32> to vector<16x1xf32>
    %13 = vector.extract_strided_slice %3 {offsets = [1, 0], sizes = [1, 16], strides = [1, 1]} : vector<3x16xf32> to vector<1x16xf32>
    %14 = vector.broadcast %12 : vector<16x1xf32> to vector<16x16xf32>
    %15 = vector.broadcast %13 : vector<1x16xf32> to vector<16x16xf32>
    %16 = arith.subf %14, %15 : vector<16x16xf32>
    %17 = arith.mulf %16, %16 : vector<16x16xf32>
    %18 = arith.addf %11, %17 : vector<16x16xf32>
    %19 = vector.extract_strided_slice %1 {offsets = [0, 2], sizes = [16, 1], strides = [1, 1]} : vector<16x3xf32> to vector<16x1xf32>
    %20 = vector.extract_strided_slice %3 {offsets = [2, 0], sizes = [1, 16], strides = [1, 1]} : vector<3x16xf32> to vector<1x16xf32>
    %21 = vector.broadcast %19 : vector<16x1xf32> to vector<16x16xf32>
    %22 = vector.broadcast %20 : vector<1x16xf32> to vector<16x16xf32>
    %23 = arith.subf %21, %22 : vector<16x16xf32>
    %24 = arith.mulf %23, %23 : vector<16x16xf32>
    %25 = arith.addf %18, %24 : vector<16x16xf32>
    %26 = math.sqrt %25 : vector<16x16xf32>
    %c0_5 = arith.constant 0 : index
    %c0_6 = arith.constant 0 : index
    %27 = vector.load %arg5[%c0_5, %c0_6] : memref<1x16xf32, #tpu.memory_space<vmem>>, vector<1x16xf32>
    %28 = vector.shape_cast %27 : vector<1x16xf32> to vector<1x1x16xf32>
    %29 = vector.shape_cast %26 : vector<16x16xf32> to vector<16x16x1xf32>
    %30 = vector.broadcast %29 : vector<16x16x1xf32> to vector<16x16x16xf32>
    %31 = vector.broadcast %28 : vector<1x1x16xf32> to vector<16x16x16xf32>
    %32 = arith.mulf %30, %31 : vector<16x16x16xf32>
    %33 = math.sin %32 : vector<16x16x16xf32>
    %34 = vector.shape_cast %33 : vector<16x16x16xf32> to vector<256x16xf32>
    %35 = math.cos %32 : vector<16x16x16xf32>
    %36 = vector.shape_cast %35 : vector<16x16x16xf32> to vector<256x16xf32>
    %c0_7 = arith.constant 0 : index
    %c0_8 = arith.constant 0 : index
    %37 = vector.load %arg6[%c0_7, %c0_8] : memref<16x32xf32, #tpu.memory_space<vmem>>, vector<16x32xf32>
    %cst_9 = arith.constant dense<0.000000e+00> : vector<256x32xf32>
    %38 = tpu.matmul %34, %37, %cst_9 {dimension_numbers = #tpu.dot_dimension_numbers<[1], [0], [0], [1], [0, 0, 1, 1], [], []>} : vector<256x16xf32>, vector<16x32xf32>, vector<256x32xf32> -> vector<256x32xf32>
    %c0_10 = arith.constant 0 : index
    %c0_11 = arith.constant 0 : index
    %39 = vector.load %arg7[%c0_10, %c0_11] : memref<16x32xf32, #tpu.memory_space<vmem>>, vector<16x32xf32>
    %cst_12 = arith.constant dense<0.000000e+00> : vector<256x32xf32>
    %40 = tpu.matmul %36, %39, %cst_12 {dimension_numbers = #tpu.dot_dimension_numbers<[1], [0], [0], [1], [0, 0, 1, 1], [], []>} : vector<256x16xf32>, vector<16x32xf32>, vector<256x32xf32> -> vector<256x32xf32>
    %41 = arith.addf %38, %40 : vector<256x32xf32>
    %c0_13 = arith.constant 0 : index
    %c0_14 = arith.constant 0 : index
    %42 = vector.load %arg8[%c0_13, %c0_14] : memref<1x32xf32, #tpu.memory_space<vmem>>, vector<1x32xf32>
    %43 = vector.broadcast %42 : vector<1x32xf32> to vector<256x32xf32>
    %44 = arith.addf %41, %43 : vector<256x32xf32>
    %45 = vector.shape_cast %44 : vector<256x32xf32> to vector<1x16x16x32xf32>
    %c0_15 = arith.constant 0 : index
    %c0_16 = arith.constant 0 : index
    %c0_17 = arith.constant 0 : index
    %c0_18 = arith.constant 0 : index
    %46 = vector.load %arg9[%c0_15, %c0_16, %c0_17, %c0_18] : memref<1x16x16x32xf32, #tpu.memory_space<vmem>>, vector<1x16x16x32xf32>
    tpu.vector_store %arg9[%c0_15, %c0_16, %c0_17, %c0_18], %45 {strides = array<i32>} : memref<1x16x16x32xf32, #tpu.memory_space<vmem>>, vector<1x16x16x32xf32>,
    return
  }
  func.func @transform_0(%arg0: i32, %arg1: i32, %arg2: i32) -> (i32, i32, i32) {
    %c0_i32 = arith.constant 0 : i32
    %c0_i32_0 = arith.constant 0 : i32
    return %arg0, %arg1, %c0_i32 : i32, i32, i32
  }
  func.func @transform_1(%arg0: i32, %arg1: i32, %arg2: i32) -> (i32, i32, i32) {
    %c0_i32 = arith.constant 0 : i32
    %c0_i32_0 = arith.constant 0 : i32
    return %arg0, %c0_i32, %arg2 : i32, i32, i32
  }
  func.func @transform_2(%arg0: i32, %arg1: i32, %arg2: i32) -> (i32, i32) {
    %c0_i32 = arith.constant 0 : i32
    %c0_i32_0 = arith.constant 0 : i32
    %c0_i32_1 = arith.constant 0 : i32
    return %c0_i32, %c0_i32_0 : i32, i32
  }
  func.func @transform_3(%arg0: i32, %arg1: i32, %arg2: i32) -> (i32, i32) {
    %c0_i32 = arith.constant 0 : i32
    %c0_i32_0 = arith.constant 0 : i32
    %c0_i32_1 = arith.constant 0 : i32
    return %c0_i32, %c0_i32_0 : i32, i32
  }
  func.func @transform_4(%arg0: i32, %arg1: i32, %arg2: i32) -> (i32, i32) {
    %c0_i32 = arith.constant 0 : i32
    %c0_i32_0 = arith.constant 0 : i32
    %c0_i32_1 = arith.constant 0 : i32
    return %c0_i32, %c0_i32_0 : i32, i32
  }
  func.func @transform_5(%arg0: i32, %arg1: i32, %arg2: i32) -> (i32, i32) {
    %c0_i32 = arith.constant 0 : i32
    %c0_i32_0 = arith.constant 0 : i32
    %c0_i32_1 = arith.constant 0 : i32
    return %c0_i32, %c0_i32_0 : i32, i32
  }
  func.func @transform_6(%arg0: i32, %arg1: i32, %arg2: i32) -> (i32, i32, i32, i32) {
    %c0_i32 = arith.constant 0 : i32
    %c0_i32_0 = arith.constant 0 : i32
    return %arg0, %arg1, %arg2, %c0_i32 : i32, i32, i32, i32
  }
}

</mosaic_0001>

<llo_original>
// kernel: tpu_custom_call.1
$region0: #{tpu_custom_call.1}
  #allocation0 [shape = 'u32[]', space=smem, size = 0x4, offset = 0x4, fixed_abs, tag = 'smem constant byte address 0x4 - core index']
  #allocation1 [shape = 'u32[144,128]{1,0:T(1,128)}', space=vmem, size = 0x12000, scoped, tag = 'internal scratch']
  %s0 = inlined_call_operand.hbm [shape: f32[2,16,3], index: 0, kind: input, shape index: {}]
  %s1 = inlined_call_operand.hbm [shape: f32[2,3,16], index: 1, kind: input, shape index: {}]
  %s2 = inlined_call_operand.hbm [shape: f32[1,16], index: 2, kind: input, shape index: {}]
  %s3 = inlined_call_operand.hbm [shape: f32[16,32], index: 3, kind: input, shape index: {}]
  %s4 = inlined_call_operand.hbm [shape: f32[16,32], index: 4, kind: input, shape index: {}]
  %s5 = inlined_call_operand.hbm [shape: f32[1,32], index: 5, kind: input, shape index: {}]
  %s6 = inlined_call_operand.hbm [shape: f32[2,16,16,32], index: 6, kind: output, shape index: {}]
  %s7 = sld [smem:[#allocation0]]
  $region81: #{tpu_custom_call.1} parent=0
    _
  %s9 = ssub.s32 1, %s7
  %s10 = scalar_select 0, %s9, %s7
  $region1: #{tpu_custom_call.1} parent=0
    #allocation2 [shape = 'u8[16384]{0}', space=vmem, size = 0x4000, scoped, tag = 'input window, operand 0']
    #allocation3 [shape = 's32[2]{0}', space=sflag, size = 0x8, scoped, tag = 'scoped memory for tpu_custom_call.1']
    #allocation4 [shape = 's32[2]{0}', space=sflag, size = 0x8, scoped, tag = 'scoped memory for tpu_custom_call.1']
    #allocation5 [shape = 'u8[4096]{0}', space=vmem, size = 0x1000, scoped, tag = 'input window, operand 1']
    #allocation6 [shape = 's32[2]{0}', space=sflag, size = 0x8, scoped, tag = 'scoped memory for tpu_custom_call.1']
    #allocation7 [shape = 'u8[512]{0}', space=vmem, size = 0x400, scoped, tag = 'input window, operand 2, single buffered']
    #allocation8 [shape = 'u8[8192]{0}', space=vmem, size = 0x2000, scoped, tag = 'input window, operand 3, single buffered']
    #allocation9 [shape = 's32[1]{0}', space=sflag, size = 0x4, scoped, tag = 'scoped memory for tpu_custom_call.1']
    #allocation10 [shape = 'u8[8192]{0}', space=vmem, size = 0x2000, scoped, tag = 'input window, operand 4, single buffered']
    #allocation11 [shape = 'u8[512]{0}', space=vmem, size = 0x400, scoped, tag = 'input window, operand 5, single buffered']
    #allocation12 [shape = 's32[1]{0}', space=sflag, size = 0x4, scoped, tag = 'scoped memory for tpu_custom_call.1']
    #allocation13 [shape = 'u8[262144]{0}', space=vmem, size = 0x40000, scoped, tag = 'output window, operand 0']
    %11 = vsyncpa [#allocation3], 0
    %s12 = scalar_lea.sflag [#allocation3], 1
    %13 = vsyncpa %s12, 0
    %14 = vsyncpa [#allocation6], 0
    %s15 = scalar_lea.sflag [#allocation6], 1
    %16 = vsyncpa %s15, 0
    %17 = vsyncpa [#allocation9], 0
    %18 = vsyncpa [#allocation12], 0
    %19 = vsyncpa [#allocation4], 0
    %s20 = scalar_lea.sflag [#allocation4], 1
    %21 = vsyncpa %s20, 0
    loop: start=0, step=1, limit=4
    $region2: #{tpu_custom_call.1} parent=1 // loop_pre_header
      _
    $region3: #{tpu_custom_call.1} parent=1 // loop_header
      %s23 = sphi 0, %s27
      %p24 = scmp.ge.s32.totalorder %s23, 4
      %s30 = sphi 0, %s49
      %s31 = sphi 0, %s45
      %s32 = sphi 0, %s41
      %s33 = sphi 0, %s30
      %s34 = sphi 0, %s31
      %s35 = sphi 0, %s32
      %s36 = sphi 0, %s33
      %s37 = sphi 0, %s34
      %s38 = sphi 0, %s35
      %s54 = sphi 0, %s56
      %s57 = sphi 0, %s54
      %s58 = sphi 0, %s57
      %s74 = sphi 0, %s58
      %s82 = sphi 0, %s84
      %s85 = sphi 0, %s82
      %s86 = sphi 0, %s85
      %s102 = sphi 0, %s86
      %s106 = sphi 0, %s106
      %s108 = sphi 0, %s106
      %s109 = sphi 0, %s108
      %s123 = sphi 0, %s109
      %s127 = sphi 0, %s127
      %s129 = sphi 0, %s127
      %s130 = sphi 0, %s129
      %s144 = sphi 0, %s130
      %s148 = sphi 0, %s148
      %s150 = sphi 0, %s148
      %s151 = sphi 0, %s150
      %s165 = sphi 0, %s151
      %s169 = sphi 0, %s169
      %s171 = sphi 0, %s169
      %s172 = sphi 0, %s171
      %s186 = sphi 0, %s172
      %s196 = sphi 0, %s198
      %s199 = sphi 0, %s196
      %s200 = sphi 0, %s199
      %s216 = sphi 0, %s200
    $region4: #{tpu_custom_call.1} parent=1 // loop_header_branch
      %26 = sbr.rel (%p24) target = $region8
    $region5: #{tpu_custom_call.1} parent=1 // loop_body
      %s28 = ssub.s32 %s23, 1
      %s29 = ssub.s32 %s23, 2
      %s39 = sadd.s32 1, %s32
      %p40 = scmp.ge.s32.totalorder %s39, 1
      %s41 = scalar_select %p40, 0, %s39
      %s42 = sadd.s32 1, %s31
      %s43 = scalar_select %p40, %s42, %s31
      %p44 = scmp.ge.s32.totalorder %s43, 1
      %s45 = scalar_select %p44, 0, %s43
      %s46 = sadd.s32 1, %s30
      %s47 = scalar_select %p44, %s46, %s30
      %p48 = scmp.ge.s32.totalorder %s47, 2
      %s49 = scalar_select %p48, 0, %s47
      %s50 = ssub.s32 %s30, %s49
      %s51 = ssub.s32 %s31, %s45
      %s52 = sor.u32 %s50, %s51
      %p53 = scmp.eq.s32.totalorder %s52, 0
      %s55 = sadd.s32 %s54, 1
      %s56 = scalar_select %p53, %s54, %s55
      %p59 = pneg %p53
      %p60 = scmp.eq.s32.totalorder %s23, 1
      %p61 = por %p59, %p60
      %p62 = scmp.ne.s32.totalorder %s54, %s57
      %p63 = scmp.eq.s32.totalorder %s23, 0
      %p64 = por %p62, %p63
      %p65 = scmp.ne.s32.totalorder %s54, %s57
      %p66 = scmp.eq.s32.totalorder %s28, 1
      %p67 = por %p65, %p66
      %p68 = scmp.ne.s32.totalorder %s57, %s58
      %p69 = scmp.eq.s32.totalorder %s28, 0
      %p70 = por %p68, %p69
      %p71 = scmp.ne.s32.totalorder %s57, %s58
      %p72 = scmp.eq.s32.totalorder %s29, 1
      %p73 = por %p71, %p72
      %p75 = scmp.ne.s32.totalorder %s58, %s74
      %p76 = scmp.eq.s32.totalorder %s29, 0
      %p77 = por %p75, %p76
      %s78 = ssub.s32 %s30, %s49
      %s79 = ssub.s32 %s32, %s41
      %s80 = sor.u32 %s78, %s79
      %p81 = scmp.eq.s32.totalorder %s80, 0
      %s83 = sadd.s32 %s82, 1
      %s84 = scalar_select %p81, %s82, %s83
      %p87 = pneg %p81
      %p88 = scmp.eq.s32.totalorder %s23, 1
      %p89 = por %p87, %p88
      %p90 = scmp.ne.s32.totalorder %s82, %s85
      %p91 = scmp.eq.s32.totalorder %s23, 0
      %p92 = por %p90, %p91
      %p93 = scmp.ne.s32.totalorder %s82, %s85
      %p94 = scmp.eq.s32.totalorder %s28, 1
      %p95 = por %p93, %p94
      %p96 = scmp.ne.s32.totalorder %s85, %s86
      %p97 = scmp.eq.s32.totalorder %s28, 0
      %p98 = por %p96, %p97
      %p99 = scmp.ne.s32.totalorder %s85, %s86
      %p100 = scmp.eq.s32.totalorder %s29, 1
      %p101 = por %p99, %p100
      %p103 = scmp.ne.s32.totalorder %s86, %s102
      %p104 = scmp.eq.s32.totalorder %s29, 0
      %p105 = por %p103, %p104
      %s107 = sadd.s32 %s106, 1
      %p110 = scmp.eq.s32.totalorder %s23, 1
      %p111 = scmp.ne.s32.totalorder %s106, %s108
      %p112 = scmp.eq.s32.totalorder %s23, 0
      %p113 = por %p111, %p112
      %p114 = scmp.ne.s32.totalorder %s106, %s108
      %p115 = scmp.eq.s32.totalorder %s28, 1
      %p116 = por %p114, %p115
      %p117 = scmp.ne.s32.totalorder %s108, %s109
      %p118 = scmp.eq.s32.totalorder %s28, 0
      %p119 = por %p117, %p118
      %p120 = scmp.ne.s32.totalorder %s108, %s109
      %p121 = scmp.eq.s32.totalorder %s29, 1
      %p122 = por %p120, %p121
      %p124 = scmp.ne.s32.totalorder %s109, %s123
      %p125 = scmp.eq.s32.totalorder %s29, 0
      %p126 = por %p124, %p125
      %s128 = sadd.s32 %s127, 1
      %p131 = scmp.eq.s32.totalorder %s23, 1
      %p132 = scmp.ne.s32.totalorder %s127, %s129
      %p133 = scmp.eq.s32.totalorder %s23, 0
      %p134 = por %p132, %p133
      %p135 = scmp.ne.s32.totalorder %s127, %s129
      %p136 = scmp.eq.s32.totalorder %s28, 1
      %p137 = por %p135, %p136
      %p138 = scmp.ne.s32.totalorder %s129, %s130
      %p139 = scmp.eq.s32.totalorder %s28, 0
      %p140 = por %p138, %p139
      %p141 = scmp.ne.s32.totalorder %s129, %s130
      %p142 = scmp.eq.s32.totalorder %s29, 1
      %p143 = por %p141, %p142
      %p145 = scmp.ne.s32.totalorder %s130, %s144
      %p146 = scmp.eq.s32.totalorder %s29, 0
      %p147 = por %p145, %p146
      %s149 = sadd.s32 %s148, 1
      %p152 = scmp.eq.s32.totalorder %s23, 1
      %p153 = scmp.ne.s32.totalorder %s148, %s150
      %p154 = scmp.eq.s32.totalorder %s23, 0
      %p155 = por %p153, %p154
      %p156 = scmp.ne.s32.totalorder %s148, %s150
      %p157 = scmp.eq.s32.totalorder %s28, 1
      %p158 = por %p156, %p157
      %p159 = scmp.ne.s32.totalorder %s150, %s151
      %p160 = scmp.eq.s32.totalorder %s28, 0
      %p161 = por %p159, %p160
      %p162 = scmp.ne.s32.totalorder %s150, %s151
      %p163 = scmp.eq.s32.totalorder %s29, 1
      %p164 = por %p162, %p163
      %p166 = scmp.ne.s32.totalorder %s151, %s165
      %p167 = scmp.eq.s32.totalorder %s29, 0
      %p168 = por %p166, %p167
      %s170 = sadd.s32 %s169, 1
      %p173 = scmp.eq.s32.totalorder %s23, 1
      %p174 = scmp.ne.s32.totalorder %s169, %s171
      %p175 = scmp.eq.s32.totalorder %s23, 0
      %p176 = por %p174, %p175
      %p177 = scmp.ne.s32.totalorder %s169, %s171
      %p178 = scmp.eq.s32.totalorder %s28, 1
      %p179 = por %p177, %p178
      %p180 = scmp.ne.s32.totalorder %s171, %s172
      %p181 = scmp.eq.s32.totalorder %s28, 0
      %p182 = por %p180, %p181
      %p183 = scmp.ne.s32.totalorder %s171, %s172
      %p184 = scmp.eq.s32.totalorder %s29, 1
      %p185 = por %p183, %p184
      %p187 = scmp.ne.s32.totalorder %s172, %s186
      %p188 = scmp.eq.s32.totalorder %s29, 0
      %p189 = por %p187, %p188
      %s190 = ssub.s32 %s30, %s49
      %s191 = ssub.s32 %s31, %s45
      %s192 = sor.u32 %s190, %s191
      %s193 = ssub.s32 %s32, %s41
      %s194 = sor.u32 %s192, %s193
      %p195 = scmp.eq.s32.totalorder %s194, 0
      %s197 = sadd.s32 %s196, 1
      %s198 = scalar_select %p195, %s196, %s197
      %p201 = pneg %p195
      %p202 = scmp.eq.s32.totalorder %s23, 1
      %p203 = por %p201, %p202
      %p204 = scmp.ne.s32.totalorder %s196, %s199
      %p205 = scmp.eq.s32.totalorder %s23, 0
      %p206 = por %p204, %p205
      %p207 = scmp.ne.s32.totalorder %s196, %s199
      %p208 = scmp.eq.s32.totalorder %s28, 1
      %p209 = por %p207, %p208
      %p210 = scmp.ne.s32.totalorder %s199, %s200
      %p211 = scmp.eq.s32.totalorder %s28, 0
      %p212 = por %p210, %p211
      %p213 = scmp.ne.s32.totalorder %s199, %s200
      %p214 = scmp.eq.s32.totalorder %s29, 1
      %p215 = por %p213, %p214
      %p217 = scmp.ne.s32.totalorder %s200, %s216
      %p218 = scmp.eq.s32.totalorder %s29, 0
      %p219 = por %p217, %p218
      %p220 = scmp.le.s32.totalorder 1, %s23
      %p221 = scmp.lt.s32.totalorder %s23, 3
      %p222 = pnand %p220, %p221
      %p223 = pneg %p222
      // Predicated region
      $region9: #{tpu_custom_call.1} parent=5 // pred_check
        _
      $region10: #{tpu_custom_call.1} parent=5 // pred_check_branch
        %225 = sbr.rel (%p222) target = $region12
      $region11: #{tpu_custom_call.1} parent=5 // pred_region
        %s226 = ssub.s32 %s23, 1
        // Predicated region
        $region13: #{tpu_custom_call.1} parent=11 // pred_check
          %p227 = pneg %p119
        $region14: #{tpu_custom_call.1} parent=11 // pred_check_branch
          %229 = sbr.rel (%p227) target = $region16
        $region15: #{tpu_custom_call.1} parent=11 // pred_region
          %s231 = ssub.s32 16, 16
          %232 = vsyncadd [#allocation6], %s231
          %s234 = sshll.u32 [#allocation7], 4
          %s235 = int_to_ptr.vmem [resolvable:$true] %s234
          %237 = dma.hbm_to_vmem [thread:$0]  %s2, 16, %s235, [#allocation6]
        $region16: #{tpu_custom_call.1} parent=11 // pred_fallthru
          _
        // Predicated region
        $region17: #{tpu_custom_call.1} parent=11 // pred_check
          %p238 = pneg %p140
        $region18: #{tpu_custom_call.1} parent=11 // pred_check_branch
          %240 = sbr.rel (%p238) target = $region20
        $region19: #{tpu_custom_call.1} parent=11 // pred_region
          %s242 = ssub.s32 256, 256
          %243 = vsyncadd [#allocation9], %s242
          %s244 = sshll.u32 [#allocation8], 4
          %s245 = int_to_ptr.vmem [resolvable:$true] %s244
          %250 = dma.hbm_to_vmem [thread:$0]  %s3, 256, %s245, [#allocation9], 128, 128, 8
        $region20: #{tpu_custom_call.1} parent=11 // pred_fallthru
          _
        // Predicated region
        $region21: #{tpu_custom_call.1} parent=11 // pred_check
          %p251 = pneg %p161
        $region22: #{tpu_custom_call.1} parent=11 // pred_check_branch
          %253 = sbr.rel (%p251) target = $region24
        $region23: #{tpu_custom_call.1} parent=11 // pred_region
          %s255 = ssub.s32 256, 256
          %256 = vsyncadd [#allocation9], %s255
          %s257 = sshll.u32 [#allocation10], 4
          %s258 = int_to_ptr.vmem [resolvable:$true] %s257
          %263 = dma.hbm_to_vmem [thread:$0]  %s4, 256, %s258, [#allocation9], 128, 128, 8
        $region24: #{tpu_custom_call.1} parent=11 // pred_fallthru
          _
        // Predicated region
        $region25: #{tpu_custom_call.1} parent=11 // pred_check
          %p264 = pneg %p182
        $region26: #{tpu_custom_call.1} parent=11 // pred_check_branch
          %266 = sbr.rel (%p264) target = $region28
        $region27: #{tpu_custom_call.1} parent=11 // pred_region
          %s268 = ssub.s32 16, 16
          %269 = vsyncadd [#allocation12], %s268
          %s271 = sshll.u32 [#allocation11], 4
          %s272 = int_to_ptr.vmem [resolvable:$true] %s271
          %274 = dma.hbm_to_vmem [thread:$0]  %s5, 16, %s272, [#allocation12]
        $region28: #{tpu_custom_call.1} parent=11 // pred_fallthru
          _
      $region12: #{tpu_custom_call.1} parent=5 // pred_fallthru
        _
      %p275 = scmp.lt.s32.totalorder %s23, 2
      // Predicated region
      $region29: #{tpu_custom_call.1} parent=5 // pred_check
        %p276 = pneg %p275
      $region30: #{tpu_custom_call.1} parent=5 // pred_check_branch
        %278 = sbr.rel (%p276) target = $region32
      $region31: #{tpu_custom_call.1} parent=5 // pred_region
        // Predicated region
        $region33: #{tpu_custom_call.1} parent=31 // pred_check
          %p279 = pneg %p64
        $region34: #{tpu_custom_call.1} parent=31 // pred_check_branch
          %281 = sbr.rel (%p279) target = $region36
        $region35: #{tpu_custom_call.1} parent=31 // pred_region
          %s282 = sand.u32 %s54, 1
          %s283 = scalar_lea.sflag [#allocation3], %s282
          %s284 = sand.u32 %s54, 1
          %s285 = smul.addr %s284, 16
          %s286 = scalar_lea.vmem [#allocation2], %s285
          %s287 = smul.u32 2, %s31
          %s289 = ssub.s32 256, 256
          %290 = vsyncadd %s283, %s289
          %s291 = smul.addr %s30, 2
          %s292 = sadd.s32 %s287, %s291
          %s293 = smul.addr %s292, 128
          %s294 = scalar_lea.hbm %s0, %s293
          %s295 = sshll.u32 %s286, 4
          %s296 = int_to_ptr.vmem [resolvable:$true] %s295
          %301 = dma.hbm_to_vmem [thread:$0]  %s294, 256, %s296, %s283, 128, 128, 8
        $region36: #{tpu_custom_call.1} parent=31 // pred_fallthru
          _
        // Predicated region
        $region37: #{tpu_custom_call.1} parent=31 // pred_check
          %p302 = pneg %p92
        $region38: #{tpu_custom_call.1} parent=31 // pred_check_branch
          %304 = sbr.rel (%p302) target = $region40
        $region39: #{tpu_custom_call.1} parent=31 // pred_region
          %s305 = sand.u32 %s23, 1
          %s306 = scalar_lea.sflag [#allocation6], %s305
          %s307 = sand.u32 %s82, 1
          %s308 = smul.addr %s307, 4
          %s309 = scalar_lea.vmem [#allocation5], %s308
          %s311 = ssub.s32 64, 64
          %312 = vsyncadd %s306, %s311
          %s313 = sadd.s32 %s32, %s30
          %s314 = smul.addr %s313, 64
          %s315 = scalar_lea.hbm %s1, %s314
          %s317 = sshll.u32 %s309, 4
          %s318 = int_to_ptr.vmem [resolvable:$true] %s317
          %320 = dma.hbm_to_vmem [thread:$0]  %s315, 64, %s318, %s306
        $region40: #{tpu_custom_call.1} parent=31 // pred_fallthru
          _
      $region32: #{tpu_custom_call.1} parent=5 // pred_fallthru
        _
      %p321 = scmp.le.s32.totalorder 1, %s23
      %p322 = scmp.lt.s32.totalorder %s23, 3
      %p323 = pnand %p321, %p322
      %p324 = pneg %p323
      // Predicated region
      $region41: #{tpu_custom_call.1} parent=5 // pred_check
        _
      $region42: #{tpu_custom_call.1} parent=5 // pred_check_branch
        %326 = sbr.rel (%p323) target = $region44
      $region43: #{tpu_custom_call.1} parent=5 // pred_region
        %s327 = ssub.s32 %s23, 1
        %s328 = sand.u32 %s57, 1
        %s329 = scalar_lea.sflag [#allocation3], %s328
        %s330 = sand.u32 %s57, 1
        %s331 = smul.addr %s330, 16
        %s332 = scalar_lea.vmem [#allocation2], %s331
        // Predicated region
        $region45: #{tpu_custom_call.1} parent=43 // pred_check
          %p333 = pneg %p70
        $region46: #{tpu_custom_call.1} parent=43 // pred_check_branch
          %335 = sbr.rel (%p333) target = $region48
        $region47: #{tpu_custom_call.1} parent=43 // pred_region
          %336 = dma.done %s329, 256
        $region48: #{tpu_custom_call.1} parent=43 // pred_fallthru
          _
        %s337 = sand.u32 %s28, 1
        %s338 = scalar_lea.sflag [#allocation6], %s337
        %s339 = sand.u32 %s85, 1
        %s340 = smul.addr %s339, 4
        %s341 = scalar_lea.vmem [#allocation5], %s340
        // Predicated region
        $region49: #{tpu_custom_call.1} parent=43 // pred_check
          %p342 = pneg %p98
        $region50: #{tpu_custom_call.1} parent=43 // pred_check_branch
          %344 = sbr.rel (%p342) target = $region52
        $region51: #{tpu_custom_call.1} parent=43 // pred_region
          %345 = dma.done %s338, 64
        $region52: #{tpu_custom_call.1} parent=43 // pred_fallthru
          _
        // Predicated region
        $region53: #{tpu_custom_call.1} parent=43 // pred_check
          %p346 = pneg %p119
        $region54: #{tpu_custom_call.1} parent=43 // pred_check_branch
          %348 = sbr.rel (%p346) target = $region56
        $region55: #{tpu_custom_call.1} parent=43 // pred_region
          %349 = dma.done [#allocation6], 16
        $region56: #{tpu_custom_call.1} parent=43 // pred_fallthru
          _
        // Predicated region
        $region57: #{tpu_custom_call.1} parent=43 // pred_check
          %p350 = pneg %p140
        $region58: #{tpu_custom_call.1} parent=43 // pred_check_branch
          %352 = sbr.rel (%p350) target = $region60
        $region59: #{tpu_custom_call.1} parent=43 // pred_region
          %353 = dma.done [#allocation9], 256
        $region60: #{tpu_custom_call.1} parent=43 // pred_fallthru
          _
        // Predicated region
        $region61: #{tpu_custom_call.1} parent=43 // pred_check
          %p354 = pneg %p161
        $region62: #{tpu_custom_call.1} parent=43 // pred_check_branch
          %356 = sbr.rel (%p354) target = $region64
        $region63: #{tpu_custom_call.1} parent=43 // pred_region
          %357 = dma.done [#allocation9], 256
        $region64: #{tpu_custom_call.1} parent=43 // pred_fallthru
          _
        // Predicated region
        $region65: #{tpu_custom_call.1} parent=43 // pred_check
          %p358 = pneg %p182
        $region66: #{tpu_custom_call.1} parent=43 // pred_check_branch
          %360 = sbr.rel (%p358) target = $region68
        $region67: #{tpu_custom_call.1} parent=43 // pred_region
          %361 = dma.done [#allocation12], 16
        $region68: #{tpu_custom_call.1} parent=43 // pred_fallthru
          _
        %s362 = sand.u32 %s57, 1
        %s363 = scalar_lea.sflag [#allocation3], %s362
        %s364 = sand.u32 %s57, 1
        %s365 = smul.addr %s364, 16
        %s366 = scalar_lea.vmem [#allocation2], %s365
        %p367 = pneg %p70
        %p368 = pneg %p67
        %s369 = sand.u32 %s28, 1
        %s370 = scalar_lea.sflag [#allocation6], %s369
        %s371 = sand.u32 %s85, 1
        %s372 = smul.addr %s371, 4
        %s373 = scalar_lea.vmem [#allocation5], %s372
        %p374 = pneg %p98
        %p375 = pneg %p95
        %p376 = pneg %p119
        %p377 = pneg %p116
        %p378 = pneg %p140
        %p379 = pneg %p137
        %p380 = pneg %p161
        %p381 = pneg %p158
        %p382 = pneg %p182
        %p383 = pneg %p179
        %p384 = pneg %p212
        %p385 = pneg %p209
        %s386 = sand.u32 %s199, 1
        %s387 = scalar_lea.sflag [#allocation4], %s386
        %s388 = sand.u32 %s199, 1
        %s389 = smul.addr %s388, 256
        %s390 = scalar_lea.vmem [#allocation13], %s389
        %s391 = smul.u32 2, %s34
        %s392 = smul.u32 16, %s34
        %s393 = smul.u32 2, %s35
        %v394 = vld [vmem:[%s332] sm:$0xff]
        %v395 = vld [vmem:[%s332 + $0x8] sm:$0xff]
        %v396 = vld [vmem:[%s341] sm:$0x7]
        %398 = vset.pattern.permute.xlu0 0
        %399 = vperm.xlu0 %398, %v394
        %v400 = vpop.permute.xlu0 %399
        %403 = vset.pattern.permute.xlu0 0
        %404 = vperm.xlu0 %403, %v395
        %v405 = vpop.permute.xlu0 %404
        %v407 = vlaneseq
        %v408 = vshrl.u32 %v407, 7
        %v409 = vsub.s32 0, %v408
        %v410 = vrot.slane %v396, %v409
        %v411 = vsub.f32 %v400, %v410
        %v412 = vsub.f32 %v405, %v410
        %v413 = vmul.f32 %v411, %v411
        %v414 = vmul.f32 %v412, %v412
        %v415 = vadd.f32 %v413, 0.0
        %v416 = vadd.f32 %v414, 0.0
        %417 = vset.pattern.permute.xlu0 1
        %418 = vperm.xlu0 %417, %v394
        %v419 = vpop.permute.xlu0 %418
        %421 = vset.pattern.permute.xlu0 1
        %422 = vperm.xlu0 %421, %v395
        %v423 = vpop.permute.xlu0 %422
        %v425 = vlaneseq
        %v426 = vshrl.u32 %v425, 7
        %v427 = vsub.s32 1, %v426
        %v428 = vrot.slane %v396, %v427
        %v429 = vsub.f32 %v419, %v428
        %v430 = vsub.f32 %v423, %v428
        %v431 = vmul.f32 %v429, %v429
        %v432 = vmul.f32 %v430, %v430
        %v433 = vadd.f32 %v415, %v431
        %v434 = vadd.f32 %v416, %v432
        %435 = vset.pattern.permute.xlu0 2
        %436 = vperm.xlu0 %435, %v394
        %v437 = vpop.permute.xlu0 %436
        %439 = vset.pattern.permute.xlu0 2
        %440 = vperm.xlu0 %439, %v395
        %v441 = vpop.permute.xlu0 %440
        %v443 = vlaneseq
        %v444 = vshrl.u32 %v443, 7
        %v445 = vsub.s32 2, %v444
        %v446 = vrot.slane %v396, %v445
        %v447 = vsub.f32 %v437, %v446
        %v448 = vsub.f32 %v441, %v446
        %v449 = vmul.f32 %v447, %v447
        %v450 = vmul.f32 %v448, %v448
        %v451 = vadd.f32 %v433, %v449
        %v452 = vadd.f32 %v434, %v450
        %v453 = vrsqrt.pop %v451
        %v454 = vmul.f32 %v451, %v453
        %vm455 = vcmp.eq.f32.partialorder %v451, inf
        %v456 = vsel %vm455, %v451, %v454
        %vm457 = vcmp.eq.f32.partialorder %v451, 0.0
        %v458 = vand.u32 %v451, 2147483648
        %v459 = vsel %vm457, %v458, %v456
        %v460 = vrsqrt.pop %v452
        %v461 = vmul.f32 %v452, %v460
        %vm462 = vcmp.eq.f32.partialorder %v452, inf
        %v463 = vsel %vm462, %v452, %v461
        %vm464 = vcmp.eq.f32.partialorder %v452, 0.0
        %v465 = vand.u32 %v452, 2147483648
        %v466 = vsel %vm464, %v465, %v463
        %v467 = vld [vmem:[#allocation7] sm:$0x1]
        %v468 = vlaneseq
        %v469 = vshrl.u32 %v468, 7
        %v470 = vsub.s32 0, %v469
        %v471 = vrot.slane %v459, %v470
        %473 = vbcast.lane.b32.xlu0 %v471, 256
        %v474 = vpop.permute.xlu0 %473
        %s476 = sor.u32 256, 8
        %477 = vbcast.lane.b32.xlu0 %v471, %s476
        %v478 = vpop.permute.xlu0 %477
        %v479 = vlaneseq
        %v480 = vshrl.u32 %v479, 7
        %v481 = vsub.s32 1, %v480
        %v482 = vrot.slane %v459, %v481
        %484 = vbcast.lane.b32.xlu0 %v482, 256
        %v485 = vpop.permute.xlu0 %484
        %s487 = sor.u32 256, 8
        %488 = vbcast.lane.b32.xlu0 %v482, %s487
        %v489 = vpop.permute.xlu0 %488
        %v490 = vlaneseq
        %v491 = vshrl.u32 %v490, 7
        %v492 = vsub.s32 2, %v491
        %v493 = vrot.slane %v459, %v492
        %495 = vbcast.lane.b32.xlu0 %v493, 256
        %v496 = vpop.permute.xlu0 %495
        %s498 = sor.u32 256, 8
        %499 = vbcast.lane.b32.xlu0 %v493, %s498
        %v500 = vpop.permute.xlu0 %499
        %v501 = vlaneseq
        %v502 = vshrl.u32 %v501, 7
        %v503 = vsub.s32 3, %v502
        %v504 = vrot.slane %v459, %v503
        %506 = vbcast.lane.b32.xlu0 %v504, 256
        %v507 = vpop.permute.xlu0 %506
        %s509 = sor.u32 256, 8
        %510 = vbcast.lane.b32.xlu0 %v504, %s509
        %v511 = vpop.permute.xlu0 %510
        %v512 = vlaneseq
        %v513 = vshrl.u32 %v512, 7
        %v514 = vsub.s32 4, %v513
        %v515 = vrot.slane %v459, %v514
        %517 = vbcast.lane.b32.xlu0 %v515, 256
        %v518 = vpop.permute.xlu0 %517
        %s520 = sor.u32 256, 8
        %521 = vbcast.lane.b32.xlu0 %v515, %s520
        %v522 = vpop.permute.xlu0 %521
        %v523 = vlaneseq
        %v524 = vshrl.u32 %v523, 7
        %v525 = vsub.s32 5, %v524
        %v526 = vrot.slane %v459, %v525
        %528 = vbcast.lane.b32.xlu0 %v526, 256
        %v529 = vpop.permute.xlu0 %528
        %s531 = sor.u32 256, 8
        %532 = vbcast.lane.b32.xlu0 %v526, %s531
        %v533 = vpop.permute.xlu0 %532
        %v534 = vlaneseq
        %v535 = vshrl.u32 %v534, 7
        %v536 = vsub.s32 6, %v535
        %v537 = vrot.slane %v459, %v536
        %539 = vbcast.lane.b32.xlu0 %v537, 256
        %v540 = vpop.permute.xlu0 %539
        %s542 = sor.u32 256, 8
        %543 = vbcast.lane.b32.xlu0 %v537, %s542
        %v544 = vpop.permute.xlu0 %543
        %v545 = vlaneseq
        %v546 = vshrl.u32 %v545, 7
        %v547 = vsub.s32 7, %v546
        %v548 = vrot.slane %v459, %v547
        %550 = vbcast.lane.b32.xlu0 %v548, 256
        %v551 = vpop.permute.xlu0 %550
        %s553 = sor.u32 256, 8
        %554 = vbcast.lane.b32.xlu0 %v548, %s553
        %v555 = vpop.permute.xlu0 %554
        %v556 = vlaneseq
        %v557 = vshrl.u32 %v556, 7
        %v558 = vsub.s32 0, %v557
        %v559 = vrot.slane %v466, %v558
        %561 = vbcast.lane.b32.xlu0 %v559, 256
        %v562 = vpop.permute.xlu0 %561
        %s564 = sor.u32 256, 8
        %565 = vbcast.lane.b32.xlu0 %v559, %s564
        %v566 = vpop.permute.xlu0 %565
        %v567 = vlaneseq
        %v568 = vshrl.u32 %v567, 7
        %v569 = vsub.s32 1, %v568
        %v570 = vrot.slane %v466, %v569
        %572 = vbcast.lane.b32.xlu0 %v570, 256
        %v573 = vpop.permute.xlu0 %572
        %s575 = sor.u32 256, 8
        %576 = vbcast.lane.b32.xlu0 %v570, %s575
        %v577 = vpop.permute.xlu0 %576
        %v578 = vlaneseq
        %v579 = vshrl.u32 %v578, 7
        %v580 = vsub.s32 2, %v579
        %v581 = vrot.slane %v466, %v580
        %583 = vbcast.lane.b32.xlu0 %v581, 256
        %v584 = vpop.permute.xlu0 %583
        %s586 = sor.u32 256, 8
        %587 = vbcast.lane.b32.xlu0 %v581, %s586
        %v588 = vpop.permute.xlu0 %587
        %v589 = vlaneseq
        %v590 = vshrl.u32 %v589, 7
        %v591 = vsub.s32 3, %v590
        %v592 = vrot.slane %v466, %v591
        %594 = vbcast.lane.b32.xlu0 %v592, 256
        %v595 = vpop.permute.xlu0 %594
        %s597 = sor.u32 256, 8
        %598 = vbcast.lane.b32.xlu0 %v592, %s597
        %v599 = vpop.permute.xlu0 %598
        %v600 = vlaneseq
        %v601 = vshrl.u32 %v600, 7
        %v602 = vsub.s32 4, %v601
        %v603 = vrot.slane %v466, %v602
        %605 = vbcast.lane.b32.xlu0 %v603, 256
        %v606 = vpop.permute.xlu0 %605
        %s608 = sor.u32 256, 8
        %609 = vbcast.lane.b32.xlu0 %v603, %s608
        %v610 = vpop.permute.xlu0 %609
        %v611 = vlaneseq
        %v612 = vshrl.u32 %v611, 7
        %v613 = vsub.s32 5, %v612
        %v614 = vrot.slane %v466, %v613
        %616 = vbcast.lane.b32.xlu0 %v614, 256
        %v617 = vpop.permute.xlu0 %616
        %s619 = sor.u32 256, 8
        %620 = vbcast.lane.b32.xlu0 %v614, %s619
        %v621 = vpop.permute.xlu0 %620
        %v622 = vlaneseq
        %v623 = vshrl.u32 %v622, 7
        %v624 = vsub.s32 6, %v623
        %v625 = vrot.slane %v466, %v624
        %627 = vbcast.lane.b32.xlu0 %v625, 256
        %v628 = vpop.permute.xlu0 %627
        %s630 = sor.u32 256, 8
        %631 = vbcast.lane.b32.xlu0 %v625, %s630
        %v632 = vpop.permute.xlu0 %631
        %v633 = vlaneseq
        %v634 = vshrl.u32 %v633, 7
        %v635 = vsub.s32 7, %v634
        %v636 = vrot.slane %v466, %v635
        %638 = vbcast.lane.b32.xlu0 %v636, 256
        %v639 = vpop.permute.xlu0 %638
        %s641 = sor.u32 256, 8
        %642 = vbcast.lane.b32.xlu0 %v636, %s641
        %v643 = vpop.permute.xlu0 %642
        %v645 = vlaneseq
        %v646 = vshrl.u32 %v645, 7
        %v647 = vsub.s32 0, %v646
        %v648 = vrot.slane %v467, %v647
        %v650 = vmul.f32 %v474, %v648
        %v651 = vmul.f32 %v478, %v648
        %v652 = vmul.f32 %v485, %v648
        %v653 = vmul.f32 %v489, %v648
        %v654 = vmul.f32 %v496, %v648
        %v655 = vmul.f32 %v500, %v648
        %v656 = vmul.f32 %v507, %v648
        %v657 = vmul.f32 %v511, %v648
        %v658 = vmul.f32 %v518, %v648
        %v659 = vmul.f32 %v522, %v648
        %v660 = vmul.f32 %v529, %v648
        %v661 = vmul.f32 %v533, %v648
        %v662 = vmul.f32 %v540, %v648
        %v663 = vmul.f32 %v544, %v648
        %v664 = vmul.f32 %v551, %v648
        %v665 = vmul.f32 %v555, %v648
        %v666 = vmul.f32 %v562, %v648
        %v667 = vmul.f32 %v566, %v648
        %v668 = vmul.f32 %v573, %v648
        %v669 = vmul.f32 %v577, %v648
        %v670 = vmul.f32 %v584, %v648
        %v671 = vmul.f32 %v588, %v648
        %v672 = vmul.f32 %v595, %v648
        %v673 = vmul.f32 %v599, %v648
        %v674 = vmul.f32 %v606, %v648
        %v675 = vmul.f32 %v610, %v648
        %v676 = vmul.f32 %v617, %v648
        %v677 = vmul.f32 %v621, %v648
        %v678 = vmul.f32 %v628, %v648
        %v679 = vmul.f32 %v632, %v648
        %v680 = vmul.f32 %v639, %v648
        %v681 = vmul.f32 %v643, %v648
        %v682 = vand.u32 2147483647, %v650
        %vm683 = vcmp.le.f32.partialorder %v682, 0.7853982
        %vm684 = vcmp.lt.s32.totalorder %v650, 0
        %v685 = vand.u32 %v650, 2139095040
        %v686 = vshrl.u32 %v685, 23
        %v687 = vsub.s32 %v686, 127
        %v688 = vand.u32 2147483647, %v650
        %v689 = vand.u32 %v688, 8388607
        %v690 = vor.u32 %v689, 8388608
        %v691 = vsub.s32 0, %v690
        %v692 = vadd.s32 %v687, 1
        %vm693 = vcmp.gt.s32.totalorder %v692, 0
        %v694 = vsel %vm693, %v692, 0
        %v695 = vshrl.u32 %v694, 5
        %v696 = vand.u32 %v694, 31
        %v697 = vsub.s32 32, %v696
        %v698 = vshrl.u32 683565275, %v697
        %v699 = vshll.u32 683565275, %v696
        %v700 = vshrl.u32 2475754826, %v697
        %v701 = vor.u32 %v699, %v700
        %v702 = vshll.u32 2475754826, %v696
        %v703 = vshrl.u32 2131351028, %v697
        %v704 = vor.u32 %v702, %v703
        %v705 = vshll.u32 2131351028, %v696
        %v706 = vshrl.u32 2102212464, %v697
        %v707 = vor.u32 %v705, %v706
        %v708 = vshll.u32 2102212464, %v696
        %v709 = vshrl.u32 920167782, %v697
        %v710 = vor.u32 %v708, %v709
        %v711 = vshll.u32 920167782, %v696
        %v712 = vshrl.u32 1326507024, %v697
        %v713 = vor.u32 %v711, %v712
        %vm714 = vcmp.lt.s32.totalorder %v695, 1
        %vm715 = vcmp.lt.s32.totalorder %v695, 2
        %vm716 = vcmp.lt.s32.totalorder %v695, 3
        %vm717 = vcmp.lt.s32.totalorder %v695, 4
        %v718 = vsel %vm714, %v698, %v701
        %v719 = vsel %vm717, %v707, 2102212464
        %v720 = vsel %vm716, %v704, %v719
        %v721 = vsel %vm715, %v718, %v720
        %v722 = vsel %vm714, %v701, %v704
        %v723 = vsel %vm717, %v710, 920167782
        %v724 = vsel %vm716, %v707, %v723
        %v725 = vsel %vm715, %v722, %v724
        %v726 = vsel %vm714, %v704, %v707
        %v727 = vsel %vm717, %v713, 1326507024
        %v728 = vsel %vm716, %v710, %v727
        %v729 = vsel %vm715, %v726, %v728
        %v730 = vshll.u32 %v690, 8
        %v731 = vmul.u32.u64.compose %v730, %v729
        %v732 = vextract.low.u32 %v731
        %v733 = vextract.high.u32 %v731
        %v734 = vmul.u32.u64.compose %v730, %v725
        %v735 = vextract.low.u32 %v734
        %v736 = vextract.high.u32 %v734
        %v737 = vmul.u32 %v730, %v721
        %v738 = vadd.s32 %v733, %v735
        %vm739 = vc.u32 %v733, %v735
        %v740 = vadd.s32 %v736, 1
        %v741 = vsel %vm739, %v740, %v736
        %v742 = vadd.s32 %v737, %v741
        %v743 = vadd.s32 %v742, 536870912
        %v744 = vshrl.u32 %v743, 30
        %v745 = vshll.u32 %v744, 30
        %v746 = vsub.s32 %v742, %v745
        %vm747 = vcmp.lt.s32.totalorder %v746, 0
        %v748 = vsub.s32 0, %v746
        %v749 = vsel %vm747, %v748, %v746
        %v750 = vclz %v749
        %v751 = vsub.s32 %v750, 2
        %vm752 = vcmp.gt.s32.totalorder 0, %v751
        %v753 = vsel %vm752, 0, %v751
        %v754 = vsub.s32 32, %v753
        %v755 = vshll.u32 %v746, %v753
        %v756 = vshrl.u32 %v738, %v754
        %v757 = vor.u32 %v755, %v756
        %v758 = vsub.s32 4294967266, %v753
        %v759 = vadd.s32 %v758, 127
        %v760 = vshll.u32 %v759, 23
        %v761 = vor.u32 4788187, %v760
        %v762 = vand.u32 2147483647, %v761
        %v764 = vcvt.s32.f32 %v757
        %v765 = vmul.f32 %v764, %v762
        %v766 = vxor.u32 %v765, 2147483648
        %v767 = vsel %vm684, %v766, %v765
        %v768 = vsub.s32 4, %v744
        %v769 = vsel %vm684, %v768, %v744
        %v770 = vsel %vm683, %v650, %v767
        %v771 = vsel %vm683, 0, %v769
        %v772 = vcosq.f32.pop %v770
        %v773 = vsinq.f32.pop %v770
        %vm774 = vweird.f32 %v650
        %v775 = vadd.s32 %v771, 3
        %v776 = vand.u32 %v775, 3
        %vm777 = vcmp.lt.s32.totalorder %v776, 2
        %vm778 = vcmp.eq.s32.totalorder %v776, 0
        %v779 = vxor.u32 %v773, 2147483648
        %v780 = vsel %vm778, %v772, %v779
        %vm781 = vcmp.eq.s32.totalorder %v776, 2
        %v782 = vxor.u32 %v772, 2147483648
        %v783 = vsel %vm781, %v782, %v773
        %v784 = vsel %vm777, %v780, %v783
        %v785 = vsel %vm774, nan, %v784
        %v786 = vand.u32 2147483647, %v651
        %vm787 = vcmp.le.f32.partialorder %v786, 0.7853982
        %vm788 = vcmp.lt.s32.totalorder %v651, 0
        %v789 = vand.u32 %v651, 2139095040
        %v790 = vshrl.u32 %v789, 23
        %v791 = vsub.s32 %v790, 127
        %v792 = vand.u32 2147483647, %v651
        %v793 = vand.u32 %v792, 8388607
        %v794 = vor.u32 %v793, 8388608
        %v795 = vsub.s32 0, %v794
        %v796 = vadd.s32 %v791, 1
        %vm797 = vcmp.gt.s32.totalorder %v796, 0
        %v798 = vsel %vm797, %v796, 0
        %v799 = vshrl.u32 %v798, 5
        %v800 = vand.u32 %v798, 31
        %v801 = vsub.s32 32, %v800
        %v802 = vshrl.u32 683565275, %v801
        %v803 = vshll.u32 683565275, %v800
        %v804 = vshrl.u32 2475754826, %v801
        %v805 = vor.u32 %v803, %v804
        %v806 = vshll.u32 2475754826, %v800
        %v807 = vshrl.u32 2131351028, %v801
        %v808 = vor.u32 %v806, %v807
        %v809 = vshll.u32 2131351028, %v800
        %v810 = vshrl.u32 2102212464, %v801
        %v811 = vor.u32 %v809, %v810
        %v812 = vshll.u32 2102212464, %v800
        %v813 = vshrl.u32 920167782, %v801
        %v814 = vor.u32 %v812, %v813
        %v815 = vshll.u32 920167782, %v800
        %v816 = vshrl.u32 1326507024, %v801
        %v817 = vor.u32 %v815, %v816
        %vm818 = vcmp.lt.s32.totalorder %v799, 1
        %vm819 = vcmp.lt.s32.totalorder %v799, 2
        %vm820 = vcmp.lt.s32.totalorder %v799, 3
        %vm821 = vcmp.lt.s32.totalorder %v799, 4
        %v822 = vsel %vm818, %v802, %v805
        %v823 = vsel %vm821, %v811, 2102212464
        %v824 = vsel %vm820, %v808, %v823
        %v825 = vsel %vm819, %v822, %v824
        %v826 = vsel %vm818, %v805, %v808
        %v827 = vsel %vm821, %v814, 920167782
        %v828 = vsel %vm820, %v811, %v827
        %v829 = vsel %vm819, %v826, %v828
        %v830 = vsel %vm818, %v808, %v811
        %v831 = vsel %vm821, %v817, 1326507024
        %v832 = vsel %vm820, %v814, %v831
        %v833 = vsel %vm819, %v830, %v832
        %v834 = vshll.u32 %v794, 8
        %v835 = vmul.u32.u64.compose %v834, %v833
        %v836 = vextract.low.u32 %v835
        %v837 = vextract.high.u32 %v835
        %v838 = vmul.u32.u64.compose %v834, %v829
        %v839 = vextract.low.u32 %v838
        %v840 = vextract.high.u32 %v838
        %v841 = vmul.u32 %v834, %v825
        %v842 = vadd.s32 %v837, %v839
        %vm843 = vc.u32 %v837, %v839
        %v844 = vadd.s32 %v840, 1
        %v845 = vsel %vm843, %v844, %v840
        %v846 = vadd.s32 %v841, %v845
        %v847 = vadd.s32 %v846, 536870912
        %v848 = vshrl.u32 %v847, 30
        %v849 = vshll.u32 %v848, 30
        %v850 = vsub.s32 %v846, %v849
        %vm851 = vcmp.lt.s32.totalorder %v850, 0
        %v852 = vsub.s32 0, %v850
        %v853 = vsel %vm851, %v852, %v850
        %v854 = vclz %v853
        %v855 = vsub.s32 %v854, 2
        %vm856 = vcmp.gt.s32.totalorder 0, %v855
        %v857 = vsel %vm856, 0, %v855
        %v858 = vsub.s32 32, %v857
        %v859 = vshll.u32 %v850, %v857
        %v860 = vshrl.u32 %v842, %v858
        %v861 = vor.u32 %v859, %v860
        %v862 = vsub.s32 4294967266, %v857
        %v863 = vadd.s32 %v862, 127
        %v864 = vshll.u32 %v863, 23
        %v865 = vor.u32 4788187, %v864
        %v866 = vand.u32 2147483647, %v865
        %v868 = vcvt.s32.f32 %v861
        %v869 = vmul.f32 %v868, %v866
        %v870 = vxor.u32 %v869, 2147483648
        %v871 = vsel %vm788, %v870, %v869
        %v872 = vsub.s32 4, %v848
        %v873 = vsel %vm788, %v872, %v848
        %v874 = vsel %vm787, %v651, %v871
        %v875 = vsel %vm787, 0, %v873
        %v876 = vcosq.f32.pop %v874
        %v877 = vsinq.f32.pop %v874
        %vm878 = vweird.f32 %v651
        %v879 = vadd.s32 %v875, 3
        %v880 = vand.u32 %v879, 3
        %vm881 = vcmp.lt.s32.totalorder %v880, 2
        %vm882 = vcmp.eq.s32.totalorder %v880, 0
        %v883 = vxor.u32 %v877, 2147483648
        %v884 = vsel %vm882, %v876, %v883
        %vm885 = vcmp.eq.s32.totalorder %v880, 2
        %v886 = vxor.u32 %v876, 2147483648
        %v887 = vsel %vm885, %v886, %v877
        %v888 = vsel %vm881, %v884, %v887
        %v889 = vsel %vm878, nan, %v888
        %v890 = vand.u32 2147483647, %v652
        %vm891 = vcmp.le.f32.partialorder %v890, 0.7853982
        %vm892 = vcmp.lt.s32.totalorder %v652, 0
        %v893 = vand.u32 %v652, 2139095040
        %v894 = vshrl.u32 %v893, 23
        %v895 = vsub.s32 %v894, 127
        %v896 = vand.u32 2147483647, %v652
        %v897 = vand.u32 %v896, 8388607
        %v898 = vor.u32 %v897, 8388608
        %v899 = vsub.s32 0, %v898
        %v900 = vadd.s32 %v895, 1
        %vm901 = vcmp.gt.s32.totalorder %v900, 0
        %v902 = vsel %vm901, %v900, 0
        %v903 = vshrl.u32 %v902, 5
        %v904 = vand.u32 %v902, 31
        %v905 = vsub.s32 32, %v904
        %v906 = vshrl.u32 683565275, %v905
        %v907 = vshll.u32 683565275, %v904
        %v908 = vshrl.u32 2475754826, %v905
        %v909 = vor.u32 %v907, %v908
        %v910 = vshll.u32 2475754826, %v904
        %v911 = vshrl.u32 2131351028, %v905
        %v912 = vor.u32 %v910, %v911
        %v913 = vshll.u32 2131351028, %v904
        %v914 = vshrl.u32 2102212464, %v905
        %v915 = vor.u32 %v913, %v914
        %v916 = vshll.u32 2102212464, %v904
        %v917 = vshrl.u32 920167782, %v905
        %v918 = vor.u32 %v916, %v917
        %v919 = vshll.u32 920167782, %v904
        %v920 = vshrl.u32 1326507024, %v905
        %v921 = vor.u32 %v919, %v920
        %vm922 = vcmp.lt.s32.totalorder %v903, 1
        %vm923 = vcmp.lt.s32.totalorder %v903, 2
        %vm924 = vcmp.lt.s32.totalorder %v903, 3
        %vm925 = vcmp.lt.s32.totalorder %v903, 4
        %v926 = vsel %vm922, %v906, %v909
        %v927 = vsel %vm925, %v915, 2102212464
        %v928 = vsel %vm924, %v912, %v927
        %v929 = vsel %vm923, %v926, %v928
        %v930 = vsel %vm922, %v909, %v912
        %v931 = vsel %vm925, %v918, 920167782
        %v932 = vsel %vm924, %v915, %v931
        %v933 = vsel %vm923, %v930, %v932
        %v934 = vsel %vm922, %v912, %v915
        %v935 = vsel %vm925, %v921, 1326507024
        %v936 = vsel %vm924, %v918, %v935
        %v937 = vsel %vm923, %v934, %v936
        %v938 = vshll.u32 %v898, 8
        %v939 = vmul.u32.u64.compose %v938, %v937
        %v940 = vextract.low.u32 %v939
        %v941 = vextract.high.u32 %v939
        %v942 = vmul.u32.u64.compose %v938, %v933
        %v943 = vextract.low.u32 %v942
        %v944 = vextract.high.u32 %v942
        %v945 = vmul.u32 %v938, %v929
        %v946 = vadd.s32 %v941, %v943
        %vm947 = vc.u32 %v941, %v943
        %v948 = vadd.s32 %v944, 1
        %v949 = vsel %vm947, %v948, %v944
        %v950 = vadd.s32 %v945, %v949
        %v951 = vadd.s32 %v950, 536870912
        %v952 = vshrl.u32 %v951, 30
        %v953 = vshll.u32 %v952, 30
        %v954 = vsub.s32 %v950, %v953
        %vm955 = vcmp.lt.s32.totalorder %v954, 0
        %v956 = vsub.s32 0, %v954
        %v957 = vsel %vm955, %v956, %v954
        %v958 = vclz %v957
        %v959 = vsub.s32 %v958, 2
        %vm960 = vcmp.gt.s32.totalorder 0, %v959
        %v961 = vsel %vm960, 0, %v959
        %v962 = vsub.s32 32, %v961
        %v963 = vshll.u32 %v954, %v961
        %v964 = vshrl.u32 %v946, %v962
        %v965 = vor.u32 %v963, %v964
        %v966 = vsub.s32 4294967266, %v961
        %v967 = vadd.s32 %v966, 127
        %v968 = vshll.u32 %v967, 23
        %v969 = vor.u32 4788187, %v968
        %v970 = vand.u32 2147483647, %v969
        %v972 = vcvt.s32.f32 %v965
        %v973 = vmul.f32 %v972, %v970
        %v974 = vxor.u32 %v973, 2147483648
        %v975 = vsel %vm892, %v974, %v973
        %v976 = vsub.s32 4, %v952
        %v977 = vsel %vm892, %v976, %v952
        %v978 = vsel %vm891, %v652, %v975
        %v979 = vsel %vm891, 0, %v977
        %v980 = vcosq.f32.pop %v978
        %v981 = vsinq.f32.pop %v978
        %vm982 = vweird.f32 %v652
        %v983 = vadd.s32 %v979, 3
        %v984 = vand.u32 %v983, 3
        %vm985 = vcmp.lt.s32.totalorder %v984, 2
        %vm986 = vcmp.eq.s32.totalorder %v984, 0
        %v987 = vxor.u32 %v981, 2147483648
        %v988 = vsel %vm986, %v980, %v987
        %vm989 = vcmp.eq.s32.totalorder %v984, 2
        %v990 = vxor.u32 %v980, 2147483648
        %v991 = vsel %vm989, %v990, %v981
        %v992 = vsel %vm985, %v988, %v991
        %v993 = vsel %vm982, nan, %v992
        %v994 = vand.u32 2147483647, %v653
        %vm995 = vcmp.le.f32.partialorder %v994, 0.7853982
        %vm996 = vcmp.lt.s32.totalorder %v653, 0
        %v997 = vand.u32 %v653, 2139095040
        %v998 = vshrl.u32 %v997, 23
        %v999 = vsub.s32 %v998, 127
        %v1000 = vand.u32 2147483647, %v653
        %v1001 = vand.u32 %v1000, 8388607
        %v1002 = vor.u32 %v1001, 8388608
        %v1003 = vsub.s32 0, %v1002
        %v1004 = vadd.s32 %v999, 1
        %vm1005 = vcmp.gt.s32.totalorder %v1004, 0
        %v1006 = vsel %vm1005, %v1004, 0
        %v1007 = vshrl.u32 %v1006, 5
        %v1008 = vand.u32 %v1006, 31
        %v1009 = vsub.s32 32, %v1008
        %v1010 = vshrl.u32 683565275, %v1009
        %v1011 = vshll.u32 683565275, %v1008
        %v1012 = vshrl.u32 2475754826, %v1009
        %v1013 = vor.u32 %v1011, %v1012
        %v1014 = vshll.u32 2475754826, %v1008
        %v1015 = vshrl.u32 2131351028, %v1009
        %v1016 = vor.u32 %v1014, %v1015
        %v1017 = vshll.u32 2131351028, %v1008
        %v1018 = vshrl.u32 2102212464, %v1009
        %v1019 = vor.u32 %v1017, %v1018
        %v1020 = vshll.u32 2102212464, %v1008
        %v1021 = vshrl.u32 920167782, %v1009
        %v1022 = vor.u32 %v1020, %v1021
        %v1023 = vshll.u32 920167782, %v1008
        %v1024 = vshrl.u32 1326507024, %v1009
        %v1025 = vor.u32 %v1023, %v1024
        %vm1026 = vcmp.lt.s32.totalorder %v1007, 1
        %vm1027 = vcmp.lt.s32.totalorder %v1007, 2
        %vm1028 = vcmp.lt.s32.totalorder %v1007, 3
        %vm1029 = vcmp.lt.s32.totalorder %v1007, 4
        %v1030 = vsel %vm1026, %v1010, %v1013
        %v1031 = vsel %vm1029, %v1019, 2102212464
        %v1032 = vsel %vm1028, %v1016, %v1031
        %v1033 = vsel %vm1027, %v1030, %v1032
        %v1034 = vsel %vm1026, %v1013, %v1016
        %v1035 = vsel %vm1029, %v1022, 920167782
        %v1036 = vsel %vm1028, %v1019, %v1035
        %v1037 = vsel %vm1027, %v1034, %v1036
        %v1038 = vsel %vm1026, %v1016, %v1019
        %v1039 = vsel %vm1029, %v1025, 1326507024
        %v1040 = vsel %vm1028, %v1022, %v1039
        %v1041 = vsel %vm1027, %v1038, %v1040
        %v1042 = vshll.u32 %v1002, 8
        %v1043 = vmul.u32.u64.compose %v1042, %v1041
        %v1044 = vextract.low.u32 %v1043
        %v1045 = vextract.high.u32 %v1043
        %v1046 = vmul.u32.u64.compose %v1042, %v1037
        %v1047 = vextract.low.u32 %v1046
        %v1048 = vextract.high.u32 %v1046
        %v1049 = vmul.u32 %v1042, %v1033
        %v1050 = vadd.s32 %v1045, %v1047
        %vm1051 = vc.u32 %v1045, %v1047
        %v1052 = vadd.s32 %v1048, 1
        %v1053 = vsel %vm1051, %v1052, %v1048
        %v1054 = vadd.s32 %v1049, %v1053
        %v1055 = vadd.s32 %v1054, 536870912
        %v1056 = vshrl.u32 %v1055, 30
        %v1057 = vshll.u32 %v1056, 30
        %v1058 = vsub.s32 %v1054, %v1057
        %vm1059 = vcmp.lt.s32.totalorder %v1058, 0
        %v1060 = vsub.s32 0, %v1058
        %v1061 = vsel %vm1059, %v1060, %v1058
        %v1062 = vclz %v1061
        %v1063 = vsub.s32 %v1062, 2
        %vm1064 = vcmp.gt.s32.totalorder 0, %v1063
        %v1065 = vsel %vm1064, 0, %v1063
        %v1066 = vsub.s32 32, %v1065
        %v1067 = vshll.u32 %v1058, %v1065
        %v1068 = vshrl.u32 %v1050, %v1066
        %v1069 = vor.u32 %v1067, %v1068
        %v1070 = vsub.s32 4294967266, %v1065
        %v1071 = vadd.s32 %v1070, 127
        %v1072 = vshll.u32 %v1071, 23
        %v1073 = vor.u32 4788187, %v1072
        %v1074 = vand.u32 2147483647, %v1073
        %v1076 = vcvt.s32.f32 %v1069
        %v1077 = vmul.f32 %v1076, %v1074
        %v1078 = vxor.u32 %v1077, 2147483648
        %v1079 = vsel %vm996, %v1078, %v1077
        %v1080 = vsub.s32 4, %v1056
        %v1081 = vsel %vm996, %v1080, %v1056
        %v1082 = vsel %vm995, %v653, %v1079
        %v1083 = vsel %vm995, 0, %v1081
        %v1084 = vcosq.f32.pop %v1082
        %v1085 = vsinq.f32.pop %v1082
        %vm1086 = vweird.f32 %v653
        %v1087 = vadd.s32 %v1083, 3
        %v1088 = vand.u32 %v1087, 3
        %vm1089 = vcmp.lt.s32.totalorder %v1088, 2
        %vm1090 = vcmp.eq.s32.totalorder %v1088, 0
        %v1091 = vxor.u32 %v1085, 2147483648
        %v1092 = vsel %vm1090, %v1084, %v1091
        %vm1093 = vcmp.eq.s32.totalorder %v1088, 2
        %v1094 = vxor.u32 %v1084, 2147483648
        %v1095 = vsel %vm1093, %v1094, %v1085
        %v1096 = vsel %vm1089, %v1092, %v1095
        %v1097 = vsel %vm1086, nan, %v1096
        %v1098 = vand.u32 2147483647, %v654
        %vm1099 = vcmp.le.f32.partialorder %v1098, 0.7853982
        %vm1100 = vcmp.lt.s32.totalorder %v654, 0
        %v1101 = vand.u32 %v654, 2139095040
        %v1102 = vshrl.u32 %v1101, 23
        %v1103 = vsub.s32 %v1102, 127
        %v1104 = vand.u32 2147483647, %v654
        %v1105 = vand.u32 %v1104, 8388607
        %v1106 = vor.u32 %v1105, 8388608
        %v1107 = vsub.s32 0, %v1106
        %v1108 = vadd.s32 %v1103, 1
        %vm1109 = vcmp.gt.s32.totalorder %v1108, 0
        %v1110 = vsel %vm1109, %v1108, 0
        %v1111 = vshrl.u32 %v1110, 5
        %v1112 = vand.u32 %v1110, 31
        %v1113 = vsub.s32 32, %v1112
        %v1114 = vshrl.u32 683565275, %v1113
        %v1115 = vshll.u32 683565275, %v1112
        %v1116 = vshrl.u32 2475754826, %v1113
        %v1117 = vor.u32 %v1115, %v1116
        %v1118 = vshll.u32 2475754826, %v1112
        %v1119 = vshrl.u32 2131351028, %v1113
        %v1120 = vor.u32 %v1118, %v1119
        %v1121 = vshll.u32 2131351028, %v1112
        %v1122 = vshrl.u32 2102212464, %v1113
        %v1123 = vor.u32 %v1121, %v1122
        %v1124 = vshll.u32 2102212464, %v1112
        %v1125 = vshrl.u32 920167782, %v1113
        %v1126 = vor.u32 %v1124, %v1125
        %v1127 = vshll.u32 920167782, %v1112
        %v1128 = vshrl.u32 1326507024, %v1113
        %v1129 = vor.u32 %v1127, %v1128
        %vm1130 = vcmp.lt.s32.totalorder %v1111, 1
        %vm1131 = vcmp.lt.s32.totalorder %v1111, 2
        %vm1132 = vcmp.lt.s32.totalorder %v1111, 3
        %vm1133 = vcmp.lt.s32.totalorder %v1111, 4
        %v1134 = vsel %vm1130, %v1114, %v1117
        %v1135 = vsel %vm1133, %v1123, 2102212464
        %v1136 = vsel %vm1132, %v1120, %v1135
        %v1137 = vsel %vm1131, %v1134, %v1136
        %v1138 = vsel %vm1130, %v1117, %v1120
        %v1139 = vsel %vm1133, %v1126, 920167782
        %v1140 = vsel %vm1132, %v1123, %v1139
        %v1141 = vsel %vm1131, %v1138, %v1140
        %v1142 = vsel %vm1130, %v1120, %v1123
        %v1143 = vsel %vm1133, %v1129, 1326507024
        %v1144 = vsel %vm1132, %v1126, %v1143
        %v1145 = vsel %vm1131, %v1142, %v1144
        %v1146 = vshll.u32 %v1106, 8
        %v1147 = vmul.u32.u64.compose %v1146, %v1145
        %v1148 = vextract.low.u32 %v1147
        %v1149 = vextract.high.u32 %v1147
        %v1150 = vmul.u32.u64.compose %v1146, %v1141
        %v1151 = vextract.low.u32 %v1150
        %v1152 = vextract.high.u32 %v1150
        %v1153 = vmul.u32 %v1146, %v1137
        %v1154 = vadd.s32 %v1149, %v1151
        %vm1155 = vc.u32 %v1149, %v1151
        %v1156 = vadd.s32 %v1152, 1
        %v1157 = vsel %vm1155, %v1156, %v1152
        %v1158 = vadd.s32 %v1153, %v1157
        %v1159 = vadd.s32 %v1158, 536870912
        %v1160 = vshrl.u32 %v1159, 30
        %v1161 = vshll.u32 %v1160, 30
        %v1162 = vsub.s32 %v1158, %v1161
        %vm1163 = vcmp.lt.s32.totalorder %v1162, 0
        %v1164 = vsub.s32 0, %v1162
        %v1165 = vsel %vm1163, %v1164, %v1162
        %v1166 = vclz %v1165
        %v1167 = vsub.s32 %v1166, 2
        %vm1168 = vcmp.gt.s32.totalorder 0, %v1167
        %v1169 = vsel %vm1168, 0, %v1167
        %v1170 = vsub.s32 32, %v1169
        %v1171 = vshll.u32 %v1162, %v1169
        %v1172 = vshrl.u32 %v1154, %v1170
        %v1173 = vor.u32 %v1171, %v1172
        %v1174 = vsub.s32 4294967266, %v1169
        %v1175 = vadd.s32 %v1174, 127
        %v1176 = vshll.u32 %v1175, 23
        %v1177 = vor.u32 4788187, %v1176
        %v1178 = vand.u32 2147483647, %v1177
        %v1180 = vcvt.s32.f32 %v1173
        %v1181 = vmul.f32 %v1180, %v1178
        %v1182 = vxor.u32 %v1181, 2147483648
        %v1183 = vsel %vm1100, %v1182, %v1181
        %v1184 = vsub.s32 4, %v1160
        %v1185 = vsel %vm1100, %v1184, %v1160
        %v1186 = vsel %vm1099, %v654, %v1183
        %v1187 = vsel %vm1099, 0, %v1185
        %v1188 = vcosq.f32.pop %v1186
        %v1189 = vsinq.f32.pop %v1186
        %vm1190 = vweird.f32 %v654
        %v1191 = vadd.s32 %v1187, 3
        %v1192 = vand.u32 %v1191, 3
        %vm1193 = vcmp.lt.s32.totalorder %v1192, 2
        %vm1194 = vcmp.eq.s32.totalorder %v1192, 0
        %v1195 = vxor.u32 %v1189, 2147483648
        %v1196 = vsel %vm1194, %v1188, %v1195
        %vm1197 = vcmp.eq.s32.totalorder %v1192, 2
        %v1198 = vxor.u32 %v1188, 2147483648
        %v1199 = vsel %vm1197, %v1198, %v1189
        %v1200 = vsel %vm1193, %v1196, %v1199
        %v1201 = vsel %vm1190, nan, %v1200
        %v1202 = vand.u32 2147483647, %v655
        %vm1203 = vcmp.le.f32.partialorder %v1202, 0.7853982
        %vm1204 = vcmp.lt.s32.totalorder %v655, 0
        %v1205 = vand.u32 %v655, 2139095040
        %v1206 = vshrl.u32 %v1205, 23
        %v1207 = vsub.s32 %v1206, 127
        %v1208 = vand.u32 2147483647, %v655
        %v1209 = vand.u32 %v1208, 8388607
        %v1210 = vor.u32 %v1209, 8388608
        %v1211 = vsub.s32 0, %v1210
        %v1212 = vadd.s32 %v1207, 1
        %vm1213 = vcmp.gt.s32.totalorder %v1212, 0
        %v1214 = vsel %vm1213, %v1212, 0
        %v1215 = vshrl.u32 %v1214, 5
        %v1216 = vand.u32 %v1214, 31
        %v1217 = vsub.s32 32, %v1216
        %v1218 = vshrl.u32 683565275, %v1217
        %v1219 = vshll.u32 683565275, %v1216
        %v1220 = vshrl.u32 2475754826, %v1217
        %v1221 = vor.u32 %v1219, %v1220
        %v1222 = vshll.u32 2475754826, %v1216
        %v1223 = vshrl.u32 2131351028, %v1217
        %v1224 = vor.u32 %v1222, %v1223
        %v1225 = vshll.u32 2131351028, %v1216
        %v1226 = vshrl.u32 2102212464, %v1217
        %v1227 = vor.u32 %v1225, %v1226
        %v1228 = vshll.u32 2102212464, %v1216
        %v1229 = vshrl.u32 920167782, %v1217
        %v1230 = vor.u32 %v1228, %v1229
        %v1231 = vshll.u32 920167782, %v1216
        %v1232 = vshrl.u32 1326507024, %v1217
        %v1233 = vor.u32 %v1231, %v1232
        %vm1234 = vcmp.lt.s32.totalorder %v1215, 1
        %vm1235 = vcmp.lt.s32.totalorder %v1215, 2
        %vm1236 = vcmp.lt.s32.totalorder %v1215, 3
        %vm1237 = vcmp.lt.s32.totalorder %v1215, 4
        %v1238 = vsel %vm1234, %v1218, %v1221
        %v1239 = vsel %vm1237, %v1227, 2102212464
        %v1240 = vsel %vm1236, %v1224, %v1239
        %v1241 = vsel %vm1235, %v1238, %v1240
        %v1242 = vsel %vm1234, %v1221, %v1224
        %v1243 = vsel %vm1237, %v1230, 920167782
        %v1244 = vsel %vm1236, %v1227, %v1243
        %v1245 = vsel %vm1235, %v1242, %v1244
        %v1246 = vsel %vm1234, %v1224, %v1227
        %v1247 = vsel %vm1237, %v1233, 1326507024
        %v1248 = vsel %vm1236, %v1230, %v1247
        %v1249 = vsel %vm1235, %v1246, %v1248
        %v1250 = vshll.u32 %v1210, 8
        %v1251 = vmul.u32.u64.compose %v1250, %v1249
        %v1252 = vextract.low.u32 %v1251
        %v1253 = vextract.high.u32 %v1251
        %v1254 = vmul.u32.u64.compose %v1250, %v1245
        %v1255 = vextract.low.u32 %v1254
        %v1256 = vextract.high.u32 %v1254
        %v1257 = vmul.u32 %v1250, %v1241
        %v1258 = vadd.s32 %v1253, %v1255
        %vm1259 = vc.u32 %v1253, %v1255
        %v1260 = vadd.s32 %v1256, 1
        %v1261 = vsel %vm1259, %v1260, %v1256
        %v1262 = vadd.s32 %v1257, %v1261
        %v1263 = vadd.s32 %v1262, 536870912
        %v1264 = vshrl.u32 %v1263, 30
        %v1265 = vshll.u32 %v1264, 30
        %v1266 = vsub.s32 %v1262, %v1265
        %vm1267 = vcmp.lt.s32.totalorder %v1266, 0
        %v1268 = vsub.s32 0, %v1266
        %v1269 = vsel %vm1267, %v1268, %v1266
        %v1270 = vclz %v1269
        %v1271 = vsub.s32 %v1270, 2
        %vm1272 = vcmp.gt.s32.totalorder 0, %v1271
        %v1273 = vsel %vm1272, 0, %v1271
        %v1274 = vsub.s32 32, %v1273
        %v1275 = vshll.u32 %v1266, %v1273
        %v1276 = vshrl.u32 %v1258, %v1274
        %v1277 = vor.u32 %v1275, %v1276
        %v1278 = vsub.s32 4294967266, %v1273
        %v1279 = vadd.s32 %v1278, 127
        %v1280 = vshll.u32 %v1279, 23
        %v1281 = vor.u32 4788187, %v1280
        %v1282 = vand.u32 2147483647, %v1281
        %v1284 = vcvt.s32.f32 %v1277
        %v1285 = vmul.f32 %v1284, %v1282
        %v1286 = vxor.u32 %v1285, 2147483648
        %v1287 = vsel %vm1204, %v1286, %v1285
        %v1288 = vsub.s32 4, %v1264
        %v1289 = vsel %vm1204, %v1288, %v1264
        %v1290 = vsel %vm1203, %v655, %v1287
        %v1291 = vsel %vm1203, 0, %v1289
        %v1292 = vcosq.f32.pop %v1290
        %v1293 = vsinq.f32.pop %v1290
        %vm1294 = vweird.f32 %v655
        %v1295 = vadd.s32 %v1291, 3
        %v1296 = vand.u32 %v1295, 3
        %vm1297 = vcmp.lt.s32.totalorder %v1296, 2
        %vm1298 = vcmp.eq.s32.totalorder %v1296, 0
        %v1299 = vxor.u32 %v1293, 2147483648
        %v1300 = vsel %vm1298, %v1292, %v1299
        %vm1301 = vcmp.eq.s32.totalorder %v1296, 2
        %v1302 = vxor.u32 %v1292, 2147483648
        %v1303 = vsel %vm1301, %v1302, %v1293
        %v1304 = vsel %vm1297, %v1300, %v1303
        %v1305 = vsel %vm1294, nan, %v1304
        %v1306 = vand.u32 2147483647, %v656
        %vm1307 = vcmp.le.f32.partialorder %v1306, 0.7853982
        %vm1308 = vcmp.lt.s32.totalorder %v656, 0
        %v1309 = vand.u32 %v656, 2139095040
        %v1310 = vshrl.u32 %v1309, 23
        %v1311 = vsub.s32 %v1310, 127
        %v1312 = vand.u32 2147483647, %v656
        %v1313 = vand.u32 %v1312, 8388607
        %v1314 = vor.u32 %v1313, 8388608
        %v1315 = vsub.s32 0, %v1314
        %v1316 = vadd.s32 %v1311, 1
        %vm1317 = vcmp.gt.s32.totalorder %v1316, 0
        %v1318 = vsel %vm1317, %v1316, 0
        %v1319 = vshrl.u32 %v1318, 5
        %v1320 = vand.u32 %v1318, 31
        %v1321 = vsub.s32 32, %v1320
        %v1322 = vshrl.u32 683565275, %v1321
        %v1323 = vshll.u32 683565275, %v1320
        %v1324 = vshrl.u32 2475754826, %v1321
        %v1325 = vor.u32 %v1323, %v1324
        %v1326 = vshll.u32 2475754826, %v1320
        %v1327 = vshrl.u32 2131351028, %v1321
        %v1328 = vor.u32 %v1326, %v1327
        %v1329 = vshll.u32 2131351028, %v1320
        %v1330 = vshrl.u32 2102212464, %v1321
        %v1331 = vor.u32 %v1329, %v1330
        %v1332 = vshll.u32 2102212464, %v1320
        %v1333 = vshrl.u32 920167782, %v1321
        %v1334 = vor.u32 %v1332, %v1333
        %v1335 = vshll.u32 920167782, %v1320
        %v1336 = vshrl.u32 1326507024, %v1321
        %v1337 = vor.u32 %v1335, %v1336
        %vm1338 = vcmp.lt.s32.totalorder %v1319, 1
        %vm1339 = vcmp.lt.s32.totalorder %v1319, 2
        %vm1340 = vcmp.lt.s32.totalorder %v1319, 3
        %vm1341 = vcmp.lt.s32.totalorder %v1319, 4
        %v1342 = vsel %vm1338, %v1322, %v1325
        %v1343 = vsel %vm1341, %v1331, 2102212464
        %v1344 = vsel %vm1340, %v1328, %v1343
        %v1345 = vsel %vm1339, %v1342, %v1344
        %v1346 = vsel %vm1338, %v1325, %v1328
        %v1347 = vsel %vm1341, %v1334, 920167782
        %v1348 = vsel %vm1340, %v1331, %v1347
        %v1349 = vsel %vm1339, %v1346, %v1348
        %v1350 = vsel %vm1338, %v1328, %v1331
        %v1351 = vsel %vm1341, %v1337, 1326507024
        %v1352 = vsel %vm1340, %v1334, %v1351
        %v1353 = vsel %vm1339, %v1350, %v1352
        %v1354 = vshll.u32 %v1314, 8
        %v1355 = vmul.u32.u64.compose %v1354, %v1353
        %v1356 = vextract.low.u32 %v1355
        %v1357 = vextract.high.u32 %v1355
        %v1358 = vmul.u32.u64.compose %v1354, %v1349
        %v1359 = vextract.low.u32 %v1358
        %v1360 = vextract.high.u32 %v1358
        %v1361 = vmul.u32 %v1354, %v1345
        %v1362 = vadd.s32 %v1357, %v1359
        %vm1363 = vc.u32 %v1357, %v1359
        %v1364 = vadd.s32 %v1360, 1
        %v1365 = vsel %vm1363, %v1364, %v1360
        %v1366 = vadd.s32 %v1361, %v1365
        %v1367 = vadd.s32 %v1366, 536870912
        %v1368 = vshrl.u32 %v1367, 30
        %v1369 = vshll.u32 %v1368, 30
        %v1370 = vsub.s32 %v1366, %v1369
        %vm1371 = vcmp.lt.s32.totalorder %v1370, 0
        %v1372 = vsub.s32 0, %v1370
        %v1373 = vsel %vm1371, %v1372, %v1370
        %v1374 = vclz %v1373
        %v1375 = vsub.s32 %v1374, 2
        %vm1376 = vcmp.gt.s32.totalorder 0, %v1375
        %v1377 = vsel %vm1376, 0, %v1375
        %v1378 = vsub.s32 32, %v1377
        %v1379 = vshll.u32 %v1370, %v1377
        %v1380 = vshrl.u32 %v1362, %v1378
        %v1381 = vor.u32 %v1379, %v1380
        %v1382 = vsub.s32 4294967266, %v1377
        %v1383 = vadd.s32 %v1382, 127
        %v1384 = vshll.u32 %v1383, 23
        %v1385 = vor.u32 4788187, %v1384
        %v1386 = vand.u32 2147483647, %v1385
        %v1388 = vcvt.s32.f32 %v1381
        %v1389 = vmul.f32 %v1388, %v1386
        %v1390 = vxor.u32 %v1389, 2147483648
        %v1391 = vsel %vm1308, %v1390, %v1389
        %v1392 = vsub.s32 4, %v1368
        %v1393 = vsel %vm1308, %v1392, %v1368
        %v1394 = vsel %vm1307, %v656, %v1391
        %v1395 = vsel %vm1307, 0, %v1393
        %v1396 = vcosq.f32.pop %v1394
        %v1397 = vsinq.f32.pop %v1394
        %vm1398 = vweird.f32 %v656
        %v1399 = vadd.s32 %v1395, 3
        %v1400 = vand.u32 %v1399, 3
        %vm1401 = vcmp.lt.s32.totalorder %v1400, 2
        %vm1402 = vcmp.eq.s32.totalorder %v1400, 0
        %v1403 = vxor.u32 %v1397, 2147483648
        %v1404 = vsel %vm1402, %v1396, %v1403
        %vm1405 = vcmp.eq.s32.totalorder %v1400, 2
        %v1406 = vxor.u32 %v1396, 2147483648
        %v1407 = vsel %vm1405, %v1406, %v1397
        %v1408 = vsel %vm1401, %v1404, %v1407
        %v1409 = vsel %vm1398, nan, %v1408
        %v1410 = vand.u32 2147483647, %v657
        %vm1411 = vcmp.le.f32.partialorder %v1410, 0.7853982
        %vm1412 = vcmp.lt.s32.totalorder %v657, 0
        %v1413 = vand.u32 %v657, 2139095040
        %v1414 = vshrl.u32 %v1413, 23
        %v1415 = vsub.s32 %v1414, 127
        %v1416 = vand.u32 2147483647, %v657
        %v1417 = vand.u32 %v1416, 8388607
        %v1418 = vor.u32 %v1417, 8388608
        %v1419 = vsub.s32 0, %v1418
        %v1420 = vadd.s32 %v1415, 1
        %vm1421 = vcmp.gt.s32.totalorder %v1420, 0
        %v1422 = vsel %vm1421, %v1420, 0
        %v1423 = vshrl.u32 %v1422, 5
        %v1424 = vand.u32 %v1422, 31
        %v1425 = vsub.s32 32, %v1424
        %v1426 = vshrl.u32 683565275, %v1425
        %v1427 = vshll.u32 683565275, %v1424
        %v1428 = vshrl.u32 2475754826, %v1425
        %v1429 = vor.u32 %v1427, %v1428
        %v1430 = vshll.u32 2475754826, %v1424
        %v1431 = vshrl.u32 2131351028, %v1425
        %v1432 = vor.u32 %v1430, %v1431
        %v1433 = vshll.u32 2131351028, %v1424
        %v1434 = vshrl.u32 2102212464, %v1425
        %v1435 = vor.u32 %v1433, %v1434
        %v1436 = vshll.u32 2102212464, %v1424
        %v1437 = vshrl.u32 920167782, %v1425
        %v1438 = vor.u32 %v1436, %v1437
        %v1439 = vshll.u32 920167782, %v1424
        %v1440 = vshrl.u32 1326507024, %v1425
        %v1441 = vor.u32 %v1439, %v1440
        %vm1442 = vcmp.lt.s32.totalorder %v1423, 1
        %vm1443 = vcmp.lt.s32.totalorder %v1423, 2
        %vm1444 = vcmp.lt.s32.totalorder %v1423, 3
        %vm1445 = vcmp.lt.s32.totalorder %v1423, 4
        %v1446 = vsel %vm1442, %v1426, %v1429
        %v1447 = vsel %vm1445, %v1435, 2102212464
        %v1448 = vsel %vm1444, %v1432, %v1447
        %v1449 = vsel %vm1443, %v1446, %v1448
        %v1450 = vsel %vm1442, %v1429, %v1432
        %v1451 = vsel %vm1445, %v1438, 920167782
        %v1452 = vsel %vm1444, %v1435, %v1451
        %v1453 = vsel %vm1443, %v1450, %v1452
        %v1454 = vsel %vm1442, %v1432, %v1435
        %v1455 = vsel %vm1445, %v1441, 1326507024
        %v1456 = vsel %vm1444, %v1438, %v1455
        %v1457 = vsel %vm1443, %v1454, %v1456
        %v1458 = vshll.u32 %v1418, 8
        %v1459 = vmul.u32.u64.compose %v1458, %v1457
        %v1460 = vextract.low.u32 %v1459
        %v1461 = vextract.high.u32 %v1459
        %v1462 = vmul.u32.u64.compose %v1458, %v1453
        %v1463 = vextract.low.u32 %v1462
        %v1464 = vextract.high.u32 %v1462
        %v1465 = vmul.u32 %v1458, %v1449
        %v1466 = vadd.s32 %v1461, %v1463
        %vm1467 = vc.u32 %v1461, %v1463
        %v1468 = vadd.s32 %v1464, 1
        %v1469 = vsel %vm1467, %v1468, %v1464
        %v1470 = vadd.s32 %v1465, %v1469
        %v1471 = vadd.s32 %v1470, 536870912
        %v1472 = vshrl.u32 %v1471, 30
        %v1473 = vshll.u32 %v1472, 30
        %v1474 = vsub.s32 %v1470, %v1473
        %vm1475 = vcmp.lt.s32.totalorder %v1474, 0
        %v1476 = vsub.s32 0, %v1474
        %v1477 = vsel %vm1475, %v1476, %v1474
        %v1478 = vclz %v1477
        %v1479 = vsub.s32 %v1478, 2
        %vm1480 = vcmp.gt.s32.totalorder 0, %v1479
        %v1481 = vsel %vm1480, 0, %v1479
        %v1482 = vsub.s32 32, %v1481
        %v1483 = vshll.u32 %v1474, %v1481
        %v1484 = vshrl.u32 %v1466, %v1482
        %v1485 = vor.u32 %v1483, %v1484
        %v1486 = vsub.s32 4294967266, %v1481
        %v1487 = vadd.s32 %v1486, 127
        %v1488 = vshll.u32 %v1487, 23
        %v1489 = vor.u32 4788187, %v1488
        %v1490 = vand.u32 2147483647, %v1489
        %v1492 = vcvt.s32.f32 %v1485
        %v1493 = vmul.f32 %v1492, %v1490
        %v1494 = vxor.u32 %v1493, 2147483648
        %v1495 = vsel %vm1412, %v1494, %v1493
        %v1496 = vsub.s32 4, %v1472
        %v1497 = vsel %vm1412, %v1496, %v1472
        %v1498 = vsel %vm1411, %v657, %v1495
        %v1499 = vsel %vm1411, 0, %v1497
        %v1500 = vcosq.f32.pop %v1498
        %v1501 = vsinq.f32.pop %v1498
        %vm1502 = vweird.f32 %v657
        %v1503 = vadd.s32 %v1499, 3
        %v1504 = vand.u32 %v1503, 3
        %vm1505 = vcmp.lt.s32.totalorder %v1504, 2
        %vm1506 = vcmp.eq.s32.totalorder %v1504, 0
        %v1507 = vxor.u32 %v1501, 2147483648
        %v1508 = vsel %vm1506, %v1500, %v1507
        %vm1509 = vcmp.eq.s32.totalorder %v1504, 2
        %v1510 = vxor.u32 %v1500, 2147483648
        %v1511 = vsel %vm1509, %v1510, %v1501
        %v1512 = vsel %vm1505, %v1508, %v1511
        %v1513 = vsel %vm1502, nan, %v1512
        %v1514 = vand.u32 2147483647, %v658
        %vm1515 = vcmp.le.f32.partialorder %v1514, 0.7853982
        %vm1516 = vcmp.lt.s32.totalorder %v658, 0
        %v1517 = vand.u32 %v658, 2139095040
        %v1518 = vshrl.u32 %v1517, 23
        %v1519 = vsub.s32 %v1518, 127
        %v1520 = vand.u32 2147483647, %v658
        %v1521 = vand.u32 %v1520, 8388607
        %v1522 = vor.u32 %v1521, 8388608
        %v1523 = vsub.s32 0, %v1522
        %v1524 = vadd.s32 %v1519, 1
        %vm1525 = vcmp.gt.s32.totalorder %v1524, 0
        %v1526 = vsel %vm1525, %v1524, 0
        %v1527 = vshrl.u32 %v1526, 5
        %v1528 = vand.u32 %v1526, 31
        %v1529 = vsub.s32 32, %v1528
        %v1530 = vshrl.u32 683565275, %v1529
        %v1531 = vshll.u32 683565275, %v1528
        %v1532 = vshrl.u32 2475754826, %v1529
        %v1533 = vor.u32 %v1531, %v1532
        %v1534 = vshll.u32 2475754826, %v1528
        %v1535 = vshrl.u32 2131351028, %v1529
        %v1536 = vor.u32 %v1534, %v1535
        %v1537 = vshll.u32 2131351028, %v1528
        %v1538 = vshrl.u32 2102212464, %v1529
        %v1539 = vor.u32 %v1537, %v1538
        %v1540 = vshll.u32 2102212464, %v1528
        %v1541 = vshrl.u32 920167782, %v1529
        %v1542 = vor.u32 %v1540, %v1541
        %v1543 = vshll.u32 920167782, %v1528
        %v1544 = vshrl.u32 1326507024, %v1529
        %v1545 = vor.u32 %v1543, %v1544
        %vm1546 = vcmp.lt.s32.totalorder %v1527, 1
        %vm1547 = vcmp.lt.s32.totalorder %v1527, 2
        %vm1548 = vcmp.lt.s32.totalorder %v1527, 3
        %vm1549 = vcmp.lt.s32.totalorder %v1527, 4
        %v1550 = vsel %vm1546, %v1530, %v1533
        %v1551 = vsel %vm1549, %v1539, 2102212464
        %v1552 = vsel %vm1548, %v1536, %v1551
        %v1553 = vsel %vm1547, %v1550, %v1552
        %v1554 = vsel %vm1546, %v1533, %v1536
        %v1555 = vsel %vm1549, %v1542, 920167782
        %v1556 = vsel %vm1548, %v1539, %v1555
        %v1557 = vsel %vm1547, %v1554, %v1556
        %v1558 = vsel %vm1546, %v1536, %v1539
        %v1559 = vsel %vm1549, %v1545, 1326507024
        %v1560 = vsel %vm1548, %v1542, %v1559
        %v1561 = vsel %vm1547, %v1558, %v1560
        %v1562 = vshll.u32 %v1522, 8
        %v1563 = vmul.u32.u64.compose %v1562, %v1561
        %v1564 = vextract.low.u32 %v1563
        %v1565 = vextract.high.u32 %v1563
        %v1566 = vmul.u32.u64.compose %v1562, %v1557
        %v1567 = vextract.low.u32 %v1566
        %v1568 = vextract.high.u32 %v1566
        %v1569 = vmul.u32 %v1562, %v1553
        %v1570 = vadd.s32 %v1565, %v1567
        %vm1571 = vc.u32 %v1565, %v1567
        %v1572 = vadd.s32 %v1568, 1
        %v1573 = vsel %vm1571, %v1572, %v1568
        %v1574 = vadd.s32 %v1569, %v1573
        %v1575 = vadd.s32 %v1574, 536870912
        %v1576 = vshrl.u32 %v1575, 30
        %v1577 = vshll.u32 %v1576, 30
        %v1578 = vsub.s32 %v1574, %v1577
        %vm1579 = vcmp.lt.s32.totalorder %v1578, 0
        %v1580 = vsub.s32 0, %v1578
        %v1581 = vsel %vm1579, %v1580, %v1578
        %v1582 = vclz %v1581
        %v1583 = vsub.s32 %v1582, 2
        %vm1584 = vcmp.gt.s32.totalorder 0, %v1583
        %v1585 = vsel %vm1584, 0, %v1583
        %v1586 = vsub.s32 32, %v1585
        %v1587 = vshll.u32 %v1578, %v1585
        %v1588 = vshrl.u32 %v1570, %v1586
        %v1589 = vor.u32 %v1587, %v1588
        %v1590 = vsub.s32 4294967266, %v1585
        %v1591 = vadd.s32 %v1590, 127
        %v1592 = vshll.u32 %v1591, 23
        %v1593 = vor.u32 4788187, %v1592
        %v1594 = vand.u32 2147483647, %v1593
        %v1596 = vcvt.s32.f32 %v1589
        %v1597 = vmul.f32 %v1596, %v1594
        %v1598 = vxor.u32 %v1597, 2147483648
        %v1599 = vsel %vm1516, %v1598, %v1597
        %v1600 = vsub.s32 4, %v1576
        %v1601 = vsel %vm1516, %v1600, %v1576
        %v1602 = vsel %vm1515, %v658, %v1599
        %v1603 = vsel %vm1515, 0, %v1601
        %v1604 = vcosq.f32.pop %v1602
        %v1605 = vsinq.f32.pop %v1602
        %vm1606 = vweird.f32 %v658
        %v1607 = vadd.s32 %v1603, 3
        %v1608 = vand.u32 %v1607, 3
        %vm1609 = vcmp.lt.s32.totalorder %v1608, 2
        %vm1610 = vcmp.eq.s32.totalorder %v1608, 0
        %v1611 = vxor.u32 %v1605, 2147483648
        %v1612 = vsel %vm1610, %v1604, %v1611
        %vm1613 = vcmp.eq.s32.totalorder %v1608, 2
        %v1614 = vxor.u32 %v1604, 2147483648
        %v1615 = vsel %vm1613, %v1614, %v1605
        %v1616 = vsel %vm1609, %v1612, %v1615
        %v1617 = vsel %vm1606, nan, %v1616
        %v1618 = vand.u32 2147483647, %v659
        %vm1619 = vcmp.le.f32.partialorder %v1618, 0.7853982
        %vm1620 = vcmp.lt.s32.totalorder %v659, 0
        %v1621 = vand.u32 %v659, 2139095040
        %v1622 = vshrl.u32 %v1621, 23
        %v1623 = vsub.s32 %v1622, 127
        %v1624 = vand.u32 2147483647, %v659
        %v1625 = vand.u32 %v1624, 8388607
        %v1626 = vor.u32 %v1625, 8388608
        %v1627 = vsub.s32 0, %v1626
        %v1628 = vadd.s32 %v1623, 1
        %vm1629 = vcmp.gt.s32.totalorder %v1628, 0
        %v1630 = vsel %vm1629, %v1628, 0
        %v1631 = vshrl.u32 %v1630, 5
        %v1632 = vand.u32 %v1630, 31
        %v1633 = vsub.s32 32, %v1632
        %v1634 = vshrl.u32 683565275, %v1633
        %v1635 = vshll.u32 683565275, %v1632
        %v1636 = vshrl.u32 2475754826, %v1633
        %v1637 = vor.u32 %v1635, %v1636
        %v1638 = vshll.u32 2475754826, %v1632
        %v1639 = vshrl.u32 2131351028, %v1633
        %v1640 = vor.u32 %v1638, %v1639
        %v1641 = vshll.u32 2131351028, %v1632
        %v1642 = vshrl.u32 2102212464, %v1633
        %v1643 = vor.u32 %v1641, %v1642
        %v1644 = vshll.u32 2102212464, %v1632
        %v1645 = vshrl.u32 920167782, %v1633
        %v1646 = vor.u32 %v1644, %v1645
        %v1647 = vshll.u32 920167782, %v1632
        %v1648 = vshrl.u32 1326507024, %v1633
        %v1649 = vor.u32 %v1647, %v1648
        %vm1650 = vcmp.lt.s32.totalorder %v1631, 1
        %vm1651 = vcmp.lt.s32.totalorder %v1631, 2
        %vm1652 = vcmp.lt.s32.totalorder %v1631, 3
        %vm1653 = vcmp.lt.s32.totalorder %v1631, 4
        %v1654 = vsel %vm1650, %v1634, %v1637
        %v1655 = vsel %vm1653, %v1643, 2102212464
        %v1656 = vsel %vm1652, %v1640, %v1655
        %v1657 = vsel %vm1651, %v1654, %v1656
        %v1658 = vsel %vm1650, %v1637, %v1640
        %v1659 = vsel %vm1653, %v1646, 920167782
        %v1660 = vsel %vm1652, %v1643, %v1659
        %v1661 = vsel %vm1651, %v1658, %v1660
        %v1662 = vsel %vm1650, %v1640, %v1643
        %v1663 = vsel %vm1653, %v1649, 1326507024
        %v1664 = vsel %vm1652, %v1646, %v1663
        %v1665 = vsel %vm1651, %v1662, %v1664
        %v1666 = vshll.u32 %v1626, 8
        %v1667 = vmul.u32.u64.compose %v1666, %v1665
        %v1668 = vextract.low.u32 %v1667
        %v1669 = vextract.high.u32 %v1667
        %v1670 = vmul.u32.u64.compose %v1666, %v1661
        %v1671 = vextract.low.u32 %v1670
        %v1672 = vextract.high.u32 %v1670
        %v1673 = vmul.u32 %v1666, %v1657
        %v1674 = vadd.s32 %v1669, %v1671
        %vm1675 = vc.u32 %v1669, %v1671
        %v1676 = vadd.s32 %v1672, 1
        %v1677 = vsel %vm1675, %v1676, %v1672
        %v1678 = vadd.s32 %v1673, %v1677
        %v1679 = vadd.s32 %v1678, 536870912
        %v1680 = vshrl.u32 %v1679, 30
        %v1681 = vshll.u32 %v1680, 30
        %v1682 = vsub.s32 %v1678, %v1681
        %vm1683 = vcmp.lt.s32.totalorder %v1682, 0
        %v1684 = vsub.s32 0, %v1682
        %v1685 = vsel %vm1683, %v1684, %v1682
        %v1686 = vclz %v1685
        %v1687 = vsub.s32 %v1686, 2
        %vm1688 = vcmp.gt.s32.totalorder 0, %v1687
        %v1689 = vsel %vm1688, 0, %v1687
        %v1690 = vsub.s32 32, %v1689
        %v1691 = vshll.u32 %v1682, %v1689
        %v1692 = vshrl.u32 %v1674, %v1690
        %v1693 = vor.u32 %v1691, %v1692
        %v1694 = vsub.s32 4294967266, %v1689
        %v1695 = vadd.s32 %v1694, 127
        %v1696 = vshll.u32 %v1695, 23
        %v1697 = vor.u32 4788187, %v1696
        %v1698 = vand.u32 2147483647, %v1697
        %v1700 = vcvt.s32.f32 %v1693
        %v1701 = vmul.f32 %v1700, %v1698
        %v1702 = vxor.u32 %v1701, 2147483648
        %v1703 = vsel %vm1620, %v1702, %v1701
        %v1704 = vsub.s32 4, %v1680
        %v1705 = vsel %vm1620, %v1704, %v1680
        %v1706 = vsel %vm1619, %v659, %v1703
        %v1707 = vsel %vm1619, 0, %v1705
        %v1708 = vcosq.f32.pop %v1706
        %v1709 = vsinq.f32.pop %v1706
        %vm1710 = vweird.f32 %v659
        %v1711 = vadd.s32 %v1707, 3
        %v1712 = vand.u32 %v1711, 3
        %vm1713 = vcmp.lt.s32.totalorder %v1712, 2
        %vm1714 = vcmp.eq.s32.totalorder %v1712, 0
        %v1715 = vxor.u32 %v1709, 2147483648
        %v1716 = vsel %vm1714, %v1708, %v1715
        %vm1717 = vcmp.eq.s32.totalorder %v1712, 2
        %v1718 = vxor.u32 %v1708, 2147483648
        %v1719 = vsel %vm1717, %v1718, %v1709
        %v1720 = vsel %vm1713, %v1716, %v1719
        %v1721 = vsel %vm1710, nan, %v1720
        %v1722 = vand.u32 2147483647, %v660
        %vm1723 = vcmp.le.f32.partialorder %v1722, 0.7853982
        %vm1724 = vcmp.lt.s32.totalorder %v660, 0
        %v1725 = vand.u32 %v660, 2139095040
        %v1726 = vshrl.u32 %v1725, 23
        %v1727 = vsub.s32 %v1726, 127
        %v1728 = vand.u32 2147483647, %v660
        %v1729 = vand.u32 %v1728, 8388607
        %v1730 = vor.u32 %v1729, 8388608
        %v1731 = vsub.s32 0, %v1730
        %v1732 = vadd.s32 %v1727, 1
        %vm1733 = vcmp.gt.s32.totalorder %v1732, 0
        %v1734 = vsel %vm1733, %v1732, 0
        %v1735 = vshrl.u32 %v1734, 5
        %v1736 = vand.u32 %v1734, 31
        %v1737 = vsub.s32 32, %v1736
        %v1738 = vshrl.u32 683565275, %v1737
        %v1739 = vshll.u32 683565275, %v1736
        %v1740 = vshrl.u32 2475754826, %v1737
        %v1741 = vor.u32 %v1739, %v1740
        %v1742 = vshll.u32 2475754826, %v1736
        %v1743 = vshrl.u32 2131351028, %v1737
        %v1744 = vor.u32 %v1742, %v1743
        %v1745 = vshll.u32 2131351028, %v1736
        %v1746 = vshrl.u32 2102212464, %v1737
        %v1747 = vor.u32 %v1745, %v1746
        %v1748 = vshll.u32 2102212464, %v1736
        %v1749 = vshrl.u32 920167782, %v1737
        %v1750 = vor.u32 %v1748, %v1749
        %v1751 = vshll.u32 920167782, %v1736
        %v1752 = vshrl.u32 1326507024, %v1737
        %v1753 = vor.u32 %v1751, %v1752
        %vm1754 = vcmp.lt.s32.totalorder %v1735, 1
        %vm1755 = vcmp.lt.s32.totalorder %v1735, 2
        %vm1756 = vcmp.lt.s32.totalorder %v1735, 3
        %vm1757 = vcmp.lt.s32.totalorder %v1735, 4
        %v1758 = vsel %vm1754, %v1738, %v1741
        %v1759 = vsel %vm1757, %v1747, 2102212464
        %v1760 = vsel %vm1756, %v1744, %v1759
        %v1761 = vsel %vm1755, %v1758, %v1760
        %v1762 = vsel %vm1754, %v1741, %v1744
        %v1763 = vsel %vm1757, %v1750, 920167782
        %v1764 = vsel %vm1756, %v1747, %v1763
        %v1765 = vsel %vm1755, %v1762, %v1764
        %v1766 = vsel %vm1754, %v1744, %v1747
        %v1767 = vsel %vm1757, %v1753, 1326507024
        %v1768 = vsel %vm1756, %v1750, %v1767
        %v1769 = vsel %vm1755, %v1766, %v1768
        %v1770 = vshll.u32 %v1730, 8
        %v1771 = vmul.u32.u64.compose %v1770, %v1769
        %v1772 = vextract.low.u32 %v1771
        %v1773 = vextract.high.u32 %v1771
        %v1774 = vmul.u32.u64.compose %v1770, %v1765
        %v1775 = vextract.low.u32 %v1774
        %v1776 = vextract.high.u32 %v1774
        %v1777 = vmul.u32 %v1770, %v1761
        %v1778 = vadd.s32 %v1773, %v1775
        %vm1779 = vc.u32 %v1773, %v1775
        %v1780 = vadd.s32 %v1776, 1
        %v1781 = vsel %vm1779, %v1780, %v1776
        %v1782 = vadd.s32 %v1777, %v1781
        %v1783 = vadd.s32 %v1782, 536870912
        %v1784 = vshrl.u32 %v1783, 30
        %v1785 = vshll.u32 %v1784, 30
        %v1786 = vsub.s32 %v1782, %v1785
        %vm1787 = vcmp.lt.s32.totalorder %v1786, 0
        %v1788 = vsub.s32 0, %v1786
        %v1789 = vsel %vm1787, %v1788, %v1786
        %v1790 = vclz %v1789
        %v1791 = vsub.s32 %v1790, 2
        %vm1792 = vcmp.gt.s32.totalorder 0, %v1791
        %v1793 = vsel %vm1792, 0, %v1791
        %v1794 = vsub.s32 32, %v1793
        %v1795 = vshll.u32 %v1786, %v1793
        %v1796 = vshrl.u32 %v1778, %v1794
        %v1797 = vor.u32 %v1795, %v1796
        %v1798 = vsub.s32 4294967266, %v1793
        %v1799 = vadd.s32 %v1798, 127
        %v1800 = vshll.u32 %v1799, 23
        %v1801 = vor.u32 4788187, %v1800
        %v1802 = vand.u32 2147483647, %v1801
        %v1804 = vcvt.s32.f32 %v1797
        %v1805 = vmul.f32 %v1804, %v1802
        %v1806 = vxor.u32 %v1805, 2147483648
        %v1807 = vsel %vm1724, %v1806, %v1805
        %v1808 = vsub.s32 4, %v1784
        %v1809 = vsel %vm1724, %v1808, %v1784
        %v1810 = vsel %vm1723, %v660, %v1807
        %v1811 = vsel %vm1723, 0, %v1809
        %v1812 = vcosq.f32.pop %v1810
        %v1813 = vsinq.f32.pop %v1810
        %vm1814 = vweird.f32 %v660
        %v1815 = vadd.s32 %v1811, 3
        %v1816 = vand.u32 %v1815, 3
        %vm1817 = vcmp.lt.s32.totalorder %v1816, 2
        %vm1818 = vcmp.eq.s32.totalorder %v1816, 0
        %v1819 = vxor.u32 %v1813, 2147483648
        %v1820 = vsel %vm1818, %v1812, %v1819
        %vm1821 = vcmp.eq.s32.totalorder %v1816, 2
        %v1822 = vxor.u32 %v1812, 2147483648
        %v1823 = vsel %vm1821, %v1822, %v1813
        %v1824 = vsel %vm1817, %v1820, %v1823
        %v1825 = vsel %vm1814, nan, %v1824
        %v1826 = vand.u32 2147483647, %v661
        %vm1827 = vcmp.le.f32.partialorder %v1826, 0.7853982
        %vm1828 = vcmp.lt.s32.totalorder %v661, 0
        %v1829 = vand.u32 %v661, 2139095040
        %v1830 = vshrl.u32 %v1829, 23
        %v1831 = vsub.s32 %v1830, 127
        %v1832 = vand.u32 2147483647, %v661
        %v1833 = vand.u32 %v1832, 8388607
        %v1834 = vor.u32 %v1833, 8388608
        %v1835 = vsub.s32 0, %v1834
        %v1836 = vadd.s32 %v1831, 1
        %vm1837 = vcmp.gt.s32.totalorder %v1836, 0
        %v1838 = vsel %vm1837, %v1836, 0
        %v1839 = vshrl.u32 %v1838, 5
        %v1840 = vand.u32 %v1838, 31
        %v1841 = vsub.s32 32, %v1840
        %v1842 = vshrl.u32 683565275, %v1841
        %v1843 = vshll.u32 683565275, %v1840
        %v1844 = vshrl.u32 2475754826, %v1841
        %v1845 = vor.u32 %v1843, %v1844
        %v1846 = vshll.u32 2475754826, %v1840
        %v1847 = vshrl.u32 2131351028, %v1841
        %v1848 = vor.u32 %v1846, %v1847
        %v1849 = vshll.u32 2131351028, %v1840
        %v1850 = vshrl.u32 2102212464, %v1841
        %v1851 = vor.u32 %v1849, %v1850
        %v1852 = vshll.u32 2102212464, %v1840
        %v1853 = vshrl.u32 920167782, %v1841
        %v1854 = vor.u32 %v1852, %v1853
        %v1855 = vshll.u32 920167782, %v1840
        %v1856 = vshrl.u32 1326507024, %v1841
        %v1857 = vor.u32 %v1855, %v1856
        %vm1858 = vcmp.lt.s32.totalorder %v1839, 1
        %vm1859 = vcmp.lt.s32.totalorder %v1839, 2
        %vm1860 = vcmp.lt.s32.totalorder %v1839, 3
        %vm1861 = vcmp.lt.s32.totalorder %v1839, 4
        %v1862 = vsel %vm1858, %v1842, %v1845
        %v1863 = vsel %vm1861, %v1851, 2102212464
        %v1864 = vsel %vm1860, %v1848, %v1863
        %v1865 = vsel %vm1859, %v1862, %v1864
        %v1866 = vsel %vm1858, %v1845, %v1848
        %v1867 = vsel %vm1861, %v1854, 920167782
        %v1868 = vsel %vm1860, %v1851, %v1867
        %v1869 = vsel %vm1859, %v1866, %v1868
        %v1870 = vsel %vm1858, %v1848, %v1851
        %v1871 = vsel %vm1861, %v1857, 1326507024
        %v1872 = vsel %vm1860, %v1854, %v1871
        %v1873 = vsel %vm1859, %v1870, %v1872
        %v1874 = vshll.u32 %v1834, 8
        %v1875 = vmul.u32.u64.compose %v1874, %v1873
        %v1876 = vextract.low.u32 %v1875
        %v1877 = vextract.high.u32 %v1875
        %v1878 = vmul.u32.u64.compose %v1874, %v1869
        %v1879 = vextract.low.u32 %v1878
        %v1880 = vextract.high.u32 %v1878
        %v1881 = vmul.u32 %v1874, %v1865
        %v1882 = vadd.s32 %v1877, %v1879
        %vm1883 = vc.u32 %v1877, %v1879
        %v1884 = vadd.s32 %v1880, 1
        %v1885 = vsel %vm1883, %v1884, %v1880
        %v1886 = vadd.s32 %v1881, %v1885
        %v1887 = vadd.s32 %v1886, 536870912
        %v1888 = vshrl.u32 %v1887, 30
        %v1889 = vshll.u32 %v1888, 30
        %v1890 = vsub.s32 %v1886, %v1889
        %vm1891 = vcmp.lt.s32.totalorder %v1890, 0
        %v1892 = vsub.s32 0, %v1890
        %v1893 = vsel %vm1891, %v1892, %v1890
        %v1894 = vclz %v1893
        %v1895 = vsub.s32 %v1894, 2
        %vm1896 = vcmp.gt.s32.totalorder 0, %v1895
        %v1897 = vsel %vm1896, 0, %v1895
        %v1898 = vsub.s32 32, %v1897
        %v1899 = vshll.u32 %v1890, %v1897
        %v1900 = vshrl.u32 %v1882, %v1898
        %v1901 = vor.u32 %v1899, %v1900
        %v1902 = vsub.s32 4294967266, %v1897
        %v1903 = vadd.s32 %v1902, 127
        %v1904 = vshll.u32 %v1903, 23
        %v1905 = vor.u32 4788187, %v1904
        %v1906 = vand.u32 2147483647, %v1905
        %v1908 = vcvt.s32.f32 %v1901
        %v1909 = vmul.f32 %v1908, %v1906
        %v1910 = vxor.u32 %v1909, 2147483648
        %v1911 = vsel %vm1828, %v1910, %v1909
        %v1912 = vsub.s32 4, %v1888
        %v1913 = vsel %vm1828, %v1912, %v1888
        %v1914 = vsel %vm1827, %v661, %v1911
        %v1915 = vsel %vm1827, 0, %v1913
        %v1916 = vcosq.f32.pop %v1914
        %v1917 = vsinq.f32.pop %v1914
        %vm1918 = vweird.f32 %v661
        %v1919 = vadd.s32 %v1915, 3
        %v1920 = vand.u32 %v1919, 3
        %vm1921 = vcmp.lt.s32.totalorder %v1920, 2
        %vm1922 = vcmp.eq.s32.totalorder %v1920, 0
        %v1923 = vxor.u32 %v1917, 2147483648
        %v1924 = vsel %vm1922, %v1916, %v1923
        %vm1925 = vcmp.eq.s32.totalorder %v1920, 2
        %v1926 = vxor.u32 %v1916, 2147483648
        %v1927 = vsel %vm1925, %v1926, %v1917
        %v1928 = vsel %vm1921, %v1924, %v1927
        %v1929 = vsel %vm1918, nan, %v1928
        %v1930 = vand.u32 2147483647, %v662
        %vm1931 = vcmp.le.f32.partialorder %v1930, 0.7853982
        %vm1932 = vcmp.lt.s32.totalorder %v662, 0
        %v1933 = vand.u32 %v662, 2139095040
        %v1934 = vshrl.u32 %v1933, 23
        %v1935 = vsub.s32 %v1934, 127
        %v1936 = vand.u32 2147483647, %v662
        %v1937 = vand.u32 %v1936, 8388607
        %v1938 = vor.u32 %v1937, 8388608
        %v1939 = vsub.s32 0, %v1938
        %v1940 = vadd.s32 %v1935, 1
        %vm1941 = vcmp.gt.s32.totalorder %v1940, 0
        %v1942 = vsel %vm1941, %v1940, 0
        %v1943 = vshrl.u32 %v1942, 5
        %v1944 = vand.u32 %v1942, 31
        %v1945 = vsub.s32 32, %v1944
        %v1946 = vshrl.u32 683565275, %v1945
        %v1947 = vshll.u32 683565275, %v1944
        %v1948 = vshrl.u32 2475754826, %v1945
        %v1949 = vor.u32 %v1947, %v1948
        %v1950 = vshll.u32 2475754826, %v1944
        %v1951 = vshrl.u32 2131351028, %v1945
        %v1952 = vor.u32 %v1950, %v1951
        %v1953 = vshll.u32 2131351028, %v1944
        %v1954 = vshrl.u32 2102212464, %v1945
        %v1955 = vor.u32 %v1953, %v1954
        %v1956 = vshll.u32 2102212464, %v1944
        %v1957 = vshrl.u32 920167782, %v1945
        %v1958 = vor.u32 %v1956, %v1957
        %v1959 = vshll.u32 920167782, %v1944
        %v1960 = vshrl.u32 1326507024, %v1945
        %v1961 = vor.u32 %v1959, %v1960
        %vm1962 = vcmp.lt.s32.totalorder %v1943, 1
        %vm1963 = vcmp.lt.s32.totalorder %v1943, 2
        %vm1964 = vcmp.lt.s32.totalorder %v1943, 3
        %vm1965 = vcmp.lt.s32.totalorder %v1943, 4
        %v1966 = vsel %vm1962, %v1946, %v1949
        %v1967 = vsel %vm1965, %v1955, 2102212464
        %v1968 = vsel %vm1964, %v1952, %v1967
        %v1969 = vsel %vm1963, %v1966, %v1968
        %v1970 = vsel %vm1962, %v1949, %v1952
        %v1971 = vsel %vm1965, %v1958, 920167782
        %v1972 = vsel %vm1964, %v1955, %v1971
        %v1973 = vsel %vm1963, %v1970, %v1972
        %v1974 = vsel %vm1962, %v1952, %v1955
        %v1975 = vsel %vm1965, %v1961, 1326507024
        %v1976 = vsel %vm1964, %v1958, %v1975
        %v1977 = vsel %vm1963, %v1974, %v1976
        %v1978 = vshll.u32 %v1938, 8
        %v1979 = vmul.u32.u64.compose %v1978, %v1977
        %v1980 = vextract.low.u32 %v1979
        %v1981 = vextract.high.u32 %v1979
        %v1982 = vmul.u32.u64.compose %v1978, %v1973
        %v1983 = vextract.low.u32 %v1982
        %v1984 = vextract.high.u32 %v1982
        %v1985 = vmul.u32 %v1978, %v1969
        %v1986 = vadd.s32 %v1981, %v1983
        %vm1987 = vc.u32 %v1981, %v1983
        %v1988 = vadd.s32 %v1984, 1
        %v1989 = vsel %vm1987, %v1988, %v1984
        %v1990 = vadd.s32 %v1985, %v1989
        %v1991 = vadd.s32 %v1990, 536870912
        %v1992 = vshrl.u32 %v1991, 30
        %v1993 = vshll.u32 %v1992, 30
        %v1994 = vsub.s32 %v1990, %v1993
        %vm1995 = vcmp.lt.s32.totalorder %v1994, 0
        %v1996 = vsub.s32 0, %v1994
        %v1997 = vsel %vm1995, %v1996, %v1994
        %v1998 = vclz %v1997
        %v1999 = vsub.s32 %v1998, 2
        %vm2000 = vcmp.gt.s32.totalorder 0, %v1999
        %v2001 = vsel %vm2000, 0, %v1999
        %v2002 = vsub.s32 32, %v2001
        %v2003 = vshll.u32 %v1994, %v2001
        %v2004 = vshrl.u32 %v1986, %v2002
        %v2005 = vor.u32 %v2003, %v2004
        %v2006 = vsub.s32 4294967266, %v2001
        %v2007 = vadd.s32 %v2006, 127
        %v2008 = vshll.u32 %v2007, 23
        %v2009 = vor.u32 4788187, %v2008
        %v2010 = vand.u32 2147483647, %v2009
        %v2012 = vcvt.s32.f32 %v2005
        %v2013 = vmul.f32 %v2012, %v2010
        %v2014 = vxor.u32 %v2013, 2147483648
        %v2015 = vsel %vm1932, %v2014, %v2013
        %v2016 = vsub.s32 4, %v1992
        %v2017 = vsel %vm1932, %v2016, %v1992
        %v2018 = vsel %vm1931, %v662, %v2015
        %v2019 = vsel %vm1931, 0, %v2017
        %v2020 = vcosq.f32.pop %v2018
        %v2021 = vsinq.f32.pop %v2018
        %vm2022 = vweird.f32 %v662
        %v2023 = vadd.s32 %v2019, 3
        %v2024 = vand.u32 %v2023, 3
        %vm2025 = vcmp.lt.s32.totalorder %v2024, 2
        %vm2026 = vcmp.eq.s32.totalorder %v2024, 0
        %v2027 = vxor.u32 %v2021, 2147483648
        %v2028 = vsel %vm2026, %v2020, %v2027
        %vm2029 = vcmp.eq.s32.totalorder %v2024, 2
        %v2030 = vxor.u32 %v2020, 2147483648
        %v2031 = vsel %vm2029, %v2030, %v2021
        %v2032 = vsel %vm2025, %v2028, %v2031
        %v2033 = vsel %vm2022, nan, %v2032
        %v2034 = vand.u32 2147483647, %v663
        %vm2035 = vcmp.le.f32.partialorder %v2034, 0.7853982
        %vm2036 = vcmp.lt.s32.totalorder %v663, 0
        %v2037 = vand.u32 %v663, 2139095040
        %v2038 = vshrl.u32 %v2037, 23
        %v2039 = vsub.s32 %v2038, 127
        %v2040 = vand.u32 2147483647, %v663
        %v2041 = vand.u32 %v2040, 8388607
        %v2042 = vor.u32 %v2041, 8388608
        %v2043 = vsub.s32 0, %v2042
        %v2044 = vadd.s32 %v2039, 1
        %vm2045 = vcmp.gt.s32.totalorder %v2044, 0
        %v2046 = vsel %vm2045, %v2044, 0
        %v2047 = vshrl.u32 %v2046, 5
        %v2048 = vand.u32 %v2046, 31
        %v2049 = vsub.s32 32, %v2048
        %v2050 = vshrl.u32 683565275, %v2049
        %v2051 = vshll.u32 683565275, %v2048
        %v2052 = vshrl.u32 2475754826, %v2049
        %v2053 = vor.u32 %v2051, %v2052
        %v2054 = vshll.u32 2475754826, %v2048
        %v2055 = vshrl.u32 2131351028, %v2049
        %v2056 = vor.u32 %v2054, %v2055
        %v2057 = vshll.u32 2131351028, %v2048
        %v2058 = vshrl.u32 2102212464, %v2049
        %v2059 = vor.u32 %v2057, %v2058
        %v2060 = vshll.u32 2102212464, %v2048
        %v2061 = vshrl.u32 920167782, %v2049
        %v2062 = vor.u32 %v2060, %v2061
        %v2063 = vshll.u32 920167782, %v2048
        %v2064 = vshrl.u32 1326507024, %v2049
        %v2065 = vor.u32 %v2063, %v2064
        %vm2066 = vcmp.lt.s32.totalorder %v2047, 1
        %vm2067 = vcmp.lt.s32.totalorder %v2047, 2
        %vm2068 = vcmp.lt.s32.totalorder %v2047, 3
        %vm2069 = vcmp.lt.s32.totalorder %v2047, 4
        %v2070 = vsel %vm2066, %v2050, %v2053
        %v2071 = vsel %vm2069, %v2059, 2102212464
        %v2072 = vsel %vm2068, %v2056, %v2071
        %v2073 = vsel %vm2067, %v2070, %v2072
        %v2074 = vsel %vm2066, %v2053, %v2056
        %v2075 = vsel %vm2069, %v2062, 920167782
        %v2076 = vsel %vm2068, %v2059, %v2075
        %v2077 = vsel %vm2067, %v2074, %v2076
        %v2078 = vsel %vm2066, %v2056, %v2059
        %v2079 = vsel %vm2069, %v2065, 1326507024
        %v2080 = vsel %vm2068, %v2062, %v2079
        %v2081 = vsel %vm2067, %v2078, %v2080
        %v2082 = vshll.u32 %v2042, 8
        %v2083 = vmul.u32.u64.compose %v2082, %v2081
        %v2084 = vextract.low.u32 %v2083
        %v2085 = vextract.high.u32 %v2083
        %v2086 = vmul.u32.u64.compose %v2082, %v2077
        %v2087 = vextract.low.u32 %v2086
        %v2088 = vextract.high.u32 %v2086
        %v2089 = vmul.u32 %v2082, %v2073
        %v2090 = vadd.s32 %v2085, %v2087
        %vm2091 = vc.u32 %v2085, %v2087
        %v2092 = vadd.s32 %v2088, 1
        %v2093 = vsel %vm2091, %v2092, %v2088
        %v2094 = vadd.s32 %v2089, %v2093
        %v2095 = vadd.s32 %v2094, 536870912
        %v2096 = vshrl.u32 %v2095, 30
        %v2097 = vshll.u32 %v2096, 30
        %v2098 = vsub.s32 %v2094, %v2097
        %vm2099 = vcmp.lt.s32.totalorder %v2098, 0
        %v2100 = vsub.s32 0, %v2098
        %v2101 = vsel %vm2099, %v2100, %v2098
        %v2102 = vclz %v2101
        %v2103 = vsub.s32 %v2102, 2
        %vm2104 = vcmp.gt.s32.totalorder 0, %v2103
        %v2105 = vsel %vm2104, 0, %v2103
        %v2106 = vsub.s32 32, %v2105
        %v2107 = vshll.u32 %v2098, %v2105
        %v2108 = vshrl.u32 %v2090, %v2106
        %v2109 = vor.u32 %v2107, %v2108
        %v2110 = vsub.s32 4294967266, %v2105
        %v2111 = vadd.s32 %v2110, 127
        %v2112 = vshll.u32 %v2111, 23
        %v2113 = vor.u32 4788187, %v2112
        %v2114 = vand.u32 2147483647, %v2113
        %v2116 = vcvt.s32.f32 %v2109
        %v2117 = vmul.f32 %v2116, %v2114
        %v2118 = vxor.u32 %v2117, 2147483648
        %v2119 = vsel %vm2036, %v2118, %v2117
        %v2120 = vsub.s32 4, %v2096
        %v2121 = vsel %vm2036, %v2120, %v2096
        %v2122 = vsel %vm2035, %v663, %v2119
        %v2123 = vsel %vm2035, 0, %v2121
        %v2124 = vcosq.f32.pop %v2122
        %v2125 = vsinq.f32.pop %v2122
        %vm2126 = vweird.f32 %v663
        %v2127 = vadd.s32 %v2123, 3
        %v2128 = vand.u32 %v2127, 3
        %vm2129 = vcmp.lt.s32.totalorder %v2128, 2
        %vm2130 = vcmp.eq.s32.totalorder %v2128, 0
        %v2131 = vxor.u32 %v2125, 2147483648
        %v2132 = vsel %vm2130, %v2124, %v2131
        %vm2133 = vcmp.eq.s32.totalorder %v2128, 2
        %v2134 = vxor.u32 %v2124, 2147483648
        %v2135 = vsel %vm2133, %v2134, %v2125
        %v2136 = vsel %vm2129, %v2132, %v2135
        %v2137 = vsel %vm2126, nan, %v2136
        %v2138 = vand.u32 2147483647, %v664
        %vm2139 = vcmp.le.f32.partialorder %v2138, 0.7853982
        %vm2140 = vcmp.lt.s32.totalorder %v664, 0
        %v2141 = vand.u32 %v664, 2139095040
        %v2142 = vshrl.u32 %v2141, 23
        %v2143 = vsub.s32 %v2142, 127
        %v2144 = vand.u32 2147483647, %v664
        %v2145 = vand.u32 %v2144, 8388607
        %v2146 = vor.u32 %v2145, 8388608
        %v2147 = vsub.s32 0, %v2146
        %v2148 = vadd.s32 %v2143, 1
        %vm2149 = vcmp.gt.s32.totalorder %v2148, 0
        %v2150 = vsel %vm2149, %v2148, 0
        %v2151 = vshrl.u32 %v2150, 5
        %v2152 = vand.u32 %v2150, 31
        %v2153 = vsub.s32 32, %v2152
        %v2154 = vshrl.u32 683565275, %v2153
        %v2155 = vshll.u32 683565275, %v2152
        %v2156 = vshrl.u32 2475754826, %v2153
        %v2157 = vor.u32 %v2155, %v2156
        %v2158 = vshll.u32 2475754826, %v2152
        %v2159 = vshrl.u32 2131351028, %v2153
        %v2160 = vor.u32 %v2158, %v2159
        %v2161 = vshll.u32 2131351028, %v2152
        %v2162 = vshrl.u32 2102212464, %v2153
        %v2163 = vor.u32 %v2161, %v2162
        %v2164 = vshll.u32 2102212464, %v2152
        %v2165 = vshrl.u32 920167782, %v2153
        %v2166 = vor.u32 %v2164, %v2165
        %v2167 = vshll.u32 920167782, %v2152
        %v2168 = vshrl.u32 1326507024, %v2153
        %v2169 = vor.u32 %v2167, %v2168
        %vm2170 = vcmp.lt.s32.totalorder %v2151, 1
        %vm2171 = vcmp.lt.s32.totalorder %v2151, 2
        %vm2172 = vcmp.lt.s32.totalorder %v2151, 3
        %vm2173 = vcmp.lt.s32.totalorder %v2151, 4
        %v2174 = vsel %vm2170, %v2154, %v2157
        %v2175 = vsel %vm2173, %v2163, 2102212464
        %v2176 = vsel %vm2172, %v2160, %v2175
        %v2177 = vsel %vm2171, %v2174, %v2176
        %v2178 = vsel %vm2170, %v2157, %v2160
        %v2179 = vsel %vm2173, %v2166, 920167782
        %v2180 = vsel %vm2172, %v2163, %v2179
        %v2181 = vsel %vm2171, %v2178, %v2180
        %v2182 = vsel %vm2170, %v2160, %v2163
        %v2183 = vsel %vm2173, %v2169, 1326507024
        %v2184 = vsel %vm2172, %v2166, %v2183
        %v2185 = vsel %vm2171, %v2182, %v2184
        %v2186 = vshll.u32 %v2146, 8
        %v2187 = vmul.u32.u64.compose %v2186, %v2185
        %v2188 = vextract.low.u32 %v2187
        %v2189 = vextract.high.u32 %v2187
        %v2190 = vmul.u32.u64.compose %v2186, %v2181
        %v2191 = vextract.low.u32 %v2190
        %v2192 = vextract.high.u32 %v2190
        %v2193 = vmul.u32 %v2186, %v2177
        %v2194 = vadd.s32 %v2189, %v2191
        %vm2195 = vc.u32 %v2189, %v2191
        %v2196 = vadd.s32 %v2192, 1
        %v2197 = vsel %vm2195, %v2196, %v2192
        %v2198 = vadd.s32 %v2193, %v2197
        %v2199 = vadd.s32 %v2198, 536870912
        %v2200 = vshrl.u32 %v2199, 30
        %v2201 = vshll.u32 %v2200, 30
        %v2202 = vsub.s32 %v2198, %v2201
        %vm2203 = vcmp.lt.s32.totalorder %v2202, 0
        %v2204 = vsub.s32 0, %v2202
        %v2205 = vsel %vm2203, %v2204, %v2202
        %v2206 = vclz %v2205
        %v2207 = vsub.s32 %v2206, 2
        %vm2208 = vcmp.gt.s32.totalorder 0, %v2207
        %v2209 = vsel %vm2208, 0, %v2207
        %v2210 = vsub.s32 32, %v2209
        %v2211 = vshll.u32 %v2202, %v2209
        %v2212 = vshrl.u32 %v2194, %v2210
        %v2213 = vor.u32 %v2211, %v2212
        %v2214 = vsub.s32 4294967266, %v2209
        %v2215 = vadd.s32 %v2214, 127
        %v2216 = vshll.u32 %v2215, 23
        %v2217 = vor.u32 4788187, %v2216
        %v2218 = vand.u32 2147483647, %v2217
        %v2220 = vcvt.s32.f32 %v2213
        %v2221 = vmul.f32 %v2220, %v2218
        %v2222 = vxor.u32 %v2221, 2147483648
        %v2223 = vsel %vm2140, %v2222, %v2221
        %v2224 = vsub.s32 4, %v2200
        %v2225 = vsel %vm2140, %v2224, %v2200
        %v2226 = vsel %vm2139, %v664, %v2223
        %v2227 = vsel %vm2139, 0, %v2225
        %v2228 = vcosq.f32.pop %v2226
        %v2229 = vsinq.f32.pop %v2226
        %vm2230 = vweird.f32 %v664
        %v2231 = vadd.s32 %v2227, 3
        %v2232 = vand.u32 %v2231, 3
        %vm2233 = vcmp.lt.s32.totalorder %v2232, 2
        %vm2234 = vcmp.eq.s32.totalorder %v2232, 0
        %v2235 = vxor.u32 %v2229, 2147483648
        %v2236 = vsel %vm2234, %v2228, %v2235
        %vm2237 = vcmp.eq.s32.totalorder %v2232, 2
        %v2238 = vxor.u32 %v2228, 2147483648
        %v2239 = vsel %vm2237, %v2238, %v2229
        %v2240 = vsel %vm2233, %v2236, %v2239
        %v2241 = vsel %vm2230, nan, %v2240
        %v2242 = vand.u32 2147483647, %v665
        %vm2243 = vcmp.le.f32.partialorder %v2242, 0.7853982
        %vm2244 = vcmp.lt.s32.totalorder %v665, 0
        %v2245 = vand.u32 %v665, 2139095040
        %v2246 = vshrl.u32 %v2245, 23
        %v2247 = vsub.s32 %v2246, 127
        %v2248 = vand.u32 2147483647, %v665
        %v2249 = vand.u32 %v2248, 8388607
        %v2250 = vor.u32 %v2249, 8388608
        %v2251 = vsub.s32 0, %v2250
        %v2252 = vadd.s32 %v2247, 1
        %vm2253 = vcmp.gt.s32.totalorder %v2252, 0
        %v2254 = vsel %vm2253, %v2252, 0
        %v2255 = vshrl.u32 %v2254, 5
        %v2256 = vand.u32 %v2254, 31
        %v2257 = vsub.s32 32, %v2256
        %v2258 = vshrl.u32 683565275, %v2257
        %v2259 = vshll.u32 683565275, %v2256
        %v2260 = vshrl.u32 2475754826, %v2257
        %v2261 = vor.u32 %v2259, %v2260
        %v2262 = vshll.u32 2475754826, %v2256
        %v2263 = vshrl.u32 2131351028, %v2257
        %v2264 = vor.u32 %v2262, %v2263
        %v2265 = vshll.u32 2131351028, %v2256
        %v2266 = vshrl.u32 2102212464, %v2257
        %v2267 = vor.u32 %v2265, %v2266
        %v2268 = vshll.u32 2102212464, %v2256
        %v2269 = vshrl.u32 920167782, %v2257
        %v2270 = vor.u32 %v2268, %v2269
        %v2271 = vshll.u32 920167782, %v2256
        %v2272 = vshrl.u32 1326507024, %v2257
        %v2273 = vor.u32 %v2271, %v2272
        %vm2274 = vcmp.lt.s32.totalorder %v2255, 1
        %vm2275 = vcmp.lt.s32.totalorder %v2255, 2
        %vm2276 = vcmp.lt.s32.totalorder %v2255, 3
        %vm2277 = vcmp.lt.s32.totalorder %v2255, 4
        %v2278 = vsel %vm2274, %v2258, %v2261
        %v2279 = vsel %vm2277, %v2267, 2102212464
        %v2280 = vsel %vm2276, %v2264, %v2279
        %v2281 = vsel %vm2275, %v2278, %v2280
        %v2282 = vsel %vm2274, %v2261, %v2264
        %v2283 = vsel %vm2277, %v2270, 920167782
        %v2284 = vsel %vm2276, %v2267, %v2283
        %v2285 = vsel %vm2275, %v2282, %v2284
        %v2286 = vsel %vm2274, %v2264, %v2267
        %v2287 = vsel %vm2277, %v2273, 1326507024
        %v2288 = vsel %vm2276, %v2270, %v2287
        %v2289 = vsel %vm2275, %v2286, %v2288
        %v2290 = vshll.u32 %v2250, 8
        %v2291 = vmul.u32.u64.compose %v2290, %v2289
        %v2292 = vextract.low.u32 %v2291
        %v2293 = vextract.high.u32 %v2291
        %v2294 = vmul.u32.u64.compose %v2290, %v2285
        %v2295 = vextract.low.u32 %v2294
        %v2296 = vextract.high.u32 %v2294
        %v2297 = vmul.u32 %v2290, %v2281
        %v2298 = vadd.s32 %v2293, %v2295
        %vm2299 = vc.u32 %v2293, %v2295
        %v2300 = vadd.s32 %v2296, 1
        %v2301 = vsel %vm2299, %v2300, %v2296
        %v2302 = vadd.s32 %v2297, %v2301
        %v2303 = vadd.s32 %v2302, 536870912
        %v2304 = vshrl.u32 %v2303, 30
        %v2305 = vshll.u32 %v2304, 30
        %v2306 = vsub.s32 %v2302, %v2305
        %vm2307 = vcmp.lt.s32.totalorder %v2306, 0
        %v2308 = vsub.s32 0, %v2306
        %v2309 = vsel %vm2307, %v2308, %v2306
        %v2310 = vclz %v2309
        %v2311 = vsub.s32 %v2310, 2
        %vm2312 = vcmp.gt.s32.totalorder 0, %v2311
        %v2313 = vsel %vm2312, 0, %v2311
        %v2314 = vsub.s32 32, %v2313
        %v2315 = vshll.u32 %v2306, %v2313
        %v2316 = vshrl.u32 %v2298, %v2314
        %v2317 = vor.u32 %v2315, %v2316
        %v2318 = vsub.s32 4294967266, %v2313
        %v2319 = vadd.s32 %v2318, 127
        %v2320 = vshll.u32 %v2319, 23
        %v2321 = vor.u32 4788187, %v2320
        %v2322 = vand.u32 2147483647, %v2321
        %v2324 = vcvt.s32.f32 %v2317
        %v2325 = vmul.f32 %v2324, %v2322
        %v2326 = vxor.u32 %v2325, 2147483648
        %v2327 = vsel %vm2244, %v2326, %v2325
        %v2328 = vsub.s32 4, %v2304
        %v2329 = vsel %vm2244, %v2328, %v2304
        %v2330 = vsel %vm2243, %v665, %v2327
        %v2331 = vsel %vm2243, 0, %v2329
        %v2332 = vcosq.f32.pop %v2330
        %v2333 = vsinq.f32.pop %v2330
        %vm2334 = vweird.f32 %v665
        %v2335 = vadd.s32 %v2331, 3
        %v2336 = vand.u32 %v2335, 3
        %vm2337 = vcmp.lt.s32.totalorder %v2336, 2
        %vm2338 = vcmp.eq.s32.totalorder %v2336, 0
        %v2339 = vxor.u32 %v2333, 2147483648
        %v2340 = vsel %vm2338, %v2332, %v2339
        %vm2341 = vcmp.eq.s32.totalorder %v2336, 2
        %v2342 = vxor.u32 %v2332, 2147483648
        %v2343 = vsel %vm2341, %v2342, %v2333
        %v2344 = vsel %vm2337, %v2340, %v2343
        %v2345 = vsel %vm2334, nan, %v2344
        %v2346 = vand.u32 2147483647, %v666
        %vm2347 = vcmp.le.f32.partialorder %v2346, 0.7853982
        %vm2348 = vcmp.lt.s32.totalorder %v666, 0
        %v2349 = vand.u32 %v666, 2139095040
        %v2350 = vshrl.u32 %v2349, 23
        %v2351 = vsub.s32 %v2350, 127
        %v2352 = vand.u32 2147483647, %v666
        %v2353 = vand.u32 %v2352, 8388607
        %v2354 = vor.u32 %v2353, 8388608
        %v2355 = vsub.s32 0, %v2354
        %v2356 = vadd.s32 %v2351, 1
        %vm2357 = vcmp.gt.s32.totalorder %v2356, 0
        %v2358 = vsel %vm2357, %v2356, 0
        %v2359 = vshrl.u32 %v2358, 5
        %v2360 = vand.u32 %v2358, 31
        %v2361 = vsub.s32 32, %v2360
        %v2362 = vshrl.u32 683565275, %v2361
        %v2363 = vshll.u32 683565275, %v2360
        %v2364 = vshrl.u32 2475754826, %v2361
        %v2365 = vor.u32 %v2363, %v2364
        %v2366 = vshll.u32 2475754826, %v2360
        %v2367 = vshrl.u32 2131351028, %v2361
        %v2368 = vor.u32 %v2366, %v2367
        %v2369 = vshll.u32 2131351028, %v2360
        %v2370 = vshrl.u32 2102212464, %v2361
        %v2371 = vor.u32 %v2369, %v2370
        %v2372 = vshll.u32 2102212464, %v2360
        %v2373 = vshrl.u32 920167782, %v2361
        %v2374 = vor.u32 %v2372, %v2373
        %v2375 = vshll.u32 920167782, %v2360
        %v2376 = vshrl.u32 1326507024, %v2361
        %v2377 = vor.u32 %v2375, %v2376
        %vm2378 = vcmp.lt.s32.totalorder %v2359, 1
        %vm2379 = vcmp.lt.s32.totalorder %v2359, 2
        %vm2380 = vcmp.lt.s32.totalorder %v2359, 3
        %vm2381 = vcmp.lt.s32.totalorder %v2359, 4
        %v2382 = vsel %vm2378, %v2362, %v2365
        %v2383 = vsel %vm2381, %v2371, 2102212464
        %v2384 = vsel %vm2380, %v2368, %v2383
        %v2385 = vsel %vm2379, %v2382, %v2384
        %v2386 = vsel %vm2378, %v2365, %v2368
        %v2387 = vsel %vm2381, %v2374, 920167782
        %v2388 = vsel %vm2380, %v2371, %v2387
        %v2389 = vsel %vm2379, %v2386, %v2388
        %v2390 = vsel %vm2378, %v2368, %v2371
        %v2391 = vsel %vm2381, %v2377, 1326507024
        %v2392 = vsel %vm2380, %v2374, %v2391
        %v2393 = vsel %vm2379, %v2390, %v2392
        %v2394 = vshll.u32 %v2354, 8
        %v2395 = vmul.u32.u64.compose %v2394, %v2393
        %v2396 = vextract.low.u32 %v2395
        %v2397 = vextract.high.u32 %v2395
        %v2398 = vmul.u32.u64.compose %v2394, %v2389
        %v2399 = vextract.low.u32 %v2398
        %v2400 = vextract.high.u32 %v2398
        %v2401 = vmul.u32 %v2394, %v2385
        %v2402 = vadd.s32 %v2397, %v2399
        %vm2403 = vc.u32 %v2397, %v2399
        %v2404 = vadd.s32 %v2400, 1
        %v2405 = vsel %vm2403, %v2404, %v2400
        %v2406 = vadd.s32 %v2401, %v2405
        %v2407 = vadd.s32 %v2406, 536870912
        %v2408 = vshrl.u32 %v2407, 30
        %v2409 = vshll.u32 %v2408, 30
        %v2410 = vsub.s32 %v2406, %v2409
        %vm2411 = vcmp.lt.s32.totalorder %v2410, 0
        %v2412 = vsub.s32 0, %v2410
        %v2413 = vsel %vm2411, %v2412, %v2410
        %v2414 = vclz %v2413
        %v2415 = vsub.s32 %v2414, 2
        %vm2416 = vcmp.gt.s32.totalorder 0, %v2415
        %v2417 = vsel %vm2416, 0, %v2415
        %v2418 = vsub.s32 32, %v2417
        %v2419 = vshll.u32 %v2410, %v2417
        %v2420 = vshrl.u32 %v2402, %v2418
        %v2421 = vor.u32 %v2419, %v2420
        %v2422 = vsub.s32 4294967266, %v2417
        %v2423 = vadd.s32 %v2422, 127
        %v2424 = vshll.u32 %v2423, 23
        %v2425 = vor.u32 4788187, %v2424
        %v2426 = vand.u32 2147483647, %v2425
        %v2428 = vcvt.s32.f32 %v2421
        %v2429 = vmul.f32 %v2428, %v2426
        %v2430 = vxor.u32 %v2429, 2147483648
        %v2431 = vsel %vm2348, %v2430, %v2429
        %v2432 = vsub.s32 4, %v2408
        %v2433 = vsel %vm2348, %v2432, %v2408
        %v2434 = vsel %vm2347, %v666, %v2431
        %v2435 = vsel %vm2347, 0, %v2433
        %v2436 = vcosq.f32.pop %v2434
        %v2437 = vsinq.f32.pop %v2434
        %vm2438 = vweird.f32 %v666
        %v2439 = vadd.s32 %v2435, 3
        %v2440 = vand.u32 %v2439, 3
        %vm2441 = vcmp.lt.s32.totalorder %v2440, 2
        %vm2442 = vcmp.eq.s32.totalorder %v2440, 0
        %v2443 = vxor.u32 %v2437, 2147483648
        %v2444 = vsel %vm2442, %v2436, %v2443
        %vm2445 = vcmp.eq.s32.totalorder %v2440, 2
        %v2446 = vxor.u32 %v2436, 2147483648
        %v2447 = vsel %vm2445, %v2446, %v2437
        %v2448 = vsel %vm2441, %v2444, %v2447
        %v2449 = vsel %vm2438, nan, %v2448
        %v2450 = vand.u32 2147483647, %v667
        %vm2451 = vcmp.le.f32.partialorder %v2450, 0.7853982
        %vm2452 = vcmp.lt.s32.totalorder %v667, 0
        %v2453 = vand.u32 %v667, 2139095040
        %v2454 = vshrl.u32 %v2453, 23
        %v2455 = vsub.s32 %v2454, 127
        %v2456 = vand.u32 2147483647, %v667
        %v2457 = vand.u32 %v2456, 8388607
        %v2458 = vor.u32 %v2457, 8388608
        %v2459 = vsub.s32 0, %v2458
        %v2460 = vadd.s32 %v2455, 1
        %vm2461 = vcmp.gt.s32.totalorder %v2460, 0
        %v2462 = vsel %vm2461, %v2460, 0
        %v2463 = vshrl.u32 %v2462, 5
        %v2464 = vand.u32 %v2462, 31
        %v2465 = vsub.s32 32, %v2464
        %v2466 = vshrl.u32 683565275, %v2465
        %v2467 = vshll.u32 683565275, %v2464
        %v2468 = vshrl.u32 2475754826, %v2465
        %v2469 = vor.u32 %v2467, %v2468
        %v2470 = vshll.u32 2475754826, %v2464
        %v2471 = vshrl.u32 2131351028, %v2465
        %v2472 = vor.u32 %v2470, %v2471
        %v2473 = vshll.u32 2131351028, %v2464
        %v2474 = vshrl.u32 2102212464, %v2465
        %v2475 = vor.u32 %v2473, %v2474
        %v2476 = vshll.u32 2102212464, %v2464
        %v2477 = vshrl.u32 920167782, %v2465
        %v2478 = vor.u32 %v2476, %v2477
        %v2479 = vshll.u32 920167782, %v2464
        %v2480 = vshrl.u32 1326507024, %v2465
        %v2481 = vor.u32 %v2479, %v2480
        %vm2482 = vcmp.lt.s32.totalorder %v2463, 1
        %vm2483 = vcmp.lt.s32.totalorder %v2463, 2
        %vm2484 = vcmp.lt.s32.totalorder %v2463, 3
        %vm2485 = vcmp.lt.s32.totalorder %v2463, 4
        %v2486 = vsel %vm2482, %v2466, %v2469
        %v2487 = vsel %vm2485, %v2475, 2102212464
        %v2488 = vsel %vm2484, %v2472, %v2487
        %v2489 = vsel %vm2483, %v2486, %v2488
        %v2490 = vsel %vm2482, %v2469, %v2472
        %v2491 = vsel %vm2485, %v2478, 920167782
        %v2492 = vsel %vm2484, %v2475, %v2491
        %v2493 = vsel %vm2483, %v2490, %v2492
        %v2494 = vsel %vm2482, %v2472, %v2475
        %v2495 = vsel %vm2485, %v2481, 1326507024
        %v2496 = vsel %vm2484, %v2478, %v2495
        %v2497 = vsel %vm2483, %v2494, %v2496
        %v2498 = vshll.u32 %v2458, 8
        %v2499 = vmul.u32.u64.compose %v2498, %v2497
        %v2500 = vextract.low.u32 %v2499
        %v2501 = vextract.high.u32 %v2499
        %v2502 = vmul.u32.u64.compose %v2498, %v2493
        %v2503 = vextract.low.u32 %v2502
        %v2504 = vextract.high.u32 %v2502
        %v2505 = vmul.u32 %v2498, %v2489
        %v2506 = vadd.s32 %v2501, %v2503
        %vm2507 = vc.u32 %v2501, %v2503
        %v2508 = vadd.s32 %v2504, 1
        %v2509 = vsel %vm2507, %v2508, %v2504
        %v2510 = vadd.s32 %v2505, %v2509
        %v2511 = vadd.s32 %v2510, 536870912
        %v2512 = vshrl.u32 %v2511, 30
        %v2513 = vshll.u32 %v2512, 30
        %v2514 = vsub.s32 %v2510, %v2513
        %vm2515 = vcmp.lt.s32.totalorder %v2514, 0
        %v2516 = vsub.s32 0, %v2514
        %v2517 = vsel %vm2515, %v2516, %v2514
        %v2518 = vclz %v2517
        %v2519 = vsub.s32 %v2518, 2
        %vm2520 = vcmp.gt.s32.totalorder 0, %v2519
        %v2521 = vsel %vm2520, 0, %v2519
        %v2522 = vsub.s32 32, %v2521
        %v2523 = vshll.u32 %v2514, %v2521
        %v2524 = vshrl.u32 %v2506, %v2522
        %v2525 = vor.u32 %v2523, %v2524
        %v2526 = vsub.s32 4294967266, %v2521
        %v2527 = vadd.s32 %v2526, 127
        %v2528 = vshll.u32 %v2527, 23
        %v2529 = vor.u32 4788187, %v2528
        %v2530 = vand.u32 2147483647, %v2529
        %v2532 = vcvt.s32.f32 %v2525
        %v2533 = vmul.f32 %v2532, %v2530
        %v2534 = vxor.u32 %v2533, 2147483648
        %v2535 = vsel %vm2452, %v2534, %v2533
        %v2536 = vsub.s32 4, %v2512
        %v2537 = vsel %vm2452, %v2536, %v2512
        %v2538 = vsel %vm2451, %v667, %v2535
        %v2539 = vsel %vm2451, 0, %v2537
        %v2540 = vcosq.f32.pop %v2538
        %v2541 = vsinq.f32.pop %v2538
        %vm2542 = vweird.f32 %v667
        %v2543 = vadd.s32 %v2539, 3
        %v2544 = vand.u32 %v2543, 3
        %vm2545 = vcmp.lt.s32.totalorder %v2544, 2
        %vm2546 = vcmp.eq.s32.totalorder %v2544, 0
        %v2547 = vxor.u32 %v2541, 2147483648
        %v2548 = vsel %vm2546, %v2540, %v2547
        %vm2549 = vcmp.eq.s32.totalorder %v2544, 2
        %v2550 = vxor.u32 %v2540, 2147483648
        %v2551 = vsel %vm2549, %v2550, %v2541
        %v2552 = vsel %vm2545, %v2548, %v2551
        %v2553 = vsel %vm2542, nan, %v2552
        %v2554 = vand.u32 2147483647, %v668
        %vm2555 = vcmp.le.f32.partialorder %v2554, 0.7853982
        %vm2556 = vcmp.lt.s32.totalorder %v668, 0
        %v2557 = vand.u32 %v668, 2139095040
        %v2558 = vshrl.u32 %v2557, 23
        %v2559 = vsub.s32 %v2558, 127
        %v2560 = vand.u32 2147483647, %v668
        %v2561 = vand.u32 %v2560, 8388607
        %v2562 = vor.u32 %v2561, 8388608
        %v2563 = vsub.s32 0, %v2562
        %v2564 = vadd.s32 %v2559, 1
        %vm2565 = vcmp.gt.s32.totalorder %v2564, 0
        %v2566 = vsel %vm2565, %v2564, 0
        %v2567 = vshrl.u32 %v2566, 5
        %v2568 = vand.u32 %v2566, 31
        %v2569 = vsub.s32 32, %v2568
        %v2570 = vshrl.u32 683565275, %v2569
        %v2571 = vshll.u32 683565275, %v2568
        %v2572 = vshrl.u32 2475754826, %v2569
        %v2573 = vor.u32 %v2571, %v2572
        %v2574 = vshll.u32 2475754826, %v2568
        %v2575 = vshrl.u32 2131351028, %v2569
        %v2576 = vor.u32 %v2574, %v2575
        %v2577 = vshll.u32 2131351028, %v2568
        %v2578 = vshrl.u32 2102212464, %v2569
        %v2579 = vor.u32 %v2577, %v2578
        %v2580 = vshll.u32 2102212464, %v2568
        %v2581 = vshrl.u32 920167782, %v2569
        %v2582 = vor.u32 %v2580, %v2581
        %v2583 = vshll.u32 920167782, %v2568
        %v2584 = vshrl.u32 1326507024, %v2569
        %v2585 = vor.u32 %v2583, %v2584
        %vm2586 = vcmp.lt.s32.totalorder %v2567, 1
        %vm2587 = vcmp.lt.s32.totalorder %v2567, 2
        %vm2588 = vcmp.lt.s32.totalorder %v2567, 3
        %vm2589 = vcmp.lt.s32.totalorder %v2567, 4
        %v2590 = vsel %vm2586, %v2570, %v2573
        %v2591 = vsel %vm2589, %v2579, 2102212464
        %v2592 = vsel %vm2588, %v2576, %v2591
        %v2593 = vsel %vm2587, %v2590, %v2592
        %v2594 = vsel %vm2586, %v2573, %v2576
        %v2595 = vsel %vm2589, %v2582, 920167782
        %v2596 = vsel %vm2588, %v2579, %v2595
        %v2597 = vsel %vm2587, %v2594, %v2596
        %v2598 = vsel %vm2586, %v2576, %v2579
        %v2599 = vsel %vm2589, %v2585, 1326507024
        %v2600 = vsel %vm2588, %v2582, %v2599
        %v2601 = vsel %vm2587, %v2598, %v2600
        %v2602 = vshll.u32 %v2562, 8
        %v2603 = vmul.u32.u64.compose %v2602, %v2601
        %v2604 = vextract.low.u32 %v2603
        %v2605 = vextract.high.u32 %v2603
        %v2606 = vmul.u32.u64.compose %v2602, %v2597
        %v2607 = vextract.low.u32 %v2606
        %v2608 = vextract.high.u32 %v2606
        %v2609 = vmul.u32 %v2602, %v2593
        %v2610 = vadd.s32 %v2605, %v2607
        %vm2611 = vc.u32 %v2605, %v2607
        %v2612 = vadd.s32 %v2608, 1
        %v2613 = vsel %vm2611, %v2612, %v2608
        %v2614 = vadd.s32 %v2609, %v2613
        %v2615 = vadd.s32 %v2614, 536870912
        %v2616 = vshrl.u32 %v2615, 30
        %v2617 = vshll.u32 %v2616, 30
        %v2618 = vsub.s32 %v2614, %v2617
        %vm2619 = vcmp.lt.s32.totalorder %v2618, 0
        %v2620 = vsub.s32 0, %v2618
        %v2621 = vsel %vm2619, %v2620, %v2618
        %v2622 = vclz %v2621
        %v2623 = vsub.s32 %v2622, 2
        %vm2624 = vcmp.gt.s32.totalorder 0, %v2623
        %v2625 = vsel %vm2624, 0, %v2623
        %v2626 = vsub.s32 32, %v2625
        %v2627 = vshll.u32 %v2618, %v2625
        %v2628 = vshrl.u32 %v2610, %v2626
        %v2629 = vor.u32 %v2627, %v2628
        %v2630 = vsub.s32 4294967266, %v2625
        %v2631 = vadd.s32 %v2630, 127
        %v2632 = vshll.u32 %v2631, 23
        %v2633 = vor.u32 4788187, %v2632
        %v2634 = vand.u32 2147483647, %v2633
        %v2636 = vcvt.s32.f32 %v2629
        %v2637 = vmul.f32 %v2636, %v2634
        %v2638 = vxor.u32 %v2637, 2147483648
        %v2639 = vsel %vm2556, %v2638, %v2637
        %v2640 = vsub.s32 4, %v2616
        %v2641 = vsel %vm2556, %v2640, %v2616
        %v2642 = vsel %vm2555, %v668, %v2639
        %v2643 = vsel %vm2555, 0, %v2641
        %v2644 = vcosq.f32.pop %v2642
        %v2645 = vsinq.f32.pop %v2642
        %vm2646 = vweird.f32 %v668
        %v2647 = vadd.s32 %v2643, 3
        %v2648 = vand.u32 %v2647, 3
        %vm2649 = vcmp.lt.s32.totalorder %v2648, 2
        %vm2650 = vcmp.eq.s32.totalorder %v2648, 0
        %v2651 = vxor.u32 %v2645, 2147483648
        %v2652 = vsel %vm2650, %v2644, %v2651
        %vm2653 = vcmp.eq.s32.totalorder %v2648, 2
        %v2654 = vxor.u32 %v2644, 2147483648
        %v2655 = vsel %vm2653, %v2654, %v2645
        %v2656 = vsel %vm2649, %v2652, %v2655
        %v2657 = vsel %vm2646, nan, %v2656
        %v2658 = vand.u32 2147483647, %v669
        %vm2659 = vcmp.le.f32.partialorder %v2658, 0.7853982
        %vm2660 = vcmp.lt.s32.totalorder %v669, 0
        %v2661 = vand.u32 %v669, 2139095040
        %v2662 = vshrl.u32 %v2661, 23
        %v2663 = vsub.s32 %v2662, 127
        %v2664 = vand.u32 2147483647, %v669
        %v2665 = vand.u32 %v2664, 8388607
        %v2666 = vor.u32 %v2665, 8388608
        %v2667 = vsub.s32 0, %v2666
        %v2668 = vadd.s32 %v2663, 1
        %vm2669 = vcmp.gt.s32.totalorder %v2668, 0
        %v2670 = vsel %vm2669, %v2668, 0
        %v2671 = vshrl.u32 %v2670, 5
        %v2672 = vand.u32 %v2670, 31
        %v2673 = vsub.s32 32, %v2672
        %v2674 = vshrl.u32 683565275, %v2673
        %v2675 = vshll.u32 683565275, %v2672
        %v2676 = vshrl.u32 2475754826, %v2673
        %v2677 = vor.u32 %v2675, %v2676
        %v2678 = vshll.u32 2475754826, %v2672
        %v2679 = vshrl.u32 2131351028, %v2673
        %v2680 = vor.u32 %v2678, %v2679
        %v2681 = vshll.u32 2131351028, %v2672
        %v2682 = vshrl.u32 2102212464, %v2673
        %v2683 = vor.u32 %v2681, %v2682
        %v2684 = vshll.u32 2102212464, %v2672
        %v2685 = vshrl.u32 920167782, %v2673
        %v2686 = vor.u32 %v2684, %v2685
        %v2687 = vshll.u32 920167782, %v2672
        %v2688 = vshrl.u32 1326507024, %v2673
        %v2689 = vor.u32 %v2687, %v2688
        %vm2690 = vcmp.lt.s32.totalorder %v2671, 1
        %vm2691 = vcmp.lt.s32.totalorder %v2671, 2
        %vm2692 = vcmp.lt.s32.totalorder %v2671, 3
        %vm2693 = vcmp.lt.s32.totalorder %v2671, 4
        %v2694 = vsel %vm2690, %v2674, %v2677
        %v2695 = vsel %vm2693, %v2683, 2102212464
        %v2696 = vsel %vm2692, %v2680, %v2695
        %v2697 = vsel %vm2691, %v2694, %v2696
        %v2698 = vsel %vm2690, %v2677, %v2680
        %v2699 = vsel %vm2693, %v2686, 920167782
        %v2700 = vsel %vm2692, %v2683, %v2699
        %v2701 = vsel %vm2691, %v2698, %v2700
        %v2702 = vsel %vm2690, %v2680, %v2683
        %v2703 = vsel %vm2693, %v2689, 1326507024
        %v2704 = vsel %vm2692, %v2686, %v2703
        %v2705 = vsel %vm2691, %v2702, %v2704
        %v2706 = vshll.u32 %v2666, 8
        %v2707 = vmul.u32.u64.compose %v2706, %v2705
        %v2708 = vextract.low.u32 %v2707
        %v2709 = vextract.high.u32 %v2707
        %v2710 = vmul.u32.u64.compose %v2706, %v2701
        %v2711 = vextract.low.u32 %v2710
        %v2712 = vextract.high.u32 %v2710
        %v2713 = vmul.u32 %v2706, %v2697
        %v2714 = vadd.s32 %v2709, %v2711
        %vm2715 = vc.u32 %v2709, %v2711
        %v2716 = vadd.s32 %v2712, 1
        %v2717 = vsel %vm2715, %v2716, %v2712
        %v2718 = vadd.s32 %v2713, %v2717
        %v2719 = vadd.s32 %v2718, 536870912
        %v2720 = vshrl.u32 %v2719, 30
        %v2721 = vshll.u32 %v2720, 30
        %v2722 = vsub.s32 %v2718, %v2721
        %vm2723 = vcmp.lt.s32.totalorder %v2722, 0
        %v2724 = vsub.s32 0, %v2722
        %v2725 = vsel %vm2723, %v2724, %v2722
        %v2726 = vclz %v2725
        %v2727 = vsub.s32 %v2726, 2
        %vm2728 = vcmp.gt.s32.totalorder 0, %v2727
        %v2729 = vsel %vm2728, 0, %v2727
        %v2730 = vsub.s32 32, %v2729
        %v2731 = vshll.u32 %v2722, %v2729
        %v2732 = vshrl.u32 %v2714, %v2730
        %v2733 = vor.u32 %v2731, %v2732
        %v2734 = vsub.s32 4294967266, %v2729
        %v2735 = vadd.s32 %v2734, 127
        %v2736 = vshll.u32 %v2735, 23
        %v2737 = vor.u32 4788187, %v2736
        %v2738 = vand.u32 2147483647, %v2737
        %v2740 = vcvt.s32.f32 %v2733
        %v2741 = vmul.f32 %v2740, %v2738
        %v2742 = vxor.u32 %v2741, 2147483648
        %v2743 = vsel %vm2660, %v2742, %v2741
        %v2744 = vsub.s32 4, %v2720
        %v2745 = vsel %vm2660, %v2744, %v2720
        %v2746 = vsel %vm2659, %v669, %v2743
        %v2747 = vsel %vm2659, 0, %v2745
        %v2748 = vcosq.f32.pop %v2746
        %v2749 = vsinq.f32.pop %v2746
        %vm2750 = vweird.f32 %v669
        %v2751 = vadd.s32 %v2747, 3
        %v2752 = vand.u32 %v2751, 3
        %vm2753 = vcmp.lt.s32.totalorder %v2752, 2
        %vm2754 = vcmp.eq.s32.totalorder %v2752, 0
        %v2755 = vxor.u32 %v2749, 2147483648
        %v2756 = vsel %vm2754, %v2748, %v2755
        %vm2757 = vcmp.eq.s32.totalorder %v2752, 2
        %v2758 = vxor.u32 %v2748, 2147483648
        %v2759 = vsel %vm2757, %v2758, %v2749
        %v2760 = vsel %vm2753, %v2756, %v2759
        %v2761 = vsel %vm2750, nan, %v2760
        %v2762 = vand.u32 2147483647, %v670
        %vm2763 = vcmp.le.f32.partialorder %v2762, 0.7853982
        %vm2764 = vcmp.lt.s32.totalorder %v670, 0
        %v2765 = vand.u32 %v670, 2139095040
        %v2766 = vshrl.u32 %v2765, 23
        %v2767 = vsub.s32 %v2766, 127
        %v2768 = vand.u32 2147483647, %v670
        %v2769 = vand.u32 %v2768, 8388607
        %v2770 = vor.u32 %v2769, 8388608
        %v2771 = vsub.s32 0, %v2770
        %v2772 = vadd.s32 %v2767, 1
        %vm2773 = vcmp.gt.s32.totalorder %v2772, 0
        %v2774 = vsel %vm2773, %v2772, 0
        %v2775 = vshrl.u32 %v2774, 5
        %v2776 = vand.u32 %v2774, 31
        %v2777 = vsub.s32 32, %v2776
        %v2778 = vshrl.u32 683565275, %v2777
        %v2779 = vshll.u32 683565275, %v2776
        %v2780 = vshrl.u32 2475754826, %v2777
        %v2781 = vor.u32 %v2779, %v2780
        %v2782 = vshll.u32 2475754826, %v2776
        %v2783 = vshrl.u32 2131351028, %v2777
        %v2784 = vor.u32 %v2782, %v2783
        %v2785 = vshll.u32 2131351028, %v2776
        %v2786 = vshrl.u32 2102212464, %v2777
        %v2787 = vor.u32 %v2785, %v2786
        %v2788 = vshll.u32 2102212464, %v2776
        %v2789 = vshrl.u32 920167782, %v2777
        %v2790 = vor.u32 %v2788, %v2789
        %v2791 = vshll.u32 920167782, %v2776
        %v2792 = vshrl.u32 1326507024, %v2777
        %v2793 = vor.u32 %v2791, %v2792
        %vm2794 = vcmp.lt.s32.totalorder %v2775, 1
        %vm2795 = vcmp.lt.s32.totalorder %v2775, 2
        %vm2796 = vcmp.lt.s32.totalorder %v2775, 3
        %vm2797 = vcmp.lt.s32.totalorder %v2775, 4
        %v2798 = vsel %vm2794, %v2778, %v2781
        %v2799 = vsel %vm2797, %v2787, 2102212464
        %v2800 = vsel %vm2796, %v2784, %v2799
        %v2801 = vsel %vm2795, %v2798, %v2800
        %v2802 = vsel %vm2794, %v2781, %v2784
        %v2803 = vsel %vm2797, %v2790, 920167782
        %v2804 = vsel %vm2796, %v2787, %v2803
        %v2805 = vsel %vm2795, %v2802, %v2804
        %v2806 = vsel %vm2794, %v2784, %v2787
        %v2807 = vsel %vm2797, %v2793, 1326507024
        %v2808 = vsel %vm2796, %v2790, %v2807
        %v2809 = vsel %vm2795, %v2806, %v2808
        %v2810 = vshll.u32 %v2770, 8
        %v2811 = vmul.u32.u64.compose %v2810, %v2809
        %v2812 = vextract.low.u32 %v2811
        %v2813 = vextract.high.u32 %v2811
        %v2814 = vmul.u32.u64.compose %v2810, %v2805
        %v2815 = vextract.low.u32 %v2814
        %v2816 = vextract.high.u32 %v2814
        %v2817 = vmul.u32 %v2810, %v2801
        %v2818 = vadd.s32 %v2813, %v2815
        %vm2819 = vc.u32 %v2813, %v2815
        %v2820 = vadd.s32 %v2816, 1
        %v2821 = vsel %vm2819, %v2820, %v2816
        %v2822 = vadd.s32 %v2817, %v2821
        %v2823 = vadd.s32 %v2822, 536870912
        %v2824 = vshrl.u32 %v2823, 30
        %v2825 = vshll.u32 %v2824, 30
        %v2826 = vsub.s32 %v2822, %v2825
        %vm2827 = vcmp.lt.s32.totalorder %v2826, 0
        %v2828 = vsub.s32 0, %v2826
        %v2829 = vsel %vm2827, %v2828, %v2826
        %v2830 = vclz %v2829
        %v2831 = vsub.s32 %v2830, 2
        %vm2832 = vcmp.gt.s32.totalorder 0, %v2831
        %v2833 = vsel %vm2832, 0, %v2831
        %v2834 = vsub.s32 32, %v2833
        %v2835 = vshll.u32 %v2826, %v2833
        %v2836 = vshrl.u32 %v2818, %v2834
        %v2837 = vor.u32 %v2835, %v2836
        %v2838 = vsub.s32 4294967266, %v2833
        %v2839 = vadd.s32 %v2838, 127
        %v2840 = vshll.u32 %v2839, 23
        %v2841 = vor.u32 4788187, %v2840
        %v2842 = vand.u32 2147483647, %v2841
        %v2844 = vcvt.s32.f32 %v2837
        %v2845 = vmul.f32 %v2844, %v2842
        %v2846 = vxor.u32 %v2845, 2147483648
        %v2847 = vsel %vm2764, %v2846, %v2845
        %v2848 = vsub.s32 4, %v2824
        %v2849 = vsel %vm2764, %v2848, %v2824
        %v2850 = vsel %vm2763, %v670, %v2847
        %v2851 = vsel %vm2763, 0, %v2849
        %v2852 = vcosq.f32.pop %v2850
        %v2853 = vsinq.f32.pop %v2850
        %vm2854 = vweird.f32 %v670
        %v2855 = vadd.s32 %v2851, 3
        %v2856 = vand.u32 %v2855, 3
        %vm2857 = vcmp.lt.s32.totalorder %v2856, 2
        %vm2858 = vcmp.eq.s32.totalorder %v2856, 0
        %v2859 = vxor.u32 %v2853, 2147483648
        %v2860 = vsel %vm2858, %v2852, %v2859
        %vm2861 = vcmp.eq.s32.totalorder %v2856, 2
        %v2862 = vxor.u32 %v2852, 2147483648
        %v2863 = vsel %vm2861, %v2862, %v2853
        %v2864 = vsel %vm2857, %v2860, %v2863
        %v2865 = vsel %vm2854, nan, %v2864
        %v2866 = vand.u32 2147483647, %v671
        %vm2867 = vcmp.le.f32.partialorder %v2866, 0.7853982
        %vm2868 = vcmp.lt.s32.totalorder %v671, 0
        %v2869 = vand.u32 %v671, 2139095040
        %v2870 = vshrl.u32 %v2869, 23
        %v2871 = vsub.s32 %v2870, 127
        %v2872 = vand.u32 2147483647, %v671
        %v2873 = vand.u32 %v2872, 8388607
        %v2874 = vor.u32 %v2873, 8388608
        %v2875 = vsub.s32 0, %v2874
        %v2876 = vadd.s32 %v2871, 1
        %vm2877 = vcmp.gt.s32.totalorder %v2876, 0
        %v2878 = vsel %vm2877, %v2876, 0
        %v2879 = vshrl.u32 %v2878, 5
        %v2880 = vand.u32 %v2878, 31
        %v2881 = vsub.s32 32, %v2880
        %v2882 = vshrl.u32 683565275, %v2881
        %v2883 = vshll.u32 683565275, %v2880
        %v2884 = vshrl.u32 2475754826, %v2881
        %v2885 = vor.u32 %v2883, %v2884
        %v2886 = vshll.u32 2475754826, %v2880
        %v2887 = vshrl.u32 2131351028, %v2881
        %v2888 = vor.u32 %v2886, %v2887
        %v2889 = vshll.u32 2131351028, %v2880
        %v2890 = vshrl.u32 2102212464, %v2881
        %v2891 = vor.u32 %v2889, %v2890
        %v2892 = vshll.u32 2102212464, %v2880
        %v2893 = vshrl.u32 920167782, %v2881
        %v2894 = vor.u32 %v2892, %v2893
        %v2895 = vshll.u32 920167782, %v2880
        %v2896 = vshrl.u32 1326507024, %v2881
        %v2897 = vor.u32 %v2895, %v2896
        %vm2898 = vcmp.lt.s32.totalorder %v2879, 1
        %vm2899 = vcmp.lt.s32.totalorder %v2879, 2
        %vm2900 = vcmp.lt.s32.totalorder %v2879, 3
        %vm2901 = vcmp.lt.s32.totalorder %v2879, 4
        %v2902 = vsel %vm2898, %v2882, %v2885
        %v2903 = vsel %vm2901, %v2891, 2102212464
        %v2904 = vsel %vm2900, %v2888, %v2903
        %v2905 = vsel %vm2899, %v2902, %v2904
        %v2906 = vsel %vm2898, %v2885, %v2888
        %v2907 = vsel %vm2901, %v2894, 920167782
        %v2908 = vsel %vm2900, %v2891, %v2907
        %v2909 = vsel %vm2899, %v2906, %v2908
        %v2910 = vsel %vm2898, %v2888, %v2891
        %v2911 = vsel %vm2901, %v2897, 1326507024
        %v2912 = vsel %vm2900, %v2894, %v2911
        %v2913 = vsel %vm2899, %v2910, %v2912
        %v2914 = vshll.u32 %v2874, 8
        %v2915 = vmul.u32.u64.compose %v2914, %v2913
        %v2916 = vextract.low.u32 %v2915
        %v2917 = vextract.high.u32 %v2915
        %v2918 = vmul.u32.u64.compose %v2914, %v2909
        %v2919 = vextract.low.u32 %v2918
        %v2920 = vextract.high.u32 %v2918
        %v2921 = vmul.u32 %v2914, %v2905
        %v2922 = vadd.s32 %v2917, %v2919
        %vm2923 = vc.u32 %v2917, %v2919
        %v2924 = vadd.s32 %v2920, 1
        %v2925 = vsel %vm2923, %v2924, %v2920
        %v2926 = vadd.s32 %v2921, %v2925
        %v2927 = vadd.s32 %v2926, 536870912
        %v2928 = vshrl.u32 %v2927, 30
        %v2929 = vshll.u32 %v2928, 30
        %v2930 = vsub.s32 %v2926, %v2929
        %vm2931 = vcmp.lt.s32.totalorder %v2930, 0
        %v2932 = vsub.s32 0, %v2930
        %v2933 = vsel %vm2931, %v2932, %v2930
        %v2934 = vclz %v2933
        %v2935 = vsub.s32 %v2934, 2
        %vm2936 = vcmp.gt.s32.totalorder 0, %v2935
        %v2937 = vsel %vm2936, 0, %v2935
        %v2938 = vsub.s32 32, %v2937
        %v2939 = vshll.u32 %v2930, %v2937
        %v2940 = vshrl.u32 %v2922, %v2938
        %v2941 = vor.u32 %v2939, %v2940
        %v2942 = vsub.s32 4294967266, %v2937
        %v2943 = vadd.s32 %v2942, 127
        %v2944 = vshll.u32 %v2943, 23
        %v2945 = vor.u32 4788187, %v2944
        %v2946 = vand.u32 2147483647, %v2945
        %v2948 = vcvt.s32.f32 %v2941
        %v2949 = vmul.f32 %v2948, %v2946
        %v2950 = vxor.u32 %v2949, 2147483648
        %v2951 = vsel %vm2868, %v2950, %v2949
        %v2952 = vsub.s32 4, %v2928
        %v2953 = vsel %vm2868, %v2952, %v2928
        %v2954 = vsel %vm2867, %v671, %v2951
        %v2955 = vsel %vm2867, 0, %v2953
        %v2956 = vcosq.f32.pop %v2954
        %v2957 = vsinq.f32.pop %v2954
        %vm2958 = vweird.f32 %v671
        %v2959 = vadd.s32 %v2955, 3
        %v2960 = vand.u32 %v2959, 3
        %vm2961 = vcmp.lt.s32.totalorder %v2960, 2
        %vm2962 = vcmp.eq.s32.totalorder %v2960, 0
        %v2963 = vxor.u32 %v2957, 2147483648
        %v2964 = vsel %vm2962, %v2956, %v2963
        %vm2965 = vcmp.eq.s32.totalorder %v2960, 2
        %v2966 = vxor.u32 %v2956, 2147483648
        %v2967 = vsel %vm2965, %v2966, %v2957
        %v2968 = vsel %vm2961, %v2964, %v2967
        %v2969 = vsel %vm2958, nan, %v2968
        %v2970 = vand.u32 2147483647, %v672
        %vm2971 = vcmp.le.f32.partialorder %v2970, 0.7853982
        %vm2972 = vcmp.lt.s32.totalorder %v672, 0
        %v2973 = vand.u32 %v672, 2139095040
        %v2974 = vshrl.u32 %v2973, 23
        %v2975 = vsub.s32 %v2974, 127
        %v2976 = vand.u32 2147483647, %v672
        %v2977 = vand.u32 %v2976, 8388607
        %v2978 = vor.u32 %v2977, 8388608
        %v2979 = vsub.s32 0, %v2978
        %v2980 = vadd.s32 %v2975, 1
        %vm2981 = vcmp.gt.s32.totalorder %v2980, 0
        %v2982 = vsel %vm2981, %v2980, 0
        %v2983 = vshrl.u32 %v2982, 5
        %v2984 = vand.u32 %v2982, 31
        %v2985 = vsub.s32 32, %v2984
        %v2986 = vshrl.u32 683565275, %v2985
        %v2987 = vshll.u32 683565275, %v2984
        %v2988 = vshrl.u32 2475754826, %v2985
        %v2989 = vor.u32 %v2987, %v2988
        %v2990 = vshll.u32 2475754826, %v2984
        %v2991 = vshrl.u32 2131351028, %v2985
        %v2992 = vor.u32 %v2990, %v2991
        %v2993 = vshll.u32 2131351028, %v2984
        %v2994 = vshrl.u32 2102212464, %v2985
        %v2995 = vor.u32 %v2993, %v2994
        %v2996 = vshll.u32 2102212464, %v2984
        %v2997 = vshrl.u32 920167782, %v2985
        %v2998 = vor.u32 %v2996, %v2997
        %v2999 = vshll.u32 920167782, %v2984
        %v3000 = vshrl.u32 1326507024, %v2985
        %v3001 = vor.u32 %v2999, %v3000
        %vm3002 = vcmp.lt.s32.totalorder %v2983, 1
        %vm3003 = vcmp.lt.s32.totalorder %v2983, 2
        %vm3004 = vcmp.lt.s32.totalorder %v2983, 3
        %vm3005 = vcmp.lt.s32.totalorder %v2983, 4
        %v3006 = vsel %vm3002, %v2986, %v2989
        %v3007 = vsel %vm3005, %v2995, 2102212464
        %v3008 = vsel %vm3004, %v2992, %v3007
        %v3009 = vsel %vm3003, %v3006, %v3008
        %v3010 = vsel %vm3002, %v2989, %v2992
        %v3011 = vsel %vm3005, %v2998, 920167782
        %v3012 = vsel %vm3004, %v2995, %v3011
        %v3013 = vsel %vm3003, %v3010, %v3012
        %v3014 = vsel %vm3002, %v2992, %v2995
        %v3015 = vsel %vm3005, %v3001, 1326507024
        %v3016 = vsel %vm3004, %v2998, %v3015
        %v3017 = vsel %vm3003, %v3014, %v3016
        %v3018 = vshll.u32 %v2978, 8
        %v3019 = vmul.u32.u64.compose %v3018, %v3017
        %v3020 = vextract.low.u32 %v3019
        %v3021 = vextract.high.u32 %v3019
        %v3022 = vmul.u32.u64.compose %v3018, %v3013
        %v3023 = vextract.low.u32 %v3022
        %v3024 = vextract.high.u32 %v3022
        %v3025 = vmul.u32 %v3018, %v3009
        %v3026 = vadd.s32 %v3021, %v3023
        %vm3027 = vc.u32 %v3021, %v3023
        %v3028 = vadd.s32 %v3024, 1
        %v3029 = vsel %vm3027, %v3028, %v3024
        %v3030 = vadd.s32 %v3025, %v3029
        %v3031 = vadd.s32 %v3030, 536870912
        %v3032 = vshrl.u32 %v3031, 30
        %v3033 = vshll.u32 %v3032, 30
        %v3034 = vsub.s32 %v3030, %v3033
        %vm3035 = vcmp.lt.s32.totalorder %v3034, 0
        %v3036 = vsub.s32 0, %v3034
        %v3037 = vsel %vm3035, %v3036, %v3034
        %v3038 = vclz %v3037
        %v3039 = vsub.s32 %v3038, 2
        %vm3040 = vcmp.gt.s32.totalorder 0, %v3039
        %v3041 = vsel %vm3040, 0, %v3039
        %v3042 = vsub.s32 32, %v3041
        %v3043 = vshll.u32 %v3034, %v3041
        %v3044 = vshrl.u32 %v3026, %v3042
        %v3045 = vor.u32 %v3043, %v3044
        %v3046 = vsub.s32 4294967266, %v3041
        %v3047 = vadd.s32 %v3046, 127
        %v3048 = vshll.u32 %v3047, 23
        %v3049 = vor.u32 4788187, %v3048
        %v3050 = vand.u32 2147483647, %v3049
        %v3052 = vcvt.s32.f32 %v3045
        %v3053 = vmul.f32 %v3052, %v3050
        %v3054 = vxor.u32 %v3053, 2147483648
        %v3055 = vsel %vm2972, %v3054, %v3053
        %v3056 = vsub.s32 4, %v3032
        %v3057 = vsel %vm2972, %v3056, %v3032
        %v3058 = vsel %vm2971, %v672, %v3055
        %v3059 = vsel %vm2971, 0, %v3057
        %v3060 = vcosq.f32.pop %v3058
        %v3061 = vsinq.f32.pop %v3058
        %vm3062 = vweird.f32 %v672
        %v3063 = vadd.s32 %v3059, 3
        %v3064 = vand.u32 %v3063, 3
        %vm3065 = vcmp.lt.s32.totalorder %v3064, 2
        %vm3066 = vcmp.eq.s32.totalorder %v3064, 0
        %v3067 = vxor.u32 %v3061, 2147483648
        %v3068 = vsel %vm3066, %v3060, %v3067
        %vm3069 = vcmp.eq.s32.totalorder %v3064, 2
        %v3070 = vxor.u32 %v3060, 2147483648
        %v3071 = vsel %vm3069, %v3070, %v3061
        %v3072 = vsel %vm3065, %v3068, %v3071
        %v3073 = vsel %vm3062, nan, %v3072
        %v3074 = vand.u32 2147483647, %v673
        %vm3075 = vcmp.le.f32.partialorder %v3074, 0.7853982
        %vm3076 = vcmp.lt.s32.totalorder %v673, 0
        %v3077 = vand.u32 %v673, 2139095040
        %v3078 = vshrl.u32 %v3077, 23
        %v3079 = vsub.s32 %v3078, 127
        %v3080 = vand.u32 2147483647, %v673
        %v3081 = vand.u32 %v3080, 8388607
        %v3082 = vor.u32 %v3081, 8388608
        %v3083 = vsub.s32 0, %v3082
        %v3084 = vadd.s32 %v3079, 1
        %vm3085 = vcmp.gt.s32.totalorder %v3084, 0
        %v3086 = vsel %vm3085, %v3084, 0
        %v3087 = vshrl.u32 %v3086, 5
        %v3088 = vand.u32 %v3086, 31
        %v3089 = vsub.s32 32, %v3088
        %v3090 = vshrl.u32 683565275, %v3089
        %v3091 = vshll.u32 683565275, %v3088
        %v3092 = vshrl.u32 2475754826, %v3089
        %v3093 = vor.u32 %v3091, %v3092
        %v3094 = vshll.u32 2475754826, %v3088
        %v3095 = vshrl.u32 2131351028, %v3089
        %v3096 = vor.u32 %v3094, %v3095
        %v3097 = vshll.u32 2131351028, %v3088
        %v3098 = vshrl.u32 2102212464, %v3089
        %v3099 = vor.u32 %v3097, %v3098
        %v3100 = vshll.u32 2102212464, %v3088
        %v3101 = vshrl.u32 920167782, %v3089
        %v3102 = vor.u32 %v3100, %v3101
        %v3103 = vshll.u32 920167782, %v3088
        %v3104 = vshrl.u32 1326507024, %v3089
        %v3105 = vor.u32 %v3103, %v3104
        %vm3106 = vcmp.lt.s32.totalorder %v3087, 1
        %vm3107 = vcmp.lt.s32.totalorder %v3087, 2
        %vm3108 = vcmp.lt.s32.totalorder %v3087, 3
        %vm3109 = vcmp.lt.s32.totalorder %v3087, 4
        %v3110 = vsel %vm3106, %v3090, %v3093
        %v3111 = vsel %vm3109, %v3099, 2102212464
        %v3112 = vsel %vm3108, %v3096, %v3111
        %v3113 = vsel %vm3107, %v3110, %v3112
        %v3114 = vsel %vm3106, %v3093, %v3096
        %v3115 = vsel %vm3109, %v3102, 920167782
        %v3116 = vsel %vm3108, %v3099, %v3115
        %v3117 = vsel %vm3107, %v3114, %v3116
        %v3118 = vsel %vm3106, %v3096, %v3099
        %v3119 = vsel %vm3109, %v3105, 1326507024
        %v3120 = vsel %vm3108, %v3102, %v3119
        %v3121 = vsel %vm3107, %v3118, %v3120
        %v3122 = vshll.u32 %v3082, 8
        %v3123 = vmul.u32.u64.compose %v3122, %v3121
        %v3124 = vextract.low.u32 %v3123
        %v3125 = vextract.high.u32 %v3123
        %v3126 = vmul.u32.u64.compose %v3122, %v3117
        %v3127 = vextract.low.u32 %v3126
        %v3128 = vextract.high.u32 %v3126
        %v3129 = vmul.u32 %v3122, %v3113
        %v3130 = vadd.s32 %v3125, %v3127
        %vm3131 = vc.u32 %v3125, %v3127
        %v3132 = vadd.s32 %v3128, 1
        %v3133 = vsel %vm3131, %v3132, %v3128
        %v3134 = vadd.s32 %v3129, %v3133
        %v3135 = vadd.s32 %v3134, 536870912
        %v3136 = vshrl.u32 %v3135, 30
        %v3137 = vshll.u32 %v3136, 30
        %v3138 = vsub.s32 %v3134, %v3137
        %vm3139 = vcmp.lt.s32.totalorder %v3138, 0
        %v3140 = vsub.s32 0, %v3138
        %v3141 = vsel %vm3139, %v3140, %v3138
        %v3142 = vclz %v3141
        %v3143 = vsub.s32 %v3142, 2
        %vm3144 = vcmp.gt.s32.totalorder 0, %v3143
        %v3145 = vsel %vm3144, 0, %v3143
        %v3146 = vsub.s32 32, %v3145
        %v3147 = vshll.u32 %v3138, %v3145
        %v3148 = vshrl.u32 %v3130, %v3146
        %v3149 = vor.u32 %v3147, %v3148
        %v3150 = vsub.s32 4294967266, %v3145
        %v3151 = vadd.s32 %v3150, 127
        %v3152 = vshll.u32 %v3151, 23
        %v3153 = vor.u32 4788187, %v3152
        %v3154 = vand.u32 2147483647, %v3153
        %v3156 = vcvt.s32.f32 %v3149
        %v3157 = vmul.f32 %v3156, %v3154
        %v3158 = vxor.u32 %v3157, 2147483648
        %v3159 = vsel %vm3076, %v3158, %v3157
        %v3160 = vsub.s32 4, %v3136
        %v3161 = vsel %vm3076, %v3160, %v3136
        %v3162 = vsel %vm3075, %v673, %v3159
        %v3163 = vsel %vm3075, 0, %v3161
        %v3164 = vcosq.f32.pop %v3162
        %v3165 = vsinq.f32.pop %v3162
        %vm3166 = vweird.f32 %v673
        %v3167 = vadd.s32 %v3163, 3
        %v3168 = vand.u32 %v3167, 3
        %vm3169 = vcmp.lt.s32.totalorder %v3168, 2
        %vm3170 = vcmp.eq.s32.totalorder %v3168, 0
        %v3171 = vxor.u32 %v3165, 2147483648
        %v3172 = vsel %vm3170, %v3164, %v3171
        %vm3173 = vcmp.eq.s32.totalorder %v3168, 2
        %v3174 = vxor.u32 %v3164, 2147483648
        %v3175 = vsel %vm3173, %v3174, %v3165
        %v3176 = vsel %vm3169, %v3172, %v3175
        %v3177 = vsel %vm3166, nan, %v3176
        %v3178 = vand.u32 2147483647, %v674
        %vm3179 = vcmp.le.f32.partialorder %v3178, 0.7853982
        %vm3180 = vcmp.lt.s32.totalorder %v674, 0
        %v3181 = vand.u32 %v674, 2139095040
        %v3182 = vshrl.u32 %v3181, 23
        %v3183 = vsub.s32 %v3182, 127
        %v3184 = vand.u32 2147483647, %v674
        %v3185 = vand.u32 %v3184, 8388607
        %v3186 = vor.u32 %v3185, 8388608
        %v3187 = vsub.s32 0, %v3186
        %v3188 = vadd.s32 %v3183, 1
        %vm3189 = vcmp.gt.s32.totalorder %v3188, 0
        %v3190 = vsel %vm3189, %v3188, 0
        %v3191 = vshrl.u32 %v3190, 5
        %v3192 = vand.u32 %v3190, 31
        %v3193 = vsub.s32 32, %v3192
        %v3194 = vshrl.u32 683565275, %v3193
        %v3195 = vshll.u32 683565275, %v3192
        %v3196 = vshrl.u32 2475754826, %v3193
        %v3197 = vor.u32 %v3195, %v3196
        %v3198 = vshll.u32 2475754826, %v3192
        %v3199 = vshrl.u32 2131351028, %v3193
        %v3200 = vor.u32 %v3198, %v3199
        %v3201 = vshll.u32 2131351028, %v3192
        %v3202 = vshrl.u32 2102212464, %v3193
        %v3203 = vor.u32 %v3201, %v3202
        %v3204 = vshll.u32 2102212464, %v3192
        %v3205 = vshrl.u32 920167782, %v3193
        %v3206 = vor.u32 %v3204, %v3205
        %v3207 = vshll.u32 920167782, %v3192
        %v3208 = vshrl.u32 1326507024, %v3193
        %v3209 = vor.u32 %v3207, %v3208
        %vm3210 = vcmp.lt.s32.totalorder %v3191, 1
        %vm3211 = vcmp.lt.s32.totalorder %v3191, 2
        %vm3212 = vcmp.lt.s32.totalorder %v3191, 3
        %vm3213 = vcmp.lt.s32.totalorder %v3191, 4
        %v3214 = vsel %vm3210, %v3194, %v3197
        %v3215 = vsel %vm3213, %v3203, 2102212464
        %v3216 = vsel %vm3212, %v3200, %v3215
        %v3217 = vsel %vm3211, %v3214, %v3216
        %v3218 = vsel %vm3210, %v3197, %v3200
        %v3219 = vsel %vm3213, %v3206, 920167782
        %v3220 = vsel %vm3212, %v3203, %v3219
        %v3221 = vsel %vm3211, %v3218, %v3220
        %v3222 = vsel %vm3210, %v3200, %v3203
        %v3223 = vsel %vm3213, %v3209, 1326507024
        %v3224 = vsel %vm3212, %v3206, %v3223
        %v3225 = vsel %vm3211, %v3222, %v3224
        %v3226 = vshll.u32 %v3186, 8
        %v3227 = vmul.u32.u64.compose %v3226, %v3225
        %v3228 = vextract.low.u32 %v3227
        %v3229 = vextract.high.u32 %v3227
        %v3230 = vmul.u32.u64.compose %v3226, %v3221
        %v3231 = vextract.low.u32 %v3230
        %v3232 = vextract.high.u32 %v3230
        %v3233 = vmul.u32 %v3226, %v3217
        %v3234 = vadd.s32 %v3229, %v3231
        %vm3235 = vc.u32 %v3229, %v3231
        %v3236 = vadd.s32 %v3232, 1
        %v3237 = vsel %vm3235, %v3236, %v3232
        %v3238 = vadd.s32 %v3233, %v3237
        %v3239 = vadd.s32 %v3238, 536870912
        %v3240 = vshrl.u32 %v3239, 30
        %v3241 = vshll.u32 %v3240, 30
        %v3242 = vsub.s32 %v3238, %v3241
        %vm3243 = vcmp.lt.s32.totalorder %v3242, 0
        %v3244 = vsub.s32 0, %v3242
        %v3245 = vsel %vm3243, %v3244, %v3242
        %v3246 = vclz %v3245
        %v3247 = vsub.s32 %v3246, 2
        %vm3248 = vcmp.gt.s32.totalorder 0, %v3247
        %v3249 = vsel %vm3248, 0, %v3247
        %v3250 = vsub.s32 32, %v3249
        %v3251 = vshll.u32 %v3242, %v3249
        %v3252 = vshrl.u32 %v3234, %v3250
        %v3253 = vor.u32 %v3251, %v3252
        %v3254 = vsub.s32 4294967266, %v3249
        %v3255 = vadd.s32 %v3254, 127
        %v3256 = vshll.u32 %v3255, 23
        %v3257 = vor.u32 4788187, %v3256
        %v3258 = vand.u32 2147483647, %v3257
        %v3260 = vcvt.s32.f32 %v3253
        %v3261 = vmul.f32 %v3260, %v3258
        %v3262 = vxor.u32 %v3261, 2147483648
        %v3263 = vsel %vm3180, %v3262, %v3261
        %v3264 = vsub.s32 4, %v3240
        %v3265 = vsel %vm3180, %v3264, %v3240
        %v3266 = vsel %vm3179, %v674, %v3263
        %v3267 = vsel %vm3179, 0, %v3265
        %v3268 = vcosq.f32.pop %v3266
        %v3269 = vsinq.f32.pop %v3266
        %vm3270 = vweird.f32 %v674
        %v3271 = vadd.s32 %v3267, 3
        %v3272 = vand.u32 %v3271, 3
        %vm3273 = vcmp.lt.s32.totalorder %v3272, 2
        %vm3274 = vcmp.eq.s32.totalorder %v3272, 0
        %v3275 = vxor.u32 %v3269, 2147483648
        %v3276 = vsel %vm3274, %v3268, %v3275
        %vm3277 = vcmp.eq.s32.totalorder %v3272, 2
        %v3278 = vxor.u32 %v3268, 2147483648
        %v3279 = vsel %vm3277, %v3278, %v3269
        %v3280 = vsel %vm3273, %v3276, %v3279
        %v3281 = vsel %vm3270, nan, %v3280
        %v3282 = vand.u32 2147483647, %v675
        %vm3283 = vcmp.le.f32.partialorder %v3282, 0.7853982
        %vm3284 = vcmp.lt.s32.totalorder %v675, 0
        %v3285 = vand.u32 %v675, 2139095040
        %v3286 = vshrl.u32 %v3285, 23
        %v3287 = vsub.s32 %v3286, 127
        %v3288 = vand.u32 2147483647, %v675
        %v3289 = vand.u32 %v3288, 8388607
        %v3290 = vor.u32 %v3289, 8388608
        %v3291 = vsub.s32 0, %v3290
        %v3292 = vadd.s32 %v3287, 1
        %vm3293 = vcmp.gt.s32.totalorder %v3292, 0
        %v3294 = vsel %vm3293, %v3292, 0
        %v3295 = vshrl.u32 %v3294, 5
        %v3296 = vand.u32 %v3294, 31
        %v3297 = vsub.s32 32, %v3296
        %v3298 = vshrl.u32 683565275, %v3297
        %v3299 = vshll.u32 683565275, %v3296
        %v3300 = vshrl.u32 2475754826, %v3297
        %v3301 = vor.u32 %v3299, %v3300
        %v3302 = vshll.u32 2475754826, %v3296
        %v3303 = vshrl.u32 2131351028, %v3297
        %v3304 = vor.u32 %v3302, %v3303
        %v3305 = vshll.u32 2131351028, %v3296
        %v3306 = vshrl.u32 2102212464, %v3297
        %v3307 = vor.u32 %v3305, %v3306
        %v3308 = vshll.u32 2102212464, %v3296
        %v3309 = vshrl.u32 920167782, %v3297
        %v3310 = vor.u32 %v3308, %v3309
        %v3311 = vshll.u32 920167782, %v3296
        %v3312 = vshrl.u32 1326507024, %v3297
        %v3313 = vor.u32 %v3311, %v3312
        %vm3314 = vcmp.lt.s32.totalorder %v3295, 1
        %vm3315 = vcmp.lt.s32.totalorder %v3295, 2
        %vm3316 = vcmp.lt.s32.totalorder %v3295, 3
        %vm3317 = vcmp.lt.s32.totalorder %v3295, 4
        %v3318 = vsel %vm3314, %v3298, %v3301
        %v3319 = vsel %vm3317, %v3307, 2102212464
        %v3320 = vsel %vm3316, %v3304, %v3319
        %v3321 = vsel %vm3315, %v3318, %v3320
        %v3322 = vsel %vm3314, %v3301, %v3304
        %v3323 = vsel %vm3317, %v3310, 920167782
        %v3324 = vsel %vm3316, %v3307, %v3323
        %v3325 = vsel %vm3315, %v3322, %v3324
        %v3326 = vsel %vm3314, %v3304, %v3307
        %v3327 = vsel %vm3317, %v3313, 1326507024
        %v3328 = vsel %vm3316, %v3310, %v3327
        %v3329 = vsel %vm3315, %v3326, %v3328
        %v3330 = vshll.u32 %v3290, 8
        %v3331 = vmul.u32.u64.compose %v3330, %v3329
        %v3332 = vextract.low.u32 %v3331
        %v3333 = vextract.high.u32 %v3331
        %v3334 = vmul.u32.u64.compose %v3330, %v3325
        %v3335 = vextract.low.u32 %v3334
        %v3336 = vextract.high.u32 %v3334
        %v3337 = vmul.u32 %v3330, %v3321
        %v3338 = vadd.s32 %v3333, %v3335
        %vm3339 = vc.u32 %v3333, %v3335
        %v3340 = vadd.s32 %v3336, 1
        %v3341 = vsel %vm3339, %v3340, %v3336
        %v3342 = vadd.s32 %v3337, %v3341
        %v3343 = vadd.s32 %v3342, 536870912
        %v3344 = vshrl.u32 %v3343, 30
        %v3345 = vshll.u32 %v3344, 30
        %v3346 = vsub.s32 %v3342, %v3345
        %vm3347 = vcmp.lt.s32.totalorder %v3346, 0
        %v3348 = vsub.s32 0, %v3346
        %v3349 = vsel %vm3347, %v3348, %v3346
        %v3350 = vclz %v3349
        %v3351 = vsub.s32 %v3350, 2
        %vm3352 = vcmp.gt.s32.totalorder 0, %v3351
        %v3353 = vsel %vm3352, 0, %v3351
        %v3354 = vsub.s32 32, %v3353
        %v3355 = vshll.u32 %v3346, %v3353
        %v3356 = vshrl.u32 %v3338, %v3354
        %v3357 = vor.u32 %v3355, %v3356
        %v3358 = vsub.s32 4294967266, %v3353
        %v3359 = vadd.s32 %v3358, 127
        %v3360 = vshll.u32 %v3359, 23
        %v3361 = vor.u32 4788187, %v3360
        %v3362 = vand.u32 2147483647, %v3361
        %v3364 = vcvt.s32.f32 %v3357
        %v3365 = vmul.f32 %v3364, %v3362
        %v3366 = vxor.u32 %v3365, 2147483648
        %v3367 = vsel %vm3284, %v3366, %v3365
        %v3368 = vsub.s32 4, %v3344
        %v3369 = vsel %vm3284, %v3368, %v3344
        %v3370 = vsel %vm3283, %v675, %v3367
        %v3371 = vsel %vm3283, 0, %v3369
        %v3372 = vcosq.f32.pop %v3370
        %v3373 = vsinq.f32.pop %v3370
        %vm3374 = vweird.f32 %v675
        %v3375 = vadd.s32 %v3371, 3
        %v3376 = vand.u32 %v3375, 3
        %vm3377 = vcmp.lt.s32.totalorder %v3376, 2
        %vm3378 = vcmp.eq.s32.totalorder %v3376, 0
        %v3379 = vxor.u32 %v3373, 2147483648
        %v3380 = vsel %vm3378, %v3372, %v3379
        %vm3381 = vcmp.eq.s32.totalorder %v3376, 2
        %v3382 = vxor.u32 %v3372, 2147483648
        %v3383 = vsel %vm3381, %v3382, %v3373
        %v3384 = vsel %vm3377, %v3380, %v3383
        %v3385 = vsel %vm3374, nan, %v3384
        %v3386 = vand.u32 2147483647, %v676
        %vm3387 = vcmp.le.f32.partialorder %v3386, 0.7853982
        %vm3388 = vcmp.lt.s32.totalorder %v676, 0
        %v3389 = vand.u32 %v676, 2139095040
        %v3390 = vshrl.u32 %v3389, 23
        %v3391 = vsub.s32 %v3390, 127
        %v3392 = vand.u32 2147483647, %v676
        %v3393 = vand.u32 %v3392, 8388607
        %v3394 = vor.u32 %v3393, 8388608
        %v3395 = vsub.s32 0, %v3394
        %v3396 = vadd.s32 %v3391, 1
        %vm3397 = vcmp.gt.s32.totalorder %v3396, 0
        %v3398 = vsel %vm3397, %v3396, 0
        %v3399 = vshrl.u32 %v3398, 5
        %v3400 = vand.u32 %v3398, 31
        %v3401 = vsub.s32 32, %v3400
        %v3402 = vshrl.u32 683565275, %v3401
        %v3403 = vshll.u32 683565275, %v3400
        %v3404 = vshrl.u32 2475754826, %v3401
        %v3405 = vor.u32 %v3403, %v3404
        %v3406 = vshll.u32 2475754826, %v3400
        %v3407 = vshrl.u32 2131351028, %v3401
        %v3408 = vor.u32 %v3406, %v3407
        %v3409 = vshll.u32 2131351028, %v3400
        %v3410 = vshrl.u32 2102212464, %v3401
        %v3411 = vor.u32 %v3409, %v3410
        %v3412 = vshll.u32 2102212464, %v3400
        %v3413 = vshrl.u32 920167782, %v3401
        %v3414 = vor.u32 %v3412, %v3413
        %v3415 = vshll.u32 920167782, %v3400
        %v3416 = vshrl.u32 1326507024, %v3401
        %v3417 = vor.u32 %v3415, %v3416
        %vm3418 = vcmp.lt.s32.totalorder %v3399, 1
        %vm3419 = vcmp.lt.s32.totalorder %v3399, 2
        %vm3420 = vcmp.lt.s32.totalorder %v3399, 3
        %vm3421 = vcmp.lt.s32.totalorder %v3399, 4
        %v3422 = vsel %vm3418, %v3402, %v3405
        %v3423 = vsel %vm3421, %v3411, 2102212464
        %v3424 = vsel %vm3420, %v3408, %v3423
        %v3425 = vsel %vm3419, %v3422, %v3424
        %v3426 = vsel %vm3418, %v3405, %v3408
        %v3427 = vsel %vm3421, %v3414, 920167782
        %v3428 = vsel %vm3420, %v3411, %v3427
        %v3429 = vsel %vm3419, %v3426, %v3428
        %v3430 = vsel %vm3418, %v3408, %v3411
        %v3431 = vsel %vm3421, %v3417, 1326507024
        %v3432 = vsel %vm3420, %v3414, %v3431
        %v3433 = vsel %vm3419, %v3430, %v3432
        %v3434 = vshll.u32 %v3394, 8
        %v3435 = vmul.u32.u64.compose %v3434, %v3433
        %v3436 = vextract.low.u32 %v3435
        %v3437 = vextract.high.u32 %v3435
        %v3438 = vmul.u32.u64.compose %v3434, %v3429
        %v3439 = vextract.low.u32 %v3438
        %v3440 = vextract.high.u32 %v3438
        %v3441 = vmul.u32 %v3434, %v3425
        %v3442 = vadd.s32 %v3437, %v3439
        %vm3443 = vc.u32 %v3437, %v3439
        %v3444 = vadd.s32 %v3440, 1
        %v3445 = vsel %vm3443, %v3444, %v3440
        %v3446 = vadd.s32 %v3441, %v3445
        %v3447 = vadd.s32 %v3446, 536870912
        %v3448 = vshrl.u32 %v3447, 30
        %v3449 = vshll.u32 %v3448, 30
        %v3450 = vsub.s32 %v3446, %v3449
        %vm3451 = vcmp.lt.s32.totalorder %v3450, 0
        %v3452 = vsub.s32 0, %v3450
        %v3453 = vsel %vm3451, %v3452, %v3450
        %v3454 = vclz %v3453
        %v3455 = vsub.s32 %v3454, 2
        %vm3456 = vcmp.gt.s32.totalorder 0, %v3455
        %v3457 = vsel %vm3456, 0, %v3455
        %v3458 = vsub.s32 32, %v3457
        %v3459 = vshll.u32 %v3450, %v3457
        %v3460 = vshrl.u32 %v3442, %v3458
        %v3461 = vor.u32 %v3459, %v3460
        %v3462 = vsub.s32 4294967266, %v3457
        %v3463 = vadd.s32 %v3462, 127
        %v3464 = vshll.u32 %v3463, 23
        %v3465 = vor.u32 4788187, %v3464
        %v3466 = vand.u32 2147483647, %v3465
        %v3468 = vcvt.s32.f32 %v3461
        %v3469 = vmul.f32 %v3468, %v3466
        %v3470 = vxor.u32 %v3469, 2147483648
        %v3471 = vsel %vm3388, %v3470, %v3469
        %v3472 = vsub.s32 4, %v3448
        %v3473 = vsel %vm3388, %v3472, %v3448
        %v3474 = vsel %vm3387, %v676, %v3471
        %v3475 = vsel %vm3387, 0, %v3473
        %v3476 = vcosq.f32.pop %v3474
        %v3477 = vsinq.f32.pop %v3474
        %vm3478 = vweird.f32 %v676
        %v3479 = vadd.s32 %v3475, 3
        %v3480 = vand.u32 %v3479, 3
        %vm3481 = vcmp.lt.s32.totalorder %v3480, 2
        %vm3482 = vcmp.eq.s32.totalorder %v3480, 0
        %v3483 = vxor.u32 %v3477, 2147483648
        %v3484 = vsel %vm3482, %v3476, %v3483
        %vm3485 = vcmp.eq.s32.totalorder %v3480, 2
        %v3486 = vxor.u32 %v3476, 2147483648
        %v3487 = vsel %vm3485, %v3486, %v3477
        %v3488 = vsel %vm3481, %v3484, %v3487
        %v3489 = vsel %vm3478, nan, %v3488
        %v3490 = vand.u32 2147483647, %v677
        %vm3491 = vcmp.le.f32.partialorder %v3490, 0.7853982
        %vm3492 = vcmp.lt.s32.totalorder %v677, 0
        %v3493 = vand.u32 %v677, 2139095040
        %v3494 = vshrl.u32 %v3493, 23
        %v3495 = vsub.s32 %v3494, 127
        %v3496 = vand.u32 2147483647, %v677
        %v3497 = vand.u32 %v3496, 8388607
        %v3498 = vor.u32 %v3497, 8388608
        %v3499 = vsub.s32 0, %v3498
        %v3500 = vadd.s32 %v3495, 1
        %vm3501 = vcmp.gt.s32.totalorder %v3500, 0
        %v3502 = vsel %vm3501, %v3500, 0
        %v3503 = vshrl.u32 %v3502, 5
        %v3504 = vand.u32 %v3502, 31
        %v3505 = vsub.s32 32, %v3504
        %v3506 = vshrl.u32 683565275, %v3505
        %v3507 = vshll.u32 683565275, %v3504
        %v3508 = vshrl.u32 2475754826, %v3505
        %v3509 = vor.u32 %v3507, %v3508
        %v3510 = vshll.u32 2475754826, %v3504
        %v3511 = vshrl.u32 2131351028, %v3505
        %v3512 = vor.u32 %v3510, %v3511
        %v3513 = vshll.u32 2131351028, %v3504
        %v3514 = vshrl.u32 2102212464, %v3505
        %v3515 = vor.u32 %v3513, %v3514
        %v3516 = vshll.u32 2102212464, %v3504
        %v3517 = vshrl.u32 920167782, %v3505
        %v3518 = vor.u32 %v3516, %v3517
        %v3519 = vshll.u32 920167782, %v3504
        %v3520 = vshrl.u32 1326507024, %v3505
        %v3521 = vor.u32 %v3519, %v3520
        %vm3522 = vcmp.lt.s32.totalorder %v3503, 1
        %vm3523 = vcmp.lt.s32.totalorder %v3503, 2
        %vm3524 = vcmp.lt.s32.totalorder %v3503, 3
        %vm3525 = vcmp.lt.s32.totalorder %v3503, 4
        %v3526 = vsel %vm3522, %v3506, %v3509
        %v3527 = vsel %vm3525, %v3515, 2102212464
        %v3528 = vsel %vm3524, %v3512, %v3527
        %v3529 = vsel %vm3523, %v3526, %v3528
        %v3530 = vsel %vm3522, %v3509, %v3512
        %v3531 = vsel %vm3525, %v3518, 920167782
        %v3532 = vsel %vm3524, %v3515, %v3531
        %v3533 = vsel %vm3523, %v3530, %v3532
        %v3534 = vsel %vm3522, %v3512, %v3515
        %v3535 = vsel %vm3525, %v3521, 1326507024
        %v3536 = vsel %vm3524, %v3518, %v3535
        %v3537 = vsel %vm3523, %v3534, %v3536
        %v3538 = vshll.u32 %v3498, 8
        %v3539 = vmul.u32.u64.compose %v3538, %v3537
        %v3540 = vextract.low.u32 %v3539
        %v3541 = vextract.high.u32 %v3539
        %v3542 = vmul.u32.u64.compose %v3538, %v3533
        %v3543 = vextract.low.u32 %v3542
        %v3544 = vextract.high.u32 %v3542
        %v3545 = vmul.u32 %v3538, %v3529
        %v3546 = vadd.s32 %v3541, %v3543
        %vm3547 = vc.u32 %v3541, %v3543
        %v3548 = vadd.s32 %v3544, 1
        %v3549 = vsel %vm3547, %v3548, %v3544
        %v3550 = vadd.s32 %v3545, %v3549
        %v3551 = vadd.s32 %v3550, 536870912
        %v3552 = vshrl.u32 %v3551, 30
        %v3553 = vshll.u32 %v3552, 30
        %v3554 = vsub.s32 %v3550, %v3553
        %vm3555 = vcmp.lt.s32.totalorder %v3554, 0
        %v3556 = vsub.s32 0, %v3554
        %v3557 = vsel %vm3555, %v3556, %v3554
        %v3558 = vclz %v3557
        %v3559 = vsub.s32 %v3558, 2
        %vm3560 = vcmp.gt.s32.totalorder 0, %v3559
        %v3561 = vsel %vm3560, 0, %v3559
        %v3562 = vsub.s32 32, %v3561
        %v3563 = vshll.u32 %v3554, %v3561
        %v3564 = vshrl.u32 %v3546, %v3562
        %v3565 = vor.u32 %v3563, %v3564
        %v3566 = vsub.s32 4294967266, %v3561
        %v3567 = vadd.s32 %v3566, 127
        %v3568 = vshll.u32 %v3567, 23
        %v3569 = vor.u32 4788187, %v3568
        %v3570 = vand.u32 2147483647, %v3569
        %v3572 = vcvt.s32.f32 %v3565
        %v3573 = vmul.f32 %v3572, %v3570
        %v3574 = vxor.u32 %v3573, 2147483648
        %v3575 = vsel %vm3492, %v3574, %v3573
        %v3576 = vsub.s32 4, %v3552
        %v3577 = vsel %vm3492, %v3576, %v3552
        %v3578 = vsel %vm3491, %v677, %v3575
        %v3579 = vsel %vm3491, 0, %v3577
        %v3580 = vcosq.f32.pop %v3578
        %v3581 = vsinq.f32.pop %v3578
        %vm3582 = vweird.f32 %v677
        %v3583 = vadd.s32 %v3579, 3
        %v3584 = vand.u32 %v3583, 3
        %vm3585 = vcmp.lt.s32.totalorder %v3584, 2
        %vm3586 = vcmp.eq.s32.totalorder %v3584, 0
        %v3587 = vxor.u32 %v3581, 2147483648
        %v3588 = vsel %vm3586, %v3580, %v3587
        %vm3589 = vcmp.eq.s32.totalorder %v3584, 2
        %v3590 = vxor.u32 %v3580, 2147483648
        %v3591 = vsel %vm3589, %v3590, %v3581
        %v3592 = vsel %vm3585, %v3588, %v3591
        %v3593 = vsel %vm3582, nan, %v3592
        %v3594 = vand.u32 2147483647, %v678
        %vm3595 = vcmp.le.f32.partialorder %v3594, 0.7853982
        %vm3596 = vcmp.lt.s32.totalorder %v678, 0
        %v3597 = vand.u32 %v678, 2139095040
        %v3598 = vshrl.u32 %v3597, 23
        %v3599 = vsub.s32 %v3598, 127
        %v3600 = vand.u32 2147483647, %v678
        %v3601 = vand.u32 %v3600, 8388607
        %v3602 = vor.u32 %v3601, 8388608
        %v3603 = vsub.s32 0, %v3602
        %v3604 = vadd.s32 %v3599, 1
        %vm3605 = vcmp.gt.s32.totalorder %v3604, 0
        %v3606 = vsel %vm3605, %v3604, 0
        %v3607 = vshrl.u32 %v3606, 5
        %v3608 = vand.u32 %v3606, 31
        %v3609 = vsub.s32 32, %v3608
        %v3610 = vshrl.u32 683565275, %v3609
        %v3611 = vshll.u32 683565275, %v3608
        %v3612 = vshrl.u32 2475754826, %v3609
        %v3613 = vor.u32 %v3611, %v3612
        %v3614 = vshll.u32 2475754826, %v3608
        %v3615 = vshrl.u32 2131351028, %v3609
        %v3616 = vor.u32 %v3614, %v3615
        %v3617 = vshll.u32 2131351028, %v3608
        %v3618 = vshrl.u32 2102212464, %v3609
        %v3619 = vor.u32 %v3617, %v3618
        %v3620 = vshll.u32 2102212464, %v3608
        %v3621 = vshrl.u32 920167782, %v3609
        %v3622 = vor.u32 %v3620, %v3621
        %v3623 = vshll.u32 920167782, %v3608
        %v3624 = vshrl.u32 1326507024, %v3609
        %v3625 = vor.u32 %v3623, %v3624
        %vm3626 = vcmp.lt.s32.totalorder %v3607, 1
        %vm3627 = vcmp.lt.s32.totalorder %v3607, 2
        %vm3628 = vcmp.lt.s32.totalorder %v3607, 3
        %vm3629 = vcmp.lt.s32.totalorder %v3607, 4
        %v3630 = vsel %vm3626, %v3610, %v3613
        %v3631 = vsel %vm3629, %v3619, 2102212464
        %v3632 = vsel %vm3628, %v3616, %v3631
        %v3633 = vsel %vm3627, %v3630, %v3632
        %v3634 = vsel %vm3626, %v3613, %v3616
        %v3635 = vsel %vm3629, %v3622, 920167782
        %v3636 = vsel %vm3628, %v3619, %v3635
        %v3637 = vsel %vm3627, %v3634, %v3636
        %v3638 = vsel %vm3626, %v3616, %v3619
        %v3639 = vsel %vm3629, %v3625, 1326507024
        %v3640 = vsel %vm3628, %v3622, %v3639
        %v3641 = vsel %vm3627, %v3638, %v3640
        %v3642 = vshll.u32 %v3602, 8
        %v3643 = vmul.u32.u64.compose %v3642, %v3641
        %v3644 = vextract.low.u32 %v3643
        %v3645 = vextract.high.u32 %v3643
        %v3646 = vmul.u32.u64.compose %v3642, %v3637
        %v3647 = vextract.low.u32 %v3646
        %v3648 = vextract.high.u32 %v3646
        %v3649 = vmul.u32 %v3642, %v3633
        %v3650 = vadd.s32 %v3645, %v3647
        %vm3651 = vc.u32 %v3645, %v3647
        %v3652 = vadd.s32 %v3648, 1
        %v3653 = vsel %vm3651, %v3652, %v3648
        %v3654 = vadd.s32 %v3649, %v3653
        %v3655 = vadd.s32 %v3654, 536870912
        %v3656 = vshrl.u32 %v3655, 30
        %v3657 = vshll.u32 %v3656, 30
        %v3658 = vsub.s32 %v3654, %v3657
        %vm3659 = vcmp.lt.s32.totalorder %v3658, 0
        %v3660 = vsub.s32 0, %v3658
        %v3661 = vsel %vm3659, %v3660, %v3658
        %v3662 = vclz %v3661
        %v3663 = vsub.s32 %v3662, 2
        %vm3664 = vcmp.gt.s32.totalorder 0, %v3663
        %v3665 = vsel %vm3664, 0, %v3663
        %v3666 = vsub.s32 32, %v3665
        %v3667 = vshll.u32 %v3658, %v3665
        %v3668 = vshrl.u32 %v3650, %v3666
        %v3669 = vor.u32 %v3667, %v3668
        %v3670 = vsub.s32 4294967266, %v3665
        %v3671 = vadd.s32 %v3670, 127
        %v3672 = vshll.u32 %v3671, 23
        %v3673 = vor.u32 4788187, %v3672
        %v3674 = vand.u32 2147483647, %v3673
        %v3676 = vcvt.s32.f32 %v3669
        %v3677 = vmul.f32 %v3676, %v3674
        %v3678 = vxor.u32 %v3677, 2147483648
        %v3679 = vsel %vm3596, %v3678, %v3677
        %v3680 = vsub.s32 4, %v3656
        %v3681 = vsel %vm3596, %v3680, %v3656
        %v3682 = vsel %vm3595, %v678, %v3679
        %v3683 = vsel %vm3595, 0, %v3681
        %v3684 = vcosq.f32.pop %v3682
        %v3685 = vsinq.f32.pop %v3682
        %vm3686 = vweird.f32 %v678
        %v3687 = vadd.s32 %v3683, 3
        %v3688 = vand.u32 %v3687, 3
        %vm3689 = vcmp.lt.s32.totalorder %v3688, 2
        %vm3690 = vcmp.eq.s32.totalorder %v3688, 0
        %v3691 = vxor.u32 %v3685, 2147483648
        %v3692 = vsel %vm3690, %v3684, %v3691
        %vm3693 = vcmp.eq.s32.totalorder %v3688, 2
        %v3694 = vxor.u32 %v3684, 2147483648
        %v3695 = vsel %vm3693, %v3694, %v3685
        %v3696 = vsel %vm3689, %v3692, %v3695
        %v3697 = vsel %vm3686, nan, %v3696
        %v3698 = vand.u32 2147483647, %v679
        %vm3699 = vcmp.le.f32.partialorder %v3698, 0.7853982
        %vm3700 = vcmp.lt.s32.totalorder %v679, 0
        %v3701 = vand.u32 %v679, 2139095040
        %v3702 = vshrl.u32 %v3701, 23
        %v3703 = vsub.s32 %v3702, 127
        %v3704 = vand.u32 2147483647, %v679
        %v3705 = vand.u32 %v3704, 8388607
        %v3706 = vor.u32 %v3705, 8388608
        %v3707 = vsub.s32 0, %v3706
        %v3708 = vadd.s32 %v3703, 1
        %vm3709 = vcmp.gt.s32.totalorder %v3708, 0
        %v3710 = vsel %vm3709, %v3708, 0
        %v3711 = vshrl.u32 %v3710, 5
        %v3712 = vand.u32 %v3710, 31
        %v3713 = vsub.s32 32, %v3712
        %v3714 = vshrl.u32 683565275, %v3713
        %v3715 = vshll.u32 683565275, %v3712
        %v3716 = vshrl.u32 2475754826, %v3713
        %v3717 = vor.u32 %v3715, %v3716
        %v3718 = vshll.u32 2475754826, %v3712
        %v3719 = vshrl.u32 2131351028, %v3713
        %v3720 = vor.u32 %v3718, %v3719
        %v3721 = vshll.u32 2131351028, %v3712
        %v3722 = vshrl.u32 2102212464, %v3713
        %v3723 = vor.u32 %v3721, %v3722
        %v3724 = vshll.u32 2102212464, %v3712
        %v3725 = vshrl.u32 920167782, %v3713
        %v3726 = vor.u32 %v3724, %v3725
        %v3727 = vshll.u32 920167782, %v3712
        %v3728 = vshrl.u32 1326507024, %v3713
        %v3729 = vor.u32 %v3727, %v3728
        %vm3730 = vcmp.lt.s32.totalorder %v3711, 1
        %vm3731 = vcmp.lt.s32.totalorder %v3711, 2
        %vm3732 = vcmp.lt.s32.totalorder %v3711, 3
        %vm3733 = vcmp.lt.s32.totalorder %v3711, 4
        %v3734 = vsel %vm3730, %v3714, %v3717
        %v3735 = vsel %vm3733, %v3723, 2102212464
        %v3736 = vsel %vm3732, %v3720, %v3735
        %v3737 = vsel %vm3731, %v3734, %v3736
        %v3738 = vsel %vm3730, %v3717, %v3720
        %v3739 = vsel %vm3733, %v3726, 920167782
        %v3740 = vsel %vm3732, %v3723, %v3739
        %v3741 = vsel %vm3731, %v3738, %v3740
        %v3742 = vsel %vm3730, %v3720, %v3723
        %v3743 = vsel %vm3733, %v3729, 1326507024
        %v3744 = vsel %vm3732, %v3726, %v3743
        %v3745 = vsel %vm3731, %v3742, %v3744
        %v3746 = vshll.u32 %v3706, 8
        %v3747 = vmul.u32.u64.compose %v3746, %v3745
        %v3748 = vextract.low.u32 %v3747
        %v3749 = vextract.high.u32 %v3747
        %v3750 = vmul.u32.u64.compose %v3746, %v3741
        %v3751 = vextract.low.u32 %v3750
        %v3752 = vextract.high.u32 %v3750
        %v3753 = vmul.u32 %v3746, %v3737
        %v3754 = vadd.s32 %v3749, %v3751
        %vm3755 = vc.u32 %v3749, %v3751
        %v3756 = vadd.s32 %v3752, 1
        %v3757 = vsel %vm3755, %v3756, %v3752
        %v3758 = vadd.s32 %v3753, %v3757
        %v3759 = vadd.s32 %v3758, 536870912
        %v3760 = vshrl.u32 %v3759, 30
        %v3761 = vshll.u32 %v3760, 30
        %v3762 = vsub.s32 %v3758, %v3761
        %vm3763 = vcmp.lt.s32.totalorder %v3762, 0
        %v3764 = vsub.s32 0, %v3762
        %v3765 = vsel %vm3763, %v3764, %v3762
        %v3766 = vclz %v3765
        %v3767 = vsub.s32 %v3766, 2
        %vm3768 = vcmp.gt.s32.totalorder 0, %v3767
        %v3769 = vsel %vm3768, 0, %v3767
        %v3770 = vsub.s32 32, %v3769
        %v3771 = vshll.u32 %v3762, %v3769
        %v3772 = vshrl.u32 %v3754, %v3770
        %v3773 = vor.u32 %v3771, %v3772
        %v3774 = vsub.s32 4294967266, %v3769
        %v3775 = vadd.s32 %v3774, 127
        %v3776 = vshll.u32 %v3775, 23
        %v3777 = vor.u32 4788187, %v3776
        %v3778 = vand.u32 2147483647, %v3777
        %v3780 = vcvt.s32.f32 %v3773
        %v3781 = vmul.f32 %v3780, %v3778
        %v3782 = vxor.u32 %v3781, 2147483648
        %v3783 = vsel %vm3700, %v3782, %v3781
        %v3784 = vsub.s32 4, %v3760
        %v3785 = vsel %vm3700, %v3784, %v3760
        %v3786 = vsel %vm3699, %v679, %v3783
        %v3787 = vsel %vm3699, 0, %v3785
        %v3788 = vcosq.f32.pop %v3786
        %v3789 = vsinq.f32.pop %v3786
        %vm3790 = vweird.f32 %v679
        %v3791 = vadd.s32 %v3787, 3
        %v3792 = vand.u32 %v3791, 3
        %vm3793 = vcmp.lt.s32.totalorder %v3792, 2
        %vm3794 = vcmp.eq.s32.totalorder %v3792, 0
        %v3795 = vxor.u32 %v3789, 2147483648
        %v3796 = vsel %vm3794, %v3788, %v3795
        %vm3797 = vcmp.eq.s32.totalorder %v3792, 2
        %v3798 = vxor.u32 %v3788, 2147483648
        %v3799 = vsel %vm3797, %v3798, %v3789
        %v3800 = vsel %vm3793, %v3796, %v3799
        %v3801 = vsel %vm3790, nan, %v3800
        %v3802 = vand.u32 2147483647, %v680
        %vm3803 = vcmp.le.f32.partialorder %v3802, 0.7853982
        %vm3804 = vcmp.lt.s32.totalorder %v680, 0
        %v3805 = vand.u32 %v680, 2139095040
        %v3806 = vshrl.u32 %v3805, 23
        %v3807 = vsub.s32 %v3806, 127
        %v3808 = vand.u32 2147483647, %v680
        %v3809 = vand.u32 %v3808, 8388607
        %v3810 = vor.u32 %v3809, 8388608
        %v3811 = vsub.s32 0, %v3810
        %v3812 = vadd.s32 %v3807, 1
        %vm3813 = vcmp.gt.s32.totalorder %v3812, 0
        %v3814 = vsel %vm3813, %v3812, 0
        %v3815 = vshrl.u32 %v3814, 5
        %v3816 = vand.u32 %v3814, 31
        %v3817 = vsub.s32 32, %v3816
        %v3818 = vshrl.u32 683565275, %v3817
        %v3819 = vshll.u32 683565275, %v3816
        %v3820 = vshrl.u32 2475754826, %v3817
        %v3821 = vor.u32 %v3819, %v3820
        %v3822 = vshll.u32 2475754826, %v3816
        %v3823 = vshrl.u32 2131351028, %v3817
        %v3824 = vor.u32 %v3822, %v3823
        %v3825 = vshll.u32 2131351028, %v3816
        %v3826 = vshrl.u32 2102212464, %v3817
        %v3827 = vor.u32 %v3825, %v3826
        %v3828 = vshll.u32 2102212464, %v3816
        %v3829 = vshrl.u32 920167782, %v3817
        %v3830 = vor.u32 %v3828, %v3829
        %v3831 = vshll.u32 920167782, %v3816
        %v3832 = vshrl.u32 1326507024, %v3817
        %v3833 = vor.u32 %v3831, %v3832
        %vm3834 = vcmp.lt.s32.totalorder %v3815, 1
        %vm3835 = vcmp.lt.s32.totalorder %v3815, 2
        %vm3836 = vcmp.lt.s32.totalorder %v3815, 3
        %vm3837 = vcmp.lt.s32.totalorder %v3815, 4
        %v3838 = vsel %vm3834, %v3818, %v3821
        %v3839 = vsel %vm3837, %v3827, 2102212464
        %v3840 = vsel %vm3836, %v3824, %v3839
        %v3841 = vsel %vm3835, %v3838, %v3840
        %v3842 = vsel %vm3834, %v3821, %v3824
        %v3843 = vsel %vm3837, %v3830, 920167782
        %v3844 = vsel %vm3836, %v3827, %v3843
        %v3845 = vsel %vm3835, %v3842, %v3844
        %v3846 = vsel %vm3834, %v3824, %v3827
        %v3847 = vsel %vm3837, %v3833, 1326507024
        %v3848 = vsel %vm3836, %v3830, %v3847
        %v3849 = vsel %vm3835, %v3846, %v3848
        %v3850 = vshll.u32 %v3810, 8
        %v3851 = vmul.u32.u64.compose %v3850, %v3849
        %v3852 = vextract.low.u32 %v3851
        %v3853 = vextract.high.u32 %v3851
        %v3854 = vmul.u32.u64.compose %v3850, %v3845
        %v3855 = vextract.low.u32 %v3854
        %v3856 = vextract.high.u32 %v3854
        %v3857 = vmul.u32 %v3850, %v3841
        %v3858 = vadd.s32 %v3853, %v3855
        %vm3859 = vc.u32 %v3853, %v3855
        %v3860 = vadd.s32 %v3856, 1
        %v3861 = vsel %vm3859, %v3860, %v3856
        %v3862 = vadd.s32 %v3857, %v3861
        %v3863 = vadd.s32 %v3862, 536870912
        %v3864 = vshrl.u32 %v3863, 30
        %v3865 = vshll.u32 %v3864, 30
        %v3866 = vsub.s32 %v3862, %v3865
        %vm3867 = vcmp.lt.s32.totalorder %v3866, 0
        %v3868 = vsub.s32 0, %v3866
        %v3869 = vsel %vm3867, %v3868, %v3866
        %v3870 = vclz %v3869
        %v3871 = vsub.s32 %v3870, 2
        %vm3872 = vcmp.gt.s32.totalorder 0, %v3871
        %v3873 = vsel %vm3872, 0, %v3871
        %v3874 = vsub.s32 32, %v3873
        %v3875 = vshll.u32 %v3866, %v3873
        %v3876 = vshrl.u32 %v3858, %v3874
        %v3877 = vor.u32 %v3875, %v3876
        %v3878 = vsub.s32 4294967266, %v3873
        %v3879 = vadd.s32 %v3878, 127
        %v3880 = vshll.u32 %v3879, 23
        %v3881 = vor.u32 4788187, %v3880
        %v3882 = vand.u32 2147483647, %v3881
        %v3884 = vcvt.s32.f32 %v3877
        %v3885 = vmul.f32 %v3884, %v3882
        %v3886 = vxor.u32 %v3885, 2147483648
        %v3887 = vsel %vm3804, %v3886, %v3885
        %v3888 = vsub.s32 4, %v3864
        %v3889 = vsel %vm3804, %v3888, %v3864
        %v3890 = vsel %vm3803, %v680, %v3887
        %v3891 = vsel %vm3803, 0, %v3889
        %v3892 = vcosq.f32.pop %v3890
        %v3893 = vsinq.f32.pop %v3890
        %vm3894 = vweird.f32 %v680
        %v3895 = vadd.s32 %v3891, 3
        %v3896 = vand.u32 %v3895, 3
        %vm3897 = vcmp.lt.s32.totalorder %v3896, 2
        %vm3898 = vcmp.eq.s32.totalorder %v3896, 0
        %v3899 = vxor.u32 %v3893, 2147483648
        %v3900 = vsel %vm3898, %v3892, %v3899
        %vm3901 = vcmp.eq.s32.totalorder %v3896, 2
        %v3902 = vxor.u32 %v3892, 2147483648
        %v3903 = vsel %vm3901, %v3902, %v3893
        %v3904 = vsel %vm3897, %v3900, %v3903
        %v3905 = vsel %vm3894, nan, %v3904
        %v3906 = vand.u32 2147483647, %v681
        %vm3907 = vcmp.le.f32.partialorder %v3906, 0.7853982
        %vm3908 = vcmp.lt.s32.totalorder %v681, 0
        %v3909 = vand.u32 %v681, 2139095040
        %v3910 = vshrl.u32 %v3909, 23
        %v3911 = vsub.s32 %v3910, 127
        %v3912 = vand.u32 2147483647, %v681
        %v3913 = vand.u32 %v3912, 8388607
        %v3914 = vor.u32 %v3913, 8388608
        %v3915 = vsub.s32 0, %v3914
        %v3916 = vadd.s32 %v3911, 1
        %vm3917 = vcmp.gt.s32.totalorder %v3916, 0
        %v3918 = vsel %vm3917, %v3916, 0
        %v3919 = vshrl.u32 %v3918, 5
        %v3920 = vand.u32 %v3918, 31
        %v3921 = vsub.s32 32, %v3920
        %v3922 = vshrl.u32 683565275, %v3921
        %v3923 = vshll.u32 683565275, %v3920
        %v3924 = vshrl.u32 2475754826, %v3921
        %v3925 = vor.u32 %v3923, %v3924
        %v3926 = vshll.u32 2475754826, %v3920
        %v3927 = vshrl.u32 2131351028, %v3921
        %v3928 = vor.u32 %v3926, %v3927
        %v3929 = vshll.u32 2131351028, %v3920
        %v3930 = vshrl.u32 2102212464, %v3921
        %v3931 = vor.u32 %v3929, %v3930
        %v3932 = vshll.u32 2102212464, %v3920
        %v3933 = vshrl.u32 920167782, %v3921
        %v3934 = vor.u32 %v3932, %v3933
        %v3935 = vshll.u32 920167782, %v3920
        %v3936 = vshrl.u32 1326507024, %v3921
        %v3937 = vor.u32 %v3935, %v3936
        %vm3938 = vcmp.lt.s32.totalorder %v3919, 1
        %vm3939 = vcmp.lt.s32.totalorder %v3919, 2
        %vm3940 = vcmp.lt.s32.totalorder %v3919, 3
        %vm3941 = vcmp.lt.s32.totalorder %v3919, 4
        %v3942 = vsel %vm3938, %v3922, %v3925
        %v3943 = vsel %vm3941, %v3931, 2102212464
        %v3944 = vsel %vm3940, %v3928, %v3943
        %v3945 = vsel %vm3939, %v3942, %v3944
        %v3946 = vsel %vm3938, %v3925, %v3928
        %v3947 = vsel %vm3941, %v3934, 920167782
        %v3948 = vsel %vm3940, %v3931, %v3947
        %v3949 = vsel %vm3939, %v3946, %v3948
        %v3950 = vsel %vm3938, %v3928, %v3931
        %v3951 = vsel %vm3941, %v3937, 1326507024
        %v3952 = vsel %vm3940, %v3934, %v3951
        %v3953 = vsel %vm3939, %v3950, %v3952
        %v3954 = vshll.u32 %v3914, 8
        %v3955 = vmul.u32.u64.compose %v3954, %v3953
        %v3956 = vextract.low.u32 %v3955
        %v3957 = vextract.high.u32 %v3955
        %v3958 = vmul.u32.u64.compose %v3954, %v3949
        %v3959 = vextract.low.u32 %v3958
        %v3960 = vextract.high.u32 %v3958
        %v3961 = vmul.u32 %v3954, %v3945
        %v3962 = vadd.s32 %v3957, %v3959
        %vm3963 = vc.u32 %v3957, %v3959
        %v3964 = vadd.s32 %v3960, 1
        %v3965 = vsel %vm3963, %v3964, %v3960
        %v3966 = vadd.s32 %v3961, %v3965
        %v3967 = vadd.s32 %v3966, 536870912
        %v3968 = vshrl.u32 %v3967, 30
        %v3969 = vshll.u32 %v3968, 30
        %v3970 = vsub.s32 %v3966, %v3969
        %vm3971 = vcmp.lt.s32.totalorder %v3970, 0
        %v3972 = vsub.s32 0, %v3970
        %v3973 = vsel %vm3971, %v3972, %v3970
        %v3974 = vclz %v3973
        %v3975 = vsub.s32 %v3974, 2
        %vm3976 = vcmp.gt.s32.totalorder 0, %v3975
        %v3977 = vsel %vm3976, 0, %v3975
        %v3978 = vsub.s32 32, %v3977
        %v3979 = vshll.u32 %v3970, %v3977
        %v3980 = vshrl.u32 %v3962, %v3978
        %v3981 = vor.u32 %v3979, %v3980
        %v3982 = vsub.s32 4294967266, %v3977
        %v3983 = vadd.s32 %v3982, 127
        %v3984 = vshll.u32 %v3983, 23
        %v3985 = vor.u32 4788187, %v3984
        %v3986 = vand.u32 2147483647, %v3985
        %v3988 = vcvt.s32.f32 %v3981
        %v3989 = vmul.f32 %v3988, %v3986
        %v3990 = vxor.u32 %v3989, 2147483648
        %v3991 = vsel %vm3908, %v3990, %v3989
        %v3992 = vsub.s32 4, %v3968
        %v3993 = vsel %vm3908, %v3992, %v3968
        %v3994 = vsel %vm3907, %v681, %v3991
        %v3995 = vsel %vm3907, 0, %v3993
        %v3996 = vcosq.f32.pop %v3994
        %v3997 = vsinq.f32.pop %v3994
        %vm3998 = vweird.f32 %v681
        %v3999 = vadd.s32 %v3995, 3
        %v4000 = vand.u32 %v3999, 3
        %vm4001 = vcmp.lt.s32.totalorder %v4000, 2
        %vm4002 = vcmp.eq.s32.totalorder %v4000, 0
        %v4003 = vxor.u32 %v3997, 2147483648
        %v4004 = vsel %vm4002, %v3996, %v4003
        %vm4005 = vcmp.eq.s32.totalorder %v4000, 2
        %v4006 = vxor.u32 %v3996, 2147483648
        %v4007 = vsel %vm4005, %v4006, %v3997
        %v4008 = vsel %vm4001, %v4004, %v4007
        %v4009 = vsel %vm3998, nan, %v4008
        %v4010 = vand.u32 2147483647, %v650
        %vm4011 = vcmp.le.f32.partialorder %v4010, 0.7853982
        %vm4012 = vcmp.lt.s32.totalorder %v650, 0
        %v4013 = vand.u32 %v650, 2139095040
        %v4014 = vshrl.u32 %v4013, 23
        %v4015 = vsub.s32 %v4014, 127
        %v4016 = vand.u32 2147483647, %v650
        %v4017 = vand.u32 %v4016, 8388607
        %v4018 = vor.u32 %v4017, 8388608
        %v4019 = vsub.s32 0, %v4018
        %v4020 = vadd.s32 %v4015, 1
        %vm4021 = vcmp.gt.s32.totalorder %v4020, 0
        %v4022 = vsel %vm4021, %v4020, 0
        %v4023 = vshrl.u32 %v4022, 5
        %v4024 = vand.u32 %v4022, 31
        %v4025 = vsub.s32 32, %v4024
        %v4026 = vshrl.u32 683565275, %v4025
        %v4027 = vshll.u32 683565275, %v4024
        %v4028 = vshrl.u32 2475754826, %v4025
        %v4029 = vor.u32 %v4027, %v4028
        %v4030 = vshll.u32 2475754826, %v4024
        %v4031 = vshrl.u32 2131351028, %v4025
        %v4032 = vor.u32 %v4030, %v4031
        %v4033 = vshll.u32 2131351028, %v4024
        %v4034 = vshrl.u32 2102212464, %v4025
        %v4035 = vor.u32 %v4033, %v4034
        %v4036 = vshll.u32 2102212464, %v4024
        %v4037 = vshrl.u32 920167782, %v4025
        %v4038 = vor.u32 %v4036, %v4037
        %v4039 = vshll.u32 920167782, %v4024
        %v4040 = vshrl.u32 1326507024, %v4025
        %v4041 = vor.u32 %v4039, %v4040
        %vm4042 = vcmp.lt.s32.totalorder %v4023, 1
        %vm4043 = vcmp.lt.s32.totalorder %v4023, 2
        %vm4044 = vcmp.lt.s32.totalorder %v4023, 3
        %vm4045 = vcmp.lt.s32.totalorder %v4023, 4
        %v4046 = vsel %vm4042, %v4026, %v4029
        %v4047 = vsel %vm4045, %v4035, 2102212464
        %v4048 = vsel %vm4044, %v4032, %v4047
        %v4049 = vsel %vm4043, %v4046, %v4048
        %v4050 = vsel %vm4042, %v4029, %v4032
        %v4051 = vsel %vm4045, %v4038, 920167782
        %v4052 = vsel %vm4044, %v4035, %v4051
        %v4053 = vsel %vm4043, %v4050, %v4052
        %v4054 = vsel %vm4042, %v4032, %v4035
        %v4055 = vsel %vm4045, %v4041, 1326507024
        %v4056 = vsel %vm4044, %v4038, %v4055
        %v4057 = vsel %vm4043, %v4054, %v4056
        %v4058 = vshll.u32 %v4018, 8
        %v4059 = vmul.u32.u64.compose %v4058, %v4057
        %v4060 = vextract.low.u32 %v4059
        %v4061 = vextract.high.u32 %v4059
        %v4062 = vmul.u32.u64.compose %v4058, %v4053
        %v4063 = vextract.low.u32 %v4062
        %v4064 = vextract.high.u32 %v4062
        %v4065 = vmul.u32 %v4058, %v4049
        %v4066 = vadd.s32 %v4061, %v4063
        %vm4067 = vc.u32 %v4061, %v4063
        %v4068 = vadd.s32 %v4064, 1
        %v4069 = vsel %vm4067, %v4068, %v4064
        %v4070 = vadd.s32 %v4065, %v4069
        %v4071 = vadd.s32 %v4070, 536870912
        %v4072 = vshrl.u32 %v4071, 30
        %v4073 = vshll.u32 %v4072, 30
        %v4074 = vsub.s32 %v4070, %v4073
        %vm4075 = vcmp.lt.s32.totalorder %v4074, 0
        %v4076 = vsub.s32 0, %v4074
        %v4077 = vsel %vm4075, %v4076, %v4074
        %v4078 = vclz %v4077
        %v4079 = vsub.s32 %v4078, 2
        %vm4080 = vcmp.gt.s32.totalorder 0, %v4079
        %v4081 = vsel %vm4080, 0, %v4079
        %v4082 = vsub.s32 32, %v4081
        %v4083 = vshll.u32 %v4074, %v4081
        %v4084 = vshrl.u32 %v4066, %v4082
        %v4085 = vor.u32 %v4083, %v4084
        %v4086 = vsub.s32 4294967266, %v4081
        %v4087 = vadd.s32 %v4086, 127
        %v4088 = vshll.u32 %v4087, 23
        %v4089 = vor.u32 4788187, %v4088
        %v4090 = vand.u32 2147483647, %v4089
        %v4092 = vcvt.s32.f32 %v4085
        %v4093 = vmul.f32 %v4092, %v4090
        %v4094 = vxor.u32 %v4093, 2147483648
        %v4095 = vsel %vm4012, %v4094, %v4093
        %v4096 = vsub.s32 4, %v4072
        %v4097 = vsel %vm4012, %v4096, %v4072
        %v4098 = vsel %vm4011, %v650, %v4095
        %v4099 = vsel %vm4011, 0, %v4097
        %v4100 = vcosq.f32.pop %v4098
        %v4101 = vsinq.f32.pop %v4098
        %vm4102 = vweird.f32 %v650
        %v4103 = vand.u32 %v4099, 3
        %vm4104 = vcmp.lt.s32.totalorder %v4103, 2
        %vm4105 = vcmp.eq.s32.totalorder %v4103, 0
        %v4106 = vxor.u32 %v4101, 2147483648
        %v4107 = vsel %vm4105, %v4100, %v4106
        %vm4108 = vcmp.eq.s32.totalorder %v4103, 2
        %v4109 = vxor.u32 %v4100, 2147483648
        %v4110 = vsel %vm4108, %v4109, %v4101
        %v4111 = vsel %vm4104, %v4107, %v4110
        %v4112 = vsel %vm4102, nan, %v4111
        %v4113 = vand.u32 2147483647, %v651
        %vm4114 = vcmp.le.f32.partialorder %v4113, 0.7853982
        %vm4115 = vcmp.lt.s32.totalorder %v651, 0
        %v4116 = vand.u32 %v651, 2139095040
        %v4117 = vshrl.u32 %v4116, 23
        %v4118 = vsub.s32 %v4117, 127
        %v4119 = vand.u32 2147483647, %v651
        %v4120 = vand.u32 %v4119, 8388607
        %v4121 = vor.u32 %v4120, 8388608
        %v4122 = vsub.s32 0, %v4121
        %v4123 = vadd.s32 %v4118, 1
        %vm4124 = vcmp.gt.s32.totalorder %v4123, 0
        %v4125 = vsel %vm4124, %v4123, 0
        %v4126 = vshrl.u32 %v4125, 5
        %v4127 = vand.u32 %v4125, 31
        %v4128 = vsub.s32 32, %v4127
        %v4129 = vshrl.u32 683565275, %v4128
        %v4130 = vshll.u32 683565275, %v4127
        %v4131 = vshrl.u32 2475754826, %v4128
        %v4132 = vor.u32 %v4130, %v4131
        %v4133 = vshll.u32 2475754826, %v4127
        %v4134 = vshrl.u32 2131351028, %v4128
        %v4135 = vor.u32 %v4133, %v4134
        %v4136 = vshll.u32 2131351028, %v4127
        %v4137 = vshrl.u32 2102212464, %v4128
        %v4138 = vor.u32 %v4136, %v4137
        %v4139 = vshll.u32 2102212464, %v4127
        %v4140 = vshrl.u32 920167782, %v4128
        %v4141 = vor.u32 %v4139, %v4140
        %v4142 = vshll.u32 920167782, %v4127
        %v4143 = vshrl.u32 1326507024, %v4128
        %v4144 = vor.u32 %v4142, %v4143
        %vm4145 = vcmp.lt.s32.totalorder %v4126, 1
        %vm4146 = vcmp.lt.s32.totalorder %v4126, 2
        %vm4147 = vcmp.lt.s32.totalorder %v4126, 3
        %vm4148 = vcmp.lt.s32.totalorder %v4126, 4
        %v4149 = vsel %vm4145, %v4129, %v4132
        %v4150 = vsel %vm4148, %v4138, 2102212464
        %v4151 = vsel %vm4147, %v4135, %v4150
        %v4152 = vsel %vm4146, %v4149, %v4151
        %v4153 = vsel %vm4145, %v4132, %v4135
        %v4154 = vsel %vm4148, %v4141, 920167782
        %v4155 = vsel %vm4147, %v4138, %v4154
        %v4156 = vsel %vm4146, %v4153, %v4155
        %v4157 = vsel %vm4145, %v4135, %v4138
        %v4158 = vsel %vm4148, %v4144, 1326507024
        %v4159 = vsel %vm4147, %v4141, %v4158
        %v4160 = vsel %vm4146, %v4157, %v4159
        %v4161 = vshll.u32 %v4121, 8
        %v4162 = vmul.u32.u64.compose %v4161, %v4160
        %v4163 = vextract.low.u32 %v4162
        %v4164 = vextract.high.u32 %v4162
        %v4165 = vmul.u32.u64.compose %v4161, %v4156
        %v4166 = vextract.low.u32 %v4165
        %v4167 = vextract.high.u32 %v4165
        %v4168 = vmul.u32 %v4161, %v4152
        %v4169 = vadd.s32 %v4164, %v4166
        %vm4170 = vc.u32 %v4164, %v4166
        %v4171 = vadd.s32 %v4167, 1
        %v4172 = vsel %vm4170, %v4171, %v4167
        %v4173 = vadd.s32 %v4168, %v4172
        %v4174 = vadd.s32 %v4173, 536870912
        %v4175 = vshrl.u32 %v4174, 30
        %v4176 = vshll.u32 %v4175, 30
        %v4177 = vsub.s32 %v4173, %v4176
        %vm4178 = vcmp.lt.s32.totalorder %v4177, 0
        %v4179 = vsub.s32 0, %v4177
        %v4180 = vsel %vm4178, %v4179, %v4177
        %v4181 = vclz %v4180
        %v4182 = vsub.s32 %v4181, 2
        %vm4183 = vcmp.gt.s32.totalorder 0, %v4182
        %v4184 = vsel %vm4183, 0, %v4182
        %v4185 = vsub.s32 32, %v4184
        %v4186 = vshll.u32 %v4177, %v4184
        %v4187 = vshrl.u32 %v4169, %v4185
        %v4188 = vor.u32 %v4186, %v4187
        %v4189 = vsub.s32 4294967266, %v4184
        %v4190 = vadd.s32 %v4189, 127
        %v4191 = vshll.u32 %v4190, 23
        %v4192 = vor.u32 4788187, %v4191
        %v4193 = vand.u32 2147483647, %v4192
        %v4195 = vcvt.s32.f32 %v4188
        %v4196 = vmul.f32 %v4195, %v4193
        %v4197 = vxor.u32 %v4196, 2147483648
        %v4198 = vsel %vm4115, %v4197, %v4196
        %v4199 = vsub.s32 4, %v4175
        %v4200 = vsel %vm4115, %v4199, %v4175
        %v4201 = vsel %vm4114, %v651, %v4198
        %v4202 = vsel %vm4114, 0, %v4200
        %v4203 = vcosq.f32.pop %v4201
        %v4204 = vsinq.f32.pop %v4201
        %vm4205 = vweird.f32 %v651
        %v4206 = vand.u32 %v4202, 3
        %vm4207 = vcmp.lt.s32.totalorder %v4206, 2
        %vm4208 = vcmp.eq.s32.totalorder %v4206, 0
        %v4209 = vxor.u32 %v4204, 2147483648
        %v4210 = vsel %vm4208, %v4203, %v4209
        %vm4211 = vcmp.eq.s32.totalorder %v4206, 2
        %v4212 = vxor.u32 %v4203, 2147483648
        %v4213 = vsel %vm4211, %v4212, %v4204
        %v4214 = vsel %vm4207, %v4210, %v4213
        %v4215 = vsel %vm4205, nan, %v4214
        %v4216 = vand.u32 2147483647, %v652
        %vm4217 = vcmp.le.f32.partialorder %v4216, 0.7853982
        %vm4218 = vcmp.lt.s32.totalorder %v652, 0
        %v4219 = vand.u32 %v652, 2139095040
        %v4220 = vshrl.u32 %v4219, 23
        %v4221 = vsub.s32 %v4220, 127
        %v4222 = vand.u32 2147483647, %v652
        %v4223 = vand.u32 %v4222, 8388607
        %v4224 = vor.u32 %v4223, 8388608
        %v4225 = vsub.s32 0, %v4224
        %v4226 = vadd.s32 %v4221, 1
        %vm4227 = vcmp.gt.s32.totalorder %v4226, 0
        %v4228 = vsel %vm4227, %v4226, 0
        %v4229 = vshrl.u32 %v4228, 5
        %v4230 = vand.u32 %v4228, 31
        %v4231 = vsub.s32 32, %v4230
        %v4232 = vshrl.u32 683565275, %v4231
        %v4233 = vshll.u32 683565275, %v4230
        %v4234 = vshrl.u32 2475754826, %v4231
        %v4235 = vor.u32 %v4233, %v4234
        %v4236 = vshll.u32 2475754826, %v4230
        %v4237 = vshrl.u32 2131351028, %v4231
        %v4238 = vor.u32 %v4236, %v4237
        %v4239 = vshll.u32 2131351028, %v4230
        %v4240 = vshrl.u32 2102212464, %v4231
        %v4241 = vor.u32 %v4239, %v4240
        %v4242 = vshll.u32 2102212464, %v4230
        %v4243 = vshrl.u32 920167782, %v4231
        %v4244 = vor.u32 %v4242, %v4243
        %v4245 = vshll.u32 920167782, %v4230
        %v4246 = vshrl.u32 1326507024, %v4231
        %v4247 = vor.u32 %v4245, %v4246
        %vm4248 = vcmp.lt.s32.totalorder %v4229, 1
        %vm4249 = vcmp.lt.s32.totalorder %v4229, 2
        %vm4250 = vcmp.lt.s32.totalorder %v4229, 3
        %vm4251 = vcmp.lt.s32.totalorder %v4229, 4
        %v4252 = vsel %vm4248, %v4232, %v4235
        %v4253 = vsel %vm4251, %v4241, 2102212464
        %v4254 = vsel %vm4250, %v4238, %v4253
        %v4255 = vsel %vm4249, %v4252, %v4254
        %v4256 = vsel %vm4248, %v4235, %v4238
        %v4257 = vsel %vm4251, %v4244, 920167782
        %v4258 = vsel %vm4250, %v4241, %v4257
        %v4259 = vsel %vm4249, %v4256, %v4258
        %v4260 = vsel %vm4248, %v4238, %v4241
        %v4261 = vsel %vm4251, %v4247, 1326507024
        %v4262 = vsel %vm4250, %v4244, %v4261
        %v4263 = vsel %vm4249, %v4260, %v4262
        %v4264 = vshll.u32 %v4224, 8
        %v4265 = vmul.u32.u64.compose %v4264, %v4263
        %v4266 = vextract.low.u32 %v4265
        %v4267 = vextract.high.u32 %v4265
        %v4268 = vmul.u32.u64.compose %v4264, %v4259
        %v4269 = vextract.low.u32 %v4268
        %v4270 = vextract.high.u32 %v4268
        %v4271 = vmul.u32 %v4264, %v4255
        %v4272 = vadd.s32 %v4267, %v4269
        %vm4273 = vc.u32 %v4267, %v4269
        %v4274 = vadd.s32 %v4270, 1
        %v4275 = vsel %vm4273, %v4274, %v4270
        %v4276 = vadd.s32 %v4271, %v4275
        %v4277 = vadd.s32 %v4276, 536870912
        %v4278 = vshrl.u32 %v4277, 30
        %v4279 = vshll.u32 %v4278, 30
        %v4280 = vsub.s32 %v4276, %v4279
        %vm4281 = vcmp.lt.s32.totalorder %v4280, 0
        %v4282 = vsub.s32 0, %v4280
        %v4283 = vsel %vm4281, %v4282, %v4280
        %v4284 = vclz %v4283
        %v4285 = vsub.s32 %v4284, 2
        %vm4286 = vcmp.gt.s32.totalorder 0, %v4285
        %v4287 = vsel %vm4286, 0, %v4285
        %v4288 = vsub.s32 32, %v4287
        %v4289 = vshll.u32 %v4280, %v4287
        %v4290 = vshrl.u32 %v4272, %v4288
        %v4291 = vor.u32 %v4289, %v4290
        %v4292 = vsub.s32 4294967266, %v4287
        %v4293 = vadd.s32 %v4292, 127
        %v4294 = vshll.u32 %v4293, 23
        %v4295 = vor.u32 4788187, %v4294
        %v4296 = vand.u32 2147483647, %v4295
        %v4298 = vcvt.s32.f32 %v4291
        %v4299 = vmul.f32 %v4298, %v4296
        %v4300 = vxor.u32 %v4299, 2147483648
        %v4301 = vsel %vm4218, %v4300, %v4299
        %v4302 = vsub.s32 4, %v4278
        %v4303 = vsel %vm4218, %v4302, %v4278
        %v4304 = vsel %vm4217, %v652, %v4301
        %v4305 = vsel %vm4217, 0, %v4303
        %v4306 = vcosq.f32.pop %v4304
        %v4307 = vsinq.f32.pop %v4304
        %vm4308 = vweird.f32 %v652
        %v4309 = vand.u32 %v4305, 3
        %vm4310 = vcmp.lt.s32.totalorder %v4309, 2
        %vm4311 = vcmp.eq.s32.totalorder %v4309, 0
        %v4312 = vxor.u32 %v4307, 2147483648
        %v4313 = vsel %vm4311, %v4306, %v4312
        %vm4314 = vcmp.eq.s32.totalorder %v4309, 2
        %v4315 = vxor.u32 %v4306, 2147483648
        %v4316 = vsel %vm4314, %v4315, %v4307
        %v4317 = vsel %vm4310, %v4313, %v4316
        %v4318 = vsel %vm4308, nan, %v4317
        %v4319 = vand.u32 2147483647, %v653
        %vm4320 = vcmp.le.f32.partialorder %v4319, 0.7853982
        %vm4321 = vcmp.lt.s32.totalorder %v653, 0
        %v4322 = vand.u32 %v653, 2139095040
        %v4323 = vshrl.u32 %v4322, 23
        %v4324 = vsub.s32 %v4323, 127
        %v4325 = vand.u32 2147483647, %v653
        %v4326 = vand.u32 %v4325, 8388607
        %v4327 = vor.u32 %v4326, 8388608
        %v4328 = vsub.s32 0, %v4327
        %v4329 = vadd.s32 %v4324, 1
        %vm4330 = vcmp.gt.s32.totalorder %v4329, 0
        %v4331 = vsel %vm4330, %v4329, 0
        %v4332 = vshrl.u32 %v4331, 5
        %v4333 = vand.u32 %v4331, 31
        %v4334 = vsub.s32 32, %v4333
        %v4335 = vshrl.u32 683565275, %v4334
        %v4336 = vshll.u32 683565275, %v4333
        %v4337 = vshrl.u32 2475754826, %v4334
        %v4338 = vor.u32 %v4336, %v4337
        %v4339 = vshll.u32 2475754826, %v4333
        %v4340 = vshrl.u32 2131351028, %v4334
        %v4341 = vor.u32 %v4339, %v4340
        %v4342 = vshll.u32 2131351028, %v4333
        %v4343 = vshrl.u32 2102212464, %v4334
        %v4344 = vor.u32 %v4342, %v4343
        %v4345 = vshll.u32 2102212464, %v4333
        %v4346 = vshrl.u32 920167782, %v4334
        %v4347 = vor.u32 %v4345, %v4346
        %v4348 = vshll.u32 920167782, %v4333
        %v4349 = vshrl.u32 1326507024, %v4334
        %v4350 = vor.u32 %v4348, %v4349
        %vm4351 = vcmp.lt.s32.totalorder %v4332, 1
        %vm4352 = vcmp.lt.s32.totalorder %v4332, 2
        %vm4353 = vcmp.lt.s32.totalorder %v4332, 3
        %vm4354 = vcmp.lt.s32.totalorder %v4332, 4
        %v4355 = vsel %vm4351, %v4335, %v4338
        %v4356 = vsel %vm4354, %v4344, 2102212464
        %v4357 = vsel %vm4353, %v4341, %v4356
        %v4358 = vsel %vm4352, %v4355, %v4357
        %v4359 = vsel %vm4351, %v4338, %v4341
        %v4360 = vsel %vm4354, %v4347, 920167782
        %v4361 = vsel %vm4353, %v4344, %v4360
        %v4362 = vsel %vm4352, %v4359, %v4361
        %v4363 = vsel %vm4351, %v4341, %v4344
        %v4364 = vsel %vm4354, %v4350, 1326507024
        %v4365 = vsel %vm4353, %v4347, %v4364
        %v4366 = vsel %vm4352, %v4363, %v4365
        %v4367 = vshll.u32 %v4327, 8
        %v4368 = vmul.u32.u64.compose %v4367, %v4366
        %v4369 = vextract.low.u32 %v4368
        %v4370 = vextract.high.u32 %v4368
        %v4371 = vmul.u32.u64.compose %v4367, %v4362
        %v4372 = vextract.low.u32 %v4371
        %v4373 = vextract.high.u32 %v4371
        %v4374 = vmul.u32 %v4367, %v4358
        %v4375 = vadd.s32 %v4370, %v4372
        %vm4376 = vc.u32 %v4370, %v4372
        %v4377 = vadd.s32 %v4373, 1
        %v4378 = vsel %vm4376, %v4377, %v4373
        %v4379 = vadd.s32 %v4374, %v4378
        %v4380 = vadd.s32 %v4379, 536870912
        %v4381 = vshrl.u32 %v4380, 30
        %v4382 = vshll.u32 %v4381, 30
        %v4383 = vsub.s32 %v4379, %v4382
        %vm4384 = vcmp.lt.s32.totalorder %v4383, 0
        %v4385 = vsub.s32 0, %v4383
        %v4386 = vsel %vm4384, %v4385, %v4383
        %v4387 = vclz %v4386
        %v4388 = vsub.s32 %v4387, 2
        %vm4389 = vcmp.gt.s32.totalorder 0, %v4388
        %v4390 = vsel %vm4389, 0, %v4388
        %v4391 = vsub.s32 32, %v4390
        %v4392 = vshll.u32 %v4383, %v4390
        %v4393 = vshrl.u32 %v4375, %v4391
        %v4394 = vor.u32 %v4392, %v4393
        %v4395 = vsub.s32 4294967266, %v4390
        %v4396 = vadd.s32 %v4395, 127
        %v4397 = vshll.u32 %v4396, 23
        %v4398 = vor.u32 4788187, %v4397
        %v4399 = vand.u32 2147483647, %v4398
        %v4401 = vcvt.s32.f32 %v4394
        %v4402 = vmul.f32 %v4401, %v4399
        %v4403 = vxor.u32 %v4402, 2147483648
        %v4404 = vsel %vm4321, %v4403, %v4402
        %v4405 = vsub.s32 4, %v4381
        %v4406 = vsel %vm4321, %v4405, %v4381
        %v4407 = vsel %vm4320, %v653, %v4404
        %v4408 = vsel %vm4320, 0, %v4406
        %v4409 = vcosq.f32.pop %v4407
        %v4410 = vsinq.f32.pop %v4407
        %vm4411 = vweird.f32 %v653
        %v4412 = vand.u32 %v4408, 3
        %vm4413 = vcmp.lt.s32.totalorder %v4412, 2
        %vm4414 = vcmp.eq.s32.totalorder %v4412, 0
        %v4415 = vxor.u32 %v4410, 2147483648
        %v4416 = vsel %vm4414, %v4409, %v4415
        %vm4417 = vcmp.eq.s32.totalorder %v4412, 2
        %v4418 = vxor.u32 %v4409, 2147483648
        %v4419 = vsel %vm4417, %v4418, %v4410
        %v4420 = vsel %vm4413, %v4416, %v4419
        %v4421 = vsel %vm4411, nan, %v4420
        %v4422 = vand.u32 2147483647, %v654
        %vm4423 = vcmp.le.f32.partialorder %v4422, 0.7853982
        %vm4424 = vcmp.lt.s32.totalorder %v654, 0
        %v4425 = vand.u32 %v654, 2139095040
        %v4426 = vshrl.u32 %v4425, 23
        %v4427 = vsub.s32 %v4426, 127
        %v4428 = vand.u32 2147483647, %v654
        %v4429 = vand.u32 %v4428, 8388607
        %v4430 = vor.u32 %v4429, 8388608
        %v4431 = vsub.s32 0, %v4430
        %v4432 = vadd.s32 %v4427, 1
        %vm4433 = vcmp.gt.s32.totalorder %v4432, 0
        %v4434 = vsel %vm4433, %v4432, 0
        %v4435 = vshrl.u32 %v4434, 5
        %v4436 = vand.u32 %v4434, 31
        %v4437 = vsub.s32 32, %v4436
        %v4438 = vshrl.u32 683565275, %v4437
        %v4439 = vshll.u32 683565275, %v4436
        %v4440 = vshrl.u32 2475754826, %v4437
        %v4441 = vor.u32 %v4439, %v4440
        %v4442 = vshll.u32 2475754826, %v4436
        %v4443 = vshrl.u32 2131351028, %v4437
        %v4444 = vor.u32 %v4442, %v4443
        %v4445 = vshll.u32 2131351028, %v4436
        %v4446 = vshrl.u32 2102212464, %v4437
        %v4447 = vor.u32 %v4445, %v4446
        %v4448 = vshll.u32 2102212464, %v4436
        %v4449 = vshrl.u32 920167782, %v4437
        %v4450 = vor.u32 %v4448, %v4449
        %v4451 = vshll.u32 920167782, %v4436
        %v4452 = vshrl.u32 1326507024, %v4437
        %v4453 = vor.u32 %v4451, %v4452
        %vm4454 = vcmp.lt.s32.totalorder %v4435, 1
        %vm4455 = vcmp.lt.s32.totalorder %v4435, 2
        %vm4456 = vcmp.lt.s32.totalorder %v4435, 3
        %vm4457 = vcmp.lt.s32.totalorder %v4435, 4
        %v4458 = vsel %vm4454, %v4438, %v4441
        %v4459 = vsel %vm4457, %v4447, 2102212464
        %v4460 = vsel %vm4456, %v4444, %v4459
        %v4461 = vsel %vm4455, %v4458, %v4460
        %v4462 = vsel %vm4454, %v4441, %v4444
        %v4463 = vsel %vm4457, %v4450, 920167782
        %v4464 = vsel %vm4456, %v4447, %v4463
        %v4465 = vsel %vm4455, %v4462, %v4464
        %v4466 = vsel %vm4454, %v4444, %v4447
        %v4467 = vsel %vm4457, %v4453, 1326507024
        %v4468 = vsel %vm4456, %v4450, %v4467
        %v4469 = vsel %vm4455, %v4466, %v4468
        %v4470 = vshll.u32 %v4430, 8
        %v4471 = vmul.u32.u64.compose %v4470, %v4469
        %v4472 = vextract.low.u32 %v4471
        %v4473 = vextract.high.u32 %v4471
        %v4474 = vmul.u32.u64.compose %v4470, %v4465
        %v4475 = vextract.low.u32 %v4474
        %v4476 = vextract.high.u32 %v4474
        %v4477 = vmul.u32 %v4470, %v4461
        %v4478 = vadd.s32 %v4473, %v4475
        %vm4479 = vc.u32 %v4473, %v4475
        %v4480 = vadd.s32 %v4476, 1
        %v4481 = vsel %vm4479, %v4480, %v4476
        %v4482 = vadd.s32 %v4477, %v4481
        %v4483 = vadd.s32 %v4482, 536870912
        %v4484 = vshrl.u32 %v4483, 30
        %v4485 = vshll.u32 %v4484, 30
        %v4486 = vsub.s32 %v4482, %v4485
        %vm4487 = vcmp.lt.s32.totalorder %v4486, 0
        %v4488 = vsub.s32 0, %v4486
        %v4489 = vsel %vm4487, %v4488, %v4486
        %v4490 = vclz %v4489
        %v4491 = vsub.s32 %v4490, 2
        %vm4492 = vcmp.gt.s32.totalorder 0, %v4491
        %v4493 = vsel %vm4492, 0, %v4491
        %v4494 = vsub.s32 32, %v4493
        %v4495 = vshll.u32 %v4486, %v4493
        %v4496 = vshrl.u32 %v4478, %v4494
        %v4497 = vor.u32 %v4495, %v4496
        %v4498 = vsub.s32 4294967266, %v4493
        %v4499 = vadd.s32 %v4498, 127
        %v4500 = vshll.u32 %v4499, 23
        %v4501 = vor.u32 4788187, %v4500
        %v4502 = vand.u32 2147483647, %v4501
        %v4504 = vcvt.s32.f32 %v4497
        %v4505 = vmul.f32 %v4504, %v4502
        %v4506 = vxor.u32 %v4505, 2147483648
        %v4507 = vsel %vm4424, %v4506, %v4505
        %v4508 = vsub.s32 4, %v4484
        %v4509 = vsel %vm4424, %v4508, %v4484
        %v4510 = vsel %vm4423, %v654, %v4507
        %v4511 = vsel %vm4423, 0, %v4509
        %v4512 = vcosq.f32.pop %v4510
        %v4513 = vsinq.f32.pop %v4510
        %vm4514 = vweird.f32 %v654
        %v4515 = vand.u32 %v4511, 3
        %vm4516 = vcmp.lt.s32.totalorder %v4515, 2
        %vm4517 = vcmp.eq.s32.totalorder %v4515, 0
        %v4518 = vxor.u32 %v4513, 2147483648
        %v4519 = vsel %vm4517, %v4512, %v4518
        %vm4520 = vcmp.eq.s32.totalorder %v4515, 2
        %v4521 = vxor.u32 %v4512, 2147483648
        %v4522 = vsel %vm4520, %v4521, %v4513
        %v4523 = vsel %vm4516, %v4519, %v4522
        %v4524 = vsel %vm4514, nan, %v4523
        %v4525 = vand.u32 2147483647, %v655
        %vm4526 = vcmp.le.f32.partialorder %v4525, 0.7853982
        %vm4527 = vcmp.lt.s32.totalorder %v655, 0
        %v4528 = vand.u32 %v655, 2139095040
        %v4529 = vshrl.u32 %v4528, 23
        %v4530 = vsub.s32 %v4529, 127
        %v4531 = vand.u32 2147483647, %v655
        %v4532 = vand.u32 %v4531, 8388607
        %v4533 = vor.u32 %v4532, 8388608
        %v4534 = vsub.s32 0, %v4533
        %v4535 = vadd.s32 %v4530, 1
        %vm4536 = vcmp.gt.s32.totalorder %v4535, 0
        %v4537 = vsel %vm4536, %v4535, 0
        %v4538 = vshrl.u32 %v4537, 5
        %v4539 = vand.u32 %v4537, 31
        %v4540 = vsub.s32 32, %v4539
        %v4541 = vshrl.u32 683565275, %v4540
        %v4542 = vshll.u32 683565275, %v4539
        %v4543 = vshrl.u32 2475754826, %v4540
        %v4544 = vor.u32 %v4542, %v4543
        %v4545 = vshll.u32 2475754826, %v4539
        %v4546 = vshrl.u32 2131351028, %v4540
        %v4547 = vor.u32 %v4545, %v4546
        %v4548 = vshll.u32 2131351028, %v4539
        %v4549 = vshrl.u32 2102212464, %v4540
        %v4550 = vor.u32 %v4548, %v4549
        %v4551 = vshll.u32 2102212464, %v4539
        %v4552 = vshrl.u32 920167782, %v4540
        %v4553 = vor.u32 %v4551, %v4552
        %v4554 = vshll.u32 920167782, %v4539
        %v4555 = vshrl.u32 1326507024, %v4540
        %v4556 = vor.u32 %v4554, %v4555
        %vm4557 = vcmp.lt.s32.totalorder %v4538, 1
        %vm4558 = vcmp.lt.s32.totalorder %v4538, 2
        %vm4559 = vcmp.lt.s32.totalorder %v4538, 3
        %vm4560 = vcmp.lt.s32.totalorder %v4538, 4
        %v4561 = vsel %vm4557, %v4541, %v4544
        %v4562 = vsel %vm4560, %v4550, 2102212464
        %v4563 = vsel %vm4559, %v4547, %v4562
        %v4564 = vsel %vm4558, %v4561, %v4563
        %v4565 = vsel %vm4557, %v4544, %v4547
        %v4566 = vsel %vm4560, %v4553, 920167782
        %v4567 = vsel %vm4559, %v4550, %v4566
        %v4568 = vsel %vm4558, %v4565, %v4567
        %v4569 = vsel %vm4557, %v4547, %v4550
        %v4570 = vsel %vm4560, %v4556, 1326507024
        %v4571 = vsel %vm4559, %v4553, %v4570
        %v4572 = vsel %vm4558, %v4569, %v4571
        %v4573 = vshll.u32 %v4533, 8
        %v4574 = vmul.u32.u64.compose %v4573, %v4572
        %v4575 = vextract.low.u32 %v4574
        %v4576 = vextract.high.u32 %v4574
        %v4577 = vmul.u32.u64.compose %v4573, %v4568
        %v4578 = vextract.low.u32 %v4577
        %v4579 = vextract.high.u32 %v4577
        %v4580 = vmul.u32 %v4573, %v4564
        %v4581 = vadd.s32 %v4576, %v4578
        %vm4582 = vc.u32 %v4576, %v4578
        %v4583 = vadd.s32 %v4579, 1
        %v4584 = vsel %vm4582, %v4583, %v4579
        %v4585 = vadd.s32 %v4580, %v4584
        %v4586 = vadd.s32 %v4585, 536870912
        %v4587 = vshrl.u32 %v4586, 30
        %v4588 = vshll.u32 %v4587, 30
        %v4589 = vsub.s32 %v4585, %v4588
        %vm4590 = vcmp.lt.s32.totalorder %v4589, 0
        %v4591 = vsub.s32 0, %v4589
        %v4592 = vsel %vm4590, %v4591, %v4589
        %v4593 = vclz %v4592
        %v4594 = vsub.s32 %v4593, 2
        %vm4595 = vcmp.gt.s32.totalorder 0, %v4594
        %v4596 = vsel %vm4595, 0, %v4594
        %v4597 = vsub.s32 32, %v4596
        %v4598 = vshll.u32 %v4589, %v4596
        %v4599 = vshrl.u32 %v4581, %v4597
        %v4600 = vor.u32 %v4598, %v4599
        %v4601 = vsub.s32 4294967266, %v4596
        %v4602 = vadd.s32 %v4601, 127
        %v4603 = vshll.u32 %v4602, 23
        %v4604 = vor.u32 4788187, %v4603
        %v4605 = vand.u32 2147483647, %v4604
        %v4607 = vcvt.s32.f32 %v4600
        %v4608 = vmul.f32 %v4607, %v4605
        %v4609 = vxor.u32 %v4608, 2147483648
        %v4610 = vsel %vm4527, %v4609, %v4608
        %v4611 = vsub.s32 4, %v4587
        %v4612 = vsel %vm4527, %v4611, %v4587
        %v4613 = vsel %vm4526, %v655, %v4610
        %v4614 = vsel %vm4526, 0, %v4612
        %v4615 = vcosq.f32.pop %v4613
        %v4616 = vsinq.f32.pop %v4613
        %vm4617 = vweird.f32 %v655
        %v4618 = vand.u32 %v4614, 3
        %vm4619 = vcmp.lt.s32.totalorder %v4618, 2
        %vm4620 = vcmp.eq.s32.totalorder %v4618, 0
        %v4621 = vxor.u32 %v4616, 2147483648
        %v4622 = vsel %vm4620, %v4615, %v4621
        %vm4623 = vcmp.eq.s32.totalorder %v4618, 2
        %v4624 = vxor.u32 %v4615, 2147483648
        %v4625 = vsel %vm4623, %v4624, %v4616
        %v4626 = vsel %vm4619, %v4622, %v4625
        %v4627 = vsel %vm4617, nan, %v4626
        %v4628 = vand.u32 2147483647, %v656
        %vm4629 = vcmp.le.f32.partialorder %v4628, 0.7853982
        %vm4630 = vcmp.lt.s32.totalorder %v656, 0
        %v4631 = vand.u32 %v656, 2139095040
        %v4632 = vshrl.u32 %v4631, 23
        %v4633 = vsub.s32 %v4632, 127
        %v4634 = vand.u32 2147483647, %v656
        %v4635 = vand.u32 %v4634, 8388607
        %v4636 = vor.u32 %v4635, 8388608
        %v4637 = vsub.s32 0, %v4636
        %v4638 = vadd.s32 %v4633, 1
        %vm4639 = vcmp.gt.s32.totalorder %v4638, 0
        %v4640 = vsel %vm4639, %v4638, 0
        %v4641 = vshrl.u32 %v4640, 5
        %v4642 = vand.u32 %v4640, 31
        %v4643 = vsub.s32 32, %v4642
        %v4644 = vshrl.u32 683565275, %v4643
        %v4645 = vshll.u32 683565275, %v4642
        %v4646 = vshrl.u32 2475754826, %v4643
        %v4647 = vor.u32 %v4645, %v4646
        %v4648 = vshll.u32 2475754826, %v4642
        %v4649 = vshrl.u32 2131351028, %v4643
        %v4650 = vor.u32 %v4648, %v4649
        %v4651 = vshll.u32 2131351028, %v4642
        %v4652 = vshrl.u32 2102212464, %v4643
        %v4653 = vor.u32 %v4651, %v4652
        %v4654 = vshll.u32 2102212464, %v4642
        %v4655 = vshrl.u32 920167782, %v4643
        %v4656 = vor.u32 %v4654, %v4655
        %v4657 = vshll.u32 920167782, %v4642
        %v4658 = vshrl.u32 1326507024, %v4643
        %v4659 = vor.u32 %v4657, %v4658
        %vm4660 = vcmp.lt.s32.totalorder %v4641, 1
        %vm4661 = vcmp.lt.s32.totalorder %v4641, 2
        %vm4662 = vcmp.lt.s32.totalorder %v4641, 3
        %vm4663 = vcmp.lt.s32.totalorder %v4641, 4
        %v4664 = vsel %vm4660, %v4644, %v4647
        %v4665 = vsel %vm4663, %v4653, 2102212464
        %v4666 = vsel %vm4662, %v4650, %v4665
        %v4667 = vsel %vm4661, %v4664, %v4666
        %v4668 = vsel %vm4660, %v4647, %v4650
        %v4669 = vsel %vm4663, %v4656, 920167782
        %v4670 = vsel %vm4662, %v4653, %v4669
        %v4671 = vsel %vm4661, %v4668, %v4670
        %v4672 = vsel %vm4660, %v4650, %v4653
        %v4673 = vsel %vm4663, %v4659, 1326507024
        %v4674 = vsel %vm4662, %v4656, %v4673
        %v4675 = vsel %vm4661, %v4672, %v4674
        %v4676 = vshll.u32 %v4636, 8
        %v4677 = vmul.u32.u64.compose %v4676, %v4675
        %v4678 = vextract.low.u32 %v4677
        %v4679 = vextract.high.u32 %v4677
        %v4680 = vmul.u32.u64.compose %v4676, %v4671
        %v4681 = vextract.low.u32 %v4680
        %v4682 = vextract.high.u32 %v4680
        %v4683 = vmul.u32 %v4676, %v4667
        %v4684 = vadd.s32 %v4679, %v4681
        %vm4685 = vc.u32 %v4679, %v4681
        %v4686 = vadd.s32 %v4682, 1
        %v4687 = vsel %vm4685, %v4686, %v4682
        %v4688 = vadd.s32 %v4683, %v4687
        %v4689 = vadd.s32 %v4688, 536870912
        %v4690 = vshrl.u32 %v4689, 30
        %v4691 = vshll.u32 %v4690, 30
        %v4692 = vsub.s32 %v4688, %v4691
        %vm4693 = vcmp.lt.s32.totalorder %v4692, 0
        %v4694 = vsub.s32 0, %v4692
        %v4695 = vsel %vm4693, %v4694, %v4692
        %v4696 = vclz %v4695
        %v4697 = vsub.s32 %v4696, 2
        %vm4698 = vcmp.gt.s32.totalorder 0, %v4697
        %v4699 = vsel %vm4698, 0, %v4697
        %v4700 = vsub.s32 32, %v4699
        %v4701 = vshll.u32 %v4692, %v4699
        %v4702 = vshrl.u32 %v4684, %v4700
        %v4703 = vor.u32 %v4701, %v4702
        %v4704 = vsub.s32 4294967266, %v4699
        %v4705 = vadd.s32 %v4704, 127
        %v4706 = vshll.u32 %v4705, 23
        %v4707 = vor.u32 4788187, %v4706
        %v4708 = vand.u32 2147483647, %v4707
        %v4710 = vcvt.s32.f32 %v4703
        %v4711 = vmul.f32 %v4710, %v4708
        %v4712 = vxor.u32 %v4711, 2147483648
        %v4713 = vsel %vm4630, %v4712, %v4711
        %v4714 = vsub.s32 4, %v4690
        %v4715 = vsel %vm4630, %v4714, %v4690
        %v4716 = vsel %vm4629, %v656, %v4713
        %v4717 = vsel %vm4629, 0, %v4715
        %v4718 = vcosq.f32.pop %v4716
        %v4719 = vsinq.f32.pop %v4716
        %vm4720 = vweird.f32 %v656
        %v4721 = vand.u32 %v4717, 3
        %vm4722 = vcmp.lt.s32.totalorder %v4721, 2
        %vm4723 = vcmp.eq.s32.totalorder %v4721, 0
        %v4724 = vxor.u32 %v4719, 2147483648
        %v4725 = vsel %vm4723, %v4718, %v4724
        %vm4726 = vcmp.eq.s32.totalorder %v4721, 2
        %v4727 = vxor.u32 %v4718, 2147483648
        %v4728 = vsel %vm4726, %v4727, %v4719
        %v4729 = vsel %vm4722, %v4725, %v4728
        %v4730 = vsel %vm4720, nan, %v4729
        %v4731 = vand.u32 2147483647, %v657
        %vm4732 = vcmp.le.f32.partialorder %v4731, 0.7853982
        %vm4733 = vcmp.lt.s32.totalorder %v657, 0
        %v4734 = vand.u32 %v657, 2139095040
        %v4735 = vshrl.u32 %v4734, 23
        %v4736 = vsub.s32 %v4735, 127
        %v4737 = vand.u32 2147483647, %v657
        %v4738 = vand.u32 %v4737, 8388607
        %v4739 = vor.u32 %v4738, 8388608
        %v4740 = vsub.s32 0, %v4739
        %v4741 = vadd.s32 %v4736, 1
        %vm4742 = vcmp.gt.s32.totalorder %v4741, 0
        %v4743 = vsel %vm4742, %v4741, 0
        %v4744 = vshrl.u32 %v4743, 5
        %v4745 = vand.u32 %v4743, 31
        %v4746 = vsub.s32 32, %v4745
        %v4747 = vshrl.u32 683565275, %v4746
        %v4748 = vshll.u32 683565275, %v4745
        %v4749 = vshrl.u32 2475754826, %v4746
        %v4750 = vor.u32 %v4748, %v4749
        %v4751 = vshll.u32 2475754826, %v4745
        %v4752 = vshrl.u32 2131351028, %v4746
        %v4753 = vor.u32 %v4751, %v4752
        %v4754 = vshll.u32 2131351028, %v4745
        %v4755 = vshrl.u32 2102212464, %v4746
        %v4756 = vor.u32 %v4754, %v4755
        %v4757 = vshll.u32 2102212464, %v4745
        %v4758 = vshrl.u32 920167782, %v4746
        %v4759 = vor.u32 %v4757, %v4758
        %v4760 = vshll.u32 920167782, %v4745
        %v4761 = vshrl.u32 1326507024, %v4746
        %v4762 = vor.u32 %v4760, %v4761
        %vm4763 = vcmp.lt.s32.totalorder %v4744, 1
        %vm4764 = vcmp.lt.s32.totalorder %v4744, 2
        %vm4765 = vcmp.lt.s32.totalorder %v4744, 3
        %vm4766 = vcmp.lt.s32.totalorder %v4744, 4
        %v4767 = vsel %vm4763, %v4747, %v4750
        %v4768 = vsel %vm4766, %v4756, 2102212464
        %v4769 = vsel %vm4765, %v4753, %v4768
        %v4770 = vsel %vm4764, %v4767, %v4769
        %v4771 = vsel %vm4763, %v4750, %v4753
        %v4772 = vsel %vm4766, %v4759, 920167782
        %v4773 = vsel %vm4765, %v4756, %v4772
        %v4774 = vsel %vm4764, %v4771, %v4773
        %v4775 = vsel %vm4763, %v4753, %v4756
        %v4776 = vsel %vm4766, %v4762, 1326507024
        %v4777 = vsel %vm4765, %v4759, %v4776
        %v4778 = vsel %vm4764, %v4775, %v4777
        %v4779 = vshll.u32 %v4739, 8
        %v4780 = vmul.u32.u64.compose %v4779, %v4778
        %v4781 = vextract.low.u32 %v4780
        %v4782 = vextract.high.u32 %v4780
        %v4783 = vmul.u32.u64.compose %v4779, %v4774
        %v4784 = vextract.low.u32 %v4783
        %v4785 = vextract.high.u32 %v4783
        %v4786 = vmul.u32 %v4779, %v4770
        %v4787 = vadd.s32 %v4782, %v4784
        %vm4788 = vc.u32 %v4782, %v4784
        %v4789 = vadd.s32 %v4785, 1
        %v4790 = vsel %vm4788, %v4789, %v4785
        %v4791 = vadd.s32 %v4786, %v4790
        %v4792 = vadd.s32 %v4791, 536870912
        %v4793 = vshrl.u32 %v4792, 30
        %v4794 = vshll.u32 %v4793, 30
        %v4795 = vsub.s32 %v4791, %v4794
        %vm4796 = vcmp.lt.s32.totalorder %v4795, 0
        %v4797 = vsub.s32 0, %v4795
        %v4798 = vsel %vm4796, %v4797, %v4795
        %v4799 = vclz %v4798
        %v4800 = vsub.s32 %v4799, 2
        %vm4801 = vcmp.gt.s32.totalorder 0, %v4800
        %v4802 = vsel %vm4801, 0, %v4800
        %v4803 = vsub.s32 32, %v4802
        %v4804 = vshll.u32 %v4795, %v4802
        %v4805 = vshrl.u32 %v4787, %v4803
        %v4806 = vor.u32 %v4804, %v4805
        %v4807 = vsub.s32 4294967266, %v4802
        %v4808 = vadd.s32 %v4807, 127
        %v4809 = vshll.u32 %v4808, 23
        %v4810 = vor.u32 4788187, %v4809
        %v4811 = vand.u32 2147483647, %v4810
        %v4813 = vcvt.s32.f32 %v4806
        %v4814 = vmul.f32 %v4813, %v4811
        %v4815 = vxor.u32 %v4814, 2147483648
        %v4816 = vsel %vm4733, %v4815, %v4814
        %v4817 = vsub.s32 4, %v4793
        %v4818 = vsel %vm4733, %v4817, %v4793
        %v4819 = vsel %vm4732, %v657, %v4816
        %v4820 = vsel %vm4732, 0, %v4818
        %v4821 = vcosq.f32.pop %v4819
        %v4822 = vsinq.f32.pop %v4819
        %vm4823 = vweird.f32 %v657
        %v4824 = vand.u32 %v4820, 3
        %vm4825 = vcmp.lt.s32.totalorder %v4824, 2
        %vm4826 = vcmp.eq.s32.totalorder %v4824, 0
        %v4827 = vxor.u32 %v4822, 2147483648
        %v4828 = vsel %vm4826, %v4821, %v4827
        %vm4829 = vcmp.eq.s32.totalorder %v4824, 2
        %v4830 = vxor.u32 %v4821, 2147483648
        %v4831 = vsel %vm4829, %v4830, %v4822
        %v4832 = vsel %vm4825, %v4828, %v4831
        %v4833 = vsel %vm4823, nan, %v4832
        %v4834 = vand.u32 2147483647, %v658
        %vm4835 = vcmp.le.f32.partialorder %v4834, 0.7853982
        %vm4836 = vcmp.lt.s32.totalorder %v658, 0
        %v4837 = vand.u32 %v658, 2139095040
        %v4838 = vshrl.u32 %v4837, 23
        %v4839 = vsub.s32 %v4838, 127
        %v4840 = vand.u32 2147483647, %v658
        %v4841 = vand.u32 %v4840, 8388607
        %v4842 = vor.u32 %v4841, 8388608
        %v4843 = vsub.s32 0, %v4842
        %v4844 = vadd.s32 %v4839, 1
        %vm4845 = vcmp.gt.s32.totalorder %v4844, 0
        %v4846 = vsel %vm4845, %v4844, 0
        %v4847 = vshrl.u32 %v4846, 5
        %v4848 = vand.u32 %v4846, 31
        %v4849 = vsub.s32 32, %v4848
        %v4850 = vshrl.u32 683565275, %v4849
        %v4851 = vshll.u32 683565275, %v4848
        %v4852 = vshrl.u32 2475754826, %v4849
        %v4853 = vor.u32 %v4851, %v4852
        %v4854 = vshll.u32 2475754826, %v4848
        %v4855 = vshrl.u32 2131351028, %v4849
        %v4856 = vor.u32 %v4854, %v4855
        %v4857 = vshll.u32 2131351028, %v4848
        %v4858 = vshrl.u32 2102212464, %v4849
        %v4859 = vor.u32 %v4857, %v4858
        %v4860 = vshll.u32 2102212464, %v4848
        %v4861 = vshrl.u32 920167782, %v4849
        %v4862 = vor.u32 %v4860, %v4861
        %v4863 = vshll.u32 920167782, %v4848
        %v4864 = vshrl.u32 1326507024, %v4849
        %v4865 = vor.u32 %v4863, %v4864
        %vm4866 = vcmp.lt.s32.totalorder %v4847, 1
        %vm4867 = vcmp.lt.s32.totalorder %v4847, 2
        %vm4868 = vcmp.lt.s32.totalorder %v4847, 3
        %vm4869 = vcmp.lt.s32.totalorder %v4847, 4
        %v4870 = vsel %vm4866, %v4850, %v4853
        %v4871 = vsel %vm4869, %v4859, 2102212464
        %v4872 = vsel %vm4868, %v4856, %v4871
        %v4873 = vsel %vm4867, %v4870, %v4872
        %v4874 = vsel %vm4866, %v4853, %v4856
        %v4875 = vsel %vm4869, %v4862, 920167782
        %v4876 = vsel %vm4868, %v4859, %v4875
        %v4877 = vsel %vm4867, %v4874, %v4876
        %v4878 = vsel %vm4866, %v4856, %v4859
        %v4879 = vsel %vm4869, %v4865, 1326507024
        %v4880 = vsel %vm4868, %v4862, %v4879
        %v4881 = vsel %vm4867, %v4878, %v4880
        %v4882 = vshll.u32 %v4842, 8
        %v4883 = vmul.u32.u64.compose %v4882, %v4881
        %v4884 = vextract.low.u32 %v4883
        %v4885 = vextract.high.u32 %v4883
        %v4886 = vmul.u32.u64.compose %v4882, %v4877
        %v4887 = vextract.low.u32 %v4886
        %v4888 = vextract.high.u32 %v4886
        %v4889 = vmul.u32 %v4882, %v4873
        %v4890 = vadd.s32 %v4885, %v4887
        %vm4891 = vc.u32 %v4885, %v4887
        %v4892 = vadd.s32 %v4888, 1
        %v4893 = vsel %vm4891, %v4892, %v4888
        %v4894 = vadd.s32 %v4889, %v4893
        %v4895 = vadd.s32 %v4894, 536870912
        %v4896 = vshrl.u32 %v4895, 30
        %v4897 = vshll.u32 %v4896, 30
        %v4898 = vsub.s32 %v4894, %v4897
        %vm4899 = vcmp.lt.s32.totalorder %v4898, 0
        %v4900 = vsub.s32 0, %v4898
        %v4901 = vsel %vm4899, %v4900, %v4898
        %v4902 = vclz %v4901
        %v4903 = vsub.s32 %v4902, 2
        %vm4904 = vcmp.gt.s32.totalorder 0, %v4903
        %v4905 = vsel %vm4904, 0, %v4903
        %v4906 = vsub.s32 32, %v4905
        %v4907 = vshll.u32 %v4898, %v4905
        %v4908 = vshrl.u32 %v4890, %v4906
        %v4909 = vor.u32 %v4907, %v4908
        %v4910 = vsub.s32 4294967266, %v4905
        %v4911 = vadd.s32 %v4910, 127
        %v4912 = vshll.u32 %v4911, 23
        %v4913 = vor.u32 4788187, %v4912
        %v4914 = vand.u32 2147483647, %v4913
        %v4916 = vcvt.s32.f32 %v4909
        %v4917 = vmul.f32 %v4916, %v4914
        %v4918 = vxor.u32 %v4917, 2147483648
        %v4919 = vsel %vm4836, %v4918, %v4917
        %v4920 = vsub.s32 4, %v4896
        %v4921 = vsel %vm4836, %v4920, %v4896
        %v4922 = vsel %vm4835, %v658, %v4919
        %v4923 = vsel %vm4835, 0, %v4921
        %v4924 = vcosq.f32.pop %v4922
        %v4925 = vsinq.f32.pop %v4922
        %vm4926 = vweird.f32 %v658
        %v4927 = vand.u32 %v4923, 3
        %vm4928 = vcmp.lt.s32.totalorder %v4927, 2
        %vm4929 = vcmp.eq.s32.totalorder %v4927, 0
        %v4930 = vxor.u32 %v4925, 2147483648
        %v4931 = vsel %vm4929, %v4924, %v4930
        %vm4932 = vcmp.eq.s32.totalorder %v4927, 2
        %v4933 = vxor.u32 %v4924, 2147483648
        %v4934 = vsel %vm4932, %v4933, %v4925
        %v4935 = vsel %vm4928, %v4931, %v4934
        %v4936 = vsel %vm4926, nan, %v4935
        %v4937 = vand.u32 2147483647, %v659
        %vm4938 = vcmp.le.f32.partialorder %v4937, 0.7853982
        %vm4939 = vcmp.lt.s32.totalorder %v659, 0
        %v4940 = vand.u32 %v659, 2139095040
        %v4941 = vshrl.u32 %v4940, 23
        %v4942 = vsub.s32 %v4941, 127
        %v4943 = vand.u32 2147483647, %v659
        %v4944 = vand.u32 %v4943, 8388607
        %v4945 = vor.u32 %v4944, 8388608
        %v4946 = vsub.s32 0, %v4945
        %v4947 = vadd.s32 %v4942, 1
        %vm4948 = vcmp.gt.s32.totalorder %v4947, 0
        %v4949 = vsel %vm4948, %v4947, 0
        %v4950 = vshrl.u32 %v4949, 5
        %v4951 = vand.u32 %v4949, 31
        %v4952 = vsub.s32 32, %v4951
        %v4953 = vshrl.u32 683565275, %v4952
        %v4954 = vshll.u32 683565275, %v4951
        %v4955 = vshrl.u32 2475754826, %v4952
        %v4956 = vor.u32 %v4954, %v4955
        %v4957 = vshll.u32 2475754826, %v4951
        %v4958 = vshrl.u32 2131351028, %v4952
        %v4959 = vor.u32 %v4957, %v4958
        %v4960 = vshll.u32 2131351028, %v4951
        %v4961 = vshrl.u32 2102212464, %v4952
        %v4962 = vor.u32 %v4960, %v4961
        %v4963 = vshll.u32 2102212464, %v4951
        %v4964 = vshrl.u32 920167782, %v4952
        %v4965 = vor.u32 %v4963, %v4964
        %v4966 = vshll.u32 920167782, %v4951
        %v4967 = vshrl.u32 1326507024, %v4952
        %v4968 = vor.u32 %v4966, %v4967
        %vm4969 = vcmp.lt.s32.totalorder %v4950, 1
        %vm4970 = vcmp.lt.s32.totalorder %v4950, 2
        %vm4971 = vcmp.lt.s32.totalorder %v4950, 3
        %vm4972 = vcmp.lt.s32.totalorder %v4950, 4
        %v4973 = vsel %vm4969, %v4953, %v4956
        %v4974 = vsel %vm4972, %v4962, 2102212464
        %v4975 = vsel %vm4971, %v4959, %v4974
        %v4976 = vsel %vm4970, %v4973, %v4975
        %v4977 = vsel %vm4969, %v4956, %v4959
        %v4978 = vsel %vm4972, %v4965, 920167782
        %v4979 = vsel %vm4971, %v4962, %v4978
        %v4980 = vsel %vm4970, %v4977, %v4979
        %v4981 = vsel %vm4969, %v4959, %v4962
        %v4982 = vsel %vm4972, %v4968, 1326507024
        %v4983 = vsel %vm4971, %v4965, %v4982
        %v4984 = vsel %vm4970, %v4981, %v4983
        %v4985 = vshll.u32 %v4945, 8
        %v4986 = vmul.u32.u64.compose %v4985, %v4984
        %v4987 = vextract.low.u32 %v4986
        %v4988 = vextract.high.u32 %v4986
        %v4989 = vmul.u32.u64.compose %v4985, %v4980
        %v4990 = vextract.low.u32 %v4989
        %v4991 = vextract.high.u32 %v4989
        %v4992 = vmul.u32 %v4985, %v4976
        %v4993 = vadd.s32 %v4988, %v4990
        %vm4994 = vc.u32 %v4988, %v4990
        %v4995 = vadd.s32 %v4991, 1
        %v4996 = vsel %vm4994, %v4995, %v4991
        %v4997 = vadd.s32 %v4992, %v4996
        %v4998 = vadd.s32 %v4997, 536870912
        %v4999 = vshrl.u32 %v4998, 30
        %v5000 = vshll.u32 %v4999, 30
        %v5001 = vsub.s32 %v4997, %v5000
        %vm5002 = vcmp.lt.s32.totalorder %v5001, 0
        %v5003 = vsub.s32 0, %v5001
        %v5004 = vsel %vm5002, %v5003, %v5001
        %v5005 = vclz %v5004
        %v5006 = vsub.s32 %v5005, 2
        %vm5007 = vcmp.gt.s32.totalorder 0, %v5006
        %v5008 = vsel %vm5007, 0, %v5006
        %v5009 = vsub.s32 32, %v5008
        %v5010 = vshll.u32 %v5001, %v5008
        %v5011 = vshrl.u32 %v4993, %v5009
        %v5012 = vor.u32 %v5010, %v5011
        %v5013 = vsub.s32 4294967266, %v5008
        %v5014 = vadd.s32 %v5013, 127
        %v5015 = vshll.u32 %v5014, 23
        %v5016 = vor.u32 4788187, %v5015
        %v5017 = vand.u32 2147483647, %v5016
        %v5019 = vcvt.s32.f32 %v5012
        %v5020 = vmul.f32 %v5019, %v5017
        %v5021 = vxor.u32 %v5020, 2147483648
        %v5022 = vsel %vm4939, %v5021, %v5020
        %v5023 = vsub.s32 4, %v4999
        %v5024 = vsel %vm4939, %v5023, %v4999
        %v5025 = vsel %vm4938, %v659, %v5022
        %v5026 = vsel %vm4938, 0, %v5024
        %v5027 = vcosq.f32.pop %v5025
        %v5028 = vsinq.f32.pop %v5025
        %vm5029 = vweird.f32 %v659
        %v5030 = vand.u32 %v5026, 3
        %vm5031 = vcmp.lt.s32.totalorder %v5030, 2
        %vm5032 = vcmp.eq.s32.totalorder %v5030, 0
        %v5033 = vxor.u32 %v5028, 2147483648
        %v5034 = vsel %vm5032, %v5027, %v5033
        %vm5035 = vcmp.eq.s32.totalorder %v5030, 2
        %v5036 = vxor.u32 %v5027, 2147483648
        %v5037 = vsel %vm5035, %v5036, %v5028
        %v5038 = vsel %vm5031, %v5034, %v5037
        %v5039 = vsel %vm5029, nan, %v5038
        %v5040 = vand.u32 2147483647, %v660
        %vm5041 = vcmp.le.f32.partialorder %v5040, 0.7853982
        %vm5042 = vcmp.lt.s32.totalorder %v660, 0
        %v5043 = vand.u32 %v660, 2139095040
        %v5044 = vshrl.u32 %v5043, 23
        %v5045 = vsub.s32 %v5044, 127
        %v5046 = vand.u32 2147483647, %v660
        %v5047 = vand.u32 %v5046, 8388607
        %v5048 = vor.u32 %v5047, 8388608
        %v5049 = vsub.s32 0, %v5048
        %v5050 = vadd.s32 %v5045, 1
        %vm5051 = vcmp.gt.s32.totalorder %v5050, 0
        %v5052 = vsel %vm5051, %v5050, 0
        %v5053 = vshrl.u32 %v5052, 5
        %v5054 = vand.u32 %v5052, 31
        %v5055 = vsub.s32 32, %v5054
        %v5056 = vshrl.u32 683565275, %v5055
        %v5057 = vshll.u32 683565275, %v5054
        %v5058 = vshrl.u32 2475754826, %v5055
        %v5059 = vor.u32 %v5057, %v5058
        %v5060 = vshll.u32 2475754826, %v5054
        %v5061 = vshrl.u32 2131351028, %v5055
        %v5062 = vor.u32 %v5060, %v5061
        %v5063 = vshll.u32 2131351028, %v5054
        %v5064 = vshrl.u32 2102212464, %v5055
        %v5065 = vor.u32 %v5063, %v5064
        %v5066 = vshll.u32 2102212464, %v5054
        %v5067 = vshrl.u32 920167782, %v5055
        %v5068 = vor.u32 %v5066, %v5067
        %v5069 = vshll.u32 920167782, %v5054
        %v5070 = vshrl.u32 1326507024, %v5055
        %v5071 = vor.u32 %v5069, %v5070
        %vm5072 = vcmp.lt.s32.totalorder %v5053, 1
        %vm5073 = vcmp.lt.s32.totalorder %v5053, 2
        %vm5074 = vcmp.lt.s32.totalorder %v5053, 3
        %vm5075 = vcmp.lt.s32.totalorder %v5053, 4
        %v5076 = vsel %vm5072, %v5056, %v5059
        %v5077 = vsel %vm5075, %v5065, 2102212464
        %v5078 = vsel %vm5074, %v5062, %v5077
        %v5079 = vsel %vm5073, %v5076, %v5078
        %v5080 = vsel %vm5072, %v5059, %v5062
        %v5081 = vsel %vm5075, %v5068, 920167782
        %v5082 = vsel %vm5074, %v5065, %v5081
        %v5083 = vsel %vm5073, %v5080, %v5082
        %v5084 = vsel %vm5072, %v5062, %v5065
        %v5085 = vsel %vm5075, %v5071, 1326507024
        %v5086 = vsel %vm5074, %v5068, %v5085
        %v5087 = vsel %vm5073, %v5084, %v5086
        %v5088 = vshll.u32 %v5048, 8
        %v5089 = vmul.u32.u64.compose %v5088, %v5087
        %v5090 = vextract.low.u32 %v5089
        %v5091 = vextract.high.u32 %v5089
        %v5092 = vmul.u32.u64.compose %v5088, %v5083
        %v5093 = vextract.low.u32 %v5092
        %v5094 = vextract.high.u32 %v5092
        %v5095 = vmul.u32 %v5088, %v5079
        %v5096 = vadd.s32 %v5091, %v5093
        %vm5097 = vc.u32 %v5091, %v5093
        %v5098 = vadd.s32 %v5094, 1
        %v5099 = vsel %vm5097, %v5098, %v5094
        %v5100 = vadd.s32 %v5095, %v5099
        %v5101 = vadd.s32 %v5100, 536870912
        %v5102 = vshrl.u32 %v5101, 30
        %v5103 = vshll.u32 %v5102, 30
        %v5104 = vsub.s32 %v5100, %v5103
        %vm5105 = vcmp.lt.s32.totalorder %v5104, 0
        %v5106 = vsub.s32 0, %v5104
        %v5107 = vsel %vm5105, %v5106, %v5104
        %v5108 = vclz %v5107
        %v5109 = vsub.s32 %v5108, 2
        %vm5110 = vcmp.gt.s32.totalorder 0, %v5109
        %v5111 = vsel %vm5110, 0, %v5109
        %v5112 = vsub.s32 32, %v5111
        %v5113 = vshll.u32 %v5104, %v5111
        %v5114 = vshrl.u32 %v5096, %v5112
        %v5115 = vor.u32 %v5113, %v5114
        %v5116 = vsub.s32 4294967266, %v5111
        %v5117 = vadd.s32 %v5116, 127
        %v5118 = vshll.u32 %v5117, 23
        %v5119 = vor.u32 4788187, %v5118
        %v5120 = vand.u32 2147483647, %v5119
        %v5122 = vcvt.s32.f32 %v5115
        %v5123 = vmul.f32 %v5122, %v5120
        %v5124 = vxor.u32 %v5123, 2147483648
        %v5125 = vsel %vm5042, %v5124, %v5123
        %v5126 = vsub.s32 4, %v5102
        %v5127 = vsel %vm5042, %v5126, %v5102
        %v5128 = vsel %vm5041, %v660, %v5125
        %v5129 = vsel %vm5041, 0, %v5127
        %v5130 = vcosq.f32.pop %v5128
        %v5131 = vsinq.f32.pop %v5128
        %vm5132 = vweird.f32 %v660
        %v5133 = vand.u32 %v5129, 3
        %vm5134 = vcmp.lt.s32.totalorder %v5133, 2
        %vm5135 = vcmp.eq.s32.totalorder %v5133, 0
        %v5136 = vxor.u32 %v5131, 2147483648
        %v5137 = vsel %vm5135, %v5130, %v5136
        %vm5138 = vcmp.eq.s32.totalorder %v5133, 2
        %v5139 = vxor.u32 %v5130, 2147483648
        %v5140 = vsel %vm5138, %v5139, %v5131
        %v5141 = vsel %vm5134, %v5137, %v5140
        %v5142 = vsel %vm5132, nan, %v5141
        %v5143 = vand.u32 2147483647, %v661
        %vm5144 = vcmp.le.f32.partialorder %v5143, 0.7853982
        %vm5145 = vcmp.lt.s32.totalorder %v661, 0
        %v5146 = vand.u32 %v661, 2139095040
        %v5147 = vshrl.u32 %v5146, 23
        %v5148 = vsub.s32 %v5147, 127
        %v5149 = vand.u32 2147483647, %v661
        %v5150 = vand.u32 %v5149, 8388607
        %v5151 = vor.u32 %v5150, 8388608
        %v5152 = vsub.s32 0, %v5151
        %v5153 = vadd.s32 %v5148, 1
        %vm5154 = vcmp.gt.s32.totalorder %v5153, 0
        %v5155 = vsel %vm5154, %v5153, 0
        %v5156 = vshrl.u32 %v5155, 5
        %v5157 = vand.u32 %v5155, 31
        %v5158 = vsub.s32 32, %v5157
        %v5159 = vshrl.u32 683565275, %v5158
        %v5160 = vshll.u32 683565275, %v5157
        %v5161 = vshrl.u32 2475754826, %v5158
        %v5162 = vor.u32 %v5160, %v5161
        %v5163 = vshll.u32 2475754826, %v5157
        %v5164 = vshrl.u32 2131351028, %v5158
        %v5165 = vor.u32 %v5163, %v5164
        %v5166 = vshll.u32 2131351028, %v5157
        %v5167 = vshrl.u32 2102212464, %v5158
        %v5168 = vor.u32 %v5166, %v5167
        %v5169 = vshll.u32 2102212464, %v5157
        %v5170 = vshrl.u32 920167782, %v5158
        %v5171 = vor.u32 %v5169, %v5170
        %v5172 = vshll.u32 920167782, %v5157
        %v5173 = vshrl.u32 1326507024, %v5158
        %v5174 = vor.u32 %v5172, %v5173
        %vm5175 = vcmp.lt.s32.totalorder %v5156, 1
        %vm5176 = vcmp.lt.s32.totalorder %v5156, 2
        %vm5177 = vcmp.lt.s32.totalorder %v5156, 3
        %vm5178 = vcmp.lt.s32.totalorder %v5156, 4
        %v5179 = vsel %vm5175, %v5159, %v5162
        %v5180 = vsel %vm5178, %v5168, 2102212464
        %v5181 = vsel %vm5177, %v5165, %v5180
        %v5182 = vsel %vm5176, %v5179, %v5181
        %v5183 = vsel %vm5175, %v5162, %v5165
        %v5184 = vsel %vm5178, %v5171, 920167782
        %v5185 = vsel %vm5177, %v5168, %v5184
        %v5186 = vsel %vm5176, %v5183, %v5185
        %v5187 = vsel %vm5175, %v5165, %v5168
        %v5188 = vsel %vm5178, %v5174, 1326507024
        %v5189 = vsel %vm5177, %v5171, %v5188
        %v5190 = vsel %vm5176, %v5187, %v5189
        %v5191 = vshll.u32 %v5151, 8
        %v5192 = vmul.u32.u64.compose %v5191, %v5190
        %v5193 = vextract.low.u32 %v5192
        %v5194 = vextract.high.u32 %v5192
        %v5195 = vmul.u32.u64.compose %v5191, %v5186
        %v5196 = vextract.low.u32 %v5195
        %v5197 = vextract.high.u32 %v5195
        %v5198 = vmul.u32 %v5191, %v5182
        %v5199 = vadd.s32 %v5194, %v5196
        %vm5200 = vc.u32 %v5194, %v5196
        %v5201 = vadd.s32 %v5197, 1
        %v5202 = vsel %vm5200, %v5201, %v5197
        %v5203 = vadd.s32 %v5198, %v5202
        %v5204 = vadd.s32 %v5203, 536870912
        %v5205 = vshrl.u32 %v5204, 30
        %v5206 = vshll.u32 %v5205, 30
        %v5207 = vsub.s32 %v5203, %v5206
        %vm5208 = vcmp.lt.s32.totalorder %v5207, 0
        %v5209 = vsub.s32 0, %v5207
        %v5210 = vsel %vm5208, %v5209, %v5207
        %v5211 = vclz %v5210
        %v5212 = vsub.s32 %v5211, 2
        %vm5213 = vcmp.gt.s32.totalorder 0, %v5212
        %v5214 = vsel %vm5213, 0, %v5212
        %v5215 = vsub.s32 32, %v5214
        %v5216 = vshll.u32 %v5207, %v5214
        %v5217 = vshrl.u32 %v5199, %v5215
        %v5218 = vor.u32 %v5216, %v5217
        %v5219 = vsub.s32 4294967266, %v5214
        %v5220 = vadd.s32 %v5219, 127
        %v5221 = vshll.u32 %v5220, 23
        %v5222 = vor.u32 4788187, %v5221
        %v5223 = vand.u32 2147483647, %v5222
        %v5225 = vcvt.s32.f32 %v5218
        %v5226 = vmul.f32 %v5225, %v5223
        %v5227 = vxor.u32 %v5226, 2147483648
        %v5228 = vsel %vm5145, %v5227, %v5226
        %v5229 = vsub.s32 4, %v5205
        %v5230 = vsel %vm5145, %v5229, %v5205
        %v5231 = vsel %vm5144, %v661, %v5228
        %v5232 = vsel %vm5144, 0, %v5230
        %v5233 = vcosq.f32.pop %v5231
        %v5234 = vsinq.f32.pop %v5231
        %vm5235 = vweird.f32 %v661
        %v5236 = vand.u32 %v5232, 3
        %vm5237 = vcmp.lt.s32.totalorder %v5236, 2
        %vm5238 = vcmp.eq.s32.totalorder %v5236, 0
        %v5239 = vxor.u32 %v5234, 2147483648
        %v5240 = vsel %vm5238, %v5233, %v5239
        %vm5241 = vcmp.eq.s32.totalorder %v5236, 2
        %v5242 = vxor.u32 %v5233, 2147483648
        %v5243 = vsel %vm5241, %v5242, %v5234
        %v5244 = vsel %vm5237, %v5240, %v5243
        %v5245 = vsel %vm5235, nan, %v5244
        %v5246 = vand.u32 2147483647, %v662
        %vm5247 = vcmp.le.f32.partialorder %v5246, 0.7853982
        %vm5248 = vcmp.lt.s32.totalorder %v662, 0
        %v5249 = vand.u32 %v662, 2139095040
        %v5250 = vshrl.u32 %v5249, 23
        %v5251 = vsub.s32 %v5250, 127
        %v5252 = vand.u32 2147483647, %v662
        %v5253 = vand.u32 %v5252, 8388607
        %v5254 = vor.u32 %v5253, 8388608
        %v5255 = vsub.s32 0, %v5254
        %v5256 = vadd.s32 %v5251, 1
        %vm5257 = vcmp.gt.s32.totalorder %v5256, 0
        %v5258 = vsel %vm5257, %v5256, 0
        %v5259 = vshrl.u32 %v5258, 5
        %v5260 = vand.u32 %v5258, 31
        %v5261 = vsub.s32 32, %v5260
        %v5262 = vshrl.u32 683565275, %v5261
        %v5263 = vshll.u32 683565275, %v5260
        %v5264 = vshrl.u32 2475754826, %v5261
        %v5265 = vor.u32 %v5263, %v5264
        %v5266 = vshll.u32 2475754826, %v5260
        %v5267 = vshrl.u32 2131351028, %v5261
        %v5268 = vor.u32 %v5266, %v5267
        %v5269 = vshll.u32 2131351028, %v5260
        %v5270 = vshrl.u32 2102212464, %v5261
        %v5271 = vor.u32 %v5269, %v5270
        %v5272 = vshll.u32 2102212464, %v5260
        %v5273 = vshrl.u32 920167782, %v5261
        %v5274 = vor.u32 %v5272, %v5273
        %v5275 = vshll.u32 920167782, %v5260
        %v5276 = vshrl.u32 1326507024, %v5261
        %v5277 = vor.u32 %v5275, %v5276
        %vm5278 = vcmp.lt.s32.totalorder %v5259, 1
        %vm5279 = vcmp.lt.s32.totalorder %v5259, 2
        %vm5280 = vcmp.lt.s32.totalorder %v5259, 3
        %vm5281 = vcmp.lt.s32.totalorder %v5259, 4
        %v5282 = vsel %vm5278, %v5262, %v5265
        %v5283 = vsel %vm5281, %v5271, 2102212464
        %v5284 = vsel %vm5280, %v5268, %v5283
        %v5285 = vsel %vm5279, %v5282, %v5284
        %v5286 = vsel %vm5278, %v5265, %v5268
        %v5287 = vsel %vm5281, %v5274, 920167782
        %v5288 = vsel %vm5280, %v5271, %v5287
        %v5289 = vsel %vm5279, %v5286, %v5288
        %v5290 = vsel %vm5278, %v5268, %v5271
        %v5291 = vsel %vm5281, %v5277, 1326507024
        %v5292 = vsel %vm5280, %v5274, %v5291
        %v5293 = vsel %vm5279, %v5290, %v5292
        %v5294 = vshll.u32 %v5254, 8
        %v5295 = vmul.u32.u64.compose %v5294, %v5293
        %v5296 = vextract.low.u32 %v5295
        %v5297 = vextract.high.u32 %v5295
        %v5298 = vmul.u32.u64.compose %v5294, %v5289
        %v5299 = vextract.low.u32 %v5298
        %v5300 = vextract.high.u32 %v5298
        %v5301 = vmul.u32 %v5294, %v5285
        %v5302 = vadd.s32 %v5297, %v5299
        %vm5303 = vc.u32 %v5297, %v5299
        %v5304 = vadd.s32 %v5300, 1
        %v5305 = vsel %vm5303, %v5304, %v5300
        %v5306 = vadd.s32 %v5301, %v5305
        %v5307 = vadd.s32 %v5306, 536870912
        %v5308 = vshrl.u32 %v5307, 30
        %v5309 = vshll.u32 %v5308, 30
        %v5310 = vsub.s32 %v5306, %v5309
        %vm5311 = vcmp.lt.s32.totalorder %v5310, 0
        %v5312 = vsub.s32 0, %v5310
        %v5313 = vsel %vm5311, %v5312, %v5310
        %v5314 = vclz %v5313
        %v5315 = vsub.s32 %v5314, 2
        %vm5316 = vcmp.gt.s32.totalorder 0, %v5315
        %v5317 = vsel %vm5316, 0, %v5315
        %v5318 = vsub.s32 32, %v5317
        %v5319 = vshll.u32 %v5310, %v5317
        %v5320 = vshrl.u32 %v5302, %v5318
        %v5321 = vor.u32 %v5319, %v5320
        %v5322 = vsub.s32 4294967266, %v5317
        %v5323 = vadd.s32 %v5322, 127
        %v5324 = vshll.u32 %v5323, 23
        %v5325 = vor.u32 4788187, %v5324
        %v5326 = vand.u32 2147483647, %v5325
        %v5328 = vcvt.s32.f32 %v5321
        %v5329 = vmul.f32 %v5328, %v5326
        %v5330 = vxor.u32 %v5329, 2147483648
        %v5331 = vsel %vm5248, %v5330, %v5329
        %v5332 = vsub.s32 4, %v5308
        %v5333 = vsel %vm5248, %v5332, %v5308
        %v5334 = vsel %vm5247, %v662, %v5331
        %v5335 = vsel %vm5247, 0, %v5333
        %v5336 = vcosq.f32.pop %v5334
        %v5337 = vsinq.f32.pop %v5334
        %vm5338 = vweird.f32 %v662
        %v5339 = vand.u32 %v5335, 3
        %vm5340 = vcmp.lt.s32.totalorder %v5339, 2
        %vm5341 = vcmp.eq.s32.totalorder %v5339, 0
        %v5342 = vxor.u32 %v5337, 2147483648
        %v5343 = vsel %vm5341, %v5336, %v5342
        %vm5344 = vcmp.eq.s32.totalorder %v5339, 2
        %v5345 = vxor.u32 %v5336, 2147483648
        %v5346 = vsel %vm5344, %v5345, %v5337
        %v5347 = vsel %vm5340, %v5343, %v5346
        %v5348 = vsel %vm5338, nan, %v5347
        %v5349 = vand.u32 2147483647, %v663
        %vm5350 = vcmp.le.f32.partialorder %v5349, 0.7853982
        %vm5351 = vcmp.lt.s32.totalorder %v663, 0
        %v5352 = vand.u32 %v663, 2139095040
        %v5353 = vshrl.u32 %v5352, 23
        %v5354 = vsub.s32 %v5353, 127
        %v5355 = vand.u32 2147483647, %v663
        %v5356 = vand.u32 %v5355, 8388607
        %v5357 = vor.u32 %v5356, 8388608
        %v5358 = vsub.s32 0, %v5357
        %v5359 = vadd.s32 %v5354, 1
        %vm5360 = vcmp.gt.s32.totalorder %v5359, 0
        %v5361 = vsel %vm5360, %v5359, 0
        %v5362 = vshrl.u32 %v5361, 5
        %v5363 = vand.u32 %v5361, 31
        %v5364 = vsub.s32 32, %v5363
        %v5365 = vshrl.u32 683565275, %v5364
        %v5366 = vshll.u32 683565275, %v5363
        %v5367 = vshrl.u32 2475754826, %v5364
        %v5368 = vor.u32 %v5366, %v5367
        %v5369 = vshll.u32 2475754826, %v5363
        %v5370 = vshrl.u32 2131351028, %v5364
        %v5371 = vor.u32 %v5369, %v5370
        %v5372 = vshll.u32 2131351028, %v5363
        %v5373 = vshrl.u32 2102212464, %v5364
        %v5374 = vor.u32 %v5372, %v5373
        %v5375 = vshll.u32 2102212464, %v5363
        %v5376 = vshrl.u32 920167782, %v5364
        %v5377 = vor.u32 %v5375, %v5376
        %v5378 = vshll.u32 920167782, %v5363
        %v5379 = vshrl.u32 1326507024, %v5364
        %v5380 = vor.u32 %v5378, %v5379
        %vm5381 = vcmp.lt.s32.totalorder %v5362, 1
        %vm5382 = vcmp.lt.s32.totalorder %v5362, 2
        %vm5383 = vcmp.lt.s32.totalorder %v5362, 3
        %vm5384 = vcmp.lt.s32.totalorder %v5362, 4
        %v5385 = vsel %vm5381, %v5365, %v5368
        %v5386 = vsel %vm5384, %v5374, 2102212464
        %v5387 = vsel %vm5383, %v5371, %v5386
        %v5388 = vsel %vm5382, %v5385, %v5387
        %v5389 = vsel %vm5381, %v5368, %v5371
        %v5390 = vsel %vm5384, %v5377, 920167782
        %v5391 = vsel %vm5383, %v5374, %v5390
        %v5392 = vsel %vm5382, %v5389, %v5391
        %v5393 = vsel %vm5381, %v5371, %v5374
        %v5394 = vsel %vm5384, %v5380, 1326507024
        %v5395 = vsel %vm5383, %v5377, %v5394
        %v5396 = vsel %vm5382, %v5393, %v5395
        %v5397 = vshll.u32 %v5357, 8
        %v5398 = vmul.u32.u64.compose %v5397, %v5396
        %v5399 = vextract.low.u32 %v5398
        %v5400 = vextract.high.u32 %v5398
        %v5401 = vmul.u32.u64.compose %v5397, %v5392
        %v5402 = vextract.low.u32 %v5401
        %v5403 = vextract.high.u32 %v5401
        %v5404 = vmul.u32 %v5397, %v5388
        %v5405 = vadd.s32 %v5400, %v5402
        %vm5406 = vc.u32 %v5400, %v5402
        %v5407 = vadd.s32 %v5403, 1
        %v5408 = vsel %vm5406, %v5407, %v5403
        %v5409 = vadd.s32 %v5404, %v5408
        %v5410 = vadd.s32 %v5409, 536870912
        %v5411 = vshrl.u32 %v5410, 30
        %v5412 = vshll.u32 %v5411, 30
        %v5413 = vsub.s32 %v5409, %v5412
        %vm5414 = vcmp.lt.s32.totalorder %v5413, 0
        %v5415 = vsub.s32 0, %v5413
        %v5416 = vsel %vm5414, %v5415, %v5413
        %v5417 = vclz %v5416
        %v5418 = vsub.s32 %v5417, 2
        %vm5419 = vcmp.gt.s32.totalorder 0, %v5418
        %v5420 = vsel %vm5419, 0, %v5418
        %v5421 = vsub.s32 32, %v5420
        %v5422 = vshll.u32 %v5413, %v5420
        %v5423 = vshrl.u32 %v5405, %v5421
        %v5424 = vor.u32 %v5422, %v5423
        %v5425 = vsub.s32 4294967266, %v5420
        %v5426 = vadd.s32 %v5425, 127
        %v5427 = vshll.u32 %v5426, 23
        %v5428 = vor.u32 4788187, %v5427
        %v5429 = vand.u32 2147483647, %v5428
        %v5431 = vcvt.s32.f32 %v5424
        %v5432 = vmul.f32 %v5431, %v5429
        %v5433 = vxor.u32 %v5432, 2147483648
        %v5434 = vsel %vm5351, %v5433, %v5432
        %v5435 = vsub.s32 4, %v5411
        %v5436 = vsel %vm5351, %v5435, %v5411
        %v5437 = vsel %vm5350, %v663, %v5434
        %v5438 = vsel %vm5350, 0, %v5436
        %v5439 = vcosq.f32.pop %v5437
        %v5440 = vsinq.f32.pop %v5437
        %vm5441 = vweird.f32 %v663
        %v5442 = vand.u32 %v5438, 3
        %vm5443 = vcmp.lt.s32.totalorder %v5442, 2
        %vm5444 = vcmp.eq.s32.totalorder %v5442, 0
        %v5445 = vxor.u32 %v5440, 2147483648
        %v5446 = vsel %vm5444, %v5439, %v5445
        %vm5447 = vcmp.eq.s32.totalorder %v5442, 2
        %v5448 = vxor.u32 %v5439, 2147483648
        %v5449 = vsel %vm5447, %v5448, %v5440
        %v5450 = vsel %vm5443, %v5446, %v5449
        %v5451 = vsel %vm5441, nan, %v5450
        %v5452 = vand.u32 2147483647, %v664
        %vm5453 = vcmp.le.f32.partialorder %v5452, 0.7853982
        %vm5454 = vcmp.lt.s32.totalorder %v664, 0
        %v5455 = vand.u32 %v664, 2139095040
        %v5456 = vshrl.u32 %v5455, 23
        %v5457 = vsub.s32 %v5456, 127
        %v5458 = vand.u32 2147483647, %v664
        %v5459 = vand.u32 %v5458, 8388607
        %v5460 = vor.u32 %v5459, 8388608
        %v5461 = vsub.s32 0, %v5460
        %v5462 = vadd.s32 %v5457, 1
        %vm5463 = vcmp.gt.s32.totalorder %v5462, 0
        %v5464 = vsel %vm5463, %v5462, 0
        %v5465 = vshrl.u32 %v5464, 5
        %v5466 = vand.u32 %v5464, 31
        %v5467 = vsub.s32 32, %v5466
        %v5468 = vshrl.u32 683565275, %v5467
        %v5469 = vshll.u32 683565275, %v5466
        %v5470 = vshrl.u32 2475754826, %v5467
        %v5471 = vor.u32 %v5469, %v5470
        %v5472 = vshll.u32 2475754826, %v5466
        %v5473 = vshrl.u32 2131351028, %v5467
        %v5474 = vor.u32 %v5472, %v5473
        %v5475 = vshll.u32 2131351028, %v5466
        %v5476 = vshrl.u32 2102212464, %v5467
        %v5477 = vor.u32 %v5475, %v5476
        %v5478 = vshll.u32 2102212464, %v5466
        %v5479 = vshrl.u32 920167782, %v5467
        %v5480 = vor.u32 %v5478, %v5479
        %v5481 = vshll.u32 920167782, %v5466
        %v5482 = vshrl.u32 1326507024, %v5467
        %v5483 = vor.u32 %v5481, %v5482
        %vm5484 = vcmp.lt.s32.totalorder %v5465, 1
        %vm5485 = vcmp.lt.s32.totalorder %v5465, 2
        %vm5486 = vcmp.lt.s32.totalorder %v5465, 3
        %vm5487 = vcmp.lt.s32.totalorder %v5465, 4
        %v5488 = vsel %vm5484, %v5468, %v5471
        %v5489 = vsel %vm5487, %v5477, 2102212464
        %v5490 = vsel %vm5486, %v5474, %v5489
        %v5491 = vsel %vm5485, %v5488, %v5490
        %v5492 = vsel %vm5484, %v5471, %v5474
        %v5493 = vsel %vm5487, %v5480, 920167782
        %v5494 = vsel %vm5486, %v5477, %v5493
        %v5495 = vsel %vm5485, %v5492, %v5494
        %v5496 = vsel %vm5484, %v5474, %v5477
        %v5497 = vsel %vm5487, %v5483, 1326507024
        %v5498 = vsel %vm5486, %v5480, %v5497
        %v5499 = vsel %vm5485, %v5496, %v5498
        %v5500 = vshll.u32 %v5460, 8
        %v5501 = vmul.u32.u64.compose %v5500, %v5499
        %v5502 = vextract.low.u32 %v5501
        %v5503 = vextract.high.u32 %v5501
        %v5504 = vmul.u32.u64.compose %v5500, %v5495
        %v5505 = vextract.low.u32 %v5504
        %v5506 = vextract.high.u32 %v5504
        %v5507 = vmul.u32 %v5500, %v5491
        %v5508 = vadd.s32 %v5503, %v5505
        %vm5509 = vc.u32 %v5503, %v5505
        %v5510 = vadd.s32 %v5506, 1
        %v5511 = vsel %vm5509, %v5510, %v5506
        %v5512 = vadd.s32 %v5507, %v5511
        %v5513 = vadd.s32 %v5512, 536870912
        %v5514 = vshrl.u32 %v5513, 30
        %v5515 = vshll.u32 %v5514, 30
        %v5516 = vsub.s32 %v5512, %v5515
        %vm5517 = vcmp.lt.s32.totalorder %v5516, 0
        %v5518 = vsub.s32 0, %v5516
        %v5519 = vsel %vm5517, %v5518, %v5516
        %v5520 = vclz %v5519
        %v5521 = vsub.s32 %v5520, 2
        %vm5522 = vcmp.gt.s32.totalorder 0, %v5521
        %v5523 = vsel %vm5522, 0, %v5521
        %v5524 = vsub.s32 32, %v5523
        %v5525 = vshll.u32 %v5516, %v5523
        %v5526 = vshrl.u32 %v5508, %v5524
        %v5527 = vor.u32 %v5525, %v5526
        %v5528 = vsub.s32 4294967266, %v5523
        %v5529 = vadd.s32 %v5528, 127
        %v5530 = vshll.u32 %v5529, 23
        %v5531 = vor.u32 4788187, %v5530
        %v5532 = vand.u32 2147483647, %v5531
        %v5534 = vcvt.s32.f32 %v5527
        %v5535 = vmul.f32 %v5534, %v5532
        %v5536 = vxor.u32 %v5535, 2147483648
        %v5537 = vsel %vm5454, %v5536, %v5535
        %v5538 = vsub.s32 4, %v5514
        %v5539 = vsel %vm5454, %v5538, %v5514
        %v5540 = vsel %vm5453, %v664, %v5537
        %v5541 = vsel %vm5453, 0, %v5539
        %v5542 = vcosq.f32.pop %v5540
        %v5543 = vsinq.f32.pop %v5540
        %vm5544 = vweird.f32 %v664
        %v5545 = vand.u32 %v5541, 3
        %vm5546 = vcmp.lt.s32.totalorder %v5545, 2
        %vm5547 = vcmp.eq.s32.totalorder %v5545, 0
        %v5548 = vxor.u32 %v5543, 2147483648
        %v5549 = vsel %vm5547, %v5542, %v5548
        %vm5550 = vcmp.eq.s32.totalorder %v5545, 2
        %v5551 = vxor.u32 %v5542, 2147483648
        %v5552 = vsel %vm5550, %v5551, %v5543
        %v5553 = vsel %vm5546, %v5549, %v5552
        %v5554 = vsel %vm5544, nan, %v5553
        %v5555 = vand.u32 2147483647, %v665
        %vm5556 = vcmp.le.f32.partialorder %v5555, 0.7853982
        %vm5557 = vcmp.lt.s32.totalorder %v665, 0
        %v5558 = vand.u32 %v665, 2139095040
        %v5559 = vshrl.u32 %v5558, 23
        %v5560 = vsub.s32 %v5559, 127
        %v5561 = vand.u32 2147483647, %v665
        %v5562 = vand.u32 %v5561, 8388607
        %v5563 = vor.u32 %v5562, 8388608
        %v5564 = vsub.s32 0, %v5563
        %v5565 = vadd.s32 %v5560, 1
        %vm5566 = vcmp.gt.s32.totalorder %v5565, 0
        %v5567 = vsel %vm5566, %v5565, 0
        %v5568 = vshrl.u32 %v5567, 5
        %v5569 = vand.u32 %v5567, 31
        %v5570 = vsub.s32 32, %v5569
        %v5571 = vshrl.u32 683565275, %v5570
        %v5572 = vshll.u32 683565275, %v5569
        %v5573 = vshrl.u32 2475754826, %v5570
        %v5574 = vor.u32 %v5572, %v5573
        %v5575 = vshll.u32 2475754826, %v5569
        %v5576 = vshrl.u32 2131351028, %v5570
        %v5577 = vor.u32 %v5575, %v5576
        %v5578 = vshll.u32 2131351028, %v5569
        %v5579 = vshrl.u32 2102212464, %v5570
        %v5580 = vor.u32 %v5578, %v5579
        %v5581 = vshll.u32 2102212464, %v5569
        %v5582 = vshrl.u32 920167782, %v5570
        %v5583 = vor.u32 %v5581, %v5582
        %v5584 = vshll.u32 920167782, %v5569
        %v5585 = vshrl.u32 1326507024, %v5570
        %v5586 = vor.u32 %v5584, %v5585
        %vm5587 = vcmp.lt.s32.totalorder %v5568, 1
        %vm5588 = vcmp.lt.s32.totalorder %v5568, 2
        %vm5589 = vcmp.lt.s32.totalorder %v5568, 3
        %vm5590 = vcmp.lt.s32.totalorder %v5568, 4
        %v5591 = vsel %vm5587, %v5571, %v5574
        %v5592 = vsel %vm5590, %v5580, 2102212464
        %v5593 = vsel %vm5589, %v5577, %v5592
        %v5594 = vsel %vm5588, %v5591, %v5593
        %v5595 = vsel %vm5587, %v5574, %v5577
        %v5596 = vsel %vm5590, %v5583, 920167782
        %v5597 = vsel %vm5589, %v5580, %v5596
        %v5598 = vsel %vm5588, %v5595, %v5597
        %v5599 = vsel %vm5587, %v5577, %v5580
        %v5600 = vsel %vm5590, %v5586, 1326507024
        %v5601 = vsel %vm5589, %v5583, %v5600
        %v5602 = vsel %vm5588, %v5599, %v5601
        %v5603 = vshll.u32 %v5563, 8
        %v5604 = vmul.u32.u64.compose %v5603, %v5602
        %v5605 = vextract.low.u32 %v5604
        %v5606 = vextract.high.u32 %v5604
        %v5607 = vmul.u32.u64.compose %v5603, %v5598
        %v5608 = vextract.low.u32 %v5607
        %v5609 = vextract.high.u32 %v5607
        %v5610 = vmul.u32 %v5603, %v5594
        %v5611 = vadd.s32 %v5606, %v5608
        %vm5612 = vc.u32 %v5606, %v5608
        %v5613 = vadd.s32 %v5609, 1
        %v5614 = vsel %vm5612, %v5613, %v5609
        %v5615 = vadd.s32 %v5610, %v5614
        %v5616 = vadd.s32 %v5615, 536870912
        %v5617 = vshrl.u32 %v5616, 30
        %v5618 = vshll.u32 %v5617, 30
        %v5619 = vsub.s32 %v5615, %v5618
        %vm5620 = vcmp.lt.s32.totalorder %v5619, 0
        %v5621 = vsub.s32 0, %v5619
        %v5622 = vsel %vm5620, %v5621, %v5619
        %v5623 = vclz %v5622
        %v5624 = vsub.s32 %v5623, 2
        %vm5625 = vcmp.gt.s32.totalorder 0, %v5624
        %v5626 = vsel %vm5625, 0, %v5624
        %v5627 = vsub.s32 32, %v5626
        %v5628 = vshll.u32 %v5619, %v5626
        %v5629 = vshrl.u32 %v5611, %v5627
        %v5630 = vor.u32 %v5628, %v5629
        %v5631 = vsub.s32 4294967266, %v5626
        %v5632 = vadd.s32 %v5631, 127
        %v5633 = vshll.u32 %v5632, 23
        %v5634 = vor.u32 4788187, %v5633
        %v5635 = vand.u32 2147483647, %v5634
        %v5637 = vcvt.s32.f32 %v5630
        %v5638 = vmul.f32 %v5637, %v5635
        %v5639 = vxor.u32 %v5638, 2147483648
        %v5640 = vsel %vm5557, %v5639, %v5638
        %v5641 = vsub.s32 4, %v5617
        %v5642 = vsel %vm5557, %v5641, %v5617
        %v5643 = vsel %vm5556, %v665, %v5640
        %v5644 = vsel %vm5556, 0, %v5642
        %v5645 = vcosq.f32.pop %v5643
        %v5646 = vsinq.f32.pop %v5643
        %vm5647 = vweird.f32 %v665
        %v5648 = vand.u32 %v5644, 3
        %vm5649 = vcmp.lt.s32.totalorder %v5648, 2
        %vm5650 = vcmp.eq.s32.totalorder %v5648, 0
        %v5651 = vxor.u32 %v5646, 2147483648
        %v5652 = vsel %vm5650, %v5645, %v5651
        %vm5653 = vcmp.eq.s32.totalorder %v5648, 2
        %v5654 = vxor.u32 %v5645, 2147483648
        %v5655 = vsel %vm5653, %v5654, %v5646
        %v5656 = vsel %vm5649, %v5652, %v5655
        %v5657 = vsel %vm5647, nan, %v5656
        %v5658 = vand.u32 2147483647, %v666
        %vm5659 = vcmp.le.f32.partialorder %v5658, 0.7853982
        %vm5660 = vcmp.lt.s32.totalorder %v666, 0
        %v5661 = vand.u32 %v666, 2139095040
        %v5662 = vshrl.u32 %v5661, 23
        %v5663 = vsub.s32 %v5662, 127
        %v5664 = vand.u32 2147483647, %v666
        %v5665 = vand.u32 %v5664, 8388607
        %v5666 = vor.u32 %v5665, 8388608
        %v5667 = vsub.s32 0, %v5666
        %v5668 = vadd.s32 %v5663, 1
        %vm5669 = vcmp.gt.s32.totalorder %v5668, 0
        %v5670 = vsel %vm5669, %v5668, 0
        %v5671 = vshrl.u32 %v5670, 5
        %v5672 = vand.u32 %v5670, 31
        %v5673 = vsub.s32 32, %v5672
        %v5674 = vshrl.u32 683565275, %v5673
        %v5675 = vshll.u32 683565275, %v5672
        %v5676 = vshrl.u32 2475754826, %v5673
        %v5677 = vor.u32 %v5675, %v5676
        %v5678 = vshll.u32 2475754826, %v5672
        %v5679 = vshrl.u32 2131351028, %v5673
        %v5680 = vor.u32 %v5678, %v5679
        %v5681 = vshll.u32 2131351028, %v5672
        %v5682 = vshrl.u32 2102212464, %v5673
        %v5683 = vor.u32 %v5681, %v5682
        %v5684 = vshll.u32 2102212464, %v5672
        %v5685 = vshrl.u32 920167782, %v5673
        %v5686 = vor.u32 %v5684, %v5685
        %v5687 = vshll.u32 920167782, %v5672
        %v5688 = vshrl.u32 1326507024, %v5673
        %v5689 = vor.u32 %v5687, %v5688
        %vm5690 = vcmp.lt.s32.totalorder %v5671, 1
        %vm5691 = vcmp.lt.s32.totalorder %v5671, 2
        %vm5692 = vcmp.lt.s32.totalorder %v5671, 3
        %vm5693 = vcmp.lt.s32.totalorder %v5671, 4
        %v5694 = vsel %vm5690, %v5674, %v5677
        %v5695 = vsel %vm5693, %v5683, 2102212464
        %v5696 = vsel %vm5692, %v5680, %v5695
        %v5697 = vsel %vm5691, %v5694, %v5696
        %v5698 = vsel %vm5690, %v5677, %v5680
        %v5699 = vsel %vm5693, %v5686, 920167782
        %v5700 = vsel %vm5692, %v5683, %v5699
        %v5701 = vsel %vm5691, %v5698, %v5700
        %v5702 = vsel %vm5690, %v5680, %v5683
        %v5703 = vsel %vm5693, %v5689, 1326507024
        %v5704 = vsel %vm5692, %v5686, %v5703
        %v5705 = vsel %vm5691, %v5702, %v5704
        %v5706 = vshll.u32 %v5666, 8
        %v5707 = vmul.u32.u64.compose %v5706, %v5705
        %v5708 = vextract.low.u32 %v5707
        %v5709 = vextract.high.u32 %v5707
        %v5710 = vmul.u32.u64.compose %v5706, %v5701
        %v5711 = vextract.low.u32 %v5710
        %v5712 = vextract.high.u32 %v5710
        %v5713 = vmul.u32 %v5706, %v5697
        %v5714 = vadd.s32 %v5709, %v5711
        %vm5715 = vc.u32 %v5709, %v5711
        %v5716 = vadd.s32 %v5712, 1
        %v5717 = vsel %vm5715, %v5716, %v5712
        %v5718 = vadd.s32 %v5713, %v5717
        %v5719 = vadd.s32 %v5718, 536870912
        %v5720 = vshrl.u32 %v5719, 30
        %v5721 = vshll.u32 %v5720, 30
        %v5722 = vsub.s32 %v5718, %v5721
        %vm5723 = vcmp.lt.s32.totalorder %v5722, 0
        %v5724 = vsub.s32 0, %v5722
        %v5725 = vsel %vm5723, %v5724, %v5722
        %v5726 = vclz %v5725
        %v5727 = vsub.s32 %v5726, 2
        %vm5728 = vcmp.gt.s32.totalorder 0, %v5727
        %v5729 = vsel %vm5728, 0, %v5727
        %v5730 = vsub.s32 32, %v5729
        %v5731 = vshll.u32 %v5722, %v5729
        %v5732 = vshrl.u32 %v5714, %v5730
        %v5733 = vor.u32 %v5731, %v5732
        %v5734 = vsub.s32 4294967266, %v5729
        %v5735 = vadd.s32 %v5734, 127
        %v5736 = vshll.u32 %v5735, 23
        %v5737 = vor.u32 4788187, %v5736
        %v5738 = vand.u32 2147483647, %v5737
        %v5740 = vcvt.s32.f32 %v5733
        %v5741 = vmul.f32 %v5740, %v5738
        %v5742 = vxor.u32 %v5741, 2147483648
        %v5743 = vsel %vm5660, %v5742, %v5741
        %v5744 = vsub.s32 4, %v5720
        %v5745 = vsel %vm5660, %v5744, %v5720
        %v5746 = vsel %vm5659, %v666, %v5743
        %v5747 = vsel %vm5659, 0, %v5745
        %v5748 = vcosq.f32.pop %v5746
        %v5749 = vsinq.f32.pop %v5746
        %vm5750 = vweird.f32 %v666
        %v5751 = vand.u32 %v5747, 3
        %vm5752 = vcmp.lt.s32.totalorder %v5751, 2
        %vm5753 = vcmp.eq.s32.totalorder %v5751, 0
        %v5754 = vxor.u32 %v5749, 2147483648
        %v5755 = vsel %vm5753, %v5748, %v5754
        %vm5756 = vcmp.eq.s32.totalorder %v5751, 2
        %v5757 = vxor.u32 %v5748, 2147483648
        %v5758 = vsel %vm5756, %v5757, %v5749
        %v5759 = vsel %vm5752, %v5755, %v5758
        %v5760 = vsel %vm5750, nan, %v5759
        %v5761 = vand.u32 2147483647, %v667
        %vm5762 = vcmp.le.f32.partialorder %v5761, 0.7853982
        %vm5763 = vcmp.lt.s32.totalorder %v667, 0
        %v5764 = vand.u32 %v667, 2139095040
        %v5765 = vshrl.u32 %v5764, 23
        %v5766 = vsub.s32 %v5765, 127
        %v5767 = vand.u32 2147483647, %v667
        %v5768 = vand.u32 %v5767, 8388607
        %v5769 = vor.u32 %v5768, 8388608
        %v5770 = vsub.s32 0, %v5769
        %v5771 = vadd.s32 %v5766, 1
        %vm5772 = vcmp.gt.s32.totalorder %v5771, 0
        %v5773 = vsel %vm5772, %v5771, 0
        %v5774 = vshrl.u32 %v5773, 5
        %v5775 = vand.u32 %v5773, 31
        %v5776 = vsub.s32 32, %v5775
        %v5777 = vshrl.u32 683565275, %v5776
        %v5778 = vshll.u32 683565275, %v5775
        %v5779 = vshrl.u32 2475754826, %v5776
        %v5780 = vor.u32 %v5778, %v5779
        %v5781 = vshll.u32 2475754826, %v5775
        %v5782 = vshrl.u32 2131351028, %v5776
        %v5783 = vor.u32 %v5781, %v5782
        %v5784 = vshll.u32 2131351028, %v5775
        %v5785 = vshrl.u32 2102212464, %v5776
        %v5786 = vor.u32 %v5784, %v5785
        %v5787 = vshll.u32 2102212464, %v5775
        %v5788 = vshrl.u32 920167782, %v5776
        %v5789 = vor.u32 %v5787, %v5788
        %v5790 = vshll.u32 920167782, %v5775
        %v5791 = vshrl.u32 1326507024, %v5776
        %v5792 = vor.u32 %v5790, %v5791
        %vm5793 = vcmp.lt.s32.totalorder %v5774, 1
        %vm5794 = vcmp.lt.s32.totalorder %v5774, 2
        %vm5795 = vcmp.lt.s32.totalorder %v5774, 3
        %vm5796 = vcmp.lt.s32.totalorder %v5774, 4
        %v5797 = vsel %vm5793, %v5777, %v5780
        %v5798 = vsel %vm5796, %v5786, 2102212464
        %v5799 = vsel %vm5795, %v5783, %v5798
        %v5800 = vsel %vm5794, %v5797, %v5799
        %v5801 = vsel %vm5793, %v5780, %v5783
        %v5802 = vsel %vm5796, %v5789, 920167782
        %v5803 = vsel %vm5795, %v5786, %v5802
        %v5804 = vsel %vm5794, %v5801, %v5803
        %v5805 = vsel %vm5793, %v5783, %v5786
        %v5806 = vsel %vm5796, %v5792, 1326507024
        %v5807 = vsel %vm5795, %v5789, %v5806
        %v5808 = vsel %vm5794, %v5805, %v5807
        %v5809 = vshll.u32 %v5769, 8
        %v5810 = vmul.u32.u64.compose %v5809, %v5808
        %v5811 = vextract.low.u32 %v5810
        %v5812 = vextract.high.u32 %v5810
        %v5813 = vmul.u32.u64.compose %v5809, %v5804
        %v5814 = vextract.low.u32 %v5813
        %v5815 = vextract.high.u32 %v5813
        %v5816 = vmul.u32 %v5809, %v5800
        %v5817 = vadd.s32 %v5812, %v5814
        %vm5818 = vc.u32 %v5812, %v5814
        %v5819 = vadd.s32 %v5815, 1
        %v5820 = vsel %vm5818, %v5819, %v5815
        %v5821 = vadd.s32 %v5816, %v5820
        %v5822 = vadd.s32 %v5821, 536870912
        %v5823 = vshrl.u32 %v5822, 30
        %v5824 = vshll.u32 %v5823, 30
        %v5825 = vsub.s32 %v5821, %v5824
        %vm5826 = vcmp.lt.s32.totalorder %v5825, 0
        %v5827 = vsub.s32 0, %v5825
        %v5828 = vsel %vm5826, %v5827, %v5825
        %v5829 = vclz %v5828
        %v5830 = vsub.s32 %v5829, 2
        %vm5831 = vcmp.gt.s32.totalorder 0, %v5830
        %v5832 = vsel %vm5831, 0, %v5830
        %v5833 = vsub.s32 32, %v5832
        %v5834 = vshll.u32 %v5825, %v5832
        %v5835 = vshrl.u32 %v5817, %v5833
        %v5836 = vor.u32 %v5834, %v5835
        %v5837 = vsub.s32 4294967266, %v5832
        %v5838 = vadd.s32 %v5837, 127
        %v5839 = vshll.u32 %v5838, 23
        %v5840 = vor.u32 4788187, %v5839
        %v5841 = vand.u32 2147483647, %v5840
        %v5843 = vcvt.s32.f32 %v5836
        %v5844 = vmul.f32 %v5843, %v5841
        %v5845 = vxor.u32 %v5844, 2147483648
        %v5846 = vsel %vm5763, %v5845, %v5844
        %v5847 = vsub.s32 4, %v5823
        %v5848 = vsel %vm5763, %v5847, %v5823
        %v5849 = vsel %vm5762, %v667, %v5846
        %v5850 = vsel %vm5762, 0, %v5848
        %v5851 = vcosq.f32.pop %v5849
        %v5852 = vsinq.f32.pop %v5849
        %vm5853 = vweird.f32 %v667
        %v5854 = vand.u32 %v5850, 3
        %vm5855 = vcmp.lt.s32.totalorder %v5854, 2
        %vm5856 = vcmp.eq.s32.totalorder %v5854, 0
        %v5857 = vxor.u32 %v5852, 2147483648
        %v5858 = vsel %vm5856, %v5851, %v5857
        %vm5859 = vcmp.eq.s32.totalorder %v5854, 2
        %v5860 = vxor.u32 %v5851, 2147483648
        %v5861 = vsel %vm5859, %v5860, %v5852
        %v5862 = vsel %vm5855, %v5858, %v5861
        %v5863 = vsel %vm5853, nan, %v5862
        %v5864 = vand.u32 2147483647, %v668
        %vm5865 = vcmp.le.f32.partialorder %v5864, 0.7853982
        %vm5866 = vcmp.lt.s32.totalorder %v668, 0
        %v5867 = vand.u32 %v668, 2139095040
        %v5868 = vshrl.u32 %v5867, 23
        %v5869 = vsub.s32 %v5868, 127
        %v5870 = vand.u32 2147483647, %v668
        %v5871 = vand.u32 %v5870, 8388607
        %v5872 = vor.u32 %v5871, 8388608
        %v5873 = vsub.s32 0, %v5872
        %v5874 = vadd.s32 %v5869, 1
        %vm5875 = vcmp.gt.s32.totalorder %v5874, 0
        %v5876 = vsel %vm5875, %v5874, 0
        %v5877 = vshrl.u32 %v5876, 5
        %v5878 = vand.u32 %v5876, 31
        %v5879 = vsub.s32 32, %v5878
        %v5880 = vshrl.u32 683565275, %v5879
        %v5881 = vshll.u32 683565275, %v5878
        %v5882 = vshrl.u32 2475754826, %v5879
        %v5883 = vor.u32 %v5881, %v5882
        %v5884 = vshll.u32 2475754826, %v5878
        %v5885 = vshrl.u32 2131351028, %v5879
        %v5886 = vor.u32 %v5884, %v5885
        %v5887 = vshll.u32 2131351028, %v5878
        %v5888 = vshrl.u32 2102212464, %v5879
        %v5889 = vor.u32 %v5887, %v5888
        %v5890 = vshll.u32 2102212464, %v5878
        %v5891 = vshrl.u32 920167782, %v5879
        %v5892 = vor.u32 %v5890, %v5891
        %v5893 = vshll.u32 920167782, %v5878
        %v5894 = vshrl.u32 1326507024, %v5879
        %v5895 = vor.u32 %v5893, %v5894
        %vm5896 = vcmp.lt.s32.totalorder %v5877, 1
        %vm5897 = vcmp.lt.s32.totalorder %v5877, 2
        %vm5898 = vcmp.lt.s32.totalorder %v5877, 3
        %vm5899 = vcmp.lt.s32.totalorder %v5877, 4
        %v5900 = vsel %vm5896, %v5880, %v5883
        %v5901 = vsel %vm5899, %v5889, 2102212464
        %v5902 = vsel %vm5898, %v5886, %v5901
        %v5903 = vsel %vm5897, %v5900, %v5902
        %v5904 = vsel %vm5896, %v5883, %v5886
        %v5905 = vsel %vm5899, %v5892, 920167782
        %v5906 = vsel %vm5898, %v5889, %v5905
        %v5907 = vsel %vm5897, %v5904, %v5906
        %v5908 = vsel %vm5896, %v5886, %v5889
        %v5909 = vsel %vm5899, %v5895, 1326507024
        %v5910 = vsel %vm5898, %v5892, %v5909
        %v5911 = vsel %vm5897, %v5908, %v5910
        %v5912 = vshll.u32 %v5872, 8
        %v5913 = vmul.u32.u64.compose %v5912, %v5911
        %v5914 = vextract.low.u32 %v5913
        %v5915 = vextract.high.u32 %v5913
        %v5916 = vmul.u32.u64.compose %v5912, %v5907
        %v5917 = vextract.low.u32 %v5916
        %v5918 = vextract.high.u32 %v5916
        %v5919 = vmul.u32 %v5912, %v5903
        %v5920 = vadd.s32 %v5915, %v5917
        %vm5921 = vc.u32 %v5915, %v5917
        %v5922 = vadd.s32 %v5918, 1
        %v5923 = vsel %vm5921, %v5922, %v5918
        %v5924 = vadd.s32 %v5919, %v5923
        %v5925 = vadd.s32 %v5924, 536870912
        %v5926 = vshrl.u32 %v5925, 30
        %v5927 = vshll.u32 %v5926, 30
        %v5928 = vsub.s32 %v5924, %v5927
        %vm5929 = vcmp.lt.s32.totalorder %v5928, 0
        %v5930 = vsub.s32 0, %v5928
        %v5931 = vsel %vm5929, %v5930, %v5928
        %v5932 = vclz %v5931
        %v5933 = vsub.s32 %v5932, 2
        %vm5934 = vcmp.gt.s32.totalorder 0, %v5933
        %v5935 = vsel %vm5934, 0, %v5933
        %v5936 = vsub.s32 32, %v5935
        %v5937 = vshll.u32 %v5928, %v5935
        %v5938 = vshrl.u32 %v5920, %v5936
        %v5939 = vor.u32 %v5937, %v5938
        %v5940 = vsub.s32 4294967266, %v5935
        %v5941 = vadd.s32 %v5940, 127
        %v5942 = vshll.u32 %v5941, 23
        %v5943 = vor.u32 4788187, %v5942
        %v5944 = vand.u32 2147483647, %v5943
        %v5946 = vcvt.s32.f32 %v5939
        %v5947 = vmul.f32 %v5946, %v5944
        %v5948 = vxor.u32 %v5947, 2147483648
        %v5949 = vsel %vm5866, %v5948, %v5947
        %v5950 = vsub.s32 4, %v5926
        %v5951 = vsel %vm5866, %v5950, %v5926
        %v5952 = vsel %vm5865, %v668, %v5949
        %v5953 = vsel %vm5865, 0, %v5951
        %v5954 = vcosq.f32.pop %v5952
        %v5955 = vsinq.f32.pop %v5952
        %vm5956 = vweird.f32 %v668
        %v5957 = vand.u32 %v5953, 3
        %vm5958 = vcmp.lt.s32.totalorder %v5957, 2
        %vm5959 = vcmp.eq.s32.totalorder %v5957, 0
        %v5960 = vxor.u32 %v5955, 2147483648
        %v5961 = vsel %vm5959, %v5954, %v5960
        %vm5962 = vcmp.eq.s32.totalorder %v5957, 2
        %v5963 = vxor.u32 %v5954, 2147483648
        %v5964 = vsel %vm5962, %v5963, %v5955
        %v5965 = vsel %vm5958, %v5961, %v5964
        %v5966 = vsel %vm5956, nan, %v5965
        %v5967 = vand.u32 2147483647, %v669
        %vm5968 = vcmp.le.f32.partialorder %v5967, 0.7853982
        %vm5969 = vcmp.lt.s32.totalorder %v669, 0
        %v5970 = vand.u32 %v669, 2139095040
        %v5971 = vshrl.u32 %v5970, 23
        %v5972 = vsub.s32 %v5971, 127
        %v5973 = vand.u32 2147483647, %v669
        %v5974 = vand.u32 %v5973, 8388607
        %v5975 = vor.u32 %v5974, 8388608
        %v5976 = vsub.s32 0, %v5975
        %v5977 = vadd.s32 %v5972, 1
        %vm5978 = vcmp.gt.s32.totalorder %v5977, 0
        %v5979 = vsel %vm5978, %v5977, 0
        %v5980 = vshrl.u32 %v5979, 5
        %v5981 = vand.u32 %v5979, 31
        %v5982 = vsub.s32 32, %v5981
        %v5983 = vshrl.u32 683565275, %v5982
        %v5984 = vshll.u32 683565275, %v5981
        %v5985 = vshrl.u32 2475754826, %v5982
        %v5986 = vor.u32 %v5984, %v5985
        %v5987 = vshll.u32 2475754826, %v5981
        %v5988 = vshrl.u32 2131351028, %v5982
        %v5989 = vor.u32 %v5987, %v5988
        %v5990 = vshll.u32 2131351028, %v5981
        %v5991 = vshrl.u32 2102212464, %v5982
        %v5992 = vor.u32 %v5990, %v5991
        %v5993 = vshll.u32 2102212464, %v5981
        %v5994 = vshrl.u32 920167782, %v5982
        %v5995 = vor.u32 %v5993, %v5994
        %v5996 = vshll.u32 920167782, %v5981
        %v5997 = vshrl.u32 1326507024, %v5982
        %v5998 = vor.u32 %v5996, %v5997
        %vm5999 = vcmp.lt.s32.totalorder %v5980, 1
        %vm6000 = vcmp.lt.s32.totalorder %v5980, 2
        %vm6001 = vcmp.lt.s32.totalorder %v5980, 3
        %vm6002 = vcmp.lt.s32.totalorder %v5980, 4
        %v6003 = vsel %vm5999, %v5983, %v5986
        %v6004 = vsel %vm6002, %v5992, 2102212464
        %v6005 = vsel %vm6001, %v5989, %v6004
        %v6006 = vsel %vm6000, %v6003, %v6005
        %v6007 = vsel %vm5999, %v5986, %v5989
        %v6008 = vsel %vm6002, %v5995, 920167782
        %v6009 = vsel %vm6001, %v5992, %v6008
        %v6010 = vsel %vm6000, %v6007, %v6009
        %v6011 = vsel %vm5999, %v5989, %v5992
        %v6012 = vsel %vm6002, %v5998, 1326507024
        %v6013 = vsel %vm6001, %v5995, %v6012
        %v6014 = vsel %vm6000, %v6011, %v6013
        %v6015 = vshll.u32 %v5975, 8
        %v6016 = vmul.u32.u64.compose %v6015, %v6014
        %v6017 = vextract.low.u32 %v6016
        %v6018 = vextract.high.u32 %v6016
        %v6019 = vmul.u32.u64.compose %v6015, %v6010
        %v6020 = vextract.low.u32 %v6019
        %v6021 = vextract.high.u32 %v6019
        %v6022 = vmul.u32 %v6015, %v6006
        %v6023 = vadd.s32 %v6018, %v6020
        %vm6024 = vc.u32 %v6018, %v6020
        %v6025 = vadd.s32 %v6021, 1
        %v6026 = vsel %vm6024, %v6025, %v6021
        %v6027 = vadd.s32 %v6022, %v6026
        %v6028 = vadd.s32 %v6027, 536870912
        %v6029 = vshrl.u32 %v6028, 30
        %v6030 = vshll.u32 %v6029, 30
        %v6031 = vsub.s32 %v6027, %v6030
        %vm6032 = vcmp.lt.s32.totalorder %v6031, 0
        %v6033 = vsub.s32 0, %v6031
        %v6034 = vsel %vm6032, %v6033, %v6031
        %v6035 = vclz %v6034
        %v6036 = vsub.s32 %v6035, 2
        %vm6037 = vcmp.gt.s32.totalorder 0, %v6036
        %v6038 = vsel %vm6037, 0, %v6036
        %v6039 = vsub.s32 32, %v6038
        %v6040 = vshll.u32 %v6031, %v6038
        %v6041 = vshrl.u32 %v6023, %v6039
        %v6042 = vor.u32 %v6040, %v6041
        %v6043 = vsub.s32 4294967266, %v6038
        %v6044 = vadd.s32 %v6043, 127
        %v6045 = vshll.u32 %v6044, 23
        %v6046 = vor.u32 4788187, %v6045
        %v6047 = vand.u32 2147483647, %v6046
        %v6049 = vcvt.s32.f32 %v6042
        %v6050 = vmul.f32 %v6049, %v6047
        %v6051 = vxor.u32 %v6050, 2147483648
        %v6052 = vsel %vm5969, %v6051, %v6050
        %v6053 = vsub.s32 4, %v6029
        %v6054 = vsel %vm5969, %v6053, %v6029
        %v6055 = vsel %vm5968, %v669, %v6052
        %v6056 = vsel %vm5968, 0, %v6054
        %v6057 = vcosq.f32.pop %v6055
        %v6058 = vsinq.f32.pop %v6055
        %vm6059 = vweird.f32 %v669
        %v6060 = vand.u32 %v6056, 3
        %vm6061 = vcmp.lt.s32.totalorder %v6060, 2
        %vm6062 = vcmp.eq.s32.totalorder %v6060, 0
        %v6063 = vxor.u32 %v6058, 2147483648
        %v6064 = vsel %vm6062, %v6057, %v6063
        %vm6065 = vcmp.eq.s32.totalorder %v6060, 2
        %v6066 = vxor.u32 %v6057, 2147483648
        %v6067 = vsel %vm6065, %v6066, %v6058
        %v6068 = vsel %vm6061, %v6064, %v6067
        %v6069 = vsel %vm6059, nan, %v6068
        %v6070 = vand.u32 2147483647, %v670
        %vm6071 = vcmp.le.f32.partialorder %v6070, 0.7853982
        %vm6072 = vcmp.lt.s32.totalorder %v670, 0
        %v6073 = vand.u32 %v670, 2139095040
        %v6074 = vshrl.u32 %v6073, 23
        %v6075 = vsub.s32 %v6074, 127
        %v6076 = vand.u32 2147483647, %v670
        %v6077 = vand.u32 %v6076, 8388607
        %v6078 = vor.u32 %v6077, 8388608
        %v6079 = vsub.s32 0, %v6078
        %v6080 = vadd.s32 %v6075, 1
        %vm6081 = vcmp.gt.s32.totalorder %v6080, 0
        %v6082 = vsel %vm6081, %v6080, 0
        %v6083 = vshrl.u32 %v6082, 5
        %v6084 = vand.u32 %v6082, 31
        %v6085 = vsub.s32 32, %v6084
        %v6086 = vshrl.u32 683565275, %v6085
        %v6087 = vshll.u32 683565275, %v6084
        %v6088 = vshrl.u32 2475754826, %v6085
        %v6089 = vor.u32 %v6087, %v6088
        %v6090 = vshll.u32 2475754826, %v6084
        %v6091 = vshrl.u32 2131351028, %v6085
        %v6092 = vor.u32 %v6090, %v6091
        %v6093 = vshll.u32 2131351028, %v6084
        %v6094 = vshrl.u32 2102212464, %v6085
        %v6095 = vor.u32 %v6093, %v6094
        %v6096 = vshll.u32 2102212464, %v6084
        %v6097 = vshrl.u32 920167782, %v6085
        %v6098 = vor.u32 %v6096, %v6097
        %v6099 = vshll.u32 920167782, %v6084
        %v6100 = vshrl.u32 1326507024, %v6085
        %v6101 = vor.u32 %v6099, %v6100
        %vm6102 = vcmp.lt.s32.totalorder %v6083, 1
        %vm6103 = vcmp.lt.s32.totalorder %v6083, 2
        %vm6104 = vcmp.lt.s32.totalorder %v6083, 3
        %vm6105 = vcmp.lt.s32.totalorder %v6083, 4
        %v6106 = vsel %vm6102, %v6086, %v6089
        %v6107 = vsel %vm6105, %v6095, 2102212464
        %v6108 = vsel %vm6104, %v6092, %v6107
        %v6109 = vsel %vm6103, %v6106, %v6108
        %v6110 = vsel %vm6102, %v6089, %v6092
        %v6111 = vsel %vm6105, %v6098, 920167782
        %v6112 = vsel %vm6104, %v6095, %v6111
        %v6113 = vsel %vm6103, %v6110, %v6112
        %v6114 = vsel %vm6102, %v6092, %v6095
        %v6115 = vsel %vm6105, %v6101, 1326507024
        %v6116 = vsel %vm6104, %v6098, %v6115
        %v6117 = vsel %vm6103, %v6114, %v6116
        %v6118 = vshll.u32 %v6078, 8
        %v6119 = vmul.u32.u64.compose %v6118, %v6117
        %v6120 = vextract.low.u32 %v6119
        %v6121 = vextract.high.u32 %v6119
        %v6122 = vmul.u32.u64.compose %v6118, %v6113
        %v6123 = vextract.low.u32 %v6122
        %v6124 = vextract.high.u32 %v6122
        %v6125 = vmul.u32 %v6118, %v6109
        %v6126 = vadd.s32 %v6121, %v6123
        %vm6127 = vc.u32 %v6121, %v6123
        %v6128 = vadd.s32 %v6124, 1
        %v6129 = vsel %vm6127, %v6128, %v6124
        %v6130 = vadd.s32 %v6125, %v6129
        %v6131 = vadd.s32 %v6130, 536870912
        %v6132 = vshrl.u32 %v6131, 30
        %v6133 = vshll.u32 %v6132, 30
        %v6134 = vsub.s32 %v6130, %v6133
        %vm6135 = vcmp.lt.s32.totalorder %v6134, 0
        %v6136 = vsub.s32 0, %v6134
        %v6137 = vsel %vm6135, %v6136, %v6134
        %v6138 = vclz %v6137
        %v6139 = vsub.s32 %v6138, 2
        %vm6140 = vcmp.gt.s32.totalorder 0, %v6139
        %v6141 = vsel %vm6140, 0, %v6139
        %v6142 = vsub.s32 32, %v6141
        %v6143 = vshll.u32 %v6134, %v6141
        %v6144 = vshrl.u32 %v6126, %v6142
        %v6145 = vor.u32 %v6143, %v6144
        %v6146 = vsub.s32 4294967266, %v6141
        %v6147 = vadd.s32 %v6146, 127
        %v6148 = vshll.u32 %v6147, 23
        %v6149 = vor.u32 4788187, %v6148
        %v6150 = vand.u32 2147483647, %v6149
        %v6152 = vcvt.s32.f32 %v6145
        %v6153 = vmul.f32 %v6152, %v6150
        %v6154 = vxor.u32 %v6153, 2147483648
        %v6155 = vsel %vm6072, %v6154, %v6153
        %v6156 = vsub.s32 4, %v6132
        %v6157 = vsel %vm6072, %v6156, %v6132
        %v6158 = vsel %vm6071, %v670, %v6155
        %v6159 = vsel %vm6071, 0, %v6157
        %v6160 = vcosq.f32.pop %v6158
        %v6161 = vsinq.f32.pop %v6158
        %vm6162 = vweird.f32 %v670
        %v6163 = vand.u32 %v6159, 3
        %vm6164 = vcmp.lt.s32.totalorder %v6163, 2
        %vm6165 = vcmp.eq.s32.totalorder %v6163, 0
        %v6166 = vxor.u32 %v6161, 2147483648
        %v6167 = vsel %vm6165, %v6160, %v6166
        %vm6168 = vcmp.eq.s32.totalorder %v6163, 2
        %v6169 = vxor.u32 %v6160, 2147483648
        %v6170 = vsel %vm6168, %v6169, %v6161
        %v6171 = vsel %vm6164, %v6167, %v6170
        %v6172 = vsel %vm6162, nan, %v6171
        %v6173 = vand.u32 2147483647, %v671
        %vm6174 = vcmp.le.f32.partialorder %v6173, 0.7853982
        %vm6175 = vcmp.lt.s32.totalorder %v671, 0
        %v6176 = vand.u32 %v671, 2139095040
        %v6177 = vshrl.u32 %v6176, 23
        %v6178 = vsub.s32 %v6177, 127
        %v6179 = vand.u32 2147483647, %v671
        %v6180 = vand.u32 %v6179, 8388607
        %v6181 = vor.u32 %v6180, 8388608
        %v6182 = vsub.s32 0, %v6181
        %v6183 = vadd.s32 %v6178, 1
        %vm6184 = vcmp.gt.s32.totalorder %v6183, 0
        %v6185 = vsel %vm6184, %v6183, 0
        %v6186 = vshrl.u32 %v6185, 5
        %v6187 = vand.u32 %v6185, 31
        %v6188 = vsub.s32 32, %v6187
        %v6189 = vshrl.u32 683565275, %v6188
        %v6190 = vshll.u32 683565275, %v6187
        %v6191 = vshrl.u32 2475754826, %v6188
        %v6192 = vor.u32 %v6190, %v6191
        %v6193 = vshll.u32 2475754826, %v6187
        %v6194 = vshrl.u32 2131351028, %v6188
        %v6195 = vor.u32 %v6193, %v6194
        %v6196 = vshll.u32 2131351028, %v6187
        %v6197 = vshrl.u32 2102212464, %v6188
        %v6198 = vor.u32 %v6196, %v6197
        %v6199 = vshll.u32 2102212464, %v6187
        %v6200 = vshrl.u32 920167782, %v6188
        %v6201 = vor.u32 %v6199, %v6200
        %v6202 = vshll.u32 920167782, %v6187
        %v6203 = vshrl.u32 1326507024, %v6188
        %v6204 = vor.u32 %v6202, %v6203
        %vm6205 = vcmp.lt.s32.totalorder %v6186, 1
        %vm6206 = vcmp.lt.s32.totalorder %v6186, 2
        %vm6207 = vcmp.lt.s32.totalorder %v6186, 3
        %vm6208 = vcmp.lt.s32.totalorder %v6186, 4
        %v6209 = vsel %vm6205, %v6189, %v6192
        %v6210 = vsel %vm6208, %v6198, 2102212464
        %v6211 = vsel %vm6207, %v6195, %v6210
        %v6212 = vsel %vm6206, %v6209, %v6211
        %v6213 = vsel %vm6205, %v6192, %v6195
        %v6214 = vsel %vm6208, %v6201, 920167782
        %v6215 = vsel %vm6207, %v6198, %v6214
        %v6216 = vsel %vm6206, %v6213, %v6215
        %v6217 = vsel %vm6205, %v6195, %v6198
        %v6218 = vsel %vm6208, %v6204, 1326507024
        %v6219 = vsel %vm6207, %v6201, %v6218
        %v6220 = vsel %vm6206, %v6217, %v6219
        %v6221 = vshll.u32 %v6181, 8
        %v6222 = vmul.u32.u64.compose %v6221, %v6220
        %v6223 = vextract.low.u32 %v6222
        %v6224 = vextract.high.u32 %v6222
        %v6225 = vmul.u32.u64.compose %v6221, %v6216
        %v6226 = vextract.low.u32 %v6225
        %v6227 = vextract.high.u32 %v6225
        %v6228 = vmul.u32 %v6221, %v6212
        %v6229 = vadd.s32 %v6224, %v6226
        %vm6230 = vc.u32 %v6224, %v6226
        %v6231 = vadd.s32 %v6227, 1
        %v6232 = vsel %vm6230, %v6231, %v6227
        %v6233 = vadd.s32 %v6228, %v6232
        %v6234 = vadd.s32 %v6233, 536870912
        %v6235 = vshrl.u32 %v6234, 30
        %v6236 = vshll.u32 %v6235, 30
        %v6237 = vsub.s32 %v6233, %v6236
        %vm6238 = vcmp.lt.s32.totalorder %v6237, 0
        %v6239 = vsub.s32 0, %v6237
        %v6240 = vsel %vm6238, %v6239, %v6237
        %v6241 = vclz %v6240
        %v6242 = vsub.s32 %v6241, 2
        %vm6243 = vcmp.gt.s32.totalorder 0, %v6242
        %v6244 = vsel %vm6243, 0, %v6242
        %v6245 = vsub.s32 32, %v6244
        %v6246 = vshll.u32 %v6237, %v6244
        %v6247 = vshrl.u32 %v6229, %v6245
        %v6248 = vor.u32 %v6246, %v6247
        %v6249 = vsub.s32 4294967266, %v6244
        %v6250 = vadd.s32 %v6249, 127
        %v6251 = vshll.u32 %v6250, 23
        %v6252 = vor.u32 4788187, %v6251
        %v6253 = vand.u32 2147483647, %v6252
        %v6255 = vcvt.s32.f32 %v6248
        %v6256 = vmul.f32 %v6255, %v6253
        %v6257 = vxor.u32 %v6256, 2147483648
        %v6258 = vsel %vm6175, %v6257, %v6256
        %v6259 = vsub.s32 4, %v6235
        %v6260 = vsel %vm6175, %v6259, %v6235
        %v6261 = vsel %vm6174, %v671, %v6258
        %v6262 = vsel %vm6174, 0, %v6260
        %v6263 = vcosq.f32.pop %v6261
        %v6264 = vsinq.f32.pop %v6261
        %vm6265 = vweird.f32 %v671
        %v6266 = vand.u32 %v6262, 3
        %vm6267 = vcmp.lt.s32.totalorder %v6266, 2
        %vm6268 = vcmp.eq.s32.totalorder %v6266, 0
        %v6269 = vxor.u32 %v6264, 2147483648
        %v6270 = vsel %vm6268, %v6263, %v6269
        %vm6271 = vcmp.eq.s32.totalorder %v6266, 2
        %v6272 = vxor.u32 %v6263, 2147483648
        %v6273 = vsel %vm6271, %v6272, %v6264
        %v6274 = vsel %vm6267, %v6270, %v6273
        %v6275 = vsel %vm6265, nan, %v6274
        %v6276 = vand.u32 2147483647, %v672
        %vm6277 = vcmp.le.f32.partialorder %v6276, 0.7853982
        %vm6278 = vcmp.lt.s32.totalorder %v672, 0
        %v6279 = vand.u32 %v672, 2139095040
        %v6280 = vshrl.u32 %v6279, 23
        %v6281 = vsub.s32 %v6280, 127
        %v6282 = vand.u32 2147483647, %v672
        %v6283 = vand.u32 %v6282, 8388607
        %v6284 = vor.u32 %v6283, 8388608
        %v6285 = vsub.s32 0, %v6284
        %v6286 = vadd.s32 %v6281, 1
        %vm6287 = vcmp.gt.s32.totalorder %v6286, 0
        %v6288 = vsel %vm6287, %v6286, 0
        %v6289 = vshrl.u32 %v6288, 5
        %v6290 = vand.u32 %v6288, 31
        %v6291 = vsub.s32 32, %v6290
        %v6292 = vshrl.u32 683565275, %v6291
        %v6293 = vshll.u32 683565275, %v6290
        %v6294 = vshrl.u32 2475754826, %v6291
        %v6295 = vor.u32 %v6293, %v6294
        %v6296 = vshll.u32 2475754826, %v6290
        %v6297 = vshrl.u32 2131351028, %v6291
        %v6298 = vor.u32 %v6296, %v6297
        %v6299 = vshll.u32 2131351028, %v6290
        %v6300 = vshrl.u32 2102212464, %v6291
        %v6301 = vor.u32 %v6299, %v6300
        %v6302 = vshll.u32 2102212464, %v6290
        %v6303 = vshrl.u32 920167782, %v6291
        %v6304 = vor.u32 %v6302, %v6303
        %v6305 = vshll.u32 920167782, %v6290
        %v6306 = vshrl.u32 1326507024, %v6291
        %v6307 = vor.u32 %v6305, %v6306
        %vm6308 = vcmp.lt.s32.totalorder %v6289, 1
        %vm6309 = vcmp.lt.s32.totalorder %v6289, 2
        %vm6310 = vcmp.lt.s32.totalorder %v6289, 3
        %vm6311 = vcmp.lt.s32.totalorder %v6289, 4
        %v6312 = vsel %vm6308, %v6292, %v6295
        %v6313 = vsel %vm6311, %v6301, 2102212464
        %v6314 = vsel %vm6310, %v6298, %v6313
        %v6315 = vsel %vm6309, %v6312, %v6314
        %v6316 = vsel %vm6308, %v6295, %v6298
        %v6317 = vsel %vm6311, %v6304, 920167782
        %v6318 = vsel %vm6310, %v6301, %v6317
        %v6319 = vsel %vm6309, %v6316, %v6318
        %v6320 = vsel %vm6308, %v6298, %v6301
        %v6321 = vsel %vm6311, %v6307, 1326507024
        %v6322 = vsel %vm6310, %v6304, %v6321
        %v6323 = vsel %vm6309, %v6320, %v6322
        %v6324 = vshll.u32 %v6284, 8
        %v6325 = vmul.u32.u64.compose %v6324, %v6323
        %v6326 = vextract.low.u32 %v6325
        %v6327 = vextract.high.u32 %v6325
        %v6328 = vmul.u32.u64.compose %v6324, %v6319
        %v6329 = vextract.low.u32 %v6328
        %v6330 = vextract.high.u32 %v6328
        %v6331 = vmul.u32 %v6324, %v6315
        %v6332 = vadd.s32 %v6327, %v6329
        %vm6333 = vc.u32 %v6327, %v6329
        %v6334 = vadd.s32 %v6330, 1
        %v6335 = vsel %vm6333, %v6334, %v6330
        %v6336 = vadd.s32 %v6331, %v6335
        %v6337 = vadd.s32 %v6336, 536870912
        %v6338 = vshrl.u32 %v6337, 30
        %v6339 = vshll.u32 %v6338, 30
        %v6340 = vsub.s32 %v6336, %v6339
        %vm6341 = vcmp.lt.s32.totalorder %v6340, 0
        %v6342 = vsub.s32 0, %v6340
        %v6343 = vsel %vm6341, %v6342, %v6340
        %v6344 = vclz %v6343
        %v6345 = vsub.s32 %v6344, 2
        %vm6346 = vcmp.gt.s32.totalorder 0, %v6345
        %v6347 = vsel %vm6346, 0, %v6345
        %v6348 = vsub.s32 32, %v6347
        %v6349 = vshll.u32 %v6340, %v6347
        %v6350 = vshrl.u32 %v6332, %v6348
        %v6351 = vor.u32 %v6349, %v6350
        %v6352 = vsub.s32 4294967266, %v6347
        %v6353 = vadd.s32 %v6352, 127
        %v6354 = vshll.u32 %v6353, 23
        %v6355 = vor.u32 4788187, %v6354
        %v6356 = vand.u32 2147483647, %v6355
        %v6358 = vcvt.s32.f32 %v6351
        %v6359 = vmul.f32 %v6358, %v6356
        %v6360 = vxor.u32 %v6359, 2147483648
        %v6361 = vsel %vm6278, %v6360, %v6359
        %v6362 = vsub.s32 4, %v6338
        %v6363 = vsel %vm6278, %v6362, %v6338
        %v6364 = vsel %vm6277, %v672, %v6361
        %v6365 = vsel %vm6277, 0, %v6363
        %v6366 = vcosq.f32.pop %v6364
        %v6367 = vsinq.f32.pop %v6364
        %vm6368 = vweird.f32 %v672
        %v6369 = vand.u32 %v6365, 3
        %vm6370 = vcmp.lt.s32.totalorder %v6369, 2
        %vm6371 = vcmp.eq.s32.totalorder %v6369, 0
        %v6372 = vxor.u32 %v6367, 2147483648
        %v6373 = vsel %vm6371, %v6366, %v6372
        %vm6374 = vcmp.eq.s32.totalorder %v6369, 2
        %v6375 = vxor.u32 %v6366, 2147483648
        %v6376 = vsel %vm6374, %v6375, %v6367
        %v6377 = vsel %vm6370, %v6373, %v6376
        %v6378 = vsel %vm6368, nan, %v6377
        %v6379 = vand.u32 2147483647, %v673
        %vm6380 = vcmp.le.f32.partialorder %v6379, 0.7853982
        %vm6381 = vcmp.lt.s32.totalorder %v673, 0
        %v6382 = vand.u32 %v673, 2139095040
        %v6383 = vshrl.u32 %v6382, 23
        %v6384 = vsub.s32 %v6383, 127
        %v6385 = vand.u32 2147483647, %v673
        %v6386 = vand.u32 %v6385, 8388607
        %v6387 = vor.u32 %v6386, 8388608
        %v6388 = vsub.s32 0, %v6387
        %v6389 = vadd.s32 %v6384, 1
        %vm6390 = vcmp.gt.s32.totalorder %v6389, 0
        %v6391 = vsel %vm6390, %v6389, 0
        %v6392 = vshrl.u32 %v6391, 5
        %v6393 = vand.u32 %v6391, 31
        %v6394 = vsub.s32 32, %v6393
        %v6395 = vshrl.u32 683565275, %v6394
        %v6396 = vshll.u32 683565275, %v6393
        %v6397 = vshrl.u32 2475754826, %v6394
        %v6398 = vor.u32 %v6396, %v6397
        %v6399 = vshll.u32 2475754826, %v6393
        %v6400 = vshrl.u32 2131351028, %v6394
        %v6401 = vor.u32 %v6399, %v6400
        %v6402 = vshll.u32 2131351028, %v6393
        %v6403 = vshrl.u32 2102212464, %v6394
        %v6404 = vor.u32 %v6402, %v6403
        %v6405 = vshll.u32 2102212464, %v6393
        %v6406 = vshrl.u32 920167782, %v6394
        %v6407 = vor.u32 %v6405, %v6406
        %v6408 = vshll.u32 920167782, %v6393
        %v6409 = vshrl.u32 1326507024, %v6394
        %v6410 = vor.u32 %v6408, %v6409
        %vm6411 = vcmp.lt.s32.totalorder %v6392, 1
        %vm6412 = vcmp.lt.s32.totalorder %v6392, 2
        %vm6413 = vcmp.lt.s32.totalorder %v6392, 3
        %vm6414 = vcmp.lt.s32.totalorder %v6392, 4
        %v6415 = vsel %vm6411, %v6395, %v6398
        %v6416 = vsel %vm6414, %v6404, 2102212464
        %v6417 = vsel %vm6413, %v6401, %v6416
        %v6418 = vsel %vm6412, %v6415, %v6417
        %v6419 = vsel %vm6411, %v6398, %v6401
        %v6420 = vsel %vm6414, %v6407, 920167782
        %v6421 = vsel %vm6413, %v6404, %v6420
        %v6422 = vsel %vm6412, %v6419, %v6421
        %v6423 = vsel %vm6411, %v6401, %v6404
        %v6424 = vsel %vm6414, %v6410, 1326507024
        %v6425 = vsel %vm6413, %v6407, %v6424
        %v6426 = vsel %vm6412, %v6423, %v6425
        %v6427 = vshll.u32 %v6387, 8
        %v6428 = vmul.u32.u64.compose %v6427, %v6426
        %v6429 = vextract.low.u32 %v6428
        %v6430 = vextract.high.u32 %v6428
        %v6431 = vmul.u32.u64.compose %v6427, %v6422
        %v6432 = vextract.low.u32 %v6431
        %v6433 = vextract.high.u32 %v6431
        %v6434 = vmul.u32 %v6427, %v6418
        %v6435 = vadd.s32 %v6430, %v6432
        %vm6436 = vc.u32 %v6430, %v6432
        %v6437 = vadd.s32 %v6433, 1
        %v6438 = vsel %vm6436, %v6437, %v6433
        %v6439 = vadd.s32 %v6434, %v6438
        %v6440 = vadd.s32 %v6439, 536870912
        %v6441 = vshrl.u32 %v6440, 30
        %v6442 = vshll.u32 %v6441, 30
        %v6443 = vsub.s32 %v6439, %v6442
        %vm6444 = vcmp.lt.s32.totalorder %v6443, 0
        %v6445 = vsub.s32 0, %v6443
        %v6446 = vsel %vm6444, %v6445, %v6443
        %v6447 = vclz %v6446
        %v6448 = vsub.s32 %v6447, 2
        %vm6449 = vcmp.gt.s32.totalorder 0, %v6448
        %v6450 = vsel %vm6449, 0, %v6448
        %v6451 = vsub.s32 32, %v6450
        %v6452 = vshll.u32 %v6443, %v6450
        %v6453 = vshrl.u32 %v6435, %v6451
        %v6454 = vor.u32 %v6452, %v6453
        %v6455 = vsub.s32 4294967266, %v6450
        %v6456 = vadd.s32 %v6455, 127
        %v6457 = vshll.u32 %v6456, 23
        %v6458 = vor.u32 4788187, %v6457
        %v6459 = vand.u32 2147483647, %v6458
        %v6461 = vcvt.s32.f32 %v6454
        %v6462 = vmul.f32 %v6461, %v6459
        %v6463 = vxor.u32 %v6462, 2147483648
        %v6464 = vsel %vm6381, %v6463, %v6462
        %v6465 = vsub.s32 4, %v6441
        %v6466 = vsel %vm6381, %v6465, %v6441
        %v6467 = vsel %vm6380, %v673, %v6464
        %v6468 = vsel %vm6380, 0, %v6466
        %v6469 = vcosq.f32.pop %v6467
        %v6470 = vsinq.f32.pop %v6467
        %vm6471 = vweird.f32 %v673
        %v6472 = vand.u32 %v6468, 3
        %vm6473 = vcmp.lt.s32.totalorder %v6472, 2
        %vm6474 = vcmp.eq.s32.totalorder %v6472, 0
        %v6475 = vxor.u32 %v6470, 2147483648
        %v6476 = vsel %vm6474, %v6469, %v6475
        %vm6477 = vcmp.eq.s32.totalorder %v6472, 2
        %v6478 = vxor.u32 %v6469, 2147483648
        %v6479 = vsel %vm6477, %v6478, %v6470
        %v6480 = vsel %vm6473, %v6476, %v6479
        %v6481 = vsel %vm6471, nan, %v6480
        %v6482 = vand.u32 2147483647, %v674
        %vm6483 = vcmp.le.f32.partialorder %v6482, 0.7853982
        %vm6484 = vcmp.lt.s32.totalorder %v674, 0
        %v6485 = vand.u32 %v674, 2139095040
        %v6486 = vshrl.u32 %v6485, 23
        %v6487 = vsub.s32 %v6486, 127
        %v6488 = vand.u32 2147483647, %v674
        %v6489 = vand.u32 %v6488, 8388607
        %v6490 = vor.u32 %v6489, 8388608
        %v6491 = vsub.s32 0, %v6490
        %v6492 = vadd.s32 %v6487, 1
        %vm6493 = vcmp.gt.s32.totalorder %v6492, 0
        %v6494 = vsel %vm6493, %v6492, 0
        %v6495 = vshrl.u32 %v6494, 5
        %v6496 = vand.u32 %v6494, 31
        %v6497 = vsub.s32 32, %v6496
        %v6498 = vshrl.u32 683565275, %v6497
        %v6499 = vshll.u32 683565275, %v6496
        %v6500 = vshrl.u32 2475754826, %v6497
        %v6501 = vor.u32 %v6499, %v6500
        %v6502 = vshll.u32 2475754826, %v6496
        %v6503 = vshrl.u32 2131351028, %v6497
        %v6504 = vor.u32 %v6502, %v6503
        %v6505 = vshll.u32 2131351028, %v6496
        %v6506 = vshrl.u32 2102212464, %v6497
        %v6507 = vor.u32 %v6505, %v6506
        %v6508 = vshll.u32 2102212464, %v6496
        %v6509 = vshrl.u32 920167782, %v6497
        %v6510 = vor.u32 %v6508, %v6509
        %v6511 = vshll.u32 920167782, %v6496
        %v6512 = vshrl.u32 1326507024, %v6497
        %v6513 = vor.u32 %v6511, %v6512
        %vm6514 = vcmp.lt.s32.totalorder %v6495, 1
        %vm6515 = vcmp.lt.s32.totalorder %v6495, 2
        %vm6516 = vcmp.lt.s32.totalorder %v6495, 3
        %vm6517 = vcmp.lt.s32.totalorder %v6495, 4
        %v6518 = vsel %vm6514, %v6498, %v6501
        %v6519 = vsel %vm6517, %v6507, 2102212464
        %v6520 = vsel %vm6516, %v6504, %v6519
        %v6521 = vsel %vm6515, %v6518, %v6520
        %v6522 = vsel %vm6514, %v6501, %v6504
        %v6523 = vsel %vm6517, %v6510, 920167782
        %v6524 = vsel %vm6516, %v6507, %v6523
        %v6525 = vsel %vm6515, %v6522, %v6524
        %v6526 = vsel %vm6514, %v6504, %v6507
        %v6527 = vsel %vm6517, %v6513, 1326507024
        %v6528 = vsel %vm6516, %v6510, %v6527
        %v6529 = vsel %vm6515, %v6526, %v6528
        %v6530 = vshll.u32 %v6490, 8
        %v6531 = vmul.u32.u64.compose %v6530, %v6529
        %v6532 = vextract.low.u32 %v6531
        %v6533 = vextract.high.u32 %v6531
        %v6534 = vmul.u32.u64.compose %v6530, %v6525
        %v6535 = vextract.low.u32 %v6534
        %v6536 = vextract.high.u32 %v6534
        %v6537 = vmul.u32 %v6530, %v6521
        %v6538 = vadd.s32 %v6533, %v6535
        %vm6539 = vc.u32 %v6533, %v6535
        %v6540 = vadd.s32 %v6536, 1
        %v6541 = vsel %vm6539, %v6540, %v6536
        %v6542 = vadd.s32 %v6537, %v6541
        %v6543 = vadd.s32 %v6542, 536870912
        %v6544 = vshrl.u32 %v6543, 30
        %v6545 = vshll.u32 %v6544, 30
        %v6546 = vsub.s32 %v6542, %v6545
        %vm6547 = vcmp.lt.s32.totalorder %v6546, 0
        %v6548 = vsub.s32 0, %v6546
        %v6549 = vsel %vm6547, %v6548, %v6546
        %v6550 = vclz %v6549
        %v6551 = vsub.s32 %v6550, 2
        %vm6552 = vcmp.gt.s32.totalorder 0, %v6551
        %v6553 = vsel %vm6552, 0, %v6551
        %v6554 = vsub.s32 32, %v6553
        %v6555 = vshll.u32 %v6546, %v6553
        %v6556 = vshrl.u32 %v6538, %v6554
        %v6557 = vor.u32 %v6555, %v6556
        %v6558 = vsub.s32 4294967266, %v6553
        %v6559 = vadd.s32 %v6558, 127
        %v6560 = vshll.u32 %v6559, 23
        %v6561 = vor.u32 4788187, %v6560
        %v6562 = vand.u32 2147483647, %v6561
        %v6564 = vcvt.s32.f32 %v6557
        %v6565 = vmul.f32 %v6564, %v6562
        %v6566 = vxor.u32 %v6565, 2147483648
        %v6567 = vsel %vm6484, %v6566, %v6565
        %v6568 = vsub.s32 4, %v6544
        %v6569 = vsel %vm6484, %v6568, %v6544
        %v6570 = vsel %vm6483, %v674, %v6567
        %v6571 = vsel %vm6483, 0, %v6569
        %v6572 = vcosq.f32.pop %v6570
        %v6573 = vsinq.f32.pop %v6570
        %vm6574 = vweird.f32 %v674
        %v6575 = vand.u32 %v6571, 3
        %vm6576 = vcmp.lt.s32.totalorder %v6575, 2
        %vm6577 = vcmp.eq.s32.totalorder %v6575, 0
        %v6578 = vxor.u32 %v6573, 2147483648
        %v6579 = vsel %vm6577, %v6572, %v6578
        %vm6580 = vcmp.eq.s32.totalorder %v6575, 2
        %v6581 = vxor.u32 %v6572, 2147483648
        %v6582 = vsel %vm6580, %v6581, %v6573
        %v6583 = vsel %vm6576, %v6579, %v6582
        %v6584 = vsel %vm6574, nan, %v6583
        %v6585 = vand.u32 2147483647, %v675
        %vm6586 = vcmp.le.f32.partialorder %v6585, 0.7853982
        %vm6587 = vcmp.lt.s32.totalorder %v675, 0
        %v6588 = vand.u32 %v675, 2139095040
        %v6589 = vshrl.u32 %v6588, 23
        %v6590 = vsub.s32 %v6589, 127
        %v6591 = vand.u32 2147483647, %v675
        %v6592 = vand.u32 %v6591, 8388607
        %v6593 = vor.u32 %v6592, 8388608
        %v6594 = vsub.s32 0, %v6593
        %v6595 = vadd.s32 %v6590, 1
        %vm6596 = vcmp.gt.s32.totalorder %v6595, 0
        %v6597 = vsel %vm6596, %v6595, 0
        %v6598 = vshrl.u32 %v6597, 5
        %v6599 = vand.u32 %v6597, 31
        %v6600 = vsub.s32 32, %v6599
        %v6601 = vshrl.u32 683565275, %v6600
        %v6602 = vshll.u32 683565275, %v6599
        %v6603 = vshrl.u32 2475754826, %v6600
        %v6604 = vor.u32 %v6602, %v6603
        %v6605 = vshll.u32 2475754826, %v6599
        %v6606 = vshrl.u32 2131351028, %v6600
        %v6607 = vor.u32 %v6605, %v6606
        %v6608 = vshll.u32 2131351028, %v6599
        %v6609 = vshrl.u32 2102212464, %v6600
        %v6610 = vor.u32 %v6608, %v6609
        %v6611 = vshll.u32 2102212464, %v6599
        %v6612 = vshrl.u32 920167782, %v6600
        %v6613 = vor.u32 %v6611, %v6612
        %v6614 = vshll.u32 920167782, %v6599
        %v6615 = vshrl.u32 1326507024, %v6600
        %v6616 = vor.u32 %v6614, %v6615
        %vm6617 = vcmp.lt.s32.totalorder %v6598, 1
        %vm6618 = vcmp.lt.s32.totalorder %v6598, 2
        %vm6619 = vcmp.lt.s32.totalorder %v6598, 3
        %vm6620 = vcmp.lt.s32.totalorder %v6598, 4
        %v6621 = vsel %vm6617, %v6601, %v6604
        %v6622 = vsel %vm6620, %v6610, 2102212464
        %v6623 = vsel %vm6619, %v6607, %v6622
        %v6624 = vsel %vm6618, %v6621, %v6623
        %v6625 = vsel %vm6617, %v6604, %v6607
        %v6626 = vsel %vm6620, %v6613, 920167782
        %v6627 = vsel %vm6619, %v6610, %v6626
        %v6628 = vsel %vm6618, %v6625, %v6627
        %v6629 = vsel %vm6617, %v6607, %v6610
        %v6630 = vsel %vm6620, %v6616, 1326507024
        %v6631 = vsel %vm6619, %v6613, %v6630
        %v6632 = vsel %vm6618, %v6629, %v6631
        %v6633 = vshll.u32 %v6593, 8
        %v6634 = vmul.u32.u64.compose %v6633, %v6632
        %v6635 = vextract.low.u32 %v6634
        %v6636 = vextract.high.u32 %v6634
        %v6637 = vmul.u32.u64.compose %v6633, %v6628
        %v6638 = vextract.low.u32 %v6637
        %v6639 = vextract.high.u32 %v6637
        %v6640 = vmul.u32 %v6633, %v6624
        %v6641 = vadd.s32 %v6636, %v6638
        %vm6642 = vc.u32 %v6636, %v6638
        %v6643 = vadd.s32 %v6639, 1
        %v6644 = vsel %vm6642, %v6643, %v6639
        %v6645 = vadd.s32 %v6640, %v6644
        %v6646 = vadd.s32 %v6645, 536870912
        %v6647 = vshrl.u32 %v6646, 30
        %v6648 = vshll.u32 %v6647, 30
        %v6649 = vsub.s32 %v6645, %v6648
        %vm6650 = vcmp.lt.s32.totalorder %v6649, 0
        %v6651 = vsub.s32 0, %v6649
        %v6652 = vsel %vm6650, %v6651, %v6649
        %v6653 = vclz %v6652
        %v6654 = vsub.s32 %v6653, 2
        %vm6655 = vcmp.gt.s32.totalorder 0, %v6654
        %v6656 = vsel %vm6655, 0, %v6654
        %v6657 = vsub.s32 32, %v6656
        %v6658 = vshll.u32 %v6649, %v6656
        %v6659 = vshrl.u32 %v6641, %v6657
        %v6660 = vor.u32 %v6658, %v6659
        %v6661 = vsub.s32 4294967266, %v6656
        %v6662 = vadd.s32 %v6661, 127
        %v6663 = vshll.u32 %v6662, 23
        %v6664 = vor.u32 4788187, %v6663
        %v6665 = vand.u32 2147483647, %v6664
        %v6667 = vcvt.s32.f32 %v6660
        %v6668 = vmul.f32 %v6667, %v6665
        %v6669 = vxor.u32 %v6668, 2147483648
        %v6670 = vsel %vm6587, %v6669, %v6668
        %v6671 = vsub.s32 4, %v6647
        %v6672 = vsel %vm6587, %v6671, %v6647
        %v6673 = vsel %vm6586, %v675, %v6670
        %v6674 = vsel %vm6586, 0, %v6672
        %v6675 = vcosq.f32.pop %v6673
        %v6676 = vsinq.f32.pop %v6673
        %vm6677 = vweird.f32 %v675
        %v6678 = vand.u32 %v6674, 3
        %vm6679 = vcmp.lt.s32.totalorder %v6678, 2
        %vm6680 = vcmp.eq.s32.totalorder %v6678, 0
        %v6681 = vxor.u32 %v6676, 2147483648
        %v6682 = vsel %vm6680, %v6675, %v6681
        %vm6683 = vcmp.eq.s32.totalorder %v6678, 2
        %v6684 = vxor.u32 %v6675, 2147483648
        %v6685 = vsel %vm6683, %v6684, %v6676
        %v6686 = vsel %vm6679, %v6682, %v6685
        %v6687 = vsel %vm6677, nan, %v6686
        %v6688 = vand.u32 2147483647, %v676
        %vm6689 = vcmp.le.f32.partialorder %v6688, 0.7853982
        %vm6690 = vcmp.lt.s32.totalorder %v676, 0
        %v6691 = vand.u32 %v676, 2139095040
        %v6692 = vshrl.u32 %v6691, 23
        %v6693 = vsub.s32 %v6692, 127
        %v6694 = vand.u32 2147483647, %v676
        %v6695 = vand.u32 %v6694, 8388607
        %v6696 = vor.u32 %v6695, 8388608
        %v6697 = vsub.s32 0, %v6696
        %v6698 = vadd.s32 %v6693, 1
        %vm6699 = vcmp.gt.s32.totalorder %v6698, 0
        %v6700 = vsel %vm6699, %v6698, 0
        %v6701 = vshrl.u32 %v6700, 5
        %v6702 = vand.u32 %v6700, 31
        %v6703 = vsub.s32 32, %v6702
        %v6704 = vshrl.u32 683565275, %v6703
        %v6705 = vshll.u32 683565275, %v6702
        %v6706 = vshrl.u32 2475754826, %v6703
        %v6707 = vor.u32 %v6705, %v6706
        %v6708 = vshll.u32 2475754826, %v6702
        %v6709 = vshrl.u32 2131351028, %v6703
        %v6710 = vor.u32 %v6708, %v6709
        %v6711 = vshll.u32 2131351028, %v6702
        %v6712 = vshrl.u32 2102212464, %v6703
        %v6713 = vor.u32 %v6711, %v6712
        %v6714 = vshll.u32 2102212464, %v6702
        %v6715 = vshrl.u32 920167782, %v6703
        %v6716 = vor.u32 %v6714, %v6715
        %v6717 = vshll.u32 920167782, %v6702
        %v6718 = vshrl.u32 1326507024, %v6703
        %v6719 = vor.u32 %v6717, %v6718
        %vm6720 = vcmp.lt.s32.totalorder %v6701, 1
        %vm6721 = vcmp.lt.s32.totalorder %v6701, 2
        %vm6722 = vcmp.lt.s32.totalorder %v6701, 3
        %vm6723 = vcmp.lt.s32.totalorder %v6701, 4
        %v6724 = vsel %vm6720, %v6704, %v6707
        %v6725 = vsel %vm6723, %v6713, 2102212464
        %v6726 = vsel %vm6722, %v6710, %v6725
        %v6727 = vsel %vm6721, %v6724, %v6726
        %v6728 = vsel %vm6720, %v6707, %v6710
        %v6729 = vsel %vm6723, %v6716, 920167782
        %v6730 = vsel %vm6722, %v6713, %v6729
        %v6731 = vsel %vm6721, %v6728, %v6730
        %v6732 = vsel %vm6720, %v6710, %v6713
        %v6733 = vsel %vm6723, %v6719, 1326507024
        %v6734 = vsel %vm6722, %v6716, %v6733
        %v6735 = vsel %vm6721, %v6732, %v6734
        %v6736 = vshll.u32 %v6696, 8
        %v6737 = vmul.u32.u64.compose %v6736, %v6735
        %v6738 = vextract.low.u32 %v6737
        %v6739 = vextract.high.u32 %v6737
        %v6740 = vmul.u32.u64.compose %v6736, %v6731
        %v6741 = vextract.low.u32 %v6740
        %v6742 = vextract.high.u32 %v6740
        %v6743 = vmul.u32 %v6736, %v6727
        %v6744 = vadd.s32 %v6739, %v6741
        %vm6745 = vc.u32 %v6739, %v6741
        %v6746 = vadd.s32 %v6742, 1
        %v6747 = vsel %vm6745, %v6746, %v6742
        %v6748 = vadd.s32 %v6743, %v6747
        %v6749 = vadd.s32 %v6748, 536870912
        %v6750 = vshrl.u32 %v6749, 30
        %v6751 = vshll.u32 %v6750, 30
        %v6752 = vsub.s32 %v6748, %v6751
        %vm6753 = vcmp.lt.s32.totalorder %v6752, 0
        %v6754 = vsub.s32 0, %v6752
        %v6755 = vsel %vm6753, %v6754, %v6752
        %v6756 = vclz %v6755
        %v6757 = vsub.s32 %v6756, 2
        %vm6758 = vcmp.gt.s32.totalorder 0, %v6757
        %v6759 = vsel %vm6758, 0, %v6757
        %v6760 = vsub.s32 32, %v6759
        %v6761 = vshll.u32 %v6752, %v6759
        %v6762 = vshrl.u32 %v6744, %v6760
        %v6763 = vor.u32 %v6761, %v6762
        %v6764 = vsub.s32 4294967266, %v6759
        %v6765 = vadd.s32 %v6764, 127
        %v6766 = vshll.u32 %v6765, 23
        %v6767 = vor.u32 4788187, %v6766
        %v6768 = vand.u32 2147483647, %v6767
        %v6770 = vcvt.s32.f32 %v6763
        %v6771 = vmul.f32 %v6770, %v6768
        %v6772 = vxor.u32 %v6771, 2147483648
        %v6773 = vsel %vm6690, %v6772, %v6771
        %v6774 = vsub.s32 4, %v6750
        %v6775 = vsel %vm6690, %v6774, %v6750
        %v6776 = vsel %vm6689, %v676, %v6773
        %v6777 = vsel %vm6689, 0, %v6775
        %v6778 = vcosq.f32.pop %v6776
        %v6779 = vsinq.f32.pop %v6776
        %vm6780 = vweird.f32 %v676
        %v6781 = vand.u32 %v6777, 3
        %vm6782 = vcmp.lt.s32.totalorder %v6781, 2
        %vm6783 = vcmp.eq.s32.totalorder %v6781, 0
        %v6784 = vxor.u32 %v6779, 2147483648
        %v6785 = vsel %vm6783, %v6778, %v6784
        %vm6786 = vcmp.eq.s32.totalorder %v6781, 2
        %v6787 = vxor.u32 %v6778, 2147483648
        %v6788 = vsel %vm6786, %v6787, %v6779
        %v6789 = vsel %vm6782, %v6785, %v6788
        %v6790 = vsel %vm6780, nan, %v6789
        %v6791 = vand.u32 2147483647, %v677
        %vm6792 = vcmp.le.f32.partialorder %v6791, 0.7853982
        %vm6793 = vcmp.lt.s32.totalorder %v677, 0
        %v6794 = vand.u32 %v677, 2139095040
        %v6795 = vshrl.u32 %v6794, 23
        %v6796 = vsub.s32 %v6795, 127
        %v6797 = vand.u32 2147483647, %v677
        %v6798 = vand.u32 %v6797, 8388607
        %v6799 = vor.u32 %v6798, 8388608
        %v6800 = vsub.s32 0, %v6799
        %v6801 = vadd.s32 %v6796, 1
        %vm6802 = vcmp.gt.s32.totalorder %v6801, 0
        %v6803 = vsel %vm6802, %v6801, 0
        %v6804 = vshrl.u32 %v6803, 5
        %v6805 = vand.u32 %v6803, 31
        %v6806 = vsub.s32 32, %v6805
        %v6807 = vshrl.u32 683565275, %v6806
        %v6808 = vshll.u32 683565275, %v6805
        %v6809 = vshrl.u32 2475754826, %v6806
        %v6810 = vor.u32 %v6808, %v6809
        %v6811 = vshll.u32 2475754826, %v6805
        %v6812 = vshrl.u32 2131351028, %v6806
        %v6813 = vor.u32 %v6811, %v6812
        %v6814 = vshll.u32 2131351028, %v6805
        %v6815 = vshrl.u32 2102212464, %v6806
        %v6816 = vor.u32 %v6814, %v6815
        %v6817 = vshll.u32 2102212464, %v6805
        %v6818 = vshrl.u32 920167782, %v6806
        %v6819 = vor.u32 %v6817, %v6818
        %v6820 = vshll.u32 920167782, %v6805
        %v6821 = vshrl.u32 1326507024, %v6806
        %v6822 = vor.u32 %v6820, %v6821
        %vm6823 = vcmp.lt.s32.totalorder %v6804, 1
        %vm6824 = vcmp.lt.s32.totalorder %v6804, 2
        %vm6825 = vcmp.lt.s32.totalorder %v6804, 3
        %vm6826 = vcmp.lt.s32.totalorder %v6804, 4
        %v6827 = vsel %vm6823, %v6807, %v6810
        %v6828 = vsel %vm6826, %v6816, 2102212464
        %v6829 = vsel %vm6825, %v6813, %v6828
        %v6830 = vsel %vm6824, %v6827, %v6829
        %v6831 = vsel %vm6823, %v6810, %v6813
        %v6832 = vsel %vm6826, %v6819, 920167782
        %v6833 = vsel %vm6825, %v6816, %v6832
        %v6834 = vsel %vm6824, %v6831, %v6833
        %v6835 = vsel %vm6823, %v6813, %v6816
        %v6836 = vsel %vm6826, %v6822, 1326507024
        %v6837 = vsel %vm6825, %v6819, %v6836
        %v6838 = vsel %vm6824, %v6835, %v6837
        %v6839 = vshll.u32 %v6799, 8
        %v6840 = vmul.u32.u64.compose %v6839, %v6838
        %v6841 = vextract.low.u32 %v6840
        %v6842 = vextract.high.u32 %v6840
        %v6843 = vmul.u32.u64.compose %v6839, %v6834
        %v6844 = vextract.low.u32 %v6843
        %v6845 = vextract.high.u32 %v6843
        %v6846 = vmul.u32 %v6839, %v6830
        %v6847 = vadd.s32 %v6842, %v6844
        %vm6848 = vc.u32 %v6842, %v6844
        %v6849 = vadd.s32 %v6845, 1
        %v6850 = vsel %vm6848, %v6849, %v6845
        %v6851 = vadd.s32 %v6846, %v6850
        %v6852 = vadd.s32 %v6851, 536870912
        %v6853 = vshrl.u32 %v6852, 30
        %v6854 = vshll.u32 %v6853, 30
        %v6855 = vsub.s32 %v6851, %v6854
        %vm6856 = vcmp.lt.s32.totalorder %v6855, 0
        %v6857 = vsub.s32 0, %v6855
        %v6858 = vsel %vm6856, %v6857, %v6855
        %v6859 = vclz %v6858
        %v6860 = vsub.s32 %v6859, 2
        %vm6861 = vcmp.gt.s32.totalorder 0, %v6860
        %v6862 = vsel %vm6861, 0, %v6860
        %v6863 = vsub.s32 32, %v6862
        %v6864 = vshll.u32 %v6855, %v6862
        %v6865 = vshrl.u32 %v6847, %v6863
        %v6866 = vor.u32 %v6864, %v6865
        %v6867 = vsub.s32 4294967266, %v6862
        %v6868 = vadd.s32 %v6867, 127
        %v6869 = vshll.u32 %v6868, 23
        %v6870 = vor.u32 4788187, %v6869
        %v6871 = vand.u32 2147483647, %v6870
        %v6873 = vcvt.s32.f32 %v6866
        %v6874 = vmul.f32 %v6873, %v6871
        %v6875 = vxor.u32 %v6874, 2147483648
        %v6876 = vsel %vm6793, %v6875, %v6874
        %v6877 = vsub.s32 4, %v6853
        %v6878 = vsel %vm6793, %v6877, %v6853
        %v6879 = vsel %vm6792, %v677, %v6876
        %v6880 = vsel %vm6792, 0, %v6878
        %v6881 = vcosq.f32.pop %v6879
        %v6882 = vsinq.f32.pop %v6879
        %vm6883 = vweird.f32 %v677
        %v6884 = vand.u32 %v6880, 3
        %vm6885 = vcmp.lt.s32.totalorder %v6884, 2
        %vm6886 = vcmp.eq.s32.totalorder %v6884, 0
        %v6887 = vxor.u32 %v6882, 2147483648
        %v6888 = vsel %vm6886, %v6881, %v6887
        %vm6889 = vcmp.eq.s32.totalorder %v6884, 2
        %v6890 = vxor.u32 %v6881, 2147483648
        %v6891 = vsel %vm6889, %v6890, %v6882
        %v6892 = vsel %vm6885, %v6888, %v6891
        %v6893 = vsel %vm6883, nan, %v6892
        %v6894 = vand.u32 2147483647, %v678
        %vm6895 = vcmp.le.f32.partialorder %v6894, 0.7853982
        %vm6896 = vcmp.lt.s32.totalorder %v678, 0
        %v6897 = vand.u32 %v678, 2139095040
        %v6898 = vshrl.u32 %v6897, 23
        %v6899 = vsub.s32 %v6898, 127
        %v6900 = vand.u32 2147483647, %v678
        %v6901 = vand.u32 %v6900, 8388607
        %v6902 = vor.u32 %v6901, 8388608
        %v6903 = vsub.s32 0, %v6902
        %v6904 = vadd.s32 %v6899, 1
        %vm6905 = vcmp.gt.s32.totalorder %v6904, 0
        %v6906 = vsel %vm6905, %v6904, 0
        %v6907 = vshrl.u32 %v6906, 5
        %v6908 = vand.u32 %v6906, 31
        %v6909 = vsub.s32 32, %v6908
        %v6910 = vshrl.u32 683565275, %v6909
        %v6911 = vshll.u32 683565275, %v6908
        %v6912 = vshrl.u32 2475754826, %v6909
        %v6913 = vor.u32 %v6911, %v6912
        %v6914 = vshll.u32 2475754826, %v6908
        %v6915 = vshrl.u32 2131351028, %v6909
        %v6916 = vor.u32 %v6914, %v6915
        %v6917 = vshll.u32 2131351028, %v6908
        %v6918 = vshrl.u32 2102212464, %v6909
        %v6919 = vor.u32 %v6917, %v6918
        %v6920 = vshll.u32 2102212464, %v6908
        %v6921 = vshrl.u32 920167782, %v6909
        %v6922 = vor.u32 %v6920, %v6921
        %v6923 = vshll.u32 920167782, %v6908
        %v6924 = vshrl.u32 1326507024, %v6909
        %v6925 = vor.u32 %v6923, %v6924
        %vm6926 = vcmp.lt.s32.totalorder %v6907, 1
        %vm6927 = vcmp.lt.s32.totalorder %v6907, 2
        %vm6928 = vcmp.lt.s32.totalorder %v6907, 3
        %vm6929 = vcmp.lt.s32.totalorder %v6907, 4
        %v6930 = vsel %vm6926, %v6910, %v6913
        %v6931 = vsel %vm6929, %v6919, 2102212464
        %v6932 = vsel %vm6928, %v6916, %v6931
        %v6933 = vsel %vm6927, %v6930, %v6932
        %v6934 = vsel %vm6926, %v6913, %v6916
        %v6935 = vsel %vm6929, %v6922, 920167782
        %v6936 = vsel %vm6928, %v6919, %v6935
        %v6937 = vsel %vm6927, %v6934, %v6936
        %v6938 = vsel %vm6926, %v6916, %v6919
        %v6939 = vsel %vm6929, %v6925, 1326507024
        %v6940 = vsel %vm6928, %v6922, %v6939
        %v6941 = vsel %vm6927, %v6938, %v6940
        %v6942 = vshll.u32 %v6902, 8
        %v6943 = vmul.u32.u64.compose %v6942, %v6941
        %v6944 = vextract.low.u32 %v6943
        %v6945 = vextract.high.u32 %v6943
        %v6946 = vmul.u32.u64.compose %v6942, %v6937
        %v6947 = vextract.low.u32 %v6946
        %v6948 = vextract.high.u32 %v6946
        %v6949 = vmul.u32 %v6942, %v6933
        %v6950 = vadd.s32 %v6945, %v6947
        %vm6951 = vc.u32 %v6945, %v6947
        %v6952 = vadd.s32 %v6948, 1
        %v6953 = vsel %vm6951, %v6952, %v6948
        %v6954 = vadd.s32 %v6949, %v6953
        %v6955 = vadd.s32 %v6954, 536870912
        %v6956 = vshrl.u32 %v6955, 30
        %v6957 = vshll.u32 %v6956, 30
        %v6958 = vsub.s32 %v6954, %v6957
        %vm6959 = vcmp.lt.s32.totalorder %v6958, 0
        %v6960 = vsub.s32 0, %v6958
        %v6961 = vsel %vm6959, %v6960, %v6958
        %v6962 = vclz %v6961
        %v6963 = vsub.s32 %v6962, 2
        %vm6964 = vcmp.gt.s32.totalorder 0, %v6963
        %v6965 = vsel %vm6964, 0, %v6963
        %v6966 = vsub.s32 32, %v6965
        %v6967 = vshll.u32 %v6958, %v6965
        %v6968 = vshrl.u32 %v6950, %v6966
        %v6969 = vor.u32 %v6967, %v6968
        %v6970 = vsub.s32 4294967266, %v6965
        %v6971 = vadd.s32 %v6970, 127
        %v6972 = vshll.u32 %v6971, 23
        %v6973 = vor.u32 4788187, %v6972
        %v6974 = vand.u32 2147483647, %v6973
        %v6976 = vcvt.s32.f32 %v6969
        %v6977 = vmul.f32 %v6976, %v6974
        %v6978 = vxor.u32 %v6977, 2147483648
        %v6979 = vsel %vm6896, %v6978, %v6977
        %v6980 = vsub.s32 4, %v6956
        %v6981 = vsel %vm6896, %v6980, %v6956
        %v6982 = vsel %vm6895, %v678, %v6979
        %v6983 = vsel %vm6895, 0, %v6981
        %v6984 = vcosq.f32.pop %v6982
        %v6985 = vsinq.f32.pop %v6982
        %vm6986 = vweird.f32 %v678
        %v6987 = vand.u32 %v6983, 3
        %vm6988 = vcmp.lt.s32.totalorder %v6987, 2
        %vm6989 = vcmp.eq.s32.totalorder %v6987, 0
        %v6990 = vxor.u32 %v6985, 2147483648
        %v6991 = vsel %vm6989, %v6984, %v6990
        %vm6992 = vcmp.eq.s32.totalorder %v6987, 2
        %v6993 = vxor.u32 %v6984, 2147483648
        %v6994 = vsel %vm6992, %v6993, %v6985
        %v6995 = vsel %vm6988, %v6991, %v6994
        %v6996 = vsel %vm6986, nan, %v6995
        %v6997 = vand.u32 2147483647, %v679
        %vm6998 = vcmp.le.f32.partialorder %v6997, 0.7853982
        %vm6999 = vcmp.lt.s32.totalorder %v679, 0
        %v7000 = vand.u32 %v679, 2139095040
        %v7001 = vshrl.u32 %v7000, 23
        %v7002 = vsub.s32 %v7001, 127
        %v7003 = vand.u32 2147483647, %v679
        %v7004 = vand.u32 %v7003, 8388607
        %v7005 = vor.u32 %v7004, 8388608
        %v7006 = vsub.s32 0, %v7005
        %v7007 = vadd.s32 %v7002, 1
        %vm7008 = vcmp.gt.s32.totalorder %v7007, 0
        %v7009 = vsel %vm7008, %v7007, 0
        %v7010 = vshrl.u32 %v7009, 5
        %v7011 = vand.u32 %v7009, 31
        %v7012 = vsub.s32 32, %v7011
        %v7013 = vshrl.u32 683565275, %v7012
        %v7014 = vshll.u32 683565275, %v7011
        %v7015 = vshrl.u32 2475754826, %v7012
        %v7016 = vor.u32 %v7014, %v7015
        %v7017 = vshll.u32 2475754826, %v7011
        %v7018 = vshrl.u32 2131351028, %v7012
        %v7019 = vor.u32 %v7017, %v7018
        %v7020 = vshll.u32 2131351028, %v7011
        %v7021 = vshrl.u32 2102212464, %v7012
        %v7022 = vor.u32 %v7020, %v7021
        %v7023 = vshll.u32 2102212464, %v7011
        %v7024 = vshrl.u32 920167782, %v7012
        %v7025 = vor.u32 %v7023, %v7024
        %v7026 = vshll.u32 920167782, %v7011
        %v7027 = vshrl.u32 1326507024, %v7012
        %v7028 = vor.u32 %v7026, %v7027
        %vm7029 = vcmp.lt.s32.totalorder %v7010, 1
        %vm7030 = vcmp.lt.s32.totalorder %v7010, 2
        %vm7031 = vcmp.lt.s32.totalorder %v7010, 3
        %vm7032 = vcmp.lt.s32.totalorder %v7010, 4
        %v7033 = vsel %vm7029, %v7013, %v7016
        %v7034 = vsel %vm7032, %v7022, 2102212464
        %v7035 = vsel %vm7031, %v7019, %v7034
        %v7036 = vsel %vm7030, %v7033, %v7035
        %v7037 = vsel %vm7029, %v7016, %v7019
        %v7038 = vsel %vm7032, %v7025, 920167782
        %v7039 = vsel %vm7031, %v7022, %v7038
        %v7040 = vsel %vm7030, %v7037, %v7039
        %v7041 = vsel %vm7029, %v7019, %v7022
        %v7042 = vsel %vm7032, %v7028, 1326507024
        %v7043 = vsel %vm7031, %v7025, %v7042
        %v7044 = vsel %vm7030, %v7041, %v7043
        %v7045 = vshll.u32 %v7005, 8
        %v7046 = vmul.u32.u64.compose %v7045, %v7044
        %v7047 = vextract.low.u32 %v7046
        %v7048 = vextract.high.u32 %v7046
        %v7049 = vmul.u32.u64.compose %v7045, %v7040
        %v7050 = vextract.low.u32 %v7049
        %v7051 = vextract.high.u32 %v7049
        %v7052 = vmul.u32 %v7045, %v7036
        %v7053 = vadd.s32 %v7048, %v7050
        %vm7054 = vc.u32 %v7048, %v7050
        %v7055 = vadd.s32 %v7051, 1
        %v7056 = vsel %vm7054, %v7055, %v7051
        %v7057 = vadd.s32 %v7052, %v7056
        %v7058 = vadd.s32 %v7057, 536870912
        %v7059 = vshrl.u32 %v7058, 30
        %v7060 = vshll.u32 %v7059, 30
        %v7061 = vsub.s32 %v7057, %v7060
        %vm7062 = vcmp.lt.s32.totalorder %v7061, 0
        %v7063 = vsub.s32 0, %v7061
        %v7064 = vsel %vm7062, %v7063, %v7061
        %v7065 = vclz %v7064
        %v7066 = vsub.s32 %v7065, 2
        %vm7067 = vcmp.gt.s32.totalorder 0, %v7066
        %v7068 = vsel %vm7067, 0, %v7066
        %v7069 = vsub.s32 32, %v7068
        %v7070 = vshll.u32 %v7061, %v7068
        %v7071 = vshrl.u32 %v7053, %v7069
        %v7072 = vor.u32 %v7070, %v7071
        %v7073 = vsub.s32 4294967266, %v7068
        %v7074 = vadd.s32 %v7073, 127
        %v7075 = vshll.u32 %v7074, 23
        %v7076 = vor.u32 4788187, %v7075
        %v7077 = vand.u32 2147483647, %v7076
        %v7079 = vcvt.s32.f32 %v7072
        %v7080 = vmul.f32 %v7079, %v7077
        %v7081 = vxor.u32 %v7080, 2147483648
        %v7082 = vsel %vm6999, %v7081, %v7080
        %v7083 = vsub.s32 4, %v7059
        %v7084 = vsel %vm6999, %v7083, %v7059
        %v7085 = vsel %vm6998, %v679, %v7082
        %v7086 = vsel %vm6998, 0, %v7084
        %v7087 = vcosq.f32.pop %v7085
        %v7088 = vsinq.f32.pop %v7085
        %vm7089 = vweird.f32 %v679
        %v7090 = vand.u32 %v7086, 3
        %vm7091 = vcmp.lt.s32.totalorder %v7090, 2
        %vm7092 = vcmp.eq.s32.totalorder %v7090, 0
        %v7093 = vxor.u32 %v7088, 2147483648
        %v7094 = vsel %vm7092, %v7087, %v7093
        %vm7095 = vcmp.eq.s32.totalorder %v7090, 2
        %v7096 = vxor.u32 %v7087, 2147483648
        %v7097 = vsel %vm7095, %v7096, %v7088
        %v7098 = vsel %vm7091, %v7094, %v7097
        %v7099 = vsel %vm7089, nan, %v7098
        %v7100 = vand.u32 2147483647, %v680
        %vm7101 = vcmp.le.f32.partialorder %v7100, 0.7853982
        %vm7102 = vcmp.lt.s32.totalorder %v680, 0
        %v7103 = vand.u32 %v680, 2139095040
        %v7104 = vshrl.u32 %v7103, 23
        %v7105 = vsub.s32 %v7104, 127
        %v7106 = vand.u32 2147483647, %v680
        %v7107 = vand.u32 %v7106, 8388607
        %v7108 = vor.u32 %v7107, 8388608
        %v7109 = vsub.s32 0, %v7108
        %v7110 = vadd.s32 %v7105, 1
        %vm7111 = vcmp.gt.s32.totalorder %v7110, 0
        %v7112 = vsel %vm7111, %v7110, 0
        %v7113 = vshrl.u32 %v7112, 5
        %v7114 = vand.u32 %v7112, 31
        %v7115 = vsub.s32 32, %v7114
        %v7116 = vshrl.u32 683565275, %v7115
        %v7117 = vshll.u32 683565275, %v7114
        %v7118 = vshrl.u32 2475754826, %v7115
        %v7119 = vor.u32 %v7117, %v7118
        %v7120 = vshll.u32 2475754826, %v7114
        %v7121 = vshrl.u32 2131351028, %v7115
        %v7122 = vor.u32 %v7120, %v7121
        %v7123 = vshll.u32 2131351028, %v7114
        %v7124 = vshrl.u32 2102212464, %v7115
        %v7125 = vor.u32 %v7123, %v7124
        %v7126 = vshll.u32 2102212464, %v7114
        %v7127 = vshrl.u32 920167782, %v7115
        %v7128 = vor.u32 %v7126, %v7127
        %v7129 = vshll.u32 920167782, %v7114
        %v7130 = vshrl.u32 1326507024, %v7115
        %v7131 = vor.u32 %v7129, %v7130
        %vm7132 = vcmp.lt.s32.totalorder %v7113, 1
        %vm7133 = vcmp.lt.s32.totalorder %v7113, 2
        %vm7134 = vcmp.lt.s32.totalorder %v7113, 3
        %vm7135 = vcmp.lt.s32.totalorder %v7113, 4
        %v7136 = vsel %vm7132, %v7116, %v7119
        %v7137 = vsel %vm7135, %v7125, 2102212464
        %v7138 = vsel %vm7134, %v7122, %v7137
        %v7139 = vsel %vm7133, %v7136, %v7138
        %v7140 = vsel %vm7132, %v7119, %v7122
        %v7141 = vsel %vm7135, %v7128, 920167782
        %v7142 = vsel %vm7134, %v7125, %v7141
        %v7143 = vsel %vm7133, %v7140, %v7142
        %v7144 = vsel %vm7132, %v7122, %v7125
        %v7145 = vsel %vm7135, %v7131, 1326507024
        %v7146 = vsel %vm7134, %v7128, %v7145
        %v7147 = vsel %vm7133, %v7144, %v7146
        %v7148 = vshll.u32 %v7108, 8
        %v7149 = vmul.u32.u64.compose %v7148, %v7147
        %v7150 = vextract.low.u32 %v7149
        %v7151 = vextract.high.u32 %v7149
        %v7152 = vmul.u32.u64.compose %v7148, %v7143
        %v7153 = vextract.low.u32 %v7152
        %v7154 = vextract.high.u32 %v7152
        %v7155 = vmul.u32 %v7148, %v7139
        %v7156 = vadd.s32 %v7151, %v7153
        %vm7157 = vc.u32 %v7151, %v7153
        %v7158 = vadd.s32 %v7154, 1
        %v7159 = vsel %vm7157, %v7158, %v7154
        %v7160 = vadd.s32 %v7155, %v7159
        %v7161 = vadd.s32 %v7160, 536870912
        %v7162 = vshrl.u32 %v7161, 30
        %v7163 = vshll.u32 %v7162, 30
        %v7164 = vsub.s32 %v7160, %v7163
        %vm7165 = vcmp.lt.s32.totalorder %v7164, 0
        %v7166 = vsub.s32 0, %v7164
        %v7167 = vsel %vm7165, %v7166, %v7164
        %v7168 = vclz %v7167
        %v7169 = vsub.s32 %v7168, 2
        %vm7170 = vcmp.gt.s32.totalorder 0, %v7169
        %v7171 = vsel %vm7170, 0, %v7169
        %v7172 = vsub.s32 32, %v7171
        %v7173 = vshll.u32 %v7164, %v7171
        %v7174 = vshrl.u32 %v7156, %v7172
        %v7175 = vor.u32 %v7173, %v7174
        %v7176 = vsub.s32 4294967266, %v7171
        %v7177 = vadd.s32 %v7176, 127
        %v7178 = vshll.u32 %v7177, 23
        %v7179 = vor.u32 4788187, %v7178
        %v7180 = vand.u32 2147483647, %v7179
        %v7182 = vcvt.s32.f32 %v7175
        %v7183 = vmul.f32 %v7182, %v7180
        %v7184 = vxor.u32 %v7183, 2147483648
        %v7185 = vsel %vm7102, %v7184, %v7183
        %v7186 = vsub.s32 4, %v7162
        %v7187 = vsel %vm7102, %v7186, %v7162
        %v7188 = vsel %vm7101, %v680, %v7185
        %v7189 = vsel %vm7101, 0, %v7187
        %v7190 = vcosq.f32.pop %v7188
        %v7191 = vsinq.f32.pop %v7188
        %vm7192 = vweird.f32 %v680
        %v7193 = vand.u32 %v7189, 3
        %vm7194 = vcmp.lt.s32.totalorder %v7193, 2
        %vm7195 = vcmp.eq.s32.totalorder %v7193, 0
        %v7196 = vxor.u32 %v7191, 2147483648
        %v7197 = vsel %vm7195, %v7190, %v7196
        %vm7198 = vcmp.eq.s32.totalorder %v7193, 2
        %v7199 = vxor.u32 %v7190, 2147483648
        %v7200 = vsel %vm7198, %v7199, %v7191
        %v7201 = vsel %vm7194, %v7197, %v7200
        %v7202 = vsel %vm7192, nan, %v7201
        %v7203 = vand.u32 2147483647, %v681
        %vm7204 = vcmp.le.f32.partialorder %v7203, 0.7853982
        %vm7205 = vcmp.lt.s32.totalorder %v681, 0
        %v7206 = vand.u32 %v681, 2139095040
        %v7207 = vshrl.u32 %v7206, 23
        %v7208 = vsub.s32 %v7207, 127
        %v7209 = vand.u32 2147483647, %v681
        %v7210 = vand.u32 %v7209, 8388607
        %v7211 = vor.u32 %v7210, 8388608
        %v7212 = vsub.s32 0, %v7211
        %v7213 = vadd.s32 %v7208, 1
        %vm7214 = vcmp.gt.s32.totalorder %v7213, 0
        %v7215 = vsel %vm7214, %v7213, 0
        %v7216 = vshrl.u32 %v7215, 5
        %v7217 = vand.u32 %v7215, 31
        %v7218 = vsub.s32 32, %v7217
        %v7219 = vshrl.u32 683565275, %v7218
        %v7220 = vshll.u32 683565275, %v7217
        %v7221 = vshrl.u32 2475754826, %v7218
        %v7222 = vor.u32 %v7220, %v7221
        %v7223 = vshll.u32 2475754826, %v7217
        %v7224 = vshrl.u32 2131351028, %v7218
        %v7225 = vor.u32 %v7223, %v7224
        %v7226 = vshll.u32 2131351028, %v7217
        %v7227 = vshrl.u32 2102212464, %v7218
        %v7228 = vor.u32 %v7226, %v7227
        %v7229 = vshll.u32 2102212464, %v7217
        %v7230 = vshrl.u32 920167782, %v7218
        %v7231 = vor.u32 %v7229, %v7230
        %v7232 = vshll.u32 920167782, %v7217
        %v7233 = vshrl.u32 1326507024, %v7218
        %v7234 = vor.u32 %v7232, %v7233
        %vm7235 = vcmp.lt.s32.totalorder %v7216, 1
        %vm7236 = vcmp.lt.s32.totalorder %v7216, 2
        %vm7237 = vcmp.lt.s32.totalorder %v7216, 3
        %vm7238 = vcmp.lt.s32.totalorder %v7216, 4
        %v7239 = vsel %vm7235, %v7219, %v7222
        %v7240 = vsel %vm7238, %v7228, 2102212464
        %v7241 = vsel %vm7237, %v7225, %v7240
        %v7242 = vsel %vm7236, %v7239, %v7241
        %v7243 = vsel %vm7235, %v7222, %v7225
        %v7244 = vsel %vm7238, %v7231, 920167782
        %v7245 = vsel %vm7237, %v7228, %v7244
        %v7246 = vsel %vm7236, %v7243, %v7245
        %v7247 = vsel %vm7235, %v7225, %v7228
        %v7248 = vsel %vm7238, %v7234, 1326507024
        %v7249 = vsel %vm7237, %v7231, %v7248
        %v7250 = vsel %vm7236, %v7247, %v7249
        %v7251 = vshll.u32 %v7211, 8
        %v7252 = vmul.u32.u64.compose %v7251, %v7250
        %v7253 = vextract.low.u32 %v7252
        %v7254 = vextract.high.u32 %v7252
        %v7255 = vmul.u32.u64.compose %v7251, %v7246
        %v7256 = vextract.low.u32 %v7255
        %v7257 = vextract.high.u32 %v7255
        %v7258 = vmul.u32 %v7251, %v7242
        %v7259 = vadd.s32 %v7254, %v7256
        %vm7260 = vc.u32 %v7254, %v7256
        %v7261 = vadd.s32 %v7257, 1
        %v7262 = vsel %vm7260, %v7261, %v7257
        %v7263 = vadd.s32 %v7258, %v7262
        %v7264 = vadd.s32 %v7263, 536870912
        %v7265 = vshrl.u32 %v7264, 30
        %v7266 = vshll.u32 %v7265, 30
        %v7267 = vsub.s32 %v7263, %v7266
        %vm7268 = vcmp.lt.s32.totalorder %v7267, 0
        %v7269 = vsub.s32 0, %v7267
        %v7270 = vsel %vm7268, %v7269, %v7267
        %v7271 = vclz %v7270
        %v7272 = vsub.s32 %v7271, 2
        %vm7273 = vcmp.gt.s32.totalorder 0, %v7272
        %v7274 = vsel %vm7273, 0, %v7272
        %v7275 = vsub.s32 32, %v7274
        %v7276 = vshll.u32 %v7267, %v7274
        %v7277 = vshrl.u32 %v7259, %v7275
        %v7278 = vor.u32 %v7276, %v7277
        %v7279 = vsub.s32 4294967266, %v7274
        %v7280 = vadd.s32 %v7279, 127
        %v7281 = vshll.u32 %v7280, 23
        %v7282 = vor.u32 4788187, %v7281
        %v7283 = vand.u32 2147483647, %v7282
        %v7285 = vcvt.s32.f32 %v7278
        %v7286 = vmul.f32 %v7285, %v7283
        %v7287 = vxor.u32 %v7286, 2147483648
        %v7288 = vsel %vm7205, %v7287, %v7286
        %v7289 = vsub.s32 4, %v7265
        %v7290 = vsel %vm7205, %v7289, %v7265
        %v7291 = vsel %vm7204, %v681, %v7288
        %v7292 = vsel %vm7204, 0, %v7290
        %v7293 = vcosq.f32.pop %v7291
        %v7294 = vsinq.f32.pop %v7291
        %vm7295 = vweird.f32 %v681
        %v7296 = vand.u32 %v7292, 3
        %vm7297 = vcmp.lt.s32.totalorder %v7296, 2
        %vm7298 = vcmp.eq.s32.totalorder %v7296, 0
        %v7299 = vxor.u32 %v7294, 2147483648
        %v7300 = vsel %vm7298, %v7293, %v7299
        %vm7301 = vcmp.eq.s32.totalorder %v7296, 2
        %v7302 = vxor.u32 %v7293, 2147483648
        %v7303 = vsel %vm7301, %v7302, %v7294
        %v7304 = vsel %vm7297, %v7300, %v7303
        %v7305 = vsel %vm7295, nan, %v7304
        %v7306 = vld [vmem:[#allocation8] sm:$0xff]
        %v7307 = vld [vmem:[#allocation8 + $0x8] sm:$0xff]
        %v7308 = vld [vmem:[#allocation10] sm:$0xff]
        %v7309 = vld [vmem:[#allocation10 + $0x8] sm:$0xff]
        %vm7310 = vcmask 130048
        %v7312 = vsel %vm7310, %v4112, 0
        %v7315 = vsel %vm7310, %v4215, 0
        %v7318 = vsel %vm7310, %v4318, 0
        %v7321 = vsel %vm7310, %v4421, 0
        %v7324 = vsel %vm7310, %v4524, 0
        %v7327 = vsel %vm7310, %v4627, 0
        %v7330 = vsel %vm7310, %v4730, 0
        %v7333 = vsel %vm7310, %v4833, 0
        %v7336 = vsel %vm7310, %v4936, 0
        %v7339 = vsel %vm7310, %v5039, 0
        %v7342 = vsel %vm7310, %v5142, 0
        %v7345 = vsel %vm7310, %v5245, 0
        %v7348 = vsel %vm7310, %v5348, 0
        %v7351 = vsel %vm7310, %v5451, 0
        %v7354 = vsel %vm7310, %v5554, 0
        %v7357 = vsel %vm7310, %v5657, 0
        %v7360 = vsel %vm7310, %v5760, 0
        %v7363 = vsel %vm7310, %v5863, 0
        %v7366 = vsel %vm7310, %v5966, 0
        %v7369 = vsel %vm7310, %v6069, 0
        %v7372 = vsel %vm7310, %v6172, 0
        %v7375 = vsel %vm7310, %v6275, 0
        %v7378 = vsel %vm7310, %v6378, 0
        %v7381 = vsel %vm7310, %v6481, 0
        %v7384 = vsel %vm7310, %v6584, 0
        %v7387 = vsel %vm7310, %v6687, 0
        %v7390 = vsel %vm7310, %v6790, 0
        %v7393 = vsel %vm7310, %v6893, 0
        %v7396 = vsel %vm7310, %v6996, 0
        %v7399 = vsel %vm7310, %v7099, 0
        %v7402 = vsel %vm7310, %v7202, 0
        %v7405 = vsel %vm7310, %v7305, 0
        %7407 = vmatprep.subr.mxu0 0.0
        %7408 = vmatpush1.msra.mxu0 %v7308
        %7409 = vmatprep.subr.mxu0 0.0
        %7410 = vmatpush1.msra.mxu0 %v7309
        %7411 = vmatprep.subr.mxu0 0.0
        %7412 = vmatpush1.msra.mxu0 0.0
        %7413 = vmatprep.subr.mxu0 0.0
        %7414 = vmatpush1.msra.mxu0 0.0
        %7415 = vmatprep.subr.mxu0 0.0
        %7416 = vmatpush1.msra.mxu0 0.0
        %7417 = vmatprep.subr.mxu0 0.0
        %7418 = vmatpush1.msra.mxu0 0.0
        %7419 = vmatprep.subr.mxu0 0.0
        %7420 = vmatpush1.msra.mxu0 0.0
        %7421 = vmatprep.subr.mxu0 0.0
        %7422 = vmatpush1.msra.mxu0 0.0
        %7423 = vmatprep.subr.mxu0 0.0
        %7424 = vmatpush1.msra.mxu0 0.0
        %7425 = vmatprep.subr.mxu0 0.0
        %7426 = vmatpush1.msra.mxu0 0.0
        %7427 = vmatprep.subr.mxu0 0.0
        %7428 = vmatpush1.msra.mxu0 0.0
        %7429 = vmatprep.subr.mxu0 0.0
        %7430 = vmatpush1.msra.mxu0 0.0
        %7431 = vmatprep.subr.mxu0 0.0
        %7432 = vmatpush1.msra.mxu0 0.0
        %7433 = vmatprep.subr.mxu0 0.0
        %7434 = vmatpush1.msra.mxu0 0.0
        %7435 = vmatprep.subr.mxu0 0.0
        %7436 = vmatpush1.msra.mxu0 0.0
        %7437 = vmatprep.subr.mxu0 0.0
        %7438 = vmatpush1.msra.mxu0 0.0
        %7439 = vmatprep.subr.mxu0 0.0
        %7440 = vmatpush1.msra.mxu0 0.0
        %7441 = vmatprep.subr.mxu0 0.0
        %7442 = vmatpush1.msra.mxu0 0.0
        %7443 = vmatprep.subr.mxu0 0.0
        %7444 = vmatpush1.msra.mxu0 0.0
        %7445 = vmatprep.subr.mxu0 0.0
        %7446 = vmatpush1.msra.mxu0 0.0
        %7447 = vmatprep.subr.mxu0 0.0
        %7448 = vmatpush1.msra.mxu0 0.0
        %7449 = vmatprep.subr.mxu0 0.0
        %7450 = vmatpush1.msra.mxu0 0.0
        %7451 = vmatprep.subr.mxu0 0.0
        %7452 = vmatpush1.msra.mxu0 0.0
        %7453 = vmatprep.subr.mxu0 0.0
        %7454 = vmatpush1.msra.mxu0 0.0
        %7455 = vmatprep.subr.mxu0 0.0
        %7456 = vmatpush1.msra.mxu0 0.0
        %7457 = vmatprep.subr.mxu0 0.0
        %7458 = vmatpush1.msra.mxu0 0.0
        %7459 = vmatprep.subr.mxu0 0.0
        %7460 = vmatpush1.msra.mxu0 0.0
        %7461 = vmatprep.subr.mxu0 0.0
        %7462 = vmatpush1.msra.mxu0 0.0
        %7463 = vmatprep.subr.mxu0 0.0
        %7464 = vmatpush1.msra.mxu0 0.0
        %7465 = vmatprep.subr.mxu0 0.0
        %7466 = vmatpush1.msra.mxu0 0.0
        %7467 = vmatprep.subr.mxu0 0.0
        %7468 = vmatpush1.msra.mxu0 0.0
        %7469 = vmatprep.subr.mxu0 0.0
        %7470 = vmatpush1.msra.mxu0 0.0
        %7471 = vmatprep.mubr.f32.mxu0 0.0
        %7472 = vmatmul.mubr.f32.gmra.mrb[0].mxu0 %v7312
        %v7473 = vpop.f32.mrb[0].mxu0
        %v7474 = vadd.f32 0.0, %v7473
        %v7475 = vpop.f32.mrb[0].mxu0
        %7476 = vmatprep.mubr.f32.mxu0 0.0
        %7477 = vmatmul.mubr.f32.gmra.mrb[0].mxu0 %v7315
        %v7478 = vpop.f32.mrb[0].mxu0
        %v7479 = vadd.f32 0.0, %v7478
        %v7480 = vpop.f32.mrb[0].mxu0
        %7481 = vmatprep.mubr.f32.mxu0 0.0
        %7482 = vmatmul.mubr.f32.gmra.mrb[0].mxu0 %v7318
        %v7483 = vpop.f32.mrb[0].mxu0
        %v7484 = vadd.f32 0.0, %v7483
        %v7485 = vpop.f32.mrb[0].mxu0
        %7486 = vmatprep.mubr.f32.mxu0 0.0
        %7487 = vmatmul.mubr.f32.gmra.mrb[0].mxu0 %v7321
        %v7488 = vpop.f32.mrb[0].mxu0
        %v7489 = vadd.f32 0.0, %v7488
        %v7490 = vpop.f32.mrb[0].mxu0
        %7491 = vmatprep.mubr.f32.mxu0 0.0
        %7492 = vmatmul.mubr.f32.gmra.mrb[0].mxu0 %v7324
        %v7493 = vpop.f32.mrb[0].mxu0
        %v7494 = vadd.f32 0.0, %v7493
        %v7495 = vpop.f32.mrb[0].mxu0
        %7496 = vmatprep.mubr.f32.mxu0 0.0
        %7497 = vmatmul.mubr.f32.gmra.mrb[0].mxu0 %v7327
        %v7498 = vpop.f32.mrb[0].mxu0
        %v7499 = vadd.f32 0.0, %v7498
        %v7500 = vpop.f32.mrb[0].mxu0
        %7501 = vmatprep.mubr.f32.mxu0 0.0
        %7502 = vmatmul.mubr.f32.gmra.mrb[0].mxu0 %v7330
        %v7503 = vpop.f32.mrb[0].mxu0
        %v7504 = vadd.f32 0.0, %v7503
        %v7505 = vpop.f32.mrb[0].mxu0
        %7506 = vmatprep.mubr.f32.mxu0 0.0
        %7507 = vmatmul.mubr.f32.gmra.mrb[0].mxu0 %v7333
        %v7508 = vpop.f32.mrb[0].mxu0
        %v7509 = vadd.f32 0.0, %v7508
        %v7510 = vpop.f32.mrb[0].mxu0
        %7511 = vmatprep.mubr.f32.mxu0 0.0
        %7512 = vmatmul.mubr.f32.gmra.mrb[0].mxu0 %v7336
        %v7513 = vpop.f32.mrb[0].mxu0
        %v7514 = vadd.f32 0.0, %v7513
        %v7515 = vpop.f32.mrb[0].mxu0
        %7516 = vmatprep.mubr.f32.mxu0 0.0
        %7517 = vmatmul.mubr.f32.gmra.mrb[0].mxu0 %v7339
        %v7518 = vpop.f32.mrb[0].mxu0
        %v7519 = vadd.f32 0.0, %v7518
        %v7520 = vpop.f32.mrb[0].mxu0
        %7521 = vmatprep.mubr.f32.mxu0 0.0
        %7522 = vmatmul.mubr.f32.gmra.mrb[0].mxu0 %v7342
        %v7523 = vpop.f32.mrb[0].mxu0
        %v7524 = vadd.f32 0.0, %v7523
        %v7525 = vpop.f32.mrb[0].mxu0
        %7526 = vmatprep.mubr.f32.mxu0 0.0
        %7527 = vmatmul.mubr.f32.gmra.mrb[0].mxu0 %v7345
        %v7528 = vpop.f32.mrb[0].mxu0
        %v7529 = vadd.f32 0.0, %v7528
        %v7530 = vpop.f32.mrb[0].mxu0
        %7531 = vmatprep.mubr.f32.mxu0 0.0
        %7532 = vmatmul.mubr.f32.gmra.mrb[0].mxu0 %v7348
        %v7533 = vpop.f32.mrb[0].mxu0
        %v7534 = vadd.f32 0.0, %v7533
        %v7535 = vpop.f32.mrb[0].mxu0
        %7536 = vmatprep.mubr.f32.mxu0 0.0
        %7537 = vmatmul.mubr.f32.gmra.mrb[0].mxu0 %v7351
        %v7538 = vpop.f32.mrb[0].mxu0
        %v7539 = vadd.f32 0.0, %v7538
        %v7540 = vpop.f32.mrb[0].mxu0
        %7541 = vmatprep.mubr.f32.mxu0 0.0
        %7542 = vmatmul.mubr.f32.gmra.mrb[0].mxu0 %v7354
        %v7543 = vpop.f32.mrb[0].mxu0
        %v7544 = vadd.f32 0.0, %v7543
        %v7545 = vpop.f32.mrb[0].mxu0
        %7546 = vmatprep.mubr.f32.mxu0 0.0
        %7547 = vmatmul.mubr.f32.gmra.mrb[0].mxu0 %v7357
        %v7548 = vpop.f32.mrb[0].mxu0
        %v7549 = vadd.f32 0.0, %v7548
        %v7550 = vpop.f32.mrb[0].mxu0
        %7551 = vmatprep.mubr.f32.mxu0 0.0
        %7552 = vmatmul.mubr.f32.gmra.mrb[0].mxu0 %v7360
        %v7553 = vpop.f32.mrb[0].mxu0
        %v7554 = vadd.f32 0.0, %v7553
        %v7555 = vpop.f32.mrb[0].mxu0
        %7556 = vmatprep.mubr.f32.mxu0 0.0
        %7557 = vmatmul.mubr.f32.gmra.mrb[0].mxu0 %v7363
        %v7558 = vpop.f32.mrb[0].mxu0
        %v7559 = vadd.f32 0.0, %v7558
        %v7560 = vpop.f32.mrb[0].mxu0
        %7561 = vmatprep.mubr.f32.mxu0 0.0
        %7562 = vmatmul.mubr.f32.gmra.mrb[0].mxu0 %v7366
        %v7563 = vpop.f32.mrb[0].mxu0
        %v7564 = vadd.f32 0.0, %v7563
        %v7565 = vpop.f32.mrb[0].mxu0
        %7566 = vmatprep.mubr.f32.mxu0 0.0
        %7567 = vmatmul.mubr.f32.gmra.mrb[0].mxu0 %v7369
        %v7568 = vpop.f32.mrb[0].mxu0
        %v7569 = vadd.f32 0.0, %v7568
        %v7570 = vpop.f32.mrb[0].mxu0
        %7571 = vmatprep.mubr.f32.mxu0 0.0
        %7572 = vmatmul.mubr.f32.gmra.mrb[0].mxu0 %v7372
        %v7573 = vpop.f32.mrb[0].mxu0
        %v7574 = vadd.f32 0.0, %v7573
        %v7575 = vpop.f32.mrb[0].mxu0
        %7576 = vmatprep.mubr.f32.mxu0 0.0
        %7577 = vmatmul.mubr.f32.gmra.mrb[0].mxu0 %v7375
        %v7578 = vpop.f32.mrb[0].mxu0
        %v7579 = vadd.f32 0.0, %v7578
        %v7580 = vpop.f32.mrb[0].mxu0
        %7581 = vmatprep.mubr.f32.mxu0 0.0
        %7582 = vmatmul.mubr.f32.gmra.mrb[0].mxu0 %v7378
        %v7583 = vpop.f32.mrb[0].mxu0
        %v7584 = vadd.f32 0.0, %v7583
        %v7585 = vpop.f32.mrb[0].mxu0
        %7586 = vmatprep.mubr.f32.mxu0 0.0
        %7587 = vmatmul.mubr.f32.gmra.mrb[0].mxu0 %v7381
        %v7588 = vpop.f32.mrb[0].mxu0
        %v7589 = vadd.f32 0.0, %v7588
        %v7590 = vpop.f32.mrb[0].mxu0
        %7591 = vmatprep.mubr.f32.mxu0 0.0
        %7592 = vmatmul.mubr.f32.gmra.mrb[0].mxu0 %v7384
        %v7593 = vpop.f32.mrb[0].mxu0
        %v7594 = vadd.f32 0.0, %v7593
        %v7595 = vpop.f32.mrb[0].mxu0
        %7596 = vmatprep.mubr.f32.mxu0 0.0
        %7597 = vmatmul.mubr.f32.gmra.mrb[0].mxu0 %v7387
        %v7598 = vpop.f32.mrb[0].mxu0
        %v7599 = vadd.f32 0.0, %v7598
        %v7600 = vpop.f32.mrb[0].mxu0
        %7601 = vmatprep.mubr.f32.mxu0 0.0
        %7602 = vmatmul.mubr.f32.gmra.mrb[0].mxu0 %v7390
        %v7603 = vpop.f32.mrb[0].mxu0
        %v7604 = vadd.f32 0.0, %v7603
        %v7605 = vpop.f32.mrb[0].mxu0
        %7606 = vmatprep.mubr.f32.mxu0 0.0
        %7607 = vmatmul.mubr.f32.gmra.mrb[0].mxu0 %v7393
        %v7608 = vpop.f32.mrb[0].mxu0
        %v7609 = vadd.f32 0.0, %v7608
        %v7610 = vpop.f32.mrb[0].mxu0
        %7611 = vmatprep.mubr.f32.mxu0 0.0
        %7612 = vmatmul.mubr.f32.gmra.mrb[0].mxu0 %v7396
        %v7613 = vpop.f32.mrb[0].mxu0
        %v7614 = vadd.f32 0.0, %v7613
        %v7615 = vpop.f32.mrb[0].mxu0
        %7616 = vmatprep.mubr.f32.mxu0 0.0
        %7617 = vmatmul.mubr.f32.gmra.mrb[0].mxu0 %v7399
        %v7618 = vpop.f32.mrb[0].mxu0
        %v7619 = vadd.f32 0.0, %v7618
        %v7620 = vpop.f32.mrb[0].mxu0
        %7621 = vmatprep.mubr.f32.mxu0 0.0
        %7622 = vmatmul.mubr.f32.gmra.mrb[0].mxu0 %v7402
        %v7623 = vpop.f32.mrb[0].mxu0
        %v7624 = vadd.f32 0.0, %v7623
        %v7625 = vpop.f32.mrb[0].mxu0
        %7626 = vmatprep.mubr.f32.mxu0 0.0
        %7627 = vmatmul.mubr.f32.gmra.mrb[0].mxu0 %v7405
        %v7628 = vpop.f32.mrb[0].mxu0
        %v7629 = vadd.f32 0.0, %v7628
        %v7630 = vpop.f32.mrb[0].mxu0
        %7631 = vdwg.mxu0
        %v7633 = vsel %vm7310, %v785, 0
        %v7636 = vsel %vm7310, %v889, 0
        %v7639 = vsel %vm7310, %v993, 0
        %v7642 = vsel %vm7310, %v1097, 0
        %v7645 = vsel %vm7310, %v1201, 0
        %v7648 = vsel %vm7310, %v1305, 0
        %v7651 = vsel %vm7310, %v1409, 0
        %v7654 = vsel %vm7310, %v1513, 0
        %v7657 = vsel %vm7310, %v1617, 0
        %v7660 = vsel %vm7310, %v1721, 0
        %v7663 = vsel %vm7310, %v1825, 0
        %v7666 = vsel %vm7310, %v1929, 0
        %v7669 = vsel %vm7310, %v2033, 0
        %v7672 = vsel %vm7310, %v2137, 0
        %v7675 = vsel %vm7310, %v2241, 0
        %v7678 = vsel %vm7310, %v2345, 0
        %v7681 = vsel %vm7310, %v2449, 0
        %v7684 = vsel %vm7310, %v2553, 0
        %v7687 = vsel %vm7310, %v2657, 0
        %v7690 = vsel %vm7310, %v2761, 0
        %v7693 = vsel %vm7310, %v2865, 0
        %v7696 = vsel %vm7310, %v2969, 0
        %v7699 = vsel %vm7310, %v3073, 0
        %v7702 = vsel %vm7310, %v3177, 0
        %v7705 = vsel %vm7310, %v3281, 0
        %v7708 = vsel %vm7310, %v3385, 0
        %v7711 = vsel %vm7310, %v3489, 0
        %v7714 = vsel %vm7310, %v3593, 0
        %v7717 = vsel %vm7310, %v3697, 0
        %v7720 = vsel %vm7310, %v3801, 0
        %v7723 = vsel %vm7310, %v3905, 0
        %v7726 = vsel %vm7310, %v4009, 0
        %7728 = vmatprep.subr.mxu0 0.0
        %7729 = vmatpush1.msra.mxu0 %v7306
        %7730 = vmatprep.subr.mxu0 0.0
        %7731 = vmatpush1.msra.mxu0 %v7307
        %7732 = vmatprep.subr.mxu0 0.0
        %7733 = vmatpush1.msra.mxu0 0.0
        %7734 = vmatprep.subr.mxu0 0.0
        %7735 = vmatpush1.msra.mxu0 0.0
        %7736 = vmatprep.subr.mxu0 0.0
        %7737 = vmatpush1.msra.mxu0 0.0
        %7738 = vmatprep.subr.mxu0 0.0
        %7739 = vmatpush1.msra.mxu0 0.0
        %7740 = vmatprep.subr.mxu0 0.0
        %7741 = vmatpush1.msra.mxu0 0.0
        %7742 = vmatprep.subr.mxu0 0.0
        %7743 = vmatpush1.msra.mxu0 0.0
        %7744 = vmatprep.subr.mxu0 0.0
        %7745 = vmatpush1.msra.mxu0 0.0
        %7746 = vmatprep.subr.mxu0 0.0
        %7747 = vmatpush1.msra.mxu0 0.0
        %7748 = vmatprep.subr.mxu0 0.0
        %7749 = vmatpush1.msra.mxu0 0.0
        %7750 = vmatprep.subr.mxu0 0.0
        %7751 = vmatpush1.msra.mxu0 0.0
        %7752 = vmatprep.subr.mxu0 0.0
        %7753 = vmatpush1.msra.mxu0 0.0
        %7754 = vmatprep.subr.mxu0 0.0
        %7755 = vmatpush1.msra.mxu0 0.0
        %7756 = vmatprep.subr.mxu0 0.0
        %7757 = vmatpush1.msra.mxu0 0.0
        %7758 = vmatprep.subr.mxu0 0.0
        %7759 = vmatpush1.msra.mxu0 0.0
        %7760 = vmatprep.subr.mxu0 0.0
        %7761 = vmatpush1.msra.mxu0 0.0
        %7762 = vmatprep.subr.mxu0 0.0
        %7763 = vmatpush1.msra.mxu0 0.0
        %7764 = vmatprep.subr.mxu0 0.0
        %7765 = vmatpush1.msra.mxu0 0.0
        %7766 = vmatprep.subr.mxu0 0.0
        %7767 = vmatpush1.msra.mxu0 0.0
        %7768 = vmatprep.subr.mxu0 0.0
        %7769 = vmatpush1.msra.mxu0 0.0
        %7770 = vmatprep.subr.mxu0 0.0
        %7771 = vmatpush1.msra.mxu0 0.0
        %7772 = vmatprep.subr.mxu0 0.0
        %7773 = vmatpush1.msra.mxu0 0.0
        %7774 = vmatprep.subr.mxu0 0.0
        %7775 = vmatpush1.msra.mxu0 0.0
        %7776 = vmatprep.subr.mxu0 0.0
        %7777 = vmatpush1.msra.mxu0 0.0
        %7778 = vmatprep.subr.mxu0 0.0
        %7779 = vmatpush1.msra.mxu0 0.0
        %7780 = vmatprep.subr.mxu0 0.0
        %7781 = vmatpush1.msra.mxu0 0.0
        %7782 = vmatprep.subr.mxu0 0.0
        %7783 = vmatpush1.msra.mxu0 0.0
        %7784 = vmatprep.subr.mxu0 0.0
        %7785 = vmatpush1.msra.mxu0 0.0
        %7786 = vmatprep.subr.mxu0 0.0
        %7787 = vmatpush1.msra.mxu0 0.0
        %7788 = vmatprep.subr.mxu0 0.0
        %7789 = vmatpush1.msra.mxu0 0.0
        %7790 = vmatprep.subr.mxu0 0.0
        %7791 = vmatpush1.msra.mxu0 0.0
        %7792 = vmatprep.mubr.f32.mxu0 0.0
        %7793 = vmatmul.mubr.f32.gmra.mrb[0].mxu0 %v7633
        %v7794 = vpop.f32.mrb[0].mxu0
        %v7795 = vadd.f32 %v7474, %v7794
        %v7796 = vpop.f32.mrb[0].mxu0
        %7797 = vmatprep.mubr.f32.mxu0 0.0
        %7798 = vmatmul.mubr.f32.gmra.mrb[0].mxu0 %v7636
        %v7799 = vpop.f32.mrb[0].mxu0
        %v7800 = vadd.f32 %v7479, %v7799
        %v7801 = vpop.f32.mrb[0].mxu0
        %7802 = vmatprep.mubr.f32.mxu0 0.0
        %7803 = vmatmul.mubr.f32.gmra.mrb[0].mxu0 %v7639
        %v7804 = vpop.f32.mrb[0].mxu0
        %v7805 = vadd.f32 %v7484, %v7804
        %v7806 = vpop.f32.mrb[0].mxu0
        %7807 = vmatprep.mubr.f32.mxu0 0.0
        %7808 = vmatmul.mubr.f32.gmra.mrb[0].mxu0 %v7642
        %v7809 = vpop.f32.mrb[0].mxu0
        %v7810 = vadd.f32 %v7489, %v7809
        %v7811 = vpop.f32.mrb[0].mxu0
        %7812 = vmatprep.mubr.f32.mxu0 0.0
        %7813 = vmatmul.mubr.f32.gmra.mrb[0].mxu0 %v7645
        %v7814 = vpop.f32.mrb[0].mxu0
        %v7815 = vadd.f32 %v7494, %v7814
        %v7816 = vpop.f32.mrb[0].mxu0
        %7817 = vmatprep.mubr.f32.mxu0 0.0
        %7818 = vmatmul.mubr.f32.gmra.mrb[0].mxu0 %v7648
        %v7819 = vpop.f32.mrb[0].mxu0
        %v7820 = vadd.f32 %v7499, %v7819
        %v7821 = vpop.f32.mrb[0].mxu0
        %7822 = vmatprep.mubr.f32.mxu0 0.0
        %7823 = vmatmul.mubr.f32.gmra.mrb[0].mxu0 %v7651
        %v7824 = vpop.f32.mrb[0].mxu0
        %v7825 = vadd.f32 %v7504, %v7824
        %v7826 = vpop.f32.mrb[0].mxu0
        %7827 = vmatprep.mubr.f32.mxu0 0.0
        %7828 = vmatmul.mubr.f32.gmra.mrb[0].mxu0 %v7654
        %v7829 = vpop.f32.mrb[0].mxu0
        %v7830 = vadd.f32 %v7509, %v7829
        %v7831 = vpop.f32.mrb[0].mxu0
        %7832 = vmatprep.mubr.f32.mxu0 0.0
        %7833 = vmatmul.mubr.f32.gmra.mrb[0].mxu0 %v7657
        %v7834 = vpop.f32.mrb[0].mxu0
        %v7835 = vadd.f32 %v7514, %v7834
        %v7836 = vpop.f32.mrb[0].mxu0
        %7837 = vmatprep.mubr.f32.mxu0 0.0
        %7838 = vmatmul.mubr.f32.gmra.mrb[0].mxu0 %v7660
        %v7839 = vpop.f32.mrb[0].mxu0
        %v7840 = vadd.f32 %v7519, %v7839
        %v7841 = vpop.f32.mrb[0].mxu0
        %7842 = vmatprep.mubr.f32.mxu0 0.0
        %7843 = vmatmul.mubr.f32.gmra.mrb[0].mxu0 %v7663
        %v7844 = vpop.f32.mrb[0].mxu0
        %v7845 = vadd.f32 %v7524, %v7844
        %v7846 = vpop.f32.mrb[0].mxu0
        %7847 = vmatprep.mubr.f32.mxu0 0.0
        %7848 = vmatmul.mubr.f32.gmra.mrb[0].mxu0 %v7666
        %v7849 = vpop.f32.mrb[0].mxu0
        %v7850 = vadd.f32 %v7529, %v7849
        %v7851 = vpop.f32.mrb[0].mxu0
        %7852 = vmatprep.mubr.f32.mxu0 0.0
        %7853 = vmatmul.mubr.f32.gmra.mrb[0].mxu0 %v7669
        %v7854 = vpop.f32.mrb[0].mxu0
        %v7855 = vadd.f32 %v7534, %v7854
        %v7856 = vpop.f32.mrb[0].mxu0
        %7857 = vmatprep.mubr.f32.mxu0 0.0
        %7858 = vmatmul.mubr.f32.gmra.mrb[0].mxu0 %v7672
        %v7859 = vpop.f32.mrb[0].mxu0
        %v7860 = vadd.f32 %v7539, %v7859
        %v7861 = vpop.f32.mrb[0].mxu0
        %7862 = vmatprep.mubr.f32.mxu0 0.0
        %7863 = vmatmul.mubr.f32.gmra.mrb[0].mxu0 %v7675
        %v7864 = vpop.f32.mrb[0].mxu0
        %v7865 = vadd.f32 %v7544, %v7864
        %v7866 = vpop.f32.mrb[0].mxu0
        %7867 = vmatprep.mubr.f32.mxu0 0.0
        %7868 = vmatmul.mubr.f32.gmra.mrb[0].mxu0 %v7678
        %v7869 = vpop.f32.mrb[0].mxu0
        %v7870 = vadd.f32 %v7549, %v7869
        %v7871 = vpop.f32.mrb[0].mxu0
        %7872 = vmatprep.mubr.f32.mxu0 0.0
        %7873 = vmatmul.mubr.f32.gmra.mrb[0].mxu0 %v7681
        %v7874 = vpop.f32.mrb[0].mxu0
        %v7875 = vadd.f32 %v7554, %v7874
        %v7876 = vpop.f32.mrb[0].mxu0
        %7877 = vmatprep.mubr.f32.mxu0 0.0
        %7878 = vmatmul.mubr.f32.gmra.mrb[0].mxu0 %v7684
        %v7879 = vpop.f32.mrb[0].mxu0
        %v7880 = vadd.f32 %v7559, %v7879
        %v7881 = vpop.f32.mrb[0].mxu0
        %7882 = vmatprep.mubr.f32.mxu0 0.0
        %7883 = vmatmul.mubr.f32.gmra.mrb[0].mxu0 %v7687
        %v7884 = vpop.f32.mrb[0].mxu0
        %v7885 = vadd.f32 %v7564, %v7884
        %v7886 = vpop.f32.mrb[0].mxu0
        %7887 = vmatprep.mubr.f32.mxu0 0.0
        %7888 = vmatmul.mubr.f32.gmra.mrb[0].mxu0 %v7690
        %v7889 = vpop.f32.mrb[0].mxu0
        %v7890 = vadd.f32 %v7569, %v7889
        %v7891 = vpop.f32.mrb[0].mxu0
        %7892 = vmatprep.mubr.f32.mxu0 0.0
        %7893 = vmatmul.mubr.f32.gmra.mrb[0].mxu0 %v7693
        %v7894 = vpop.f32.mrb[0].mxu0
        %v7895 = vadd.f32 %v7574, %v7894
        %v7896 = vpop.f32.mrb[0].mxu0
        %7897 = vmatprep.mubr.f32.mxu0 0.0
        %7898 = vmatmul.mubr.f32.gmra.mrb[0].mxu0 %v7696
        %v7899 = vpop.f32.mrb[0].mxu0
        %v7900 = vadd.f32 %v7579, %v7899
        %v7901 = vpop.f32.mrb[0].mxu0
        %7902 = vmatprep.mubr.f32.mxu0 0.0
        %7903 = vmatmul.mubr.f32.gmra.mrb[0].mxu0 %v7699
        %v7904 = vpop.f32.mrb[0].mxu0
        %v7905 = vadd.f32 %v7584, %v7904
        %v7906 = vpop.f32.mrb[0].mxu0
        %7907 = vmatprep.mubr.f32.mxu0 0.0
        %7908 = vmatmul.mubr.f32.gmra.mrb[0].mxu0 %v7702
        %v7909 = vpop.f32.mrb[0].mxu0
        %v7910 = vadd.f32 %v7589, %v7909
        %v7911 = vpop.f32.mrb[0].mxu0
        %7912 = vmatprep.mubr.f32.mxu0 0.0
        %7913 = vmatmul.mubr.f32.gmra.mrb[0].mxu0 %v7705
        %v7914 = vpop.f32.mrb[0].mxu0
        %v7915 = vadd.f32 %v7594, %v7914
        %v7916 = vpop.f32.mrb[0].mxu0
        %7917 = vmatprep.mubr.f32.mxu0 0.0
        %7918 = vmatmul.mubr.f32.gmra.mrb[0].mxu0 %v7708
        %v7919 = vpop.f32.mrb[0].mxu0
        %v7920 = vadd.f32 %v7599, %v7919
        %v7921 = vpop.f32.mrb[0].mxu0
        %7922 = vmatprep.mubr.f32.mxu0 0.0
        %7923 = vmatmul.mubr.f32.gmra.mrb[0].mxu0 %v7711
        %v7924 = vpop.f32.mrb[0].mxu0
        %v7925 = vadd.f32 %v7604, %v7924
        %v7926 = vpop.f32.mrb[0].mxu0
        %7927 = vmatprep.mubr.f32.mxu0 0.0
        %7928 = vmatmul.mubr.f32.gmra.mrb[0].mxu0 %v7714
        %v7929 = vpop.f32.mrb[0].mxu0
        %v7930 = vadd.f32 %v7609, %v7929
        %v7931 = vpop.f32.mrb[0].mxu0
        %7932 = vmatprep.mubr.f32.mxu0 0.0
        %7933 = vmatmul.mubr.f32.gmra.mrb[0].mxu0 %v7717
        %v7934 = vpop.f32.mrb[0].mxu0
        %v7935 = vadd.f32 %v7614, %v7934
        %v7936 = vpop.f32.mrb[0].mxu0
        %7937 = vmatprep.mubr.f32.mxu0 0.0
        %7938 = vmatmul.mubr.f32.gmra.mrb[0].mxu0 %v7720
        %v7939 = vpop.f32.mrb[0].mxu0
        %v7940 = vadd.f32 %v7619, %v7939
        %v7941 = vpop.f32.mrb[0].mxu0
        %7942 = vmatprep.mubr.f32.mxu0 0.0
        %7943 = vmatmul.mubr.f32.gmra.mrb[0].mxu0 %v7723
        %v7944 = vpop.f32.mrb[0].mxu0
        %v7945 = vadd.f32 %v7624, %v7944
        %v7946 = vpop.f32.mrb[0].mxu0
        %7947 = vmatprep.mubr.f32.mxu0 0.0
        %7948 = vmatmul.mubr.f32.gmra.mrb[0].mxu0 %v7726
        %v7949 = vpop.f32.mrb[0].mxu0
        %v7950 = vadd.f32 %v7629, %v7949
        %v7951 = vpop.f32.mrb[0].mxu0
        %7952 = vdwg.mxu0
        %v7953 = vld [vmem:[#allocation11] sm:$0x1]
        %v7955 = vlaneseq
        %v7956 = vshrl.u32 %v7955, 7
        %v7957 = vsub.s32 0, %v7956
        %v7958 = vrot.slane %v7953, %v7957
        %v7960 = vadd.f32 %v7795, %v7958
        %v7961 = vadd.f32 %v7800, %v7958
        %v7962 = vadd.f32 %v7805, %v7958
        %v7963 = vadd.f32 %v7810, %v7958
        %v7964 = vadd.f32 %v7815, %v7958
        %v7965 = vadd.f32 %v7820, %v7958
        %v7966 = vadd.f32 %v7825, %v7958
        %v7967 = vadd.f32 %v7830, %v7958
        %v7968 = vadd.f32 %v7835, %v7958
        %v7969 = vadd.f32 %v7840, %v7958
        %v7970 = vadd.f32 %v7845, %v7958
        %v7971 = vadd.f32 %v7850, %v7958
        %v7972 = vadd.f32 %v7855, %v7958
        %v7973 = vadd.f32 %v7860, %v7958
        %v7974 = vadd.f32 %v7865, %v7958
        %v7975 = vadd.f32 %v7870, %v7958
        %v7976 = vadd.f32 %v7875, %v7958
        %v7977 = vadd.f32 %v7880, %v7958
        %v7978 = vadd.f32 %v7885, %v7958
        %v7979 = vadd.f32 %v7890, %v7958
        %v7980 = vadd.f32 %v7895, %v7958
        %v7981 = vadd.f32 %v7900, %v7958
        %v7982 = vadd.f32 %v7905, %v7958
        %v7983 = vadd.f32 %v7910, %v7958
        %v7984 = vadd.f32 %v7915, %v7958
        %v7985 = vadd.f32 %v7920, %v7958
        %v7986 = vadd.f32 %v7925, %v7958
        %v7987 = vadd.f32 %v7930, %v7958
        %v7988 = vadd.f32 %v7935, %v7958
        %v7989 = vadd.f32 %v7940, %v7958
        %v7990 = vadd.f32 %v7945, %v7958
        %v7991 = vadd.f32 %v7950, %v7958
        %vm7992 = vcmask 261120
        %7993 = vst.msk [vmem:[%s390] sm:$0xff] %vm7992, %v7960
        %7994 = vst.msk [vmem:[%s390 + $0x8] sm:$0xff] %vm7992, %v7961
        %7995 = vst.msk [vmem:[%s390 + $0x10] sm:$0xff] %vm7992, %v7962
        %7996 = vst.msk [vmem:[%s390 + $0x18] sm:$0xff] %vm7992, %v7963
        %7997 = vst.msk [vmem:[%s390 + $0x20] sm:$0xff] %vm7992, %v7964
        %7998 = vst.msk [vmem:[%s390 + $0x28] sm:$0xff] %vm7992, %v7965
        %7999 = vst.msk [vmem:[%s390 + $0x30] sm:$0xff] %vm7992, %v7966
        %8000 = vst.msk [vmem:[%s390 + $0x38] sm:$0xff] %vm7992, %v7967
        %8001 = vst.msk [vmem:[%s390 + $0x40] sm:$0xff] %vm7992, %v7968
        %8002 = vst.msk [vmem:[%s390 + $0x48] sm:$0xff] %vm7992, %v7969
        %8003 = vst.msk [vmem:[%s390 + $0x50] sm:$0xff] %vm7992, %v7970
        %8004 = vst.msk [vmem:[%s390 + $0x58] sm:$0xff] %vm7992, %v7971
        %8005 = vst.msk [vmem:[%s390 + $0x60] sm:$0xff] %vm7992, %v7972
        %8006 = vst.msk [vmem:[%s390 + $0x68] sm:$0xff] %vm7992, %v7973
        %8007 = vst.msk [vmem:[%s390 + $0x70] sm:$0xff] %vm7992, %v7974
        %8008 = vst.msk [vmem:[%s390 + $0x78] sm:$0xff] %vm7992, %v7975
        %8009 = vst.msk [vmem:[%s390 + $0x80] sm:$0xff] %vm7992, %v7976
        %8010 = vst.msk [vmem:[%s390 + $0x88] sm:$0xff] %vm7992, %v7977
        %8011 = vst.msk [vmem:[%s390 + $0x90] sm:$0xff] %vm7992, %v7978
        %8012 = vst.msk [vmem:[%s390 + $0x98] sm:$0xff] %vm7992, %v7979
        %8013 = vst.msk [vmem:[%s390 + $0xa0] sm:$0xff] %vm7992, %v7980
        %8014 = vst.msk [vmem:[%s390 + $0xa8] sm:$0xff] %vm7992, %v7981
        %8015 = vst.msk [vmem:[%s390 + $0xb0] sm:$0xff] %vm7992, %v7982
        %8016 = vst.msk [vmem:[%s390 + $0xb8] sm:$0xff] %vm7992, %v7983
        %8017 = vst.msk [vmem:[%s390 + $0xc0] sm:$0xff] %vm7992, %v7984
        %8018 = vst.msk [vmem:[%s390 + $0xc8] sm:$0xff] %vm7992, %v7985
        %8019 = vst.msk [vmem:[%s390 + $0xd0] sm:$0xff] %vm7992, %v7986
        %8020 = vst.msk [vmem:[%s390 + $0xd8] sm:$0xff] %vm7992, %v7987
        %8021 = vst.msk [vmem:[%s390 + $0xe0] sm:$0xff] %vm7992, %v7988
        %8022 = vst.msk [vmem:[%s390 + $0xe8] sm:$0xff] %vm7992, %v7989
        %8023 = vst.msk [vmem:[%s390 + $0xf0] sm:$0xff] %vm7992, %v7990
        %8024 = vst.msk [vmem:[%s390 + $0xf8] sm:$0xff] %vm7992, %v7991
        %s8025 = sand.u32 %s199, 1
        %s8026 = scalar_lea.sflag [#allocation4], %s8025
        %s8027 = sand.u32 %s199, 1
        %s8028 = smul.addr %s8027, 256
        %s8029 = scalar_lea.vmem [#allocation13], %s8028
        // Predicated region
        $region69: #{tpu_custom_call.1} parent=43 // pred_check
          %p8030 = pneg %p209
        $region70: #{tpu_custom_call.1} parent=43 // pred_check_branch
          %8032 = sbr.rel (%p8030) target = $region72
        $region71: #{tpu_custom_call.1} parent=43 // pred_region
          %s8033 = smul.u32 16, %s34
          %s8034 = smul.u32 2, %s35
          %s8036 = ssub.s32 4096, 4096
          %8037 = vsyncadd %s8026, %s8036
          %s8038 = smul.addr %s8033, 2
          %s8039 = sadd.s32 %s8034, %s8038
          %s8040 = smul.addr %s33, 32
          %s8041 = sadd.s32 %s8039, %s8040
          %s8042 = smul.addr %s8041, 128
          %s8043 = scalar_lea.hbm %s6, %s8042
          %s8044 = sshll.u32 %s8029, 4
          %s8045 = int_to_ptr.vmem [resolvable:$true] %s8044
          %8050 = dma.vmem_to_hbm [thread:$0]  %s8045, 4096, %s8043, %s8026, 128, 128, 8
        $region72: #{tpu_custom_call.1} parent=43 // pred_fallthru
          _
      $region44: #{tpu_custom_call.1} parent=5 // pred_fallthru
        _
      %p8051 = scmp.le.s32.totalorder 2, %s23
      // Predicated region
      $region73: #{tpu_custom_call.1} parent=5 // pred_check
        %p8052 = pneg %p8051
      $region74: #{tpu_custom_call.1} parent=5 // pred_check_branch
        %8054 = sbr.rel (%p8052) target = $region76
      $region75: #{tpu_custom_call.1} parent=5 // pred_region
        %s8055 = ssub.s32 %s23, 2
        // Predicated region
        $region77: #{tpu_custom_call.1} parent=75 // pred_check
          %p8056 = pneg %p215
        $region78: #{tpu_custom_call.1} parent=75 // pred_check_branch
          %8058 = sbr.rel (%p8056) target = $region80
        $region79: #{tpu_custom_call.1} parent=75 // pred_region
          %s8059 = sand.u32 %s200, 1
          %s8060 = scalar_lea.sflag [#allocation4], %s8059
          %s8061 = sand.u32 %s200, 1
          %s8062 = smul.addr %s8061, 256
          %s8063 = scalar_lea.vmem [#allocation13], %s8062
          %8064 = dma.done %s8060, 4096
        $region80: #{tpu_custom_call.1} parent=75 // pred_fallthru
          _
      $region76: #{tpu_custom_call.1} parent=5 // pred_fallthru
        _
    $region6: #{tpu_custom_call.1} parent=1 // loop_footer
      %s27 = sadd.s32 1, %s23
    $region7: #{tpu_custom_call.1} parent=1 // loop_footer_branch
      %22 = sbr.rel target = $region3
    $region8: #{tpu_custom_call.1} parent=1 // loop_exit
      _
    %8065 = vsyncpa [#allocation3], 1
    %s8066 = scalar_lea.sflag [#allocation3], 1
    %8067 = vsyncpa %s8066, 1
    %8068 = vsyncpa [#allocation6], 1
    %s8069 = scalar_lea.sflag [#allocation6], 1
    %8070 = vsyncpa %s8069, 1
    %8071 = vsyncpa [#allocation9], 1
    %8072 = vsyncpa [#allocation12], 1
    %8073 = vsyncpa [#allocation4], 1
    %s8074 = scalar_lea.sflag [#allocation4], 1
    %8075 = vsyncpa %s8074, 1

</llo_original>
